<compile_context>
chip_gen: v6e
topology: v6e:2x2x1
jax: 0.10.0
libtpu: 0.0.40
codegen_flags: <defaults>
</compile_context>

<pallas_src>
import functools

import numpy as np
import jax
import jax.numpy as jnp
from jax.experimental import pallas as pl
from jax.experimental.pallas import tpu as pltpu


MXU_DTYPE = jnp.bfloat16      # MXU input dtype (f32 accumulate)
ACT_DTYPE = jnp.bfloat16      # residual-stream dtype between layers
LN_EPS = 1e-6
NEG_INF = -1e9

_LAYER_W_NAMES = ('w_qkv', 'fc', 'ln1_g', 'ln1_b', 'w1', 'b1', 'w2', 'b2',
                  'ln2_g', 'ln2_b')


# ----------------------------------------------------------------------------
# small helpers
# ----------------------------------------------------------------------------

def _mm(a, b):
    """a[M, K] @ b[K, N] on the MXU (bf16 in, f32 accumulate).

    Weights arrive pre-cast to bf16 from the wrapper, so .astype is a no-op
    for them; only the (much smaller) activation operand gets cast."""
    return jax.lax.dot_general(
        a.astype(MXU_DTYPE), b.astype(MXU_DTYPE),
        (((1,), (0,)), ((), ())), preferred_element_type=jnp.float32)


def _mm_t(a, b):
    """a[M, K] @ b[N, K]^T without materializing a transpose."""
    return jax.lax.dot_general(
        a.astype(MXU_DTYPE), b.astype(MXU_DTYPE),
        (((1,), (1,)), ((), ())), preferred_element_type=jnp.float32)


def _ln(x, g, b, eps):
    mu = jnp.mean(x, axis=-1, keepdims=True)
    var = jnp.mean(jnp.square(x - mu), axis=-1, keepdims=True)
    return (x - mu) * jax.lax.rsqrt(var + eps) * g + b


def _vmem_budget(block_bytes):
    """Explicit scoped-VMEM limit: 2x (double buffering) + headroom, clamped
    to [16 MiB, 50 MiB] so it stays under v7x's 64 MiB with margin."""
    return int(min(max(3 * int(block_bytes) + (2 << 20), 16 << 20), 50 << 20))


def _pick_tile(n, pref, unit):
    """Largest multiple of `unit` <= pref that divides n (else n itself)."""
    if n <= pref:
        return n
    t = (pref // unit) * unit
    while t >= unit:
        if n % t == 0:
            return t
        t -= unit
    return n


# ----------------------------------------------------------------------------
# Shared transformer-layer math (used by the layer kernel and the pool kernel)
# ----------------------------------------------------------------------------

def _encoder_layer_math(x, w, *, H, dk, dv, eps, bad_mask):
    """One post-LN EncoderLayer on an (L, D) f32 tile.  w = tuple of the 10
    weights in _LAYER_W_NAMES order (matmul weights already bf16)."""
    wqkv, fc, g1, bt1, w1, bb1, w2, bb2, g2, bt2 = w

    # fused QKV projection; 1/sqrt(d_k) is folded into the Q weight columns
    qkv = _mm(x, wqkv)                                 # (L, H*(2dk+dv)) f32
    koff, voff = H * dk, 2 * H * dk
    heads = []
    for h in range(H):                                 # small static head loop
        # TODO(synk): per-head slices are lane-sub-128 at realistic dk/dv=64;
        # pad head widths to 128 (or process head pairs) to avoid relayouts.
        q = qkv[:, h * dk:(h + 1) * dk]
        k = qkv[:, koff + h * dk: koff + (h + 1) * dk]
        v = qkv[:, voff + h * dv: voff + (h + 1) * dv]
        s = _mm_t(q, k)                                # (L, L)
        if bad_mask is not None:
            s = jnp.where(bad_mask, NEG_INF, s)
        s = s - jnp.max(s, axis=-1, keepdims=True)
        p = jnp.exp(s)
        p = p * pl.reciprocal(jnp.sum(p, axis=-1, keepdims=True), approx=True)
        heads.append(_mm(p, v))                        # (L, dv)

    # single (L, H*dv) @ (H*dv, D) output projection: full MXU contraction
    attn = _mm(jnp.concatenate(heads, axis=-1), fc)

    x1 = _ln(x + attn, g1, bt1, eps)
    hmid = jnp.maximum(_mm(x1, w1) + bb1, 0.0)
    ffn = _mm(hmid, w2) + bb2
    return _ln(x1 + ffn, g2, bt2, eps)


# ----------------------------------------------------------------------------
# Fused transformer layer kernel (optional entry-LN, key-pad / causal mask)
# ----------------------------------------------------------------------------

def _layer_kernel(*refs, H, dk, dv, eps, has_key_mask, causal, has_input_ln):
    it = iter(refs)
    x_ref = next(it)
    km_ref = next(it) if has_key_mask else None        # (1, L) key-pad mask
    if has_input_ln:
        g0_ref, b0_ref = next(it), next(it)
    w = tuple(next(it)[...] for _ in _LAYER_W_NAMES)
    o_ref = next(it)

    x = x_ref[...].astype(jnp.float32)                 # (L, D)
    L = x.shape[0]
    if has_input_ln:                                   # fused embedding LayerNorm
        x = _ln(x, g0_ref[...], b0_ref[...], eps)

    # boolean attention mask, built in-kernel (no (B, L, L) HBM buffer)
    bad = None
    if has_key_mask:
        bad = km_ref[...] == 0.0                       # (1, L)
    if causal:
        row = jax.lax.broadcasted_iota(jnp.int32, (L, L), 0)
        col = jax.lax.broadcasted_iota(jnp.int32, (L, L), 1)
        c = row < col
        bad = c if bad is None else (bad | c)

    y = _encoder_layer_math(x, w, H=H, dk=dk, dv=dv, eps=eps, bad_mask=bad)
    o_ref[...] = y.astype(o_ref.dtype)


def fused_layer(x, lp, *, cfg, key_mask=None, causal=False, input_ln=None,
                out_dtype=ACT_DTYPE):
    """One full transformer EncoderLayer as a single pallas_call.

    x:         (B, L, D)  bf16 (or f32) residual stream
    key_mask:  (B, 1, L)  f32 (0 = masked key) or None
    causal:    add lower-triangular mask (built in-kernel)
    input_ln:  (gamma, beta) of an entry LayerNorm fused before the layer
    """
    B, L, D = x.shape
    H, dk, dv = cfg['n_head'], cfg['d_k'], cfg['d_v']

    args = [x]
    in_specs = [pl.BlockSpec((None, L, D), lambda b: (b, 0, 0))]
    block_bytes = L * D * x.dtype.itemsize
    if key_mask is not None:
        args.append(key_mask)
        in_specs.append(pl.BlockSpec((None, 1, L), lambda b: (b, 0, 0)))
        block_bytes += L * key_mask.dtype.itemsize
    if input_ln is not None:
        args += [input_ln[0], input_ln[1]]
        in_specs += [pl.BlockSpec((1, D), lambda b: (0, 0))] * 2
        block_bytes += 2 * 4 * D

    # Weights: constant index map => fetched once, VMEM-resident across the
    # batch grid (already bf16 from init, halving DMA bytes + residency).
    # NOTE: pipeline_mode=pl.Buffered(1) would also drop their second buffer;
    # kept at default buffering for portability.
    for name in _LAYER_W_NAMES:
        w = lp[name]
        args.append(w)
        in_specs.append(pl.BlockSpec(w.shape, lambda b: (0, 0)))
        block_bytes += w.size * w.dtype.itemsize

    out_shape = jax.ShapeDtypeStruct((B, L, D), out_dtype)
    out_spec = pl.BlockSpec((None, L, D), lambda b: (b, 0, 0))
    block_bytes += L * D * np.dtype(out_dtype).itemsize

    kernel = functools.partial(
        _layer_kernel, H=H, dk=dk, dv=dv, eps=LN_EPS,
        has_key_mask=key_mask is not None, causal=causal,
        has_input_ln=input_ln is not None)

    return pl.pallas_call(
        kernel,
        out_shape=out_shape,
        grid=(B,),
        in_specs=in_specs,
        out_specs=out_spec,
        compiler_params=pltpu.CompilerParams(
            dimension_semantics=("parallel",),
            vmem_limit_bytes=_vmem_budget(block_bytes)),
    )(*args)


# ----------------------------------------------------------------------------
# Fused out_mu + out_var kernel (two EncoderLayers + masked-mean pooling)
# ----------------------------------------------------------------------------

def _pool_pair_kernel(*refs, H, dk, dv, eps, clip_max):
    it = iter(refs)
    x_ref, pm_ref = next(it), next(it)
    wa = tuple(next(it)[...] for _ in _LAYER_W_NAMES)
    wb = tuple(next(it)[...] for _ in _LAYER_W_NAMES)
    mu_ref, lv_ref = next(it), next(it)

    x = x_ref[...].astype(jnp.float32)                 # (L, D)
    m = pm_ref[...]                                    # (L, 1) f32 {0,1}
    # guarded masked-mean denominator (EUP reciprocal; guard all-pad sequences)
    inv_cnt = pl.reciprocal(
        jnp.maximum(jnp.sum(m, axis=0, keepdims=True), 1.0), approx=True)

    # out_mu / out_var EncoderLayers: reference passes no attention mask
    ya = _encoder_layer_math(x, wa, H=H, dk=dk, dv=dv, eps=eps, bad_mask=None)
    mu_ref[...] = jnp.sum(ya * m, axis=0, keepdims=True) * inv_cnt

    yb = _encoder_layer_math(x, wb, H=H, dk=dk, dv=dv, eps=eps, bad_mask=None)
    lv = jnp.sum(yb * m, axis=0, keepdims=True) * inv_cnt
    lv_ref[...] = jnp.minimum(lv, clip_max)            # upper clamp only


def fused_pool_pair(x, pool_mask, lp_mu, lp_var, *, cfg, clip_max=80.0):
    B, L, D = x.shape
    H, dk, dv = cfg['n_head'], cfg['d_k'], cfg['d_v']

    args = [x, pool_mask]
    in_specs = [pl.BlockSpec((None, L, D), lambda b: (b, 0, 0)),
                pl.BlockSpec((None, L, 1), lambda b: (b, 0, 0))]
    block_bytes = L * D * x.dtype.itemsize + 4 * L
    for lp in (lp_mu, lp_var):
        for name in _LAYER_W_NAMES:
            w = lp[name]
            args.append(w)
            in_specs.append(pl.BlockSpec(w.shape, lambda b: (0, 0)))
            block_bytes += w.size * w.dtype.itemsize

    out_shape = (jax.ShapeDtypeStruct((B, 1, D), jnp.float32),
                 jax.ShapeDtypeStruct((B, 1, D), jnp.float32))
    out_specs = (pl.BlockSpec((None, 1, D), lambda b: (b, 0, 0)),
                 pl.BlockSpec((None, 1, D), lambda b: (b, 0, 0)))
    block_bytes += 2 * 4 * D

    kernel = functools.partial(_pool_pair_kernel, H=H, dk=dk, dv=dv,
                               eps=LN_EPS, clip_max=float(clip_max))
    mu, logvar = pl.pallas_call(
        kernel,
        out_shape=out_shape,
        grid=(B,),
        in_specs=in_specs,
        out_specs=out_specs,
        compiler_params=pltpu.CompilerParams(
            dimension_semantics=("parallel",),
            vmem_limit_bytes=_vmem_budget(block_bytes)),
    )(*args)
    return mu[:, 0, :], logvar[:, 0, :]


# ----------------------------------------------------------------------------
# Tiled loss kernel: word projection + CE + accuracy + KLD
#   grid = (row_blocks, vocab_blocks); online logsumexp / argmax over vocab,
#   scalar partials accumulated in VMEM scratch, lane-dense (1, 128) output.
# ----------------------------------------------------------------------------

def _loss_kernel(x_ref, emb_ref, tgt_ref, m_ref, mu_ref, lv_ref, o_ref,
                 m_sc, l_sc, t_sc, bv_sc, bi_sc, ce_sc, ok_sc, cnt_sc,
                 *, kld_weight, inv_n_batch, v_total, tv):
    ri, vi = pl.program_id(0), pl.program_id(1)
    n_r, n_v = pl.num_programs(0), pl.num_programs(1)

    @pl.when(jnp.logical_and(ri == 0, vi == 0))
    def _():                                           # global accumulators
        ce_sc[...] = jnp.zeros_like(ce_sc)
        ok_sc[...] = jnp.zeros_like(ok_sc)
        cnt_sc[...] = jnp.zeros_like(cnt_sc)

    @pl.when(vi == 0)
    def _():                                           # per-row-block state
        m_sc[...] = jnp.full_like(m_sc, -jnp.inf)
        l_sc[...] = jnp.zeros_like(l_sc)
        t_sc[...] = jnp.zeros_like(t_sc)
        bv_sc[...] = jnp.full_like(bv_sc, -jnp.inf)
        bi_sc[...] = jnp.full_like(bi_sc, v_total)

    # shared-weight word projection: emb consumed as stored (tv, D), contracted
    # on dim 1 (no transpose); scale_prj d_model^-0.5 pre-folded into emb.
    logits = _mm_t(x_ref[...], emb_ref[...])           # (tn, tv) f32
    tn = logits.shape[0]
    col = vi * tv + jax.lax.broadcasted_iota(jnp.int32, (tn, tv), 1)
    tgt = tgt_ref[...]                                 # (tn, 1) i32

    # target logit (exactly one hit across all vocab blocks)
    t_sc[...] += jnp.sum(jnp.where(col == tgt, logits, 0.0),
                         axis=-1, keepdims=True)

    # online log-sum-exp
    blk_max = jnp.max(logits, axis=-1, keepdims=True)
    m_new = jnp.maximum(m_sc[...], blk_max)
    l_sc[...] = (l_sc[...] * jnp.exp(m_sc[...] - m_new)
                 + jnp.sum(jnp.exp(logits - m_new), axis=-1, keepdims=True))
    m_sc[...] = m_new

    # running argmax, first-occurrence tie-breaking (strict '>' keeps the
    # earlier vocab block / smaller index on ties)
    blk_idx = jnp.min(jnp.where(logits >= blk_max, col, v_total),
                      axis=-1, keepdims=True)
    better = blk_max > bv_sc[...]
    bv_sc[...] = jnp.where(better, blk_max, bv_sc[...])
    bi_sc[...] = jnp.where(better, blk_idx, bi_sc[...])

    @pl.when(vi == n_v - 1)
    def _():                                           # fold row block into sums
        msk = m_ref[...]                               # (tn, 1) f32 {0,1}
        ce = (jnp.log(l_sc[...]) + m_sc[...]) - t_sc[...]
        ce_sc[...] += jnp.sum(ce * msk, axis=0, keepdims=True)
        ok = (bi_sc[...] == tgt).astype(jnp.float32) * msk
        ok_sc[...] += jnp.sum(ok, axis=0, keepdims=True)
        cnt_sc[...] += jnp.sum(msk, axis=0, keepdims=True)

    @pl.when(jnp.logical_and(ri == n_r - 1, vi == n_v - 1))
    def _():                                           # finalize
        inv_cnt = pl.reciprocal(jnp.maximum(cnt_sc[...], 1.0), approx=True)
        rec = ce_sc[...] * inv_cnt                     # (1, 1)
        acc = ok_sc[...] * inv_cnt
        mu, lv = mu_ref[...], lv_ref[...]
        kld_b = -0.5 * jnp.sum(1.0 + lv - mu * mu - jnp.exp(lv),
                               axis=1, keepdims=True)  # (B, 1)
        kld = jnp.sum(kld_b, axis=0, keepdims=True) * inv_n_batch
        loss = rec + kld * kld_weight
        lane = jax.lax.broadcasted_iota(jnp.int32, (1, 128), 1)
        o_ref[...] = jnp.where(lane == 0, loss,
                      jnp.where(lane == 1, rec,
                       jnp.where(lane == 2, kld, acc)))


def fused_loss(x2, emb_prj, tgt2, m2, mu, logvar, cfg, *, row_tile=256,
               vocab_tile=4096):
    N, D = x2.shape
    V = emb_prj.shape[0]
    B = mu.shape[0]
    row_unit = 16 if x2.dtype == jnp.bfloat16 else 8
    tn = _pick_tile(N, row_tile, row_unit)
    tv = V if V <= 128 else _pick_tile(V, vocab_tile, 128)
    n_r, n_v = N // tn, V // tv

    kernel = functools.partial(
        _loss_kernel, kld_weight=float(cfg['kld_weight']),
        inv_n_batch=1.0 / float(B), v_total=int(V), tv=int(tv))

    block_bytes = (tn * D * x2.dtype.itemsize + tv * D * emb_prj.dtype.itemsize
                   + tn * 8 + 2 * B * mu.shape[1] * 4
                   + 2 * tn * tv * 4 + 1024)           # logits temporaries

    out = pl.pallas_call(
        kernel,
        out_shape=jax.ShapeDtypeStruct((1, 128), jnp.float32),
        grid=(n_r, n_v),
        in_specs=[
            pl.BlockSpec((tn, D), lambda r, v: (r, 0)),
            pl.BlockSpec((tv, D), lambda r, v: (v, 0)),
            pl.BlockSpec((tn, 1), lambda r, v: (r, 0)),
            pl.BlockSpec((tn, 1), lambda r, v: (r, 0)),
            pl.BlockSpec(mu.shape, lambda r, v: (0, 0)),
            pl.BlockSpec(logvar.shape, lambda r, v: (0, 0)),
        ],
        out_specs=pl.BlockSpec((1, 128), lambda r, v: (0, 0)),
        scratch_shapes=[
            pltpu.VMEM((tn, 1), jnp.float32),   # running max
            pltpu.VMEM((tn, 1), jnp.float32),   # running sum-exp
            pltpu.VMEM((tn, 1), jnp.float32),   # target logit
            pltpu.VMEM((tn, 1), jnp.float32),   # running best value
            pltpu.VMEM((tn, 1), jnp.int32),     # running best index
            pltpu.VMEM((1, 1), jnp.float32),    # sum masked CE
            pltpu.VMEM((1, 1), jnp.float32),    # sum correct
            pltpu.VMEM((1, 1), jnp.float32),    # sum mask count
        ],
        compiler_params=pltpu.CompilerParams(
            dimension_semantics=("arbitrary", "arbitrary"),
            vmem_limit_bytes=_vmem_budget(block_bytes)),
    )(x2, emb_prj, tgt2, m2, mu, logvar)
    return out[0, 0], out[0, 1], out[0, 2], out[0, 3]


# ----------------------------------------------------------------------------
# Model glue (plain JAX around the fused kernels)
# ----------------------------------------------------------------------------

def sinusoid_table(n_position, d_hid):
    pos = np.arange(n_position, dtype=np.float64)[:, None]
    i = np.arange(d_hid, dtype=np.float64)[None, :]
    angle = pos / np.power(10000.0, 2.0 * np.floor(i / 2.0) / d_hid)
    even = (np.arange(d_hid)[None, :] % 2) == 0
    table = np.where(even, np.sin(angle), np.cos(angle))
    return jnp.asarray(table, dtype=jnp.float32)


def encoder_mean_fwd(p, seq, body_mask, cfg):
    """SeqvaeEncoderMean forward -> (mu, logvar), each [B, d_model] f32."""
    B, S = seq.shape
    # embedding table pre-scaled by sqrt(d_model) at init (scale_emb=True)
    x = jnp.take(p['emb'], seq, axis=0) + p['pos'][None, :S, :]
    x = x.astype(ACT_DTYPE)                            # bf16 residual stream
    # dropout (eval) -> identity

    key_mask = body_mask.astype(jnp.float32)[:, None, :]   # (B, 1, S)
    pool_mask = body_mask.astype(jnp.float32)[:, :, None]  # (B, S, 1)

    layers = p['layers']
    if layers:
        x = fused_layer(x, layers[0], cfg=cfg, key_mask=key_mask,
                        input_ln=(p['ln_g'], p['ln_b']))
        for lp in layers[1:]:
            x = fused_layer(x, lp, cfg=cfg, key_mask=key_mask)
    else:
        # rare trunk-less config: apply the embedding LayerNorm once here so
        # the fused pooling kernel does not recompute it twice
        x = _ln(x.astype(jnp.float32), p['ln_g'], p['ln_b'],
                LN_EPS).astype(ACT_DTYPE)

    # out_mu / out_var EncoderLayers fused into ONE call (shared x read,
    # shared masked-mean denominator, logvar clamped at 80)
    return fused_pool_pair(x, pool_mask, p['out_mu'], p['out_var'],
                           cfg=cfg, clip_max=80.0)


def decoder_head_fwd(p, seq, z, cfg):
    """SeqvaeDecoderHead body -> decoder hidden states [B, S+1, d_model] bf16."""
    B, S = seq.shape
    V = cfg['n_vocab'] + 1
    summary_id = V - 1
    head = jnp.full((B, 1), summary_id, seq.dtype)
    seq_d = jnp.concatenate([head, seq], axis=1)            # (B, L)
    L = S + 1

    key_mask = (seq_d != cfg['pad_id']).astype(jnp.float32)[:, None, :]

    emb = jnp.take(p['emb'], seq_d, axis=0)                 # scale_emb=False
    # TODO(synk): HeadSummaryEncoder internals not in the spec; assuming the
    # summary vector replaces the head-token embedding at position 0.
    emb = emb.at[:, 0, :].set(z)
    x = (emb + p['pos'][None, :L, :]).astype(ACT_DTYPE)

    for i, lp in enumerate(p['layers']):
        x = fused_layer(x, lp, cfg=cfg, key_mask=key_mask, causal=True,
                        input_ln=(p['ln_g'], p['ln_b']) if i == 0 else None)
    return x   # word projection + scale_prj are fused into the loss kernel


def seqvae_loss_forward(params, batch, eps, cfg, *, loss_row_tile=256):
    mask = batch['body_mask']
    mu, logvar = encoder_mean_fwd(params['encoder'], batch['input_ids'],
                                  mask, cfg)
    std = jnp.exp(0.5 * logvar)
    z = eps * std + mu                                       # reparameterize
    dec_out = decoder_head_fwd(params['decoder'], batch['input_ids'], z, cfg)

    B, S = batch['input_ids'].shape
    D = cfg['d_model']
    x2 = dec_out[:, 1:, :].reshape(B * S, D)                 # drop head token
    tgt2 = batch['output_ids'].astype(jnp.int32).reshape(B * S, 1)
    m2 = mask.astype(jnp.float32).reshape(B * S, 1)

    loss, rec, kld, acc = fused_loss(
        x2, params['decoder']['emb_prj'], tgt2, m2, mu, logvar, cfg,
        row_tile=loss_row_tile)
    return loss, {'acc': acc, 'recons_loss': rec, 'kld_loss': kld}


# ----------------------------------------------------------------------------
# Deterministic parameter init (matmul weights stored bf16)
# ----------------------------------------------------------------------------

def init_layer(key, cfg, std=0.08):
    D, Di = cfg['d_model'], cfg['d_inner']
    H, dk, dv = cfg['n_head'], cfg['d_k'], cfg['d_v']
    ks = jax.random.split(key, 6)
    n = jax.random.normal
    w_qs = n(ks[0], (D, H * dk), jnp.float32) * std
    w_ks = n(ks[1], (D, H * dk), jnp.float32) * std
    w_vs = n(ks[2], (D, H * dv), jnp.float32) * std
    return {
        # fused [Q | K | V]; 1/sqrt(d_k) folded into the Q columns; bf16
        'w_qkv': jnp.concatenate([w_qs * (dk ** -0.5), w_ks, w_vs],
                                 axis=1).astype(MXU_DTYPE),
        'fc': (n(ks[3], (H * dv, D), jnp.float32) * std).astype(MXU_DTYPE),
        'ln1_g': jnp.ones((1, D), jnp.float32),
        'ln1_b': jnp.zeros((1, D), jnp.float32),
        'w1': (n(ks[4], (D, Di), jnp.float32) * std).astype(MXU_DTYPE),
        'b1': jnp.zeros((1, Di), jnp.float32),
        'w2': (n(ks[5], (Di, D), jnp.float32) * std).astype(MXU_DTYPE),
        'b2': jnp.zeros((1, D), jnp.float32),
        'ln2_g': jnp.ones((1, D), jnp.float32),
        'ln2_b': jnp.zeros((1, D), jnp.float32),
    }


def init_params(key, cfg):
    D = cfg['d_model']
    ks = jax.random.split(key, 6)
    n_trunk = cfg['n_encoder_layer'] - 1
    enc_layer_keys = list(jax.random.split(ks[1], n_trunk)) if n_trunk > 0 else []
    dec_layer_keys = jax.random.split(ks[5], cfg['n_decoder_layer'])

    # encoder embedding pre-scaled by sqrt(d_model) (scale_emb=True folded in)
    enc_emb = jax.random.normal(ks[0], (cfg['n_vocab'], D), jnp.float32) * 0.05
    enc_emb = (enc_emb * (D ** 0.5)).at[cfg['pad_id']].set(0.0)

    # decoder embedding shared with word_prj (scale_emb=False inside decoder)
    dec_emb = (jax.random.normal(ks[4], (cfg['n_vocab'] + 1, D), jnp.float32)
               * 0.05).at[cfg['pad_id']].set(0.0)

    enc = {
        'emb': enc_emb,
        'pos': sinusoid_table(cfg['n_seq_max'], D),
        'ln_g': jnp.ones((1, D), jnp.float32),
        'ln_b': jnp.zeros((1, D), jnp.float32),
        'layers': [init_layer(k, cfg) for k in enc_layer_keys],
        'out_mu': init_layer(ks[2], cfg),
        'out_var': init_layer(ks[3], cfg),
    }
    dec = {
        'emb': dec_emb,                                  # f32, for the gather
        # bf16 copy for the loss word projection, scale_prj (d^-0.5) folded in
        'emb_prj': (dec_emb * (D ** -0.5)).astype(MXU_DTYPE),
        'pos': sinusoid_table(cfg['n_seq_max'], D),
        'ln_g': jnp.ones((1, D), jnp.float32),
        'ln_b': jnp.zeros((1, D), jnp.float32),
        'layers': [init_layer(k, cfg) for k in dec_layer_keys],
    }
    return {'encoder': enc, 'decoder': dec}


# ----------------------------------------------------------------------------
# Main
# ----------------------------------------------------------------------------

if __name__ == "__main__":
    cfg = dict(
        n_vocab=12, d_model=32, d_inner=64, n_head=2, d_k=16, d_v=16,
        n_encoder_layer=2, n_decoder_layer=2, n_seq_max=32,
        pad_id=0, kld_weight=1e-3,
    )

    key = jax.random.PRNGKey(0)
    pkey, dkey, ekey = jax.random.split(key, 3)
    params = init_params(pkey, cfg)

    B, S = 2, 16
    lengths = jnp.array([11, 16], jnp.int32)
    positions = jnp.arange(S, dtype=jnp.int32)[None, :]
    body_mask = positions < lengths[:, None]                 # bool [B, S]

    k1, k2 = jax.random.split(dkey)
    input_ids = jax.random.randint(k1, (B, S), 1, cfg['n_vocab'], dtype=jnp.int32)
    input_ids = jnp.where(body_mask, input_ids, 0)           # pad tail with pad_id
    output_ids = jax.random.randint(k2, (B, S), 1, cfg['n_vocab'], dtype=jnp.int32)

    batch = {'input_ids': input_ids, 'output_ids': output_ids,
             'body_mask': body_mask}
    eps = jax.random.normal(ekey, (B, cfg['d_model']), jnp.float32)

    # loss_row_tile=16 deliberately exercises the multi-row-block accumulation
    # path of the tiled loss kernel at these toy shapes (N = B*S = 32).
    fwd = jax.jit(functools.partial(seqvae_loss_forward, cfg=cfg,
                                    loss_row_tile=16))
    loss, aux = fwd(params, batch, eps)
    jax.block_until_ready(loss)
    assert bool(jnp.isfinite(loss))
    print("KERNEL_OK")
</pallas_src>

<mosaic_0001>
module attributes {stable_mosaic.version = 11 : i64} {
  func.func @_layer_kernel(%arg0: i32, %arg1: memref<1x16x32xbf16, #tpu.memory_space<vmem>>, %arg2: memref<1x1x16xf32, #tpu.memory_space<vmem>>, %arg3: memref<1x32xf32, #tpu.memory_space<vmem>>, %arg4: memref<1x32xf32, #tpu.memory_space<vmem>>, %arg5: memref<32x96xbf16, #tpu.memory_space<vmem>>, %arg6: memref<32x32xbf16, #tpu.memory_space<vmem>>, %arg7: memref<1x32xf32, #tpu.memory_space<vmem>>, %arg8: memref<1x32xf32, #tpu.memory_space<vmem>>, %arg9: memref<32x64xbf16, #tpu.memory_space<vmem>>, %arg10: memref<1x64xf32, #tpu.memory_space<vmem>>, %arg11: memref<64x32xbf16, #tpu.memory_space<vmem>>, %arg12: memref<1x32xf32, #tpu.memory_space<vmem>>, %arg13: memref<1x32xf32, #tpu.memory_space<vmem>>, %arg14: memref<1x32xf32, #tpu.memory_space<vmem>>, %arg15: memref<1x16x32xbf16, #tpu.memory_space<vmem>>) attributes {dimension_semantics = [#tpu.dimension_semantics<parallel>], iteration_bounds = array<i64: 2>, scalar_prefetch = 0 : i64, scratch_operands = 0 : i64, tpu.core_type = #tpu.core_type<tc>, window_params = [{transform_indices = @transform_0, window_bounds = array<i64: 1, 16, 32>}, {transform_indices = @transform_1, window_bounds = array<i64: 1, 1, 16>}, {pipeline_mode = #tpu.pipeline_mode<synchronous>, transform_indices = @transform_2, window_bounds = array<i64: 1, 32>}, {pipeline_mode = #tpu.pipeline_mode<synchronous>, transform_indices = @transform_3, window_bounds = array<i64: 1, 32>}, {pipeline_mode = #tpu.pipeline_mode<synchronous>, transform_indices = @transform_4, window_bounds = array<i64: 32, 96>}, {pipeline_mode = #tpu.pipeline_mode<synchronous>, transform_indices = @transform_5, window_bounds = array<i64: 32, 32>}, {pipeline_mode = #tpu.pipeline_mode<synchronous>, transform_indices = @transform_6, window_bounds = array<i64: 1, 32>}, {pipeline_mode = #tpu.pipeline_mode<synchronous>, transform_indices = @transform_7, window_bounds = array<i64: 1, 32>}, {pipeline_mode = #tpu.pipeline_mode<synchronous>, transform_indices = @transform_8, window_bounds = array<i64: 32, 64>}, {pipeline_mode = #tpu.pipeline_mode<synchronous>, transform_indices = @transform_9, window_bounds = array<i64: 1, 64>}, {pipeline_mode = #tpu.pipeline_mode<synchronous>, transform_indices = @transform_10, window_bounds = array<i64: 64, 32>}, {pipeline_mode = #tpu.pipeline_mode<synchronous>, transform_indices = @transform_11, window_bounds = array<i64: 1, 32>}, {pipeline_mode = #tpu.pipeline_mode<synchronous>, transform_indices = @transform_12, window_bounds = array<i64: 1, 32>}, {pipeline_mode = #tpu.pipeline_mode<synchronous>, transform_indices = @transform_13, window_bounds = array<i64: 1, 32>}, {transform_indices = @transform_14, window_bounds = array<i64: 1, 16, 32>}]} {
    %c0 = arith.constant 0 : index
    %c0_0 = arith.constant 0 : index
    %0 = vector.load %arg5[%c0, %c0_0] : memref<32x96xbf16, #tpu.memory_space<vmem>>, vector<32x96xbf16>
    %c0_1 = arith.constant 0 : index
    %c0_2 = arith.constant 0 : index
    %1 = vector.load %arg6[%c0_1, %c0_2] : memref<32x32xbf16, #tpu.memory_space<vmem>>, vector<32x32xbf16>
    %c0_3 = arith.constant 0 : index
    %c0_4 = arith.constant 0 : index
    %2 = vector.load %arg7[%c0_3, %c0_4] : memref<1x32xf32, #tpu.memory_space<vmem>>, vector<1x32xf32>
    %c0_5 = arith.constant 0 : index
    %c0_6 = arith.constant 0 : index
    %3 = vector.load %arg8[%c0_5, %c0_6] : memref<1x32xf32, #tpu.memory_space<vmem>>, vector<1x32xf32>
    %c0_7 = arith.constant 0 : index
    %c0_8 = arith.constant 0 : index
    %4 = vector.load %arg9[%c0_7, %c0_8] : memref<32x64xbf16, #tpu.memory_space<vmem>>, vector<32x64xbf16>
    %c0_9 = arith.constant 0 : index
    %c0_10 = arith.constant 0 : index
    %5 = vector.load %arg10[%c0_9, %c0_10] : memref<1x64xf32, #tpu.memory_space<vmem>>, vector<1x64xf32>
    %c0_11 = arith.constant 0 : index
    %c0_12 = arith.constant 0 : index
    %6 = vector.load %arg11[%c0_11, %c0_12] : memref<64x32xbf16, #tpu.memory_space<vmem>>, vector<64x32xbf16>
    %c0_13 = arith.constant 0 : index
    %c0_14 = arith.constant 0 : index
    %7 = vector.load %arg12[%c0_13, %c0_14] : memref<1x32xf32, #tpu.memory_space<vmem>>, vector<1x32xf32>
    %c0_15 = arith.constant 0 : index
    %c0_16 = arith.constant 0 : index
    %8 = vector.load %arg13[%c0_15, %c0_16] : memref<1x32xf32, #tpu.memory_space<vmem>>, vector<1x32xf32>
    %c0_17 = arith.constant 0 : index
    %c0_18 = arith.constant 0 : index
    %9 = vector.load %arg14[%c0_17, %c0_18] : memref<1x32xf32, #tpu.memory_space<vmem>>, vector<1x32xf32>
    %c0_19 = arith.constant 0 : index
    %c0_20 = arith.constant 0 : index
    %c0_21 = arith.constant 0 : index
    %10 = vector.load %arg1[%c0_19, %c0_20, %c0_21] : memref<1x16x32xbf16, #tpu.memory_space<vmem>>, vector<1x16x32xbf16>
    %11 = vector.shape_cast %10 : vector<1x16x32xbf16> to vector<16x32xbf16>
    %12 = arith.extf %11 : vector<16x32xbf16> to vector<16x32xf32>
    %c0_22 = arith.constant 0 : index
    %c0_23 = arith.constant 0 : index
    %13 = vector.load %arg3[%c0_22, %c0_23] : memref<1x32xf32, #tpu.memory_space<vmem>>, vector<1x32xf32>
    %c0_24 = arith.constant 0 : index
    %c0_25 = arith.constant 0 : index
    %14 = vector.load %arg4[%c0_24, %c0_25] : memref<1x32xf32, #tpu.memory_space<vmem>>, vector<1x32xf32>
    %cst = arith.constant dense<0.000000e+00> : vector<16xf32>
    %15 = vector.multi_reduction <add>, %12, %cst [1] : vector<16x32xf32> to vector<16xf32>
    %16 = vector.shape_cast %15 : vector<16xf32> to vector<16x1xf32>
    %cst_26 = arith.constant 3.200000e+01 : f32
    %17 = vector.broadcast %cst_26 : f32 to vector<16x1xf32>
    %18 = arith.divf %16, %17 : vector<16x1xf32>
    %19 = vector.broadcast %18 : vector<16x1xf32> to vector<16x32xf32>
    %20 = arith.subf %12, %19 : vector<16x32xf32>
    %21 = arith.mulf %20, %20 : vector<16x32xf32>
    %cst_27 = arith.constant dense<0.000000e+00> : vector<16xf32>
    %22 = vector.multi_reduction <add>, %21, %cst_27 [1] : vector<16x32xf32> to vector<16xf32>
    %23 = vector.shape_cast %22 : vector<16xf32> to vector<16x1xf32>
    %cst_28 = arith.constant 3.200000e+01 : f32
    %24 = vector.broadcast %cst_28 : f32 to vector<16x1xf32>
    %25 = arith.divf %23, %24 : vector<16x1xf32>
    %26 = vector.broadcast %18 : vector<16x1xf32> to vector<16x32xf32>
    %27 = arith.subf %12, %26 : vector<16x32xf32>
    %cst_29 = arith.constant 9.99999997E-7 : f32
    %28 = vector.broadcast %cst_29 : f32 to vector<16x1xf32>
    %29 = arith.addf %25, %28 : vector<16x1xf32>
    %30 = math.rsqrt %29 : vector<16x1xf32>
    %31 = vector.broadcast %30 : vector<16x1xf32> to vector<16x32xf32>
    %32 = arith.mulf %27, %31 : vector<16x32xf32>
    %33 = vector.broadcast %13 : vector<1x32xf32> to vector<16x32xf32>
    %34 = arith.mulf %32, %33 : vector<16x32xf32>
    %35 = vector.broadcast %14 : vector<1x32xf32> to vector<16x32xf32>
    %36 = arith.addf %34, %35 : vector<16x32xf32>
    %c0_30 = arith.constant 0 : index
    %c0_31 = arith.constant 0 : index
    %c0_32 = arith.constant 0 : index
    %37 = vector.load %arg2[%c0_30, %c0_31, %c0_32] : memref<1x1x16xf32, #tpu.memory_space<vmem>>, vector<1x1x16xf32>
    %38 = vector.shape_cast %37 : vector<1x1x16xf32> to vector<1x16xf32>
    %cst_33 = arith.constant 0.000000e+00 : f32
    %39 = vector.broadcast %cst_33 : f32 to vector<1x16xf32>
    %40 = arith.cmpf oeq, %38, %39 : vector<1x16xf32>
    %41 = arith.truncf %36 : vector<16x32xf32> to vector<16x32xbf16>
    %cst_34 = arith.constant dense<0.000000e+00> : vector<16x96xf32>
    %42 = tpu.matmul %41, %0, %cst_34 {dimension_numbers = #tpu.dot_dimension_numbers<[1], [0], [0], [1], [0, 0, 1, 1], [], []>} : vector<16x32xbf16>, vector<32x96xbf16>, vector<16x96xf32> -> vector<16x96xf32>
    %43 = vector.extract_strided_slice %42 {offsets = [0, 0], sizes = [16, 16], strides = [1, 1]} : vector<16x96xf32> to vector<16x16xf32>
    %44 = vector.extract_strided_slice %42 {offsets = [0, 32], sizes = [16, 16], strides = [1, 1]} : vector<16x96xf32> to vector<16x16xf32>
    %45 = vector.extract_strided_slice %42 {offsets = [0, 64], sizes = [16, 16], strides = [1, 1]} : vector<16x96xf32> to vector<16x16xf32>
    %46 = arith.truncf %43 : vector<16x16xf32> to vector<16x16xbf16>
    %47 = arith.truncf %44 : vector<16x16xf32> to vector<16x16xbf16>
    %cst_35 = arith.constant dense<0.000000e+00> : vector<16x16xf32>
    %48 = tpu.matmul %46, %47, %cst_35 {dimension_numbers = #tpu.dot_dimension_numbers<[1], [1], [0], [0], [0, 0, 1, 0], [], []>} : vector<16x16xbf16>, vector<16x16xbf16>, vector<16x16xf32> -> vector<16x16xf32>
    %cst_36 = arith.constant -1.000000e+09 : f32
    %49 = vector.shape_cast %40 : vector<1x16xi1> to vector<1x16xi1>
    %50 = vector.broadcast %49 : vector<1x16xi1> to vector<16x16xi1>
    %51 = vector.broadcast %cst_36 : f32 to vector<16x16xf32>
    %52 = arith.select %50, %51, %48 : vector<16x16xi1>, vector<16x16xf32>
    %cst_37 = arith.constant dense<0xFF800000> : vector<16xf32>
    %53 = vector.multi_reduction <maximumf>, %52, %cst_37 [1] : vector<16x16xf32> to vector<16xf32>
    %54 = vector.shape_cast %53 : vector<16xf32> to vector<16x1xf32>
    %55 = vector.broadcast %54 : vector<16x1xf32> to vector<16x16xf32>
    %56 = arith.subf %52, %55 : vector<16x16xf32>
    %57 = math.exp %56 : vector<16x16xf32>
    %cst_38 = arith.constant dense<0.000000e+00> : vector<16xf32>
    %58 = vector.multi_reduction <add>, %57, %cst_38 [1] : vector<16x16xf32> to vector<16xf32>
    %59 = vector.shape_cast %58 : vector<16xf32> to vector<16x1xf32>
    %60 = tpu.reciprocal %59 {approx = true} : vector<16x1xf32> -> vector<16x1xf32>
    %61 = vector.broadcast %60 : vector<16x1xf32> to vector<16x16xf32>
    %62 = arith.mulf %57, %61 : vector<16x16xf32>
    %63 = arith.truncf %62 : vector<16x16xf32> to vector<16x16xbf16>
    %64 = arith.truncf %45 : vector<16x16xf32> to vector<16x16xbf16>
    %cst_39 = arith.constant dense<0.000000e+00> : vector<16x16xf32>
    %65 = tpu.matmul %63, %64, %cst_39 {dimension_numbers = #tpu.dot_dimension_numbers<[1], [0], [0], [1], [0, 0, 1, 1], [], []>} : vector<16x16xbf16>, vector<16x16xbf16>, vector<16x16xf32> -> vector<16x16xf32>
    %66 = vector.extract_strided_slice %42 {offsets = [0, 16], sizes = [16, 16], strides = [1, 1]} : vector<16x96xf32> to vector<16x16xf32>
    %67 = vector.extract_strided_slice %42 {offsets = [0, 48], sizes = [16, 16], strides = [1, 1]} : vector<16x96xf32> to vector<16x16xf32>
    %68 = vector.extract_strided_slice %42 {offsets = [0, 80], sizes = [16, 16], strides = [1, 1]} : vector<16x96xf32> to vector<16x16xf32>
    %69 = arith.truncf %66 : vector<16x16xf32> to vector<16x16xbf16>
    %70 = arith.truncf %67 : vector<16x16xf32> to vector<16x16xbf16>
    %cst_40 = arith.constant dense<0.000000e+00> : vector<16x16xf32>
    %71 = tpu.matmul %69, %70, %cst_40 {dimension_numbers = #tpu.dot_dimension_numbers<[1], [1], [0], [0], [0, 0, 1, 0], [], []>} : vector<16x16xbf16>, vector<16x16xbf16>, vector<16x16xf32> -> vector<16x16xf32>
    %cst_41 = arith.constant -1.000000e+09 : f32
    %72 = vector.shape_cast %40 : vector<1x16xi1> to vector<1x16xi1>
    %73 = vector.broadcast %72 : vector<1x16xi1> to vector<16x16xi1>
    %74 = vector.broadcast %cst_41 : f32 to vector<16x16xf32>
    %75 = arith.select %73, %74, %71 : vector<16x16xi1>, vector<16x16xf32>
    %cst_42 = arith.constant dense<0xFF800000> : vector<16xf32>
    %76 = vector.multi_reduction <maximumf>, %75, %cst_42 [1] : vector<16x16xf32> to vector<16xf32>
    %77 = vector.shape_cast %76 : vector<16xf32> to vector<16x1xf32>
    %78 = vector.broadcast %77 : vector<16x1xf32> to vector<16x16xf32>
    %79 = arith.subf %75, %78 : vector<16x16xf32>
    %80 = math.exp %79 : vector<16x16xf32>
    %cst_43 = arith.constant dense<0.000000e+00> : vector<16xf32>
    %81 = vector.multi_reduction <add>, %80, %cst_43 [1] : vector<16x16xf32> to vector<16xf32>
    %82 = vector.shape_cast %81 : vector<16xf32> to vector<16x1xf32>
    %83 = tpu.reciprocal %82 {approx = true} : vector<16x1xf32> -> vector<16x1xf32>
    %84 = vector.broadcast %83 : vector<16x1xf32> to vector<16x16xf32>
    %85 = arith.mulf %80, %84 : vector<16x16xf32>
    %86 = arith.truncf %85 : vector<16x16xf32> to vector<16x16xbf16>
    %87 = arith.truncf %68 : vector<16x16xf32> to vector<16x16xbf16>
    %cst_44 = arith.constant dense<0.000000e+00> : vector<16x16xf32>
    %88 = tpu.matmul %86, %87, %cst_44 {dimension_numbers = #tpu.dot_dimension_numbers<[1], [0], [0], [1], [0, 0, 1, 1], [], []>} : vector<16x16xbf16>, vector<16x16xbf16>, vector<16x16xf32> -> vector<16x16xf32>
    %89 = tpu.concatenate %65, %88 in 1 : vector<16x16xf32>, vector<16x16xf32> -> vector<16x32xf32>
    %90 = arith.truncf %89 : vector<16x32xf32> to vector<16x32xbf16>
    %cst_45 = arith.constant dense<0.000000e+00> : vector<16x32xf32>
    %91 = tpu.matmul %90, %1, %cst_45 {dimension_numbers = #tpu.dot_dimension_numbers<[1], [0], [0], [1], [0, 0, 1, 1], [], []>} : vector<16x32xbf16>, vector<32x32xbf16>, vector<16x32xf32> -> vector<16x32xf32>
    %92 = arith.addf %36, %91 : vector<16x32xf32>
    %cst_46 = arith.constant dense<0.000000e+00> : vector<16xf32>
    %93 = vector.multi_reduction <add>, %92, %cst_46 [1] : vector<16x32xf32> to vector<16xf32>
    %94 = vector.shape_cast %93 : vector<16xf32> to vector<16x1xf32>
    %cst_47 = arith.constant 3.200000e+01 : f32
    %95 = vector.broadcast %cst_47 : f32 to vector<16x1xf32>
    %96 = arith.divf %94, %95 : vector<16x1xf32>
    %97 = vector.broadcast %96 : vector<16x1xf32> to vector<16x32xf32>
    %98 = arith.subf %92, %97 : vector<16x32xf32>
    %99 = arith.mulf %98, %98 : vector<16x32xf32>
    %cst_48 = arith.constant dense<0.000000e+00> : vector<16xf32>
    %100 = vector.multi_reduction <add>, %99, %cst_48 [1] : vector<16x32xf32> to vector<16xf32>
    %101 = vector.shape_cast %100 : vector<16xf32> to vector<16x1xf32>
    %cst_49 = arith.constant 3.200000e+01 : f32
    %102 = vector.broadcast %cst_49 : f32 to vector<16x1xf32>
    %103 = arith.divf %101, %102 : vector<16x1xf32>
    %104 = vector.broadcast %96 : vector<16x1xf32> to vector<16x32xf32>
    %105 = arith.subf %92, %104 : vector<16x32xf32>
    %cst_50 = arith.constant 9.99999997E-7 : f32
    %106 = vector.broadcast %cst_50 : f32 to vector<16x1xf32>
    %107 = arith.addf %103, %106 : vector<16x1xf32>
    %108 = math.rsqrt %107 : vector<16x1xf32>
    %109 = vector.broadcast %108 : vector<16x1xf32> to vector<16x32xf32>
    %110 = arith.mulf %105, %109 : vector<16x32xf32>
    %111 = vector.broadcast %2 : vector<1x32xf32> to vector<16x32xf32>
    %112 = arith.mulf %110, %111 : vector<16x32xf32>
    %113 = vector.broadcast %3 : vector<1x32xf32> to vector<16x32xf32>
    %114 = arith.addf %112, %113 : vector<16x32xf32>
    %115 = arith.truncf %114 : vector<16x32xf32> to vector<16x32xbf16>
    %cst_51 = arith.constant dense<0.000000e+00> : vector<16x64xf32>
    %116 = tpu.matmul %115, %4, %cst_51 {dimension_numbers = #tpu.dot_dimension_numbers<[1], [0], [0], [1], [0, 0, 1, 1], [], []>} : vector<16x32xbf16>, vector<32x64xbf16>, vector<16x64xf32> -> vector<16x64xf32>
    %117 = vector.broadcast %5 : vector<1x64xf32> to vector<16x64xf32>
    %118 = arith.addf %116, %117 : vector<16x64xf32>
    %cst_52 = arith.constant 0.000000e+00 : f32
    %119 = vector.broadcast %cst_52 : f32 to vector<16x64xf32>
    %120 = arith.maximumf %118, %119 : vector<16x64xf32>
    %121 = arith.truncf %120 : vector<16x64xf32> to vector<16x64xbf16>
    %cst_53 = arith.constant dense<0.000000e+00> : vector<16x32xf32>
    %122 = tpu.matmul %121, %6, %cst_53 {dimension_numbers = #tpu.dot_dimension_numbers<[1], [0], [0], [1], [0, 0, 1, 1], [], []>} : vector<16x64xbf16>, vector<64x32xbf16>, vector<16x32xf32> -> vector<16x32xf32>
    %123 = vector.broadcast %7 : vector<1x32xf32> to vector<16x32xf32>
    %124 = arith.addf %122, %123 : vector<16x32xf32>
    %125 = arith.addf %114, %124 : vector<16x32xf32>
    %cst_54 = arith.constant dense<0.000000e+00> : vector<16xf32>
    %126 = vector.multi_reduction <add>, %125, %cst_54 [1] : vector<16x32xf32> to vector<16xf32>
    %127 = vector.shape_cast %126 : vector<16xf32> to vector<16x1xf32>
    %cst_55 = arith.constant 3.200000e+01 : f32
    %128 = vector.broadcast %cst_55 : f32 to vector<16x1xf32>
    %129 = arith.divf %127, %128 : vector<16x1xf32>
    %130 = vector.broadcast %129 : vector<16x1xf32> to vector<16x32xf32>
    %131 = arith.subf %125, %130 : vector<16x32xf32>
    %132 = arith.mulf %131, %131 : vector<16x32xf32>
    %cst_56 = arith.constant dense<0.000000e+00> : vector<16xf32>
    %133 = vector.multi_reduction <add>, %132, %cst_56 [1] : vector<16x32xf32> to vector<16xf32>
    %134 = vector.shape_cast %133 : vector<16xf32> to vector<16x1xf32>
    %cst_57 = arith.constant 3.200000e+01 : f32
    %135 = vector.broadcast %cst_57 : f32 to vector<16x1xf32>
    %136 = arith.divf %134, %135 : vector<16x1xf32>
    %137 = vector.broadcast %129 : vector<16x1xf32> to vector<16x32xf32>
    %138 = arith.subf %125, %137 : vector<16x32xf32>
    %cst_58 = arith.constant 9.99999997E-7 : f32
    %139 = vector.broadcast %cst_58 : f32 to vector<16x1xf32>
    %140 = arith.addf %136, %139 : vector<16x1xf32>
    %141 = math.rsqrt %140 : vector<16x1xf32>
    %142 = vector.broadcast %141 : vector<16x1xf32> to vector<16x32xf32>
    %143 = arith.mulf %138, %142 : vector<16x32xf32>
    %144 = vector.broadcast %8 : vector<1x32xf32> to vector<16x32xf32>
    %145 = arith.mulf %143, %144 : vector<16x32xf32>
    %146 = vector.broadcast %9 : vector<1x32xf32> to vector<16x32xf32>
    %147 = arith.addf %145, %146 : vector<16x32xf32>
    %148 = arith.truncf %147 : vector<16x32xf32> to vector<16x32xbf16>
    %c0_59 = arith.constant 0 : index
    %c0_60 = arith.constant 0 : index
    %c0_61 = arith.constant 0 : index
    %149 = vector.load %arg15[%c0_59, %c0_60, %c0_61] : memref<1x16x32xbf16, #tpu.memory_space<vmem>>, vector<1x16x32xbf16>
    %150 = vector.shape_cast %149 : vector<1x16x32xbf16> to vector<16x32xbf16>
    %151 = vector.shape_cast %148 : vector<16x32xbf16> to vector<1x16x32xbf16>
    tpu.vector_store %arg15[%c0_59, %c0_60, %c0_61], %151 {strides = array<i32>} : memref<1x16x32xbf16, #tpu.memory_space<vmem>>, vector<1x16x32xbf16>,
    return
  }
  func.func @transform_0(%arg0: i32) -> (i32, i32, i32) {
    %c0_i32 = arith.constant 0 : i32
    %c0_i32_0 = arith.constant 0 : i32
    %c0_i32_1 = arith.constant 0 : i32
    return %arg0, %c0_i32, %c0_i32_0 : i32, i32, i32
  }
  func.func @transform_1(%arg0: i32) -> (i32, i32, i32) {
    %c0_i32 = arith.constant 0 : i32
    %c0_i32_0 = arith.constant 0 : i32
    %c0_i32_1 = arith.constant 0 : i32
    return %arg0, %c0_i32, %c0_i32_0 : i32, i32, i32
  }
  func.func @transform_2(%arg0: i32) -> (i32, i32) {
    %c0_i32 = arith.constant 0 : i32
    %c0_i32_0 = arith.constant 0 : i32
    %c0_i32_1 = arith.constant 0 : i32
    return %c0_i32, %c0_i32_0 : i32, i32
  }
  func.func @transform_3(%arg0: i32) -> (i32, i32) {
    %c0_i32 = arith.constant 0 : i32
    %c0_i32_0 = arith.constant 0 : i32
    %c0_i32_1 = arith.constant 0 : i32
    return %c0_i32, %c0_i32_0 : i32, i32
  }
  func.func @transform_4(%arg0: i32) -> (i32, i32) {
    %c0_i32 = arith.constant 0 : i32
    %c0_i32_0 = arith.constant 0 : i32
    %c0_i32_1 = arith.constant 0 : i32
    return %c0_i32, %c0_i32_0 : i32, i32
  }
  func.func @transform_5(%arg0: i32) -> (i32, i32) {
    %c0_i32 = arith.constant 0 : i32
    %c0_i32_0 = arith.constant 0 : i32
    %c0_i32_1 = arith.constant 0 : i32
    return %c0_i32, %c0_i32_0 : i32, i32
  }
  func.func @transform_6(%arg0: i32) -> (i32, i32) {
    %c0_i32 = arith.constant 0 : i32
    %c0_i32_0 = arith.constant 0 : i32
    %c0_i32_1 = arith.constant 0 : i32
    return %c0_i32, %c0_i32_0 : i32, i32
  }
  func.func @transform_7(%arg0: i32) -> (i32, i32) {
    %c0_i32 = arith.constant 0 : i32
    %c0_i32_0 = arith.constant 0 : i32
    %c0_i32_1 = arith.constant 0 : i32
    return %c0_i32, %c0_i32_0 : i32, i32
  }
  func.func @transform_8(%arg0: i32) -> (i32, i32) {
    %c0_i32 = arith.constant 0 : i32
    %c0_i32_0 = arith.constant 0 : i32
    %c0_i32_1 = arith.constant 0 : i32
    return %c0_i32, %c0_i32_0 : i32, i32
  }
  func.func @transform_9(%arg0: i32) -> (i32, i32) {
    %c0_i32 = arith.constant 0 : i32
    %c0_i32_0 = arith.constant 0 : i32
    %c0_i32_1 = arith.constant 0 : i32
    return %c0_i32, %c0_i32_0 : i32, i32
  }
  func.func @transform_10(%arg0: i32) -> (i32, i32) {
    %c0_i32 = arith.constant 0 : i32
    %c0_i32_0 = arith.constant 0 : i32
    %c0_i32_1 = arith.constant 0 : i32
    return %c0_i32, %c0_i32_0 : i32, i32
  }
  func.func @transform_11(%arg0: i32) -> (i32, i32) {
    %c0_i32 = arith.constant 0 : i32
    %c0_i32_0 = arith.constant 0 : i32
    %c0_i32_1 = arith.constant 0 : i32
    return %c0_i32, %c0_i32_0 : i32, i32
  }
  func.func @transform_12(%arg0: i32) -> (i32, i32) {
    %c0_i32 = arith.constant 0 : i32
    %c0_i32_0 = arith.constant 0 : i32
    %c0_i32_1 = arith.constant 0 : i32
    return %c0_i32, %c0_i32_0 : i32, i32
  }
  func.func @transform_13(%arg0: i32) -> (i32, i32) {
    %c0_i32 = arith.constant 0 : i32
    %c0_i32_0 = arith.constant 0 : i32
    %c0_i32_1 = arith.constant 0 : i32
    return %c0_i32, %c0_i32_0 : i32, i32
  }
  func.func @transform_14(%arg0: i32) -> (i32, i32, i32) {
    %c0_i32 = arith.constant 0 : i32
    %c0_i32_0 = arith.constant 0 : i32
    %c0_i32_1 = arith.constant 0 : i32
    return %arg0, %c0_i32, %c0_i32_0 : i32, i32, i32
  }
}

module attributes {stable_mosaic.version = 11 : i64} {
  func.func @_pool_pair_kernel(%arg0: i32, %arg1: memref<1x16x32xbf16, #tpu.memory_space<vmem>>, %arg2: memref<1x16x1xf32, #tpu.memory_space<vmem>>, %arg3: memref<32x96xbf16, #tpu.memory_space<vmem>>, %arg4: memref<32x32xbf16, #tpu.memory_space<vmem>>, %arg5: memref<1x32xf32, #tpu.memory_space<vmem>>, %arg6: memref<1x32xf32, #tpu.memory_space<vmem>>, %arg7: memref<32x64xbf16, #tpu.memory_space<vmem>>, %arg8: memref<1x64xf32, #tpu.memory_space<vmem>>, %arg9: memref<64x32xbf16, #tpu.memory_space<vmem>>, %arg10: memref<1x32xf32, #tpu.memory_space<vmem>>, %arg11: memref<1x32xf32, #tpu.memory_space<vmem>>, %arg12: memref<1x32xf32, #tpu.memory_space<vmem>>, %arg13: memref<32x96xbf16, #tpu.memory_space<vmem>>, %arg14: memref<32x32xbf16, #tpu.memory_space<vmem>>, %arg15: memref<1x32xf32, #tpu.memory_space<vmem>>, %arg16: memref<1x32xf32, #tpu.memory_space<vmem>>, %arg17: memref<32x64xbf16, #tpu.memory_space<vmem>>, %arg18: memref<1x64xf32, #tpu.memory_space<vmem>>, %arg19: memref<64x32xbf16, #tpu.memory_space<vmem>>, %arg20: memref<1x32xf32, #tpu.memory_space<vmem>>, %arg21: memref<1x32xf32, #tpu.memory_space<vmem>>, %arg22: memref<1x32xf32, #tpu.memory_space<vmem>>, %arg23: memref<1x1x32xf32, #tpu.memory_space<vmem>>, %arg24: memref<1x1x32xf32, #tpu.memory_space<vmem>>) attributes {dimension_semantics = [#tpu.dimension_semantics<parallel>], iteration_bounds = array<i64: 2>, scalar_prefetch = 0 : i64, scratch_operands = 0 : i64, tpu.core_type = #tpu.core_type<tc>, window_params = [{transform_indices = @transform_0, window_bounds = array<i64: 1, 16, 32>}, {transform_indices = @transform_1, window_bounds = array<i64: 1, 16, 1>}, {pipeline_mode = #tpu.pipeline_mode<synchronous>, transform_indices = @transform_2, window_bounds = array<i64: 32, 96>}, {pipeline_mode = #tpu.pipeline_mode<synchronous>, transform_indices = @transform_3, window_bounds = array<i64: 32, 32>}, {pipeline_mode = #tpu.pipeline_mode<synchronous>, transform_indices = @transform_4, window_bounds = array<i64: 1, 32>}, {pipeline_mode = #tpu.pipeline_mode<synchronous>, transform_indices = @transform_5, window_bounds = array<i64: 1, 32>}, {pipeline_mode = #tpu.pipeline_mode<synchronous>, transform_indices = @transform_6, window_bounds = array<i64: 32, 64>}, {pipeline_mode = #tpu.pipeline_mode<synchronous>, transform_indices = @transform_7, window_bounds = array<i64: 1, 64>}, {pipeline_mode = #tpu.pipeline_mode<synchronous>, transform_indices = @transform_8, window_bounds = array<i64: 64, 32>}, {pipeline_mode = #tpu.pipeline_mode<synchronous>, transform_indices = @transform_9, window_bounds = array<i64: 1, 32>}, {pipeline_mode = #tpu.pipeline_mode<synchronous>, transform_indices = @transform_10, window_bounds = array<i64: 1, 32>}, {pipeline_mode = #tpu.pipeline_mode<synchronous>, transform_indices = @transform_11, window_bounds = array<i64: 1, 32>}, {pipeline_mode = #tpu.pipeline_mode<synchronous>, transform_indices = @transform_12, window_bounds = array<i64: 32, 96>}, {pipeline_mode = #tpu.pipeline_mode<synchronous>, transform_indices = @transform_13, window_bounds = array<i64: 32, 32>}, {pipeline_mode = #tpu.pipeline_mode<synchronous>, transform_indices = @transform_14, window_bounds = array<i64: 1, 32>}, {pipeline_mode = #tpu.pipeline_mode<synchronous>, transform_indices = @transform_15, window_bounds = array<i64: 1, 32>}, {pipeline_mode = #tpu.pipeline_mode<synchronous>, transform_indices = @transform_16, window_bounds = array<i64: 32, 64>}, {pipeline_mode = #tpu.pipeline_mode<synchronous>, transform_indices = @transform_17, window_bounds = array<i64: 1, 64>}, {pipeline_mode = #tpu.pipeline_mode<synchronous>, transform_indices = @transform_18, window_bounds = array<i64: 64, 32>}, {pipeline_mode = #tpu.pipeline_mode<synchronous>, transform_indices = @transform_19, window_bounds = array<i64: 1, 32>}, {pipeline_mode = #tpu.pipeline_mode<synchronous>, transform_indices = @transform_20, window_bounds = array<i64: 1, 32>}, {pipeline_mode = #tpu.pipeline_mode<synchronous>, transform_indices = @transform_21, window_bounds = array<i64: 1, 32>}, {transform_indices = @transform_22, window_bounds = array<i64: 1, 1, 32>}, {transform_indices = @transform_23, window_bounds = array<i64: 1, 1, 32>}]} {
    %c0 = arith.constant 0 : index
    %c0_0 = arith.constant 0 : index
    %0 = vector.load %arg3[%c0, %c0_0] : memref<32x96xbf16, #tpu.memory_space<vmem>>, vector<32x96xbf16>
    %c0_1 = arith.constant 0 : index
    %c0_2 = arith.constant 0 : index
    %1 = vector.load %arg4[%c0_1, %c0_2] : memref<32x32xbf16, #tpu.memory_space<vmem>>, vector<32x32xbf16>
    %c0_3 = arith.constant 0 : index
    %c0_4 = arith.constant 0 : index
    %2 = vector.load %arg5[%c0_3, %c0_4] : memref<1x32xf32, #tpu.memory_space<vmem>>, vector<1x32xf32>
    %c0_5 = arith.constant 0 : index
    %c0_6 = arith.constant 0 : index
    %3 = vector.load %arg6[%c0_5, %c0_6] : memref<1x32xf32, #tpu.memory_space<vmem>>, vector<1x32xf32>
    %c0_7 = arith.constant 0 : index
    %c0_8 = arith.constant 0 : index
    %4 = vector.load %arg7[%c0_7, %c0_8] : memref<32x64xbf16, #tpu.memory_space<vmem>>, vector<32x64xbf16>
    %c0_9 = arith.constant 0 : index
    %c0_10 = arith.constant 0 : index
    %5 = vector.load %arg8[%c0_9, %c0_10] : memref<1x64xf32, #tpu.memory_space<vmem>>, vector<1x64xf32>
    %c0_11 = arith.constant 0 : index
    %c0_12 = arith.constant 0 : index
    %6 = vector.load %arg9[%c0_11, %c0_12] : memref<64x32xbf16, #tpu.memory_space<vmem>>, vector<64x32xbf16>
    %c0_13 = arith.constant 0 : index
    %c0_14 = arith.constant 0 : index
    %7 = vector.load %arg10[%c0_13, %c0_14] : memref<1x32xf32, #tpu.memory_space<vmem>>, vector<1x32xf32>
    %c0_15 = arith.constant 0 : index
    %c0_16 = arith.constant 0 : index
    %8 = vector.load %arg11[%c0_15, %c0_16] : memref<1x32xf32, #tpu.memory_space<vmem>>, vector<1x32xf32>
    %c0_17 = arith.constant 0 : index
    %c0_18 = arith.constant 0 : index
    %9 = vector.load %arg12[%c0_17, %c0_18] : memref<1x32xf32, #tpu.memory_space<vmem>>, vector<1x32xf32>
    %c0_19 = arith.constant 0 : index
    %c0_20 = arith.constant 0 : index
    %10 = vector.load %arg13[%c0_19, %c0_20] : memref<32x96xbf16, #tpu.memory_space<vmem>>, vector<32x96xbf16>
    %c0_21 = arith.constant 0 : index
    %c0_22 = arith.constant 0 : index
    %11 = vector.load %arg14[%c0_21, %c0_22] : memref<32x32xbf16, #tpu.memory_space<vmem>>, vector<32x32xbf16>
    %c0_23 = arith.constant 0 : index
    %c0_24 = arith.constant 0 : index
    %12 = vector.load %arg15[%c0_23, %c0_24] : memref<1x32xf32, #tpu.memory_space<vmem>>, vector<1x32xf32>
    %c0_25 = arith.constant 0 : index
    %c0_26 = arith.constant 0 : index
    %13 = vector.load %arg16[%c0_25, %c0_26] : memref<1x32xf32, #tpu.memory_space<vmem>>, vector<1x32xf32>
    %c0_27 = arith.constant 0 : index
    %c0_28 = arith.constant 0 : index
    %14 = vector.load %arg17[%c0_27, %c0_28] : memref<32x64xbf16, #tpu.memory_space<vmem>>, vector<32x64xbf16>
    %c0_29 = arith.constant 0 : index
    %c0_30 = arith.constant 0 : index
    %15 = vector.load %arg18[%c0_29, %c0_30] : memref<1x64xf32, #tpu.memory_space<vmem>>, vector<1x64xf32>
    %c0_31 = arith.constant 0 : index
    %c0_32 = arith.constant 0 : index
    %16 = vector.load %arg19[%c0_31, %c0_32] : memref<64x32xbf16, #tpu.memory_space<vmem>>, vector<64x32xbf16>
    %c0_33 = arith.constant 0 : index
    %c0_34 = arith.constant 0 : index
    %17 = vector.load %arg20[%c0_33, %c0_34] : memref<1x32xf32, #tpu.memory_space<vmem>>, vector<1x32xf32>
    %c0_35 = arith.constant 0 : index
    %c0_36 = arith.constant 0 : index
    %18 = vector.load %arg21[%c0_35, %c0_36] : memref<1x32xf32, #tpu.memory_space<vmem>>, vector<1x32xf32>
    %c0_37 = arith.constant 0 : index
    %c0_38 = arith.constant 0 : index
    %19 = vector.load %arg22[%c0_37, %c0_38] : memref<1x32xf32, #tpu.memory_space<vmem>>, vector<1x32xf32>
    %c0_39 = arith.constant 0 : index
    %c0_40 = arith.constant 0 : index
    %c0_41 = arith.constant 0 : index
    %20 = vector.load %arg1[%c0_39, %c0_40, %c0_41] : memref<1x16x32xbf16, #tpu.memory_space<vmem>>, vector<1x16x32xbf16>
    %21 = vector.shape_cast %20 : vector<1x16x32xbf16> to vector<16x32xbf16>
    %22 = arith.extf %21 : vector<16x32xbf16> to vector<16x32xf32>
    %c0_42 = arith.constant 0 : index
    %c0_43 = arith.constant 0 : index
    %c0_44 = arith.constant 0 : index
    %23 = vector.load %arg2[%c0_42, %c0_43, %c0_44] : memref<1x16x1xf32, #tpu.memory_space<vmem>>, vector<1x16x1xf32>
    %24 = vector.shape_cast %23 : vector<1x16x1xf32> to vector<16x1xf32>
    %cst = arith.constant dense<0.000000e+00> : vector<1xf32>
    %25 = vector.multi_reduction <add>, %24, %cst [0] : vector<16x1xf32> to vector<1xf32>
    %26 = vector.shape_cast %25 : vector<1xf32> to vector<1x1xf32>
    %cst_45 = arith.constant 1.000000e+00 : f32
    %27 = vector.broadcast %cst_45 : f32 to vector<1x1xf32>
    %28 = arith.maximumf %26, %27 : vector<1x1xf32>
    %29 = tpu.reciprocal %28 {approx = true} : vector<1x1xf32> -> vector<1x1xf32>
    %30 = arith.truncf %22 : vector<16x32xf32> to vector<16x32xbf16>
    %cst_46 = arith.constant dense<0.000000e+00> : vector<16x96xf32>
    %31 = tpu.matmul %30, %0, %cst_46 {dimension_numbers = #tpu.dot_dimension_numbers<[1], [0], [0], [1], [0, 0, 1, 1], [], []>} : vector<16x32xbf16>, vector<32x96xbf16>, vector<16x96xf32> -> vector<16x96xf32>
    %32 = vector.extract_strided_slice %31 {offsets = [0, 0], sizes = [16, 16], strides = [1, 1]} : vector<16x96xf32> to vector<16x16xf32>
    %33 = vector.extract_strided_slice %31 {offsets = [0, 32], sizes = [16, 16], strides = [1, 1]} : vector<16x96xf32> to vector<16x16xf32>
    %34 = vector.extract_strided_slice %31 {offsets = [0, 64], sizes = [16, 16], strides = [1, 1]} : vector<16x96xf32> to vector<16x16xf32>
    %35 = arith.truncf %32 : vector<16x16xf32> to vector<16x16xbf16>
    %36 = arith.truncf %33 : vector<16x16xf32> to vector<16x16xbf16>
    %cst_47 = arith.constant dense<0.000000e+00> : vector<16x16xf32>
    %37 = tpu.matmul %35, %36, %cst_47 {dimension_numbers = #tpu.dot_dimension_numbers<[1], [1], [0], [0], [0, 0, 1, 0], [], []>} : vector<16x16xbf16>, vector<16x16xbf16>, vector<16x16xf32> -> vector<16x16xf32>
    %cst_48 = arith.constant dense<0xFF800000> : vector<16xf32>
    %38 = vector.multi_reduction <maximumf>, %37, %cst_48 [1] : vector<16x16xf32> to vector<16xf32>
    %39 = vector.shape_cast %38 : vector<16xf32> to vector<16x1xf32>
    %40 = vector.broadcast %39 : vector<16x1xf32> to vector<16x16xf32>
    %41 = arith.subf %37, %40 : vector<16x16xf32>
    %42 = math.exp %41 : vector<16x16xf32>
    %cst_49 = arith.constant dense<0.000000e+00> : vector<16xf32>
    %43 = vector.multi_reduction <add>, %42, %cst_49 [1] : vector<16x16xf32> to vector<16xf32>
    %44 = vector.shape_cast %43 : vector<16xf32> to vector<16x1xf32>
    %45 = tpu.reciprocal %44 {approx = true} : vector<16x1xf32> -> vector<16x1xf32>
    %46 = vector.broadcast %45 : vector<16x1xf32> to vector<16x16xf32>
    %47 = arith.mulf %42, %46 : vector<16x16xf32>
    %48 = arith.truncf %47 : vector<16x16xf32> to vector<16x16xbf16>
    %49 = arith.truncf %34 : vector<16x16xf32> to vector<16x16xbf16>
    %cst_50 = arith.constant dense<0.000000e+00> : vector<16x16xf32>
    %50 = tpu.matmul %48, %49, %cst_50 {dimension_numbers = #tpu.dot_dimension_numbers<[1], [0], [0], [1], [0, 0, 1, 1], [], []>} : vector<16x16xbf16>, vector<16x16xbf16>, vector<16x16xf32> -> vector<16x16xf32>
    %51 = vector.extract_strided_slice %31 {offsets = [0, 16], sizes = [16, 16], strides = [1, 1]} : vector<16x96xf32> to vector<16x16xf32>
    %52 = vector.extract_strided_slice %31 {offsets = [0, 48], sizes = [16, 16], strides = [1, 1]} : vector<16x96xf32> to vector<16x16xf32>
    %53 = vector.extract_strided_slice %31 {offsets = [0, 80], sizes = [16, 16], strides = [1, 1]} : vector<16x96xf32> to vector<16x16xf32>
    %54 = arith.truncf %51 : vector<16x16xf32> to vector<16x16xbf16>
    %55 = arith.truncf %52 : vector<16x16xf32> to vector<16x16xbf16>
    %cst_51 = arith.constant dense<0.000000e+00> : vector<16x16xf32>
    %56 = tpu.matmul %54, %55, %cst_51 {dimension_numbers = #tpu.dot_dimension_numbers<[1], [1], [0], [0], [0, 0, 1, 0], [], []>} : vector<16x16xbf16>, vector<16x16xbf16>, vector<16x16xf32> -> vector<16x16xf32>
    %cst_52 = arith.constant dense<0xFF800000> : vector<16xf32>
    %57 = vector.multi_reduction <maximumf>, %56, %cst_52 [1] : vector<16x16xf32> to vector<16xf32>
    %58 = vector.shape_cast %57 : vector<16xf32> to vector<16x1xf32>
    %59 = vector.broadcast %58 : vector<16x1xf32> to vector<16x16xf32>
    %60 = arith.subf %56, %59 : vector<16x16xf32>
    %61 = math.exp %60 : vector<16x16xf32>
    %cst_53 = arith.constant dense<0.000000e+00> : vector<16xf32>
    %62 = vector.multi_reduction <add>, %61, %cst_53 [1] : vector<16x16xf32> to vector<16xf32>
    %63 = vector.shape_cast %62 : vector<16xf32> to vector<16x1xf32>
    %64 = tpu.reciprocal %63 {approx = true} : vector<16x1xf32> -> vector<16x1xf32>
    %65 = vector.broadcast %64 : vector<16x1xf32> to vector<16x16xf32>
    %66 = arith.mulf %61, %65 : vector<16x16xf32>
    %67 = arith.truncf %66 : vector<16x16xf32> to vector<16x16xbf16>
    %68 = arith.truncf %53 : vector<16x16xf32> to vector<16x16xbf16>
    %cst_54 = arith.constant dense<0.000000e+00> : vector<16x16xf32>
    %69 = tpu.matmul %67, %68, %cst_54 {dimension_numbers = #tpu.dot_dimension_numbers<[1], [0], [0], [1], [0, 0, 1, 1], [], []>} : vector<16x16xbf16>, vector<16x16xbf16>, vector<16x16xf32> -> vector<16x16xf32>
    %70 = tpu.concatenate %50, %69 in 1 : vector<16x16xf32>, vector<16x16xf32> -> vector<16x32xf32>
    %71 = arith.truncf %70 : vector<16x32xf32> to vector<16x32xbf16>
    %cst_55 = arith.constant dense<0.000000e+00> : vector<16x32xf32>
    %72 = tpu.matmul %71, %1, %cst_55 {dimension_numbers = #tpu.dot_dimension_numbers<[1], [0], [0], [1], [0, 0, 1, 1], [], []>} : vector<16x32xbf16>, vector<32x32xbf16>, vector<16x32xf32> -> vector<16x32xf32>
    %73 = arith.addf %22, %72 : vector<16x32xf32>
    %cst_56 = arith.constant dense<0.000000e+00> : vector<16xf32>
    %74 = vector.multi_reduction <add>, %73, %cst_56 [1] : vector<16x32xf32> to vector<16xf32>
    %75 = vector.shape_cast %74 : vector<16xf32> to vector<16x1xf32>
    %cst_57 = arith.constant 3.200000e+01 : f32
    %76 = vector.broadcast %cst_57 : f32 to vector<16x1xf32>
    %77 = arith.divf %75, %76 : vector<16x1xf32>
    %78 = vector.broadcast %77 : vector<16x1xf32> to vector<16x32xf32>
    %79 = arith.subf %73, %78 : vector<16x32xf32>
    %80 = arith.mulf %79, %79 : vector<16x32xf32>
    %cst_58 = arith.constant dense<0.000000e+00> : vector<16xf32>
    %81 = vector.multi_reduction <add>, %80, %cst_58 [1] : vector<16x32xf32> to vector<16xf32>
    %82 = vector.shape_cast %81 : vector<16xf32> to vector<16x1xf32>
    %cst_59 = arith.constant 3.200000e+01 : f32
    %83 = vector.broadcast %cst_59 : f32 to vector<16x1xf32>
    %84 = arith.divf %82, %83 : vector<16x1xf32>
    %85 = vector.broadcast %77 : vector<16x1xf32> to vector<16x32xf32>
    %86 = arith.subf %73, %85 : vector<16x32xf32>
    %cst_60 = arith.constant 9.99999997E-7 : f32
    %87 = vector.broadcast %cst_60 : f32 to vector<16x1xf32>
    %88 = arith.addf %84, %87 : vector<16x1xf32>
    %89 = math.rsqrt %88 : vector<16x1xf32>
    %90 = vector.broadcast %89 : vector<16x1xf32> to vector<16x32xf32>
    %91 = arith.mulf %86, %90 : vector<16x32xf32>
    %92 = vector.broadcast %2 : vector<1x32xf32> to vector<16x32xf32>
    %93 = arith.mulf %91, %92 : vector<16x32xf32>
    %94 = vector.broadcast %3 : vector<1x32xf32> to vector<16x32xf32>
    %95 = arith.addf %93, %94 : vector<16x32xf32>
    %96 = arith.truncf %95 : vector<16x32xf32> to vector<16x32xbf16>
    %cst_61 = arith.constant dense<0.000000e+00> : vector<16x64xf32>
    %97 = tpu.matmul %96, %4, %cst_61 {dimension_numbers = #tpu.dot_dimension_numbers<[1], [0], [0], [1], [0, 0, 1, 1], [], []>} : vector<16x32xbf16>, vector<32x64xbf16>, vector<16x64xf32> -> vector<16x64xf32>
    %98 = vector.broadcast %5 : vector<1x64xf32> to vector<16x64xf32>
    %99 = arith.addf %97, %98 : vector<16x64xf32>
    %cst_62 = arith.constant 0.000000e+00 : f32
    %100 = vector.broadcast %cst_62 : f32 to vector<16x64xf32>
    %101 = arith.maximumf %99, %100 : vector<16x64xf32>
    %102 = arith.truncf %101 : vector<16x64xf32> to vector<16x64xbf16>
    %cst_63 = arith.constant dense<0.000000e+00> : vector<16x32xf32>
    %103 = tpu.matmul %102, %6, %cst_63 {dimension_numbers = #tpu.dot_dimension_numbers<[1], [0], [0], [1], [0, 0, 1, 1], [], []>} : vector<16x64xbf16>, vector<64x32xbf16>, vector<16x32xf32> -> vector<16x32xf32>
    %104 = vector.broadcast %7 : vector<1x32xf32> to vector<16x32xf32>
    %105 = arith.addf %103, %104 : vector<16x32xf32>
    %106 = arith.addf %95, %105 : vector<16x32xf32>
    %cst_64 = arith.constant dense<0.000000e+00> : vector<16xf32>
    %107 = vector.multi_reduction <add>, %106, %cst_64 [1] : vector<16x32xf32> to vector<16xf32>
    %108 = vector.shape_cast %107 : vector<16xf32> to vector<16x1xf32>
    %cst_65 = arith.constant 3.200000e+01 : f32
    %109 = vector.broadcast %cst_65 : f32 to vector<16x1xf32>
    %110 = arith.divf %108, %109 : vector<16x1xf32>
    %111 = vector.broadcast %110 : vector<16x1xf32> to vector<16x32xf32>
    %112 = arith.subf %106, %111 : vector<16x32xf32>
    %113 = arith.mulf %112, %112 : vector<16x32xf32>
    %cst_66 = arith.constant dense<0.000000e+00> : vector<16xf32>
    %114 = vector.multi_reduction <add>, %113, %cst_66 [1] : vector<16x32xf32> to vector<16xf32>
    %115 = vector.shape_cast %114 : vector<16xf32> to vector<16x1xf32>
    %cst_67 = arith.constant 3.200000e+01 : f32
    %116 = vector.broadcast %cst_67 : f32 to vector<16x1xf32>
    %117 = arith.divf %115, %116 : vector<16x1xf32>
    %118 = vector.broadcast %110 : vector<16x1xf32> to vector<16x32xf32>
    %119 = arith.subf %106, %118 : vector<16x32xf32>
    %cst_68 = arith.constant 9.99999997E-7 : f32
    %120 = vector.broadcast %cst_68 : f32 to vector<16x1xf32>
    %121 = arith.addf %117, %120 : vector<16x1xf32>
    %122 = math.rsqrt %121 : vector<16x1xf32>
    %123 = vector.broadcast %122 : vector<16x1xf32> to vector<16x32xf32>
    %124 = arith.mulf %119, %123 : vector<16x32xf32>
    %125 = vector.broadcast %8 : vector<1x32xf32> to vector<16x32xf32>
    %126 = arith.mulf %124, %125 : vector<16x32xf32>
    %127 = vector.broadcast %9 : vector<1x32xf32> to vector<16x32xf32>
    %128 = arith.addf %126, %127 : vector<16x32xf32>
    %129 = vector.broadcast %24 : vector<16x1xf32> to vector<16x32xf32>
    %130 = arith.mulf %128, %129 : vector<16x32xf32>
    %cst_69 = arith.constant dense<0.000000e+00> : vector<32xf32>
    %131 = vector.multi_reduction <add>, %130, %cst_69 [0] : vector<16x32xf32> to vector<32xf32>
    %132 = vector.shape_cast %131 : vector<32xf32> to vector<1x32xf32>
    %133 = vector.broadcast %29 : vector<1x1xf32> to vector<1x32xf32>
    %134 = arith.mulf %132, %133 : vector<1x32xf32>
    %c0_70 = arith.constant 0 : index
    %c0_71 = arith.constant 0 : index
    %c0_72 = arith.constant 0 : index
    %135 = vector.load %arg23[%c0_70, %c0_71, %c0_72] : memref<1x1x32xf32, #tpu.memory_space<vmem>>, vector<1x1x32xf32>
    %136 = vector.shape_cast %135 : vector<1x1x32xf32> to vector<1x32xf32>
    %137 = vector.shape_cast %134 : vector<1x32xf32> to vector<1x1x32xf32>
    tpu.vector_store %arg23[%c0_70, %c0_71, %c0_72], %137 {strides = array<i32>} : memref<1x1x32xf32, #tpu.memory_space<vmem>>, vector<1x1x32xf32>,
    %138 = arith.truncf %22 : vector<16x32xf32> to vector<16x32xbf16>
    %cst_73 = arith.constant dense<0.000000e+00> : vector<16x96xf32>
    %139 = tpu.matmul %138, %10, %cst_73 {dimension_numbers = #tpu.dot_dimension_numbers<[1], [0], [0], [1], [0, 0, 1, 1], [], []>} : vector<16x32xbf16>, vector<32x96xbf16>, vector<16x96xf32> -> vector<16x96xf32>
    %140 = vector.extract_strided_slice %139 {offsets = [0, 0], sizes = [16, 16], strides = [1, 1]} : vector<16x96xf32> to vector<16x16xf32>
    %141 = vector.extract_strided_slice %139 {offsets = [0, 32], sizes = [16, 16], strides = [1, 1]} : vector<16x96xf32> to vector<16x16xf32>
    %142 = vector.extract_strided_slice %139 {offsets = [0, 64], sizes = [16, 16], strides = [1, 1]} : vector<16x96xf32> to vector<16x16xf32>
    %143 = arith.truncf %140 : vector<16x16xf32> to vector<16x16xbf16>
    %144 = arith.truncf %141 : vector<16x16xf32> to vector<16x16xbf16>
    %cst_74 = arith.constant dense<0.000000e+00> : vector<16x16xf32>
    %145 = tpu.matmul %143, %144, %cst_74 {dimension_numbers = #tpu.dot_dimension_numbers<[1], [1], [0], [0], [0, 0, 1, 0], [], []>} : vector<16x16xbf16>, vector<16x16xbf16>, vector<16x16xf32> -> vector<16x16xf32>
    %cst_75 = arith.constant dense<0xFF800000> : vector<16xf32>
    %146 = vector.multi_reduction <maximumf>, %145, %cst_75 [1] : vector<16x16xf32> to vector<16xf32>
    %147 = vector.shape_cast %146 : vector<16xf32> to vector<16x1xf32>
    %148 = vector.broadcast %147 : vector<16x1xf32> to vector<16x16xf32>
    %149 = arith.subf %145, %148 : vector<16x16xf32>
    %150 = math.exp %149 : vector<16x16xf32>
    %cst_76 = arith.constant dense<0.000000e+00> : vector<16xf32>
    %151 = vector.multi_reduction <add>, %150, %cst_76 [1] : vector<16x16xf32> to vector<16xf32>
    %152 = vector.shape_cast %151 : vector<16xf32> to vector<16x1xf32>
    %153 = tpu.reciprocal %152 {approx = true} : vector<16x1xf32> -> vector<16x1xf32>
    %154 = vector.broadcast %153 : vector<16x1xf32> to vector<16x16xf32>
    %155 = arith.mulf %150, %154 : vector<16x16xf32>
    %156 = arith.truncf %155 : vector<16x16xf32> to vector<16x16xbf16>
    %157 = arith.truncf %142 : vector<16x16xf32> to vector<16x16xbf16>
    %cst_77 = arith.constant dense<0.000000e+00> : vector<16x16xf32>
    %158 = tpu.matmul %156, %157, %cst_77 {dimension_numbers = #tpu.dot_dimension_numbers<[1], [0], [0], [1], [0, 0, 1, 1], [], []>} : vector<16x16xbf16>, vector<16x16xbf16>, vector<16x16xf32> -> vector<16x16xf32>
    %159 = vector.extract_strided_slice %139 {offsets = [0, 16], sizes = [16, 16], strides = [1, 1]} : vector<16x96xf32> to vector<16x16xf32>
    %160 = vector.extract_strided_slice %139 {offsets = [0, 48], sizes = [16, 16], strides = [1, 1]} : vector<16x96xf32> to vector<16x16xf32>
    %161 = vector.extract_strided_slice %139 {offsets = [0, 80], sizes = [16, 16], strides = [1, 1]} : vector<16x96xf32> to vector<16x16xf32>
    %162 = arith.truncf %159 : vector<16x16xf32> to vector<16x16xbf16>
    %163 = arith.truncf %160 : vector<16x16xf32> to vector<16x16xbf16>
    %cst_78 = arith.constant dense<0.000000e+00> : vector<16x16xf32>
    %164 = tpu.matmul %162, %163, %cst_78 {dimension_numbers = #tpu.dot_dimension_numbers<[1], [1], [0], [0], [0, 0, 1, 0], [], []>} : vector<16x16xbf16>, vector<16x16xbf16>, vector<16x16xf32> -> vector<16x16xf32>
    %cst_79 = arith.constant dense<0xFF800000> : vector<16xf32>
    %165 = vector.multi_reduction <maximumf>, %164, %cst_79 [1] : vector<16x16xf32> to vector<16xf32>
    %166 = vector.shape_cast %165 : vector<16xf32> to vector<16x1xf32>
    %167 = vector.broadcast %166 : vector<16x1xf32> to vector<16x16xf32>
    %168 = arith.subf %164, %167 : vector<16x16xf32>
    %169 = math.exp %168 : vector<16x16xf32>
    %cst_80 = arith.constant dense<0.000000e+00> : vector<16xf32>
    %170 = vector.multi_reduction <add>, %169, %cst_80 [1] : vector<16x16xf32> to vector<16xf32>
    %171 = vector.shape_cast %170 : vector<16xf32> to vector<16x1xf32>
    %172 = tpu.reciprocal %171 {approx = true} : vector<16x1xf32> -> vector<16x1xf32>
    %173 = vector.broadcast %172 : vector<16x1xf32> to vector<16x16xf32>
    %174 = arith.mulf %169, %173 : vector<16x16xf32>
    %175 = arith.truncf %174 : vector<16x16xf32> to vector<16x16xbf16>
    %176 = arith.truncf %161 : vector<16x16xf32> to vector<16x16xbf16>
    %cst_81 = arith.constant dense<0.000000e+00> : vector<16x16xf32>
    %177 = tpu.matmul %175, %176, %cst_81 {dimension_numbers = #tpu.dot_dimension_numbers<[1], [0], [0], [1], [0, 0, 1, 1], [], []>} : vector<16x16xbf16>, vector<16x16xbf16>, vector<16x16xf32> -> vector<16x16xf32>
    %178 = tpu.concatenate %158, %177 in 1 : vector<16x16xf32>, vector<16x16xf32> -> vector<16x32xf32>
    %179 = arith.truncf %178 : vector<16x32xf32> to vector<16x32xbf16>
    %cst_82 = arith.constant dense<0.000000e+00> : vector<16x32xf32>
    %180 = tpu.matmul %179, %11, %cst_82 {dimension_numbers = #tpu.dot_dimension_numbers<[1], [0], [0], [1], [0, 0, 1, 1], [], []>} : vector<16x32xbf16>, vector<32x32xbf16>, vector<16x32xf32> -> vector<16x32xf32>
    %181 = arith.addf %22, %180 : vector<16x32xf32>
    %cst_83 = arith.constant dense<0.000000e+00> : vector<16xf32>
    %182 = vector.multi_reduction <add>, %181, %cst_83 [1] : vector<16x32xf32> to vector<16xf32>
    %183 = vector.shape_cast %182 : vector<16xf32> to vector<16x1xf32>
    %cst_84 = arith.constant 3.200000e+01 : f32
    %184 = vector.broadcast %cst_84 : f32 to vector<16x1xf32>
    %185 = arith.divf %183, %184 : vector<16x1xf32>
    %186 = vector.broadcast %185 : vector<16x1xf32> to vector<16x32xf32>
    %187 = arith.subf %181, %186 : vector<16x32xf32>
    %188 = arith.mulf %187, %187 : vector<16x32xf32>
    %cst_85 = arith.constant dense<0.000000e+00> : vector<16xf32>
    %189 = vector.multi_reduction <add>, %188, %cst_85 [1] : vector<16x32xf32> to vector<16xf32>
    %190 = vector.shape_cast %189 : vector<16xf32> to vector<16x1xf32>
    %cst_86 = arith.constant 3.200000e+01 : f32
    %191 = vector.broadcast %cst_86 : f32 to vector<16x1xf32>
    %192 = arith.divf %190, %191 : vector<16x1xf32>
    %193 = vector.broadcast %185 : vector<16x1xf32> to vector<16x32xf32>
    %194 = arith.subf %181, %193 : vector<16x32xf32>
    %cst_87 = arith.constant 9.99999997E-7 : f32
    %195 = vector.broadcast %cst_87 : f32 to vector<16x1xf32>
    %196 = arith.addf %192, %195 : vector<16x1xf32>
    %197 = math.rsqrt %196 : vector<16x1xf32>
    %198 = vector.broadcast %197 : vector<16x1xf32> to vector<16x32xf32>
    %199 = arith.mulf %194, %198 : vector<16x32xf32>
    %200 = vector.broadcast %12 : vector<1x32xf32> to vector<16x32xf32>
    %201 = arith.mulf %199, %200 : vector<16x32xf32>
    %202 = vector.broadcast %13 : vector<1x32xf32> to vector<16x32xf32>
    %203 = arith.addf %201, %202 : vector<16x32xf32>
    %204 = arith.truncf %203 : vector<16x32xf32> to vector<16x32xbf16>
    %cst_88 = arith.constant dense<0.000000e+00> : vector<16x64xf32>
    %205 = tpu.matmul %204, %14, %cst_88 {dimension_numbers = #tpu.dot_dimension_numbers<[1], [0], [0], [1], [0, 0, 1, 1], [], []>} : vector<16x32xbf16>, vector<32x64xbf16>, vector<16x64xf32> -> vector<16x64xf32>
    %206 = vector.broadcast %15 : vector<1x64xf32> to vector<16x64xf32>
    %207 = arith.addf %205, %206 : vector<16x64xf32>
    %cst_89 = arith.constant 0.000000e+00 : f32
    %208 = vector.broadcast %cst_89 : f32 to vector<16x64xf32>
    %209 = arith.maximumf %207, %208 : vector<16x64xf32>
    %210 = arith.truncf %209 : vector<16x64xf32> to vector<16x64xbf16>
    %cst_90 = arith.constant dense<0.000000e+00> : vector<16x32xf32>
    %211 = tpu.matmul %210, %16, %cst_90 {dimension_numbers = #tpu.dot_dimension_numbers<[1], [0], [0], [1], [0, 0, 1, 1], [], []>} : vector<16x64xbf16>, vector<64x32xbf16>, vector<16x32xf32> -> vector<16x32xf32>
    %212 = vector.broadcast %17 : vector<1x32xf32> to vector<16x32xf32>
    %213 = arith.addf %211, %212 : vector<16x32xf32>
    %214 = arith.addf %203, %213 : vector<16x32xf32>
    %cst_91 = arith.constant dense<0.000000e+00> : vector<16xf32>
    %215 = vector.multi_reduction <add>, %214, %cst_91 [1] : vector<16x32xf32> to vector<16xf32>
    %216 = vector.shape_cast %215 : vector<16xf32> to vector<16x1xf32>
    %cst_92 = arith.constant 3.200000e+01 : f32
    %217 = vector.broadcast %cst_92 : f32 to vector<16x1xf32>
    %218 = arith.divf %216, %217 : vector<16x1xf32>
    %219 = vector.broadcast %218 : vector<16x1xf32> to vector<16x32xf32>
    %220 = arith.subf %214, %219 : vector<16x32xf32>
    %221 = arith.mulf %220, %220 : vector<16x32xf32>
    %cst_93 = arith.constant dense<0.000000e+00> : vector<16xf32>
    %222 = vector.multi_reduction <add>, %221, %cst_93 [1] : vector<16x32xf32> to vector<16xf32>
    %223 = vector.shape_cast %222 : vector<16xf32> to vector<16x1xf32>
    %cst_94 = arith.constant 3.200000e+01 : f32
    %224 = vector.broadcast %cst_94 : f32 to vector<16x1xf32>
    %225 = arith.divf %223, %224 : vector<16x1xf32>
    %226 = vector.broadcast %218 : vector<16x1xf32> to vector<16x32xf32>
    %227 = arith.subf %214, %226 : vector<16x32xf32>
    %cst_95 = arith.constant 9.99999997E-7 : f32
    %228 = vector.broadcast %cst_95 : f32 to vector<16x1xf32>
    %229 = arith.addf %225, %228 : vector<16x1xf32>
    %230 = math.rsqrt %229 : vector<16x1xf32>
    %231 = vector.broadcast %230 : vector<16x1xf32> to vector<16x32xf32>
    %232 = arith.mulf %227, %231 : vector<16x32xf32>
    %233 = vector.broadcast %18 : vector<1x32xf32> to vector<16x32xf32>
    %234 = arith.mulf %232, %233 : vector<16x32xf32>
    %235 = vector.broadcast %19 : vector<1x32xf32> to vector<16x32xf32>
    %236 = arith.addf %234, %235 : vector<16x32xf32>
    %237 = vector.broadcast %24 : vector<16x1xf32> to vector<16x32xf32>
    %238 = arith.mulf %236, %237 : vector<16x32xf32>
    %cst_96 = arith.constant dense<0.000000e+00> : vector<32xf32>
    %239 = vector.multi_reduction <add>, %238, %cst_96 [0] : vector<16x32xf32> to vector<32xf32>
    %240 = vector.shape_cast %239 : vector<32xf32> to vector<1x32xf32>
    %241 = vector.broadcast %29 : vector<1x1xf32> to vector<1x32xf32>
    %242 = arith.mulf %240, %241 : vector<1x32xf32>
    %cst_97 = arith.constant 8.000000e+01 : f32
    %243 = vector.broadcast %cst_97 : f32 to vector<1x32xf32>
    %244 = arith.minimumf %242, %243 : vector<1x32xf32>
    %c0_98 = arith.constant 0 : index
    %c0_99 = arith.constant 0 : index
    %c0_100 = arith.constant 0 : index
    %245 = vector.load %arg24[%c0_98, %c0_99, %c0_100] : memref<1x1x32xf32, #tpu.memory_space<vmem>>, vector<1x1x32xf32>
    %246 = vector.shape_cast %245 : vector<1x1x32xf32> to vector<1x32xf32>
    %247 = vector.shape_cast %244 : vector<1x32xf32> to vector<1x1x32xf32>
    tpu.vector_store %arg24[%c0_98, %c0_99, %c0_100], %247 {strides = array<i32>} : memref<1x1x32xf32, #tpu.memory_space<vmem>>, vector<1x1x32xf32>,
    return
  }
  func.func @transform_0(%arg0: i32) -> (i32, i32, i32) {
    %c0_i32 = arith.constant 0 : i32
    %c0_i32_0 = arith.constant 0 : i32
    %c0_i32_1 = arith.constant 0 : i32
    return %arg0, %c0_i32, %c0_i32_0 : i32, i32, i32
  }
  func.func @transform_1(%arg0: i32) -> (i32, i32, i32) {
    %c0_i32 = arith.constant 0 : i32
    %c0_i32_0 = arith.constant 0 : i32
    %c0_i32_1 = arith.constant 0 : i32
    return %arg0, %c0_i32, %c0_i32_0 : i32, i32, i32
  }
  func.func @transform_2(%arg0: i32) -> (i32, i32) {
    %c0_i32 = arith.constant 0 : i32
    %c0_i32_0 = arith.constant 0 : i32
    %c0_i32_1 = arith.constant 0 : i32
    return %c0_i32, %c0_i32_0 : i32, i32
  }
  func.func @transform_3(%arg0: i32) -> (i32, i32) {
    %c0_i32 = arith.constant 0 : i32
    %c0_i32_0 = arith.constant 0 : i32
    %c0_i32_1 = arith.constant 0 : i32
    return %c0_i32, %c0_i32_0 : i32, i32
  }
  func.func @transform_4(%arg0: i32) -> (i32, i32) {
    %c0_i32 = arith.constant 0 : i32
    %c0_i32_0 = arith.constant 0 : i32
    %c0_i32_1 = arith.constant 0 : i32
    return %c0_i32, %c0_i32_0 : i32, i32
  }
  func.func @transform_5(%arg0: i32) -> (i32, i32) {
    %c0_i32 = arith.constant 0 : i32
    %c0_i32_0 = arith.constant 0 : i32
    %c0_i32_1 = arith.constant 0 : i32
    return %c0_i32, %c0_i32_0 : i32, i32
  }
  func.func @transform_6(%arg0: i32) -> (i32, i32) {
    %c0_i32 = arith.constant 0 : i32
    %c0_i32_0 = arith.constant 0 : i32
    %c0_i32_1 = arith.constant 0 : i32
    return %c0_i32, %c0_i32_0 : i32, i32
  }
  func.func @transform_7(%arg0: i32) -> (i32, i32) {
    %c0_i32 = arith.constant 0 : i32
    %c0_i32_0 = arith.constant 0 : i32
    %c0_i32_1 = arith.constant 0 : i32
    return %c0_i32, %c0_i32_0 : i32, i32
  }
  func.func @transform_8(%arg0: i32) -> (i32, i32) {
    %c0_i32 = arith.constant 0 : i32
    %c0_i32_0 = arith.constant 0 : i32
    %c0_i32_1 = arith.constant 0 : i32
    return %c0_i32, %c0_i32_0 : i32, i32
  }
  func.func @transform_9(%arg0: i32) -> (i32, i32) {
    %c0_i32 = arith.constant 0 : i32
    %c0_i32_0 = arith.constant 0 : i32
    %c0_i32_1 = arith.constant 0 : i32
    return %c0_i32, %c0_i32_0 : i32, i32
  }
  func.func @transform_10(%arg0: i32) -> (i32, i32) {
    %c0_i32 = arith.constant 0 : i32
    %c0_i32_0 = arith.constant 0 : i32
    %c0_i32_1 = arith.constant 0 : i32
    return %c0_i32, %c0_i32_0 : i32, i32
  }
  func.func @transform_11(%arg0: i32) -> (i32, i32) {
    %c0_i32 = arith.constant 0 : i32
    %c0_i32_0 = arith.constant 0 : i32
    %c0_i32_1 = arith.constant 0 : i32
    return %c0_i32, %c0_i32_0 : i32, i32
  }
  func.func @transform_12(%arg0: i32) -> (i32, i32) {
    %c0_i32 = arith.constant 0 : i32
    %c0_i32_0 = arith.constant 0 : i32
    %c0_i32_1 = arith.constant 0 : i32
    return %c0_i32, %c0_i32_0 : i32, i32
  }
  func.func @transform_13(%arg0: i32) -> (i32, i32) {
    %c0_i32 = arith.constant 0 : i32
    %c0_i32_0 = arith.constant 0 : i32
    %c0_i32_1 = arith.constant 0 : i32
    return %c0_i32, %c0_i32_0 : i32, i32
  }
  func.func @transform_14(%arg0: i32) -> (i32, i32) {
    %c0_i32 = arith.constant 0 : i32
    %c0_i32_0 = arith.constant 0 : i32
    %c0_i32_1 = arith.constant 0 : i32
    return %c0_i32, %c0_i32_0 : i32, i32
  }
  func.func @transform_15(%arg0: i32) -> (i32, i32) {
    %c0_i32 = arith.constant 0 : i32
    %c0_i32_0 = arith.constant 0 : i32
    %c0_i32_1 = arith.constant 0 : i32
    return %c0_i32, %c0_i32_0 : i32, i32
  }
  func.func @transform_16(%arg0: i32) -> (i32, i32) {
    %c0_i32 = arith.constant 0 : i32
    %c0_i32_0 = arith.constant 0 : i32
    %c0_i32_1 = arith.constant 0 : i32
    return %c0_i32, %c0_i32_0 : i32, i32
  }
  func.func @transform_17(%arg0: i32) -> (i32, i32) {
    %c0_i32 = arith.constant 0 : i32
    %c0_i32_0 = arith.constant 0 : i32
    %c0_i32_1 = arith.constant 0 : i32
    return %c0_i32, %c0_i32_0 : i32, i32
  }
  func.func @transform_18(%arg0: i32) -> (i32, i32) {
    %c0_i32 = arith.constant 0 : i32
    %c0_i32_0 = arith.constant 0 : i32
    %c0_i32_1 = arith.constant 0 : i32
    return %c0_i32, %c0_i32_0 : i32, i32
  }
  func.func @transform_19(%arg0: i32) -> (i32, i32) {
    %c0_i32 = arith.constant 0 : i32
    %c0_i32_0 = arith.constant 0 : i32
    %c0_i32_1 = arith.constant 0 : i32
    return %c0_i32, %c0_i32_0 : i32, i32
  }
  func.func @transform_20(%arg0: i32) -> (i32, i32) {
    %c0_i32 = arith.constant 0 : i32
    %c0_i32_0 = arith.constant 0 : i32
    %c0_i32_1 = arith.constant 0 : i32
    return %c0_i32, %c0_i32_0 : i32, i32
  }
  func.func @transform_21(%arg0: i32) -> (i32, i32) {
    %c0_i32 = arith.constant 0 : i32
    %c0_i32_0 = arith.constant 0 : i32
    %c0_i32_1 = arith.constant 0 : i32
    return %c0_i32, %c0_i32_0 : i32, i32
  }
  func.func @transform_22(%arg0: i32) -> (i32, i32, i32) {
    %c0_i32 = arith.constant 0 : i32
    %c0_i32_0 = arith.constant 0 : i32
    %c0_i32_1 = arith.constant 0 : i32
    return %arg0, %c0_i32, %c0_i32_0 : i32, i32, i32
  }
  func.func @transform_23(%arg0: i32) -> (i32, i32, i32) {
    %c0_i32 = arith.constant 0 : i32
    %c0_i32_0 = arith.constant 0 : i32
    %c0_i32_1 = arith.constant 0 : i32
    return %arg0, %c0_i32, %c0_i32_0 : i32, i32, i32
  }
}

module attributes {stable_mosaic.version = 11 : i64} {
  func.func @_layer_kernel(%arg0: i32, %arg1: memref<1x17x32xbf16, #tpu.memory_space<vmem>>, %arg2: memref<1x1x17xf32, #tpu.memory_space<vmem>>, %arg3: memref<1x32xf32, #tpu.memory_space<vmem>>, %arg4: memref<1x32xf32, #tpu.memory_space<vmem>>, %arg5: memref<32x96xbf16, #tpu.memory_space<vmem>>, %arg6: memref<32x32xbf16, #tpu.memory_space<vmem>>, %arg7: memref<1x32xf32, #tpu.memory_space<vmem>>, %arg8: memref<1x32xf32, #tpu.memory_space<vmem>>, %arg9: memref<32x64xbf16, #tpu.memory_space<vmem>>, %arg10: memref<1x64xf32, #tpu.memory_space<vmem>>, %arg11: memref<64x32xbf16, #tpu.memory_space<vmem>>, %arg12: memref<1x32xf32, #tpu.memory_space<vmem>>, %arg13: memref<1x32xf32, #tpu.memory_space<vmem>>, %arg14: memref<1x32xf32, #tpu.memory_space<vmem>>, %arg15: memref<1x17x32xbf16, #tpu.memory_space<vmem>>) attributes {dimension_semantics = [#tpu.dimension_semantics<parallel>], iteration_bounds = array<i64: 2>, scalar_prefetch = 0 : i64, scratch_operands = 0 : i64, tpu.core_type = #tpu.core_type<tc>, window_params = [{transform_indices = @transform_0, window_bounds = array<i64: 1, 17, 32>}, {transform_indices = @transform_1, window_bounds = array<i64: 1, 1, 17>}, {pipeline_mode = #tpu.pipeline_mode<synchronous>, transform_indices = @transform_2, window_bounds = array<i64: 1, 32>}, {pipeline_mode = #tpu.pipeline_mode<synchronous>, transform_indices = @transform_3, window_bounds = array<i64: 1, 32>}, {pipeline_mode = #tpu.pipeline_mode<synchronous>, transform_indices = @transform_4, window_bounds = array<i64: 32, 96>}, {pipeline_mode = #tpu.pipeline_mode<synchronous>, transform_indices = @transform_5, window_bounds = array<i64: 32, 32>}, {pipeline_mode = #tpu.pipeline_mode<synchronous>, transform_indices = @transform_6, window_bounds = array<i64: 1, 32>}, {pipeline_mode = #tpu.pipeline_mode<synchronous>, transform_indices = @transform_7, window_bounds = array<i64: 1, 32>}, {pipeline_mode = #tpu.pipeline_mode<synchronous>, transform_indices = @transform_8, window_bounds = array<i64: 32, 64>}, {pipeline_mode = #tpu.pipeline_mode<synchronous>, transform_indices = @transform_9, window_bounds = array<i64: 1, 64>}, {pipeline_mode = #tpu.pipeline_mode<synchronous>, transform_indices = @transform_10, window_bounds = array<i64: 64, 32>}, {pipeline_mode = #tpu.pipeline_mode<synchronous>, transform_indices = @transform_11, window_bounds = array<i64: 1, 32>}, {pipeline_mode = #tpu.pipeline_mode<synchronous>, transform_indices = @transform_12, window_bounds = array<i64: 1, 32>}, {pipeline_mode = #tpu.pipeline_mode<synchronous>, transform_indices = @transform_13, window_bounds = array<i64: 1, 32>}, {transform_indices = @transform_14, window_bounds = array<i64: 1, 17, 32>}]} {
    %c0 = arith.constant 0 : index
    %c0_0 = arith.constant 0 : index
    %0 = vector.load %arg5[%c0, %c0_0] : memref<32x96xbf16, #tpu.memory_space<vmem>>, vector<32x96xbf16>
    %c0_1 = arith.constant 0 : index
    %c0_2 = arith.constant 0 : index
    %1 = vector.load %arg6[%c0_1, %c0_2] : memref<32x32xbf16, #tpu.memory_space<vmem>>, vector<32x32xbf16>
    %c0_3 = arith.constant 0 : index
    %c0_4 = arith.constant 0 : index
    %2 = vector.load %arg7[%c0_3, %c0_4] : memref<1x32xf32, #tpu.memory_space<vmem>>, vector<1x32xf32>
    %c0_5 = arith.constant 0 : index
    %c0_6 = arith.constant 0 : index
    %3 = vector.load %arg8[%c0_5, %c0_6] : memref<1x32xf32, #tpu.memory_space<vmem>>, vector<1x32xf32>
    %c0_7 = arith.constant 0 : index
    %c0_8 = arith.constant 0 : index
    %4 = vector.load %arg9[%c0_7, %c0_8] : memref<32x64xbf16, #tpu.memory_space<vmem>>, vector<32x64xbf16>
    %c0_9 = arith.constant 0 : index
    %c0_10 = arith.constant 0 : index
    %5 = vector.load %arg10[%c0_9, %c0_10] : memref<1x64xf32, #tpu.memory_space<vmem>>, vector<1x64xf32>
    %c0_11 = arith.constant 0 : index
    %c0_12 = arith.constant 0 : index
    %6 = vector.load %arg11[%c0_11, %c0_12] : memref<64x32xbf16, #tpu.memory_space<vmem>>, vector<64x32xbf16>
    %c0_13 = arith.constant 0 : index
    %c0_14 = arith.constant 0 : index
    %7 = vector.load %arg12[%c0_13, %c0_14] : memref<1x32xf32, #tpu.memory_space<vmem>>, vector<1x32xf32>
    %c0_15 = arith.constant 0 : index
    %c0_16 = arith.constant 0 : index
    %8 = vector.load %arg13[%c0_15, %c0_16] : memref<1x32xf32, #tpu.memory_space<vmem>>, vector<1x32xf32>
    %c0_17 = arith.constant 0 : index
    %c0_18 = arith.constant 0 : index
    %9 = vector.load %arg14[%c0_17, %c0_18] : memref<1x32xf32, #tpu.memory_space<vmem>>, vector<1x32xf32>
    %c0_19 = arith.constant 0 : index
    %c0_20 = arith.constant 0 : index
    %c0_21 = arith.constant 0 : index
    %10 = vector.load %arg1[%c0_19, %c0_20, %c0_21] : memref<1x17x32xbf16, #tpu.memory_space<vmem>>, vector<1x17x32xbf16>
    %11 = vector.shape_cast %10 : vector<1x17x32xbf16> to vector<17x32xbf16>
    %12 = arith.extf %11 : vector<17x32xbf16> to vector<17x32xf32>
    %c0_22 = arith.constant 0 : index
    %c0_23 = arith.constant 0 : index
    %13 = vector.load %arg3[%c0_22, %c0_23] : memref<1x32xf32, #tpu.memory_space<vmem>>, vector<1x32xf32>
    %c0_24 = arith.constant 0 : index
    %c0_25 = arith.constant 0 : index
    %14 = vector.load %arg4[%c0_24, %c0_25] : memref<1x32xf32, #tpu.memory_space<vmem>>, vector<1x32xf32>
    %cst = arith.constant dense<0.000000e+00> : vector<17xf32>
    %15 = vector.multi_reduction <add>, %12, %cst [1] : vector<17x32xf32> to vector<17xf32>
    %16 = vector.shape_cast %15 : vector<17xf32> to vector<17x1xf32>
    %cst_26 = arith.constant 3.200000e+01 : f32
    %17 = vector.broadcast %cst_26 : f32 to vector<17x1xf32>
    %18 = arith.divf %16, %17 : vector<17x1xf32>
    %19 = vector.broadcast %18 : vector<17x1xf32> to vector<17x32xf32>
    %20 = arith.subf %12, %19 : vector<17x32xf32>
    %21 = arith.mulf %20, %20 : vector<17x32xf32>
    %cst_27 = arith.constant dense<0.000000e+00> : vector<17xf32>
    %22 = vector.multi_reduction <add>, %21, %cst_27 [1] : vector<17x32xf32> to vector<17xf32>
    %23 = vector.shape_cast %22 : vector<17xf32> to vector<17x1xf32>
    %cst_28 = arith.constant 3.200000e+01 : f32
    %24 = vector.broadcast %cst_28 : f32 to vector<17x1xf32>
    %25 = arith.divf %23, %24 : vector<17x1xf32>
    %26 = vector.broadcast %18 : vector<17x1xf32> to vector<17x32xf32>
    %27 = arith.subf %12, %26 : vector<17x32xf32>
    %cst_29 = arith.constant 9.99999997E-7 : f32
    %28 = vector.broadcast %cst_29 : f32 to vector<17x1xf32>
    %29 = arith.addf %25, %28 : vector<17x1xf32>
    %30 = math.rsqrt %29 : vector<17x1xf32>
    %31 = vector.broadcast %30 : vector<17x1xf32> to vector<17x32xf32>
    %32 = arith.mulf %27, %31 : vector<17x32xf32>
    %33 = vector.broadcast %13 : vector<1x32xf32> to vector<17x32xf32>
    %34 = arith.mulf %32, %33 : vector<17x32xf32>
    %35 = vector.broadcast %14 : vector<1x32xf32> to vector<17x32xf32>
    %36 = arith.addf %34, %35 : vector<17x32xf32>
    %c0_30 = arith.constant 0 : index
    %c0_31 = arith.constant 0 : index
    %c0_32 = arith.constant 0 : index
    %37 = vector.load %arg2[%c0_30, %c0_31, %c0_32] : memref<1x1x17xf32, #tpu.memory_space<vmem>>, vector<1x1x17xf32>
    %38 = vector.shape_cast %37 : vector<1x1x17xf32> to vector<1x17xf32>
    %cst_33 = arith.constant 0.000000e+00 : f32
    %39 = vector.broadcast %cst_33 : f32 to vector<1x17xf32>
    %40 = arith.cmpf oeq, %38, %39 : vector<1x17xf32>
    %41 = tpu.iota {dimensions = array<i32: 0>} : vector<17x17xi32>
    %42 = tpu.iota {dimensions = array<i32: 1>} : vector<17x17xi32>
    %43 = arith.cmpi slt, %41, %42 : vector<17x17xi32>
    %44 = vector.broadcast %40 : vector<1x17xi1> to vector<17x17xi1>
    %45 = arith.ori %44, %43 : vector<17x17xi1>
    %46 = arith.truncf %36 : vector<17x32xf32> to vector<17x32xbf16>
    %cst_34 = arith.constant dense<0.000000e+00> : vector<17x96xf32>
    %47 = tpu.matmul %46, %0, %cst_34 {dimension_numbers = #tpu.dot_dimension_numbers<[1], [0], [0], [1], [0, 0, 1, 1], [], []>} : vector<17x32xbf16>, vector<32x96xbf16>, vector<17x96xf32> -> vector<17x96xf32>
    %48 = vector.extract_strided_slice %47 {offsets = [0, 0], sizes = [17, 16], strides = [1, 1]} : vector<17x96xf32> to vector<17x16xf32>
    %49 = vector.extract_strided_slice %47 {offsets = [0, 32], sizes = [17, 16], strides = [1, 1]} : vector<17x96xf32> to vector<17x16xf32>
    %50 = vector.extract_strided_slice %47 {offsets = [0, 64], sizes = [17, 16], strides = [1, 1]} : vector<17x96xf32> to vector<17x16xf32>
    %51 = arith.truncf %48 : vector<17x16xf32> to vector<17x16xbf16>
    %52 = arith.truncf %49 : vector<17x16xf32> to vector<17x16xbf16>
    %cst_35 = arith.constant dense<0.000000e+00> : vector<17x17xf32>
    %53 = tpu.matmul %51, %52, %cst_35 {dimension_numbers = #tpu.dot_dimension_numbers<[1], [1], [0], [0], [0, 0, 1, 0], [], []>} : vector<17x16xbf16>, vector<17x16xbf16>, vector<17x17xf32> -> vector<17x17xf32>
    %cst_36 = arith.constant -1.000000e+09 : f32
    %54 = vector.broadcast %cst_36 : f32 to vector<17x17xf32>
    %55 = arith.select %45, %54, %53 : vector<17x17xi1>, vector<17x17xf32>
    %cst_37 = arith.constant dense<0xFF800000> : vector<17xf32>
    %56 = vector.multi_reduction <maximumf>, %55, %cst_37 [1] : vector<17x17xf32> to vector<17xf32>
    %57 = vector.shape_cast %56 : vector<17xf32> to vector<17x1xf32>
    %58 = vector.broadcast %57 : vector<17x1xf32> to vector<17x17xf32>
    %59 = arith.subf %55, %58 : vector<17x17xf32>
    %60 = math.exp %59 : vector<17x17xf32>
    %cst_38 = arith.constant dense<0.000000e+00> : vector<17xf32>
    %61 = vector.multi_reduction <add>, %60, %cst_38 [1] : vector<17x17xf32> to vector<17xf32>
    %62 = vector.shape_cast %61 : vector<17xf32> to vector<17x1xf32>
    %63 = tpu.reciprocal %62 {approx = true} : vector<17x1xf32> -> vector<17x1xf32>
    %64 = vector.broadcast %63 : vector<17x1xf32> to vector<17x17xf32>
    %65 = arith.mulf %60, %64 : vector<17x17xf32>
    %66 = arith.truncf %65 : vector<17x17xf32> to vector<17x17xbf16>
    %67 = arith.truncf %50 : vector<17x16xf32> to vector<17x16xbf16>
    %cst_39 = arith.constant dense<0.000000e+00> : vector<17x16xf32>
    %68 = tpu.matmul %66, %67, %cst_39 {dimension_numbers = #tpu.dot_dimension_numbers<[1], [0], [0], [1], [0, 0, 1, 1], [], []>} : vector<17x17xbf16>, vector<17x16xbf16>, vector<17x16xf32> -> vector<17x16xf32>
    %69 = vector.extract_strided_slice %47 {offsets = [0, 16], sizes = [17, 16], strides = [1, 1]} : vector<17x96xf32> to vector<17x16xf32>
    %70 = vector.extract_strided_slice %47 {offsets = [0, 48], sizes = [17, 16], strides = [1, 1]} : vector<17x96xf32> to vector<17x16xf32>
    %71 = vector.extract_strided_slice %47 {offsets = [0, 80], sizes = [17, 16], strides = [1, 1]} : vector<17x96xf32> to vector<17x16xf32>
    %72 = arith.truncf %69 : vector<17x16xf32> to vector<17x16xbf16>
    %73 = arith.truncf %70 : vector<17x16xf32> to vector<17x16xbf16>
    %cst_40 = arith.constant dense<0.000000e+00> : vector<17x17xf32>
    %74 = tpu.matmul %72, %73, %cst_40 {dimension_numbers = #tpu.dot_dimension_numbers<[1], [1], [0], [0], [0, 0, 1, 0], [], []>} : vector<17x16xbf16>, vector<17x16xbf16>, vector<17x17xf32> -> vector<17x17xf32>
    %cst_41 = arith.constant -1.000000e+09 : f32
    %75 = vector.broadcast %cst_41 : f32 to vector<17x17xf32>
    %76 = arith.select %45, %75, %74 : vector<17x17xi1>, vector<17x17xf32>
    %cst_42 = arith.constant dense<0xFF800000> : vector<17xf32>
    %77 = vector.multi_reduction <maximumf>, %76, %cst_42 [1] : vector<17x17xf32> to vector<17xf32>
    %78 = vector.shape_cast %77 : vector<17xf32> to vector<17x1xf32>
    %79 = vector.broadcast %78 : vector<17x1xf32> to vector<17x17xf32>
    %80 = arith.subf %76, %79 : vector<17x17xf32>
    %81 = math.exp %80 : vector<17x17xf32>
    %cst_43 = arith.constant dense<0.000000e+00> : vector<17xf32>
    %82 = vector.multi_reduction <add>, %81, %cst_43 [1] : vector<17x17xf32> to vector<17xf32>
    %83 = vector.shape_cast %82 : vector<17xf32> to vector<17x1xf32>
    %84 = tpu.reciprocal %83 {approx = true} : vector<17x1xf32> -> vector<17x1xf32>
    %85 = vector.broadcast %84 : vector<17x1xf32> to vector<17x17xf32>
    %86 = arith.mulf %81, %85 : vector<17x17xf32>
    %87 = arith.truncf %86 : vector<17x17xf32> to vector<17x17xbf16>
    %88 = arith.truncf %71 : vector<17x16xf32> to vector<17x16xbf16>
    %cst_44 = arith.constant dense<0.000000e+00> : vector<17x16xf32>
    %89 = tpu.matmul %87, %88, %cst_44 {dimension_numbers = #tpu.dot_dimension_numbers<[1], [0], [0], [1], [0, 0, 1, 1], [], []>} : vector<17x17xbf16>, vector<17x16xbf16>, vector<17x16xf32> -> vector<17x16xf32>
    %90 = tpu.concatenate %68, %89 in 1 : vector<17x16xf32>, vector<17x16xf32> -> vector<17x32xf32>
    %91 = arith.truncf %90 : vector<17x32xf32> to vector<17x32xbf16>
    %cst_45 = arith.constant dense<0.000000e+00> : vector<17x32xf32>
    %92 = tpu.matmul %91, %1, %cst_45 {dimension_numbers = #tpu.dot_dimension_numbers<[1], [0], [0], [1], [0, 0, 1, 1], [], []>} : vector<17x32xbf16>, vector<32x32xbf16>, vector<17x32xf32> -> vector<17x32xf32>
    %93 = arith.addf %36, %92 : vector<17x32xf32>
    %cst_46 = arith.constant dense<0.000000e+00> : vector<17xf32>
    %94 = vector.multi_reduction <add>, %93, %cst_46 [1] : vector<17x32xf32> to vector<17xf32>
    %95 = vector.shape_cast %94 : vector<17xf32> to vector<17x1xf32>
    %cst_47 = arith.constant 3.200000e+01 : f32
    %96 = vector.broadcast %cst_47 : f32 to vector<17x1xf32>
    %97 = arith.divf %95, %96 : vector<17x1xf32>
    %98 = vector.broadcast %97 : vector<17x1xf32> to vector<17x32xf32>
    %99 = arith.subf %93, %98 : vector<17x32xf32>
    %100 = arith.mulf %99, %99 : vector<17x32xf32>
    %cst_48 = arith.constant dense<0.000000e+00> : vector<17xf32>
    %101 = vector.multi_reduction <add>, %100, %cst_48 [1] : vector<17x32xf32> to vector<17xf32>
    %102 = vector.shape_cast %101 : vector<17xf32> to vector<17x1xf32>
    %cst_49 = arith.constant 3.200000e+01 : f32
    %103 = vector.broadcast %cst_49 : f32 to vector<17x1xf32>
    %104 = arith.divf %102, %103 : vector<17x1xf32>
    %105 = vector.broadcast %97 : vector<17x1xf32> to vector<17x32xf32>
    %106 = arith.subf %93, %105 : vector<17x32xf32>
    %cst_50 = arith.constant 9.99999997E-7 : f32
    %107 = vector.broadcast %cst_50 : f32 to vector<17x1xf32>
    %108 = arith.addf %104, %107 : vector<17x1xf32>
    %109 = math.rsqrt %108 : vector<17x1xf32>
    %110 = vector.broadcast %109 : vector<17x1xf32> to vector<17x32xf32>
    %111 = arith.mulf %106, %110 : vector<17x32xf32>
    %112 = vector.broadcast %2 : vector<1x32xf32> to vector<17x32xf32>
    %113 = arith.mulf %111, %112 : vector<17x32xf32>
    %114 = vector.broadcast %3 : vector<1x32xf32> to vector<17x32xf32>
    %115 = arith.addf %113, %114 : vector<17x32xf32>
    %116 = arith.truncf %115 : vector<17x32xf32> to vector<17x32xbf16>
    %cst_51 = arith.constant dense<0.000000e+00> : vector<17x64xf32>
    %117 = tpu.matmul %116, %4, %cst_51 {dimension_numbers = #tpu.dot_dimension_numbers<[1], [0], [0], [1], [0, 0, 1, 1], [], []>} : vector<17x32xbf16>, vector<32x64xbf16>, vector<17x64xf32> -> vector<17x64xf32>
    %118 = vector.broadcast %5 : vector<1x64xf32> to vector<17x64xf32>
    %119 = arith.addf %117, %118 : vector<17x64xf32>
    %cst_52 = arith.constant 0.000000e+00 : f32
    %120 = vector.broadcast %cst_52 : f32 to vector<17x64xf32>
    %121 = arith.maximumf %119, %120 : vector<17x64xf32>
    %122 = arith.truncf %121 : vector<17x64xf32> to vector<17x64xbf16>
    %cst_53 = arith.constant dense<0.000000e+00> : vector<17x32xf32>
    %123 = tpu.matmul %122, %6, %cst_53 {dimension_numbers = #tpu.dot_dimension_numbers<[1], [0], [0], [1], [0, 0, 1, 1], [], []>} : vector<17x64xbf16>, vector<64x32xbf16>, vector<17x32xf32> -> vector<17x32xf32>
    %124 = vector.broadcast %7 : vector<1x32xf32> to vector<17x32xf32>
    %125 = arith.addf %123, %124 : vector<17x32xf32>
    %126 = arith.addf %115, %125 : vector<17x32xf32>
    %cst_54 = arith.constant dense<0.000000e+00> : vector<17xf32>
    %127 = vector.multi_reduction <add>, %126, %cst_54 [1] : vector<17x32xf32> to vector<17xf32>
    %128 = vector.shape_cast %127 : vector<17xf32> to vector<17x1xf32>
    %cst_55 = arith.constant 3.200000e+01 : f32
    %129 = vector.broadcast %cst_55 : f32 to vector<17x1xf32>
    %130 = arith.divf %128, %129 : vector<17x1xf32>
    %131 = vector.broadcast %130 : vector<17x1xf32> to vector<17x32xf32>
    %132 = arith.subf %126, %131 : vector<17x32xf32>
    %133 = arith.mulf %132, %132 : vector<17x32xf32>
    %cst_56 = arith.constant dense<0.000000e+00> : vector<17xf32>
    %134 = vector.multi_reduction <add>, %133, %cst_56 [1] : vector<17x32xf32> to vector<17xf32>
    %135 = vector.shape_cast %134 : vector<17xf32> to vector<17x1xf32>
    %cst_57 = arith.constant 3.200000e+01 : f32
    %136 = vector.broadcast %cst_57 : f32 to vector<17x1xf32>
    %137 = arith.divf %135, %136 : vector<17x1xf32>
    %138 = vector.broadcast %130 : vector<17x1xf32> to vector<17x32xf32>
    %139 = arith.subf %126, %138 : vector<17x32xf32>
    %cst_58 = arith.constant 9.99999997E-7 : f32
    %140 = vector.broadcast %cst_58 : f32 to vector<17x1xf32>
    %141 = arith.addf %137, %140 : vector<17x1xf32>
    %142 = math.rsqrt %141 : vector<17x1xf32>
    %143 = vector.broadcast %142 : vector<17x1xf32> to vector<17x32xf32>
    %144 = arith.mulf %139, %143 : vector<17x32xf32>
    %145 = vector.broadcast %8 : vector<1x32xf32> to vector<17x32xf32>
    %146 = arith.mulf %144, %145 : vector<17x32xf32>
    %147 = vector.broadcast %9 : vector<1x32xf32> to vector<17x32xf32>
    %148 = arith.addf %146, %147 : vector<17x32xf32>
    %149 = arith.truncf %148 : vector<17x32xf32> to vector<17x32xbf16>
    %c0_59 = arith.constant 0 : index
    %c0_60 = arith.constant 0 : index
    %c0_61 = arith.constant 0 : index
    %150 = vector.load %arg15[%c0_59, %c0_60, %c0_61] : memref<1x17x32xbf16, #tpu.memory_space<vmem>>, vector<1x17x32xbf16>
    %151 = vector.shape_cast %150 : vector<1x17x32xbf16> to vector<17x32xbf16>
    %152 = vector.shape_cast %149 : vector<17x32xbf16> to vector<1x17x32xbf16>
    tpu.vector_store %arg15[%c0_59, %c0_60, %c0_61], %152 {strides = array<i32>} : memref<1x17x32xbf16, #tpu.memory_space<vmem>>, vector<1x17x32xbf16>,
    return
  }
  func.func @transform_0(%arg0: i32) -> (i32, i32, i32) {
    %c0_i32 = arith.constant 0 : i32
    %c0_i32_0 = arith.constant 0 : i32
    %c0_i32_1 = arith.constant 0 : i32
    return %arg0, %c0_i32, %c0_i32_0 : i32, i32, i32
  }
  func.func @transform_1(%arg0: i32) -> (i32, i32, i32) {
    %c0_i32 = arith.constant 0 : i32
    %c0_i32_0 = arith.constant 0 : i32
    %c0_i32_1 = arith.constant 0 : i32
    return %arg0, %c0_i32, %c0_i32_0 : i32, i32, i32
  }
  func.func @transform_2(%arg0: i32) -> (i32, i32) {
    %c0_i32 = arith.constant 0 : i32
    %c0_i32_0 = arith.constant 0 : i32
    %c0_i32_1 = arith.constant 0 : i32
    return %c0_i32, %c0_i32_0 : i32, i32
  }
  func.func @transform_3(%arg0: i32) -> (i32, i32) {
    %c0_i32 = arith.constant 0 : i32
    %c0_i32_0 = arith.constant 0 : i32
    %c0_i32_1 = arith.constant 0 : i32
    return %c0_i32, %c0_i32_0 : i32, i32
  }
  func.func @transform_4(%arg0: i32) -> (i32, i32) {
    %c0_i32 = arith.constant 0 : i32
    %c0_i32_0 = arith.constant 0 : i32
    %c0_i32_1 = arith.constant 0 : i32
    return %c0_i32, %c0_i32_0 : i32, i32
  }
  func.func @transform_5(%arg0: i32) -> (i32, i32) {
    %c0_i32 = arith.constant 0 : i32
    %c0_i32_0 = arith.constant 0 : i32
    %c0_i32_1 = arith.constant 0 : i32
    return %c0_i32, %c0_i32_0 : i32, i32
  }
  func.func @transform_6(%arg0: i32) -> (i32, i32) {
    %c0_i32 = arith.constant 0 : i32
    %c0_i32_0 = arith.constant 0 : i32
    %c0_i32_1 = arith.constant 0 : i32
    return %c0_i32, %c0_i32_0 : i32, i32
  }
  func.func @transform_7(%arg0: i32) -> (i32, i32) {
    %c0_i32 = arith.constant 0 : i32
    %c0_i32_0 = arith.constant 0 : i32
    %c0_i32_1 = arith.constant 0 : i32
    return %c0_i32, %c0_i32_0 : i32, i32
  }
  func.func @transform_8(%arg0: i32) -> (i32, i32) {
    %c0_i32 = arith.constant 0 : i32
    %c0_i32_0 = arith.constant 0 : i32
    %c0_i32_1 = arith.constant 0 : i32
    return %c0_i32, %c0_i32_0 : i32, i32
  }
  func.func @transform_9(%arg0: i32) -> (i32, i32) {
    %c0_i32 = arith.constant 0 : i32
    %c0_i32_0 = arith.constant 0 : i32
    %c0_i32_1 = arith.constant 0 : i32
    return %c0_i32, %c0_i32_0 : i32, i32
  }
  func.func @transform_10(%arg0: i32) -> (i32, i32) {
    %c0_i32 = arith.constant 0 : i32
    %c0_i32_0 = arith.constant 0 : i32
    %c0_i32_1 = arith.constant 0 : i32
    return %c0_i32, %c0_i32_0 : i32, i32
  }
  func.func @transform_11(%arg0: i32) -> (i32, i32) {
    %c0_i32 = arith.constant 0 : i32
    %c0_i32_0 = arith.constant 0 : i32
    %c0_i32_1 = arith.constant 0 : i32
    return %c0_i32, %c0_i32_0 : i32, i32
  }
  func.func @transform_12(%arg0: i32) -> (i32, i32) {
    %c0_i32 = arith.constant 0 : i32
    %c0_i32_0 = arith.constant 0 : i32
    %c0_i32_1 = arith.constant 0 : i32
    return %c0_i32, %c0_i32_0 : i32, i32
  }
  func.func @transform_13(%arg0: i32) -> (i32, i32) {
    %c0_i32 = arith.constant 0 : i32
    %c0_i32_0 = arith.constant 0 : i32
    %c0_i32_1 = arith.constant 0 : i32
    return %c0_i32, %c0_i32_0 : i32, i32
  }
  func.func @transform_14(%arg0: i32) -> (i32, i32, i32) {
    %c0_i32 = arith.constant 0 : i32
    %c0_i32_0 = arith.constant 0 : i32
    %c0_i32_1 = arith.constant 0 : i32
    return %arg0, %c0_i32, %c0_i32_0 : i32, i32, i32
  }
}

module attributes {stable_mosaic.version = 11 : i64} {
  func.func @_layer_kernel(%arg0: i32, %arg1: memref<1x17x32xbf16, #tpu.memory_space<vmem>>, %arg2: memref<1x1x17xf32, #tpu.memory_space<vmem>>, %arg3: memref<32x96xbf16, #tpu.memory_space<vmem>>, %arg4: memref<32x32xbf16, #tpu.memory_space<vmem>>, %arg5: memref<1x32xf32, #tpu.memory_space<vmem>>, %arg6: memref<1x32xf32, #tpu.memory_space<vmem>>, %arg7: memref<32x64xbf16, #tpu.memory_space<vmem>>, %arg8: memref<1x64xf32, #tpu.memory_space<vmem>>, %arg9: memref<64x32xbf16, #tpu.memory_space<vmem>>, %arg10: memref<1x32xf32, #tpu.memory_space<vmem>>, %arg11: memref<1x32xf32, #tpu.memory_space<vmem>>, %arg12: memref<1x32xf32, #tpu.memory_space<vmem>>, %arg13: memref<1x17x32xbf16, #tpu.memory_space<vmem>>) attributes {dimension_semantics = [#tpu.dimension_semantics<parallel>], iteration_bounds = array<i64: 2>, scalar_prefetch = 0 : i64, scratch_operands = 0 : i64, tpu.core_type = #tpu.core_type<tc>, window_params = [{transform_indices = @transform_0, window_bounds = array<i64: 1, 17, 32>}, {transform_indices = @transform_1, window_bounds = array<i64: 1, 1, 17>}, {pipeline_mode = #tpu.pipeline_mode<synchronous>, transform_indices = @transform_2, window_bounds = array<i64: 32, 96>}, {pipeline_mode = #tpu.pipeline_mode<synchronous>, transform_indices = @transform_3, window_bounds = array<i64: 32, 32>}, {pipeline_mode = #tpu.pipeline_mode<synchronous>, transform_indices = @transform_4, window_bounds = array<i64: 1, 32>}, {pipeline_mode = #tpu.pipeline_mode<synchronous>, transform_indices = @transform_5, window_bounds = array<i64: 1, 32>}, {pipeline_mode = #tpu.pipeline_mode<synchronous>, transform_indices = @transform_6, window_bounds = array<i64: 32, 64>}, {pipeline_mode = #tpu.pipeline_mode<synchronous>, transform_indices = @transform_7, window_bounds = array<i64: 1, 64>}, {pipeline_mode = #tpu.pipeline_mode<synchronous>, transform_indices = @transform_8, window_bounds = array<i64: 64, 32>}, {pipeline_mode = #tpu.pipeline_mode<synchronous>, transform_indices = @transform_9, window_bounds = array<i64: 1, 32>}, {pipeline_mode = #tpu.pipeline_mode<synchronous>, transform_indices = @transform_10, window_bounds = array<i64: 1, 32>}, {pipeline_mode = #tpu.pipeline_mode<synchronous>, transform_indices = @transform_11, window_bounds = array<i64: 1, 32>}, {transform_indices = @transform_12, window_bounds = array<i64: 1, 17, 32>}]} {
    %c0 = arith.constant 0 : index
    %c0_0 = arith.constant 0 : index
    %0 = vector.load %arg3[%c0, %c0_0] : memref<32x96xbf16, #tpu.memory_space<vmem>>, vector<32x96xbf16>
    %c0_1 = arith.constant 0 : index
    %c0_2 = arith.constant 0 : index
    %1 = vector.load %arg4[%c0_1, %c0_2] : memref<32x32xbf16, #tpu.memory_space<vmem>>, vector<32x32xbf16>
    %c0_3 = arith.constant 0 : index
    %c0_4 = arith.constant 0 : index
    %2 = vector.load %arg5[%c0_3, %c0_4] : memref<1x32xf32, #tpu.memory_space<vmem>>, vector<1x32xf32>
    %c0_5 = arith.constant 0 : index
    %c0_6 = arith.constant 0 : index
    %3 = vector.load %arg6[%c0_5, %c0_6] : memref<1x32xf32, #tpu.memory_space<vmem>>, vector<1x32xf32>
    %c0_7 = arith.constant 0 : index
    %c0_8 = arith.constant 0 : index
    %4 = vector.load %arg7[%c0_7, %c0_8] : memref<32x64xbf16, #tpu.memory_space<vmem>>, vector<32x64xbf16>
    %c0_9 = arith.constant 0 : index
    %c0_10 = arith.constant 0 : index
    %5 = vector.load %arg8[%c0_9, %c0_10] : memref<1x64xf32, #tpu.memory_space<vmem>>, vector<1x64xf32>
    %c0_11 = arith.constant 0 : index
    %c0_12 = arith.constant 0 : index
    %6 = vector.load %arg9[%c0_11, %c0_12] : memref<64x32xbf16, #tpu.memory_space<vmem>>, vector<64x32xbf16>
    %c0_13 = arith.constant 0 : index
    %c0_14 = arith.constant 0 : index
    %7 = vector.load %arg10[%c0_13, %c0_14] : memref<1x32xf32, #tpu.memory_space<vmem>>, vector<1x32xf32>
    %c0_15 = arith.constant 0 : index
    %c0_16 = arith.constant 0 : index
    %8 = vector.load %arg11[%c0_15, %c0_16] : memref<1x32xf32, #tpu.memory_space<vmem>>, vector<1x32xf32>
    %c0_17 = arith.constant 0 : index
    %c0_18 = arith.constant 0 : index
    %9 = vector.load %arg12[%c0_17, %c0_18] : memref<1x32xf32, #tpu.memory_space<vmem>>, vector<1x32xf32>
    %c0_19 = arith.constant 0 : index
    %c0_20 = arith.constant 0 : index
    %c0_21 = arith.constant 0 : index
    %10 = vector.load %arg1[%c0_19, %c0_20, %c0_21] : memref<1x17x32xbf16, #tpu.memory_space<vmem>>, vector<1x17x32xbf16>
    %11 = vector.shape_cast %10 : vector<1x17x32xbf16> to vector<17x32xbf16>
    %12 = arith.extf %11 : vector<17x32xbf16> to vector<17x32xf32>
    %c0_22 = arith.constant 0 : index
    %c0_23 = arith.constant 0 : index
    %c0_24 = arith.constant 0 : index
    %13 = vector.load %arg2[%c0_22, %c0_23, %c0_24] : memref<1x1x17xf32, #tpu.memory_space<vmem>>, vector<1x1x17xf32>
    %14 = vector.shape_cast %13 : vector<1x1x17xf32> to vector<1x17xf32>
    %cst = arith.constant 0.000000e+00 : f32
    %15 = vector.broadcast %cst : f32 to vector<1x17xf32>
    %16 = arith.cmpf oeq, %14, %15 : vector<1x17xf32>
    %17 = tpu.iota {dimensions = array<i32: 0>} : vector<17x17xi32>
    %18 = tpu.iota {dimensions = array<i32: 1>} : vector<17x17xi32>
    %19 = arith.cmpi slt, %17, %18 : vector<17x17xi32>
    %20 = vector.broadcast %16 : vector<1x17xi1> to vector<17x17xi1>
    %21 = arith.ori %20, %19 : vector<17x17xi1>
    %22 = arith.truncf %12 : vector<17x32xf32> to vector<17x32xbf16>
    %cst_25 = arith.constant dense<0.000000e+00> : vector<17x96xf32>
    %23 = tpu.matmul %22, %0, %cst_25 {dimension_numbers = #tpu.dot_dimension_numbers<[1], [0], [0], [1], [0, 0, 1, 1], [], []>} : vector<17x32xbf16>, vector<32x96xbf16>, vector<17x96xf32> -> vector<17x96xf32>
    %24 = vector.extract_strided_slice %23 {offsets = [0, 0], sizes = [17, 16], strides = [1, 1]} : vector<17x96xf32> to vector<17x16xf32>
    %25 = vector.extract_strided_slice %23 {offsets = [0, 32], sizes = [17, 16], strides = [1, 1]} : vector<17x96xf32> to vector<17x16xf32>
    %26 = vector.extract_strided_slice %23 {offsets = [0, 64], sizes = [17, 16], strides = [1, 1]} : vector<17x96xf32> to vector<17x16xf32>
    %27 = arith.truncf %24 : vector<17x16xf32> to vector<17x16xbf16>
    %28 = arith.truncf %25 : vector<17x16xf32> to vector<17x16xbf16>
    %cst_26 = arith.constant dense<0.000000e+00> : vector<17x17xf32>
    %29 = tpu.matmul %27, %28, %cst_26 {dimension_numbers = #tpu.dot_dimension_numbers<[1], [1], [0], [0], [0, 0, 1, 0], [], []>} : vector<17x16xbf16>, vector<17x16xbf16>, vector<17x17xf32> -> vector<17x17xf32>
    %cst_27 = arith.constant -1.000000e+09 : f32
    %30 = vector.broadcast %cst_27 : f32 to vector<17x17xf32>
    %31 = arith.select %21, %30, %29 : vector<17x17xi1>, vector<17x17xf32>
    %cst_28 = arith.constant dense<0xFF800000> : vector<17xf32>
    %32 = vector.multi_reduction <maximumf>, %31, %cst_28 [1] : vector<17x17xf32> to vector<17xf32>
    %33 = vector.shape_cast %32 : vector<17xf32> to vector<17x1xf32>
    %34 = vector.broadcast %33 : vector<17x1xf32> to vector<17x17xf32>
    %35 = arith.subf %31, %34 : vector<17x17xf32>
    %36 = math.exp %35 : vector<17x17xf32>
    %cst_29 = arith.constant dense<0.000000e+00> : vector<17xf32>
    %37 = vector.multi_reduction <add>, %36, %cst_29 [1] : vector<17x17xf32> to vector<17xf32>
    %38 = vector.shape_cast %37 : vector<17xf32> to vector<17x1xf32>
    %39 = tpu.reciprocal %38 {approx = true} : vector<17x1xf32> -> vector<17x1xf32>
    %40 = vector.broadcast %39 : vector<17x1xf32> to vector<17x17xf32>
    %41 = arith.mulf %36, %40 : vector<17x17xf32>
    %42 = arith.truncf %41 : vector<17x17xf32> to vector<17x17xbf16>
    %43 = arith.truncf %26 : vector<17x16xf32> to vector<17x16xbf16>
    %cst_30 = arith.constant dense<0.000000e+00> : vector<17x16xf32>
    %44 = tpu.matmul %42, %43, %cst_30 {dimension_numbers = #tpu.dot_dimension_numbers<[1], [0], [0], [1], [0, 0, 1, 1], [], []>} : vector<17x17xbf16>, vector<17x16xbf16>, vector<17x16xf32> -> vector<17x16xf32>
    %45 = vector.extract_strided_slice %23 {offsets = [0, 16], sizes = [17, 16], strides = [1, 1]} : vector<17x96xf32> to vector<17x16xf32>
    %46 = vector.extract_strided_slice %23 {offsets = [0, 48], sizes = [17, 16], strides = [1, 1]} : vector<17x96xf32> to vector<17x16xf32>
    %47 = vector.extract_strided_slice %23 {offsets = [0, 80], sizes = [17, 16], strides = [1, 1]} : vector<17x96xf32> to vector<17x16xf32>
    %48 = arith.truncf %45 : vector<17x16xf32> to vector<17x16xbf16>
    %49 = arith.truncf %46 : vector<17x16xf32> to vector<17x16xbf16>
    %cst_31 = arith.constant dense<0.000000e+00> : vector<17x17xf32>
    %50 = tpu.matmul %48, %49, %cst_31 {dimension_numbers = #tpu.dot_dimension_numbers<[1], [1], [0], [0], [0, 0, 1, 0], [], []>} : vector<17x16xbf16>, vector<17x16xbf16>, vector<17x17xf32> -> vector<17x17xf32>
    %cst_32 = arith.constant -1.000000e+09 : f32
    %51 = vector.broadcast %cst_32 : f32 to vector<17x17xf32>
    %52 = arith.select %21, %51, %50 : vector<17x17xi1>, vector<17x17xf32>
    %cst_33 = arith.constant dense<0xFF800000> : vector<17xf32>
    %53 = vector.multi_reduction <maximumf>, %52, %cst_33 [1] : vector<17x17xf32> to vector<17xf32>
    %54 = vector.shape_cast %53 : vector<17xf32> to vector<17x1xf32>
    %55 = vector.broadcast %54 : vector<17x1xf32> to vector<17x17xf32>
    %56 = arith.subf %52, %55 : vector<17x17xf32>
    %57 = math.exp %56 : vector<17x17xf32>
    %cst_34 = arith.constant dense<0.000000e+00> : vector<17xf32>
    %58 = vector.multi_reduction <add>, %57, %cst_34 [1] : vector<17x17xf32> to vector<17xf32>
    %59 = vector.shape_cast %58 : vector<17xf32> to vector<17x1xf32>
    %60 = tpu.reciprocal %59 {approx = true} : vector<17x1xf32> -> vector<17x1xf32>
    %61 = vector.broadcast %60 : vector<17x1xf32> to vector<17x17xf32>
    %62 = arith.mulf %57, %61 : vector<17x17xf32>
    %63 = arith.truncf %62 : vector<17x17xf32> to vector<17x17xbf16>
    %64 = arith.truncf %47 : vector<17x16xf32> to vector<17x16xbf16>
    %cst_35 = arith.constant dense<0.000000e+00> : vector<17x16xf32>
    %65 = tpu.matmul %63, %64, %cst_35 {dimension_numbers = #tpu.dot_dimension_numbers<[1], [0], [0], [1], [0, 0, 1, 1], [], []>} : vector<17x17xbf16>, vector<17x16xbf16>, vector<17x16xf32> -> vector<17x16xf32>
    %66 = tpu.concatenate %44, %65 in 1 : vector<17x16xf32>, vector<17x16xf32> -> vector<17x32xf32>
    %67 = arith.truncf %66 : vector<17x32xf32> to vector<17x32xbf16>
    %cst_36 = arith.constant dense<0.000000e+00> : vector<17x32xf32>
    %68 = tpu.matmul %67, %1, %cst_36 {dimension_numbers = #tpu.dot_dimension_numbers<[1], [0], [0], [1], [0, 0, 1, 1], [], []>} : vector<17x32xbf16>, vector<32x32xbf16>, vector<17x32xf32> -> vector<17x32xf32>
    %69 = arith.addf %12, %68 : vector<17x32xf32>
    %cst_37 = arith.constant dense<0.000000e+00> : vector<17xf32>
    %70 = vector.multi_reduction <add>, %69, %cst_37 [1] : vector<17x32xf32> to vector<17xf32>
    %71 = vector.shape_cast %70 : vector<17xf32> to vector<17x1xf32>
    %cst_38 = arith.constant 3.200000e+01 : f32
    %72 = vector.broadcast %cst_38 : f32 to vector<17x1xf32>
    %73 = arith.divf %71, %72 : vector<17x1xf32>
    %74 = vector.broadcast %73 : vector<17x1xf32> to vector<17x32xf32>
    %75 = arith.subf %69, %74 : vector<17x32xf32>
    %76 = arith.mulf %75, %75 : vector<17x32xf32>
    %cst_39 = arith.constant dense<0.000000e+00> : vector<17xf32>
    %77 = vector.multi_reduction <add>, %76, %cst_39 [1] : vector<17x32xf32> to vector<17xf32>
    %78 = vector.shape_cast %77 : vector<17xf32> to vector<17x1xf32>
    %cst_40 = arith.constant 3.200000e+01 : f32
    %79 = vector.broadcast %cst_40 : f32 to vector<17x1xf32>
    %80 = arith.divf %78, %79 : vector<17x1xf32>
    %81 = vector.broadcast %73 : vector<17x1xf32> to vector<17x32xf32>
    %82 = arith.subf %69, %81 : vector<17x32xf32>
    %cst_41 = arith.constant 9.99999997E-7 : f32
    %83 = vector.broadcast %cst_41 : f32 to vector<17x1xf32>
    %84 = arith.addf %80, %83 : vector<17x1xf32>
    %85 = math.rsqrt %84 : vector<17x1xf32>
    %86 = vector.broadcast %85 : vector<17x1xf32> to vector<17x32xf32>
    %87 = arith.mulf %82, %86 : vector<17x32xf32>
    %88 = vector.broadcast %2 : vector<1x32xf32> to vector<17x32xf32>
    %89 = arith.mulf %87, %88 : vector<17x32xf32>
    %90 = vector.broadcast %3 : vector<1x32xf32> to vector<17x32xf32>
    %91 = arith.addf %89, %90 : vector<17x32xf32>
    %92 = arith.truncf %91 : vector<17x32xf32> to vector<17x32xbf16>
    %cst_42 = arith.constant dense<0.000000e+00> : vector<17x64xf32>
    %93 = tpu.matmul %92, %4, %cst_42 {dimension_numbers = #tpu.dot_dimension_numbers<[1], [0], [0], [1], [0, 0, 1, 1], [], []>} : vector<17x32xbf16>, vector<32x64xbf16>, vector<17x64xf32> -> vector<17x64xf32>
    %94 = vector.broadcast %5 : vector<1x64xf32> to vector<17x64xf32>
    %95 = arith.addf %93, %94 : vector<17x64xf32>
    %cst_43 = arith.constant 0.000000e+00 : f32
    %96 = vector.broadcast %cst_43 : f32 to vector<17x64xf32>
    %97 = arith.maximumf %95, %96 : vector<17x64xf32>
    %98 = arith.truncf %97 : vector<17x64xf32> to vector<17x64xbf16>
    %cst_44 = arith.constant dense<0.000000e+00> : vector<17x32xf32>
    %99 = tpu.matmul %98, %6, %cst_44 {dimension_numbers = #tpu.dot_dimension_numbers<[1], [0], [0], [1], [0, 0, 1, 1], [], []>} : vector<17x64xbf16>, vector<64x32xbf16>, vector<17x32xf32> -> vector<17x32xf32>
    %100 = vector.broadcast %7 : vector<1x32xf32> to vector<17x32xf32>
    %101 = arith.addf %99, %100 : vector<17x32xf32>
    %102 = arith.addf %91, %101 : vector<17x32xf32>
    %cst_45 = arith.constant dense<0.000000e+00> : vector<17xf32>
    %103 = vector.multi_reduction <add>, %102, %cst_45 [1] : vector<17x32xf32> to vector<17xf32>
    %104 = vector.shape_cast %103 : vector<17xf32> to vector<17x1xf32>
    %cst_46 = arith.constant 3.200000e+01 : f32
    %105 = vector.broadcast %cst_46 : f32 to vector<17x1xf32>
    %106 = arith.divf %104, %105 : vector<17x1xf32>
    %107 = vector.broadcast %106 : vector<17x1xf32> to vector<17x32xf32>
    %108 = arith.subf %102, %107 : vector<17x32xf32>
    %109 = arith.mulf %108, %108 : vector<17x32xf32>
    %cst_47 = arith.constant dense<0.000000e+00> : vector<17xf32>
    %110 = vector.multi_reduction <add>, %109, %cst_47 [1] : vector<17x32xf32> to vector<17xf32>
    %111 = vector.shape_cast %110 : vector<17xf32> to vector<17x1xf32>
    %cst_48 = arith.constant 3.200000e+01 : f32
    %112 = vector.broadcast %cst_48 : f32 to vector<17x1xf32>
    %113 = arith.divf %111, %112 : vector<17x1xf32>
    %114 = vector.broadcast %106 : vector<17x1xf32> to vector<17x32xf32>
    %115 = arith.subf %102, %114 : vector<17x32xf32>
    %cst_49 = arith.constant 9.99999997E-7 : f32
    %116 = vector.broadcast %cst_49 : f32 to vector<17x1xf32>
    %117 = arith.addf %113, %116 : vector<17x1xf32>
    %118 = math.rsqrt %117 : vector<17x1xf32>
    %119 = vector.broadcast %118 : vector<17x1xf32> to vector<17x32xf32>
    %120 = arith.mulf %115, %119 : vector<17x32xf32>
    %121 = vector.broadcast %8 : vector<1x32xf32> to vector<17x32xf32>
    %122 = arith.mulf %120, %121 : vector<17x32xf32>
    %123 = vector.broadcast %9 : vector<1x32xf32> to vector<17x32xf32>
    %124 = arith.addf %122, %123 : vector<17x32xf32>
    %125 = arith.truncf %124 : vector<17x32xf32> to vector<17x32xbf16>
    %c0_50 = arith.constant 0 : index
    %c0_51 = arith.constant 0 : index
    %c0_52 = arith.constant 0 : index
    %126 = vector.load %arg13[%c0_50, %c0_51, %c0_52] : memref<1x17x32xbf16, #tpu.memory_space<vmem>>, vector<1x17x32xbf16>
    %127 = vector.shape_cast %126 : vector<1x17x32xbf16> to vector<17x32xbf16>
    %128 = vector.shape_cast %125 : vector<17x32xbf16> to vector<1x17x32xbf16>
    tpu.vector_store %arg13[%c0_50, %c0_51, %c0_52], %128 {strides = array<i32>} : memref<1x17x32xbf16, #tpu.memory_space<vmem>>, vector<1x17x32xbf16>,
    return
  }
  func.func @transform_0(%arg0: i32) -> (i32, i32, i32) {
    %c0_i32 = arith.constant 0 : i32
    %c0_i32_0 = arith.constant 0 : i32
    %c0_i32_1 = arith.constant 0 : i32
    return %arg0, %c0_i32, %c0_i32_0 : i32, i32, i32
  }
  func.func @transform_1(%arg0: i32) -> (i32, i32, i32) {
    %c0_i32 = arith.constant 0 : i32
    %c0_i32_0 = arith.constant 0 : i32
    %c0_i32_1 = arith.constant 0 : i32
    return %arg0, %c0_i32, %c0_i32_0 : i32, i32, i32
  }
  func.func @transform_2(%arg0: i32) -> (i32, i32) {
    %c0_i32 = arith.constant 0 : i32
    %c0_i32_0 = arith.constant 0 : i32
    %c0_i32_1 = arith.constant 0 : i32
    return %c0_i32, %c0_i32_0 : i32, i32
  }
  func.func @transform_3(%arg0: i32) -> (i32, i32) {
    %c0_i32 = arith.constant 0 : i32
    %c0_i32_0 = arith.constant 0 : i32
    %c0_i32_1 = arith.constant 0 : i32
    return %c0_i32, %c0_i32_0 : i32, i32
  }
  func.func @transform_4(%arg0: i32) -> (i32, i32) {
    %c0_i32 = arith.constant 0 : i32
    %c0_i32_0 = arith.constant 0 : i32
    %c0_i32_1 = arith.constant 0 : i32
    return %c0_i32, %c0_i32_0 : i32, i32
  }
  func.func @transform_5(%arg0: i32) -> (i32, i32) {
    %c0_i32 = arith.constant 0 : i32
    %c0_i32_0 = arith.constant 0 : i32
    %c0_i32_1 = arith.constant 0 : i32
    return %c0_i32, %c0_i32_0 : i32, i32
  }
  func.func @transform_6(%arg0: i32) -> (i32, i32) {
    %c0_i32 = arith.constant 0 : i32
    %c0_i32_0 = arith.constant 0 : i32
    %c0_i32_1 = arith.constant 0 : i32
    return %c0_i32, %c0_i32_0 : i32, i32
  }
  func.func @transform_7(%arg0: i32) -> (i32, i32) {
    %c0_i32 = arith.constant 0 : i32
    %c0_i32_0 = arith.constant 0 : i32
    %c0_i32_1 = arith.constant 0 : i32
    return %c0_i32, %c0_i32_0 : i32, i32
  }
  func.func @transform_8(%arg0: i32) -> (i32, i32) {
    %c0_i32 = arith.constant 0 : i32
    %c0_i32_0 = arith.constant 0 : i32
    %c0_i32_1 = arith.constant 0 : i32
    return %c0_i32, %c0_i32_0 : i32, i32
  }
  func.func @transform_9(%arg0: i32) -> (i32, i32) {
    %c0_i32 = arith.constant 0 : i32
    %c0_i32_0 = arith.constant 0 : i32
    %c0_i32_1 = arith.constant 0 : i32
    return %c0_i32, %c0_i32_0 : i32, i32
  }
  func.func @transform_10(%arg0: i32) -> (i32, i32) {
    %c0_i32 = arith.constant 0 : i32
    %c0_i32_0 = arith.constant 0 : i32
    %c0_i32_1 = arith.constant 0 : i32
    return %c0_i32, %c0_i32_0 : i32, i32
  }
  func.func @transform_11(%arg0: i32) -> (i32, i32) {
    %c0_i32 = arith.constant 0 : i32
    %c0_i32_0 = arith.constant 0 : i32
    %c0_i32_1 = arith.constant 0 : i32
    return %c0_i32, %c0_i32_0 : i32, i32
  }
  func.func @transform_12(%arg0: i32) -> (i32, i32, i32) {
    %c0_i32 = arith.constant 0 : i32
    %c0_i32_0 = arith.constant 0 : i32
    %c0_i32_1 = arith.constant 0 : i32
    return %arg0, %c0_i32, %c0_i32_0 : i32, i32, i32
  }
}

module attributes {stable_mosaic.version = 11 : i64} {
  func.func @_loss_kernel(%arg0: i32, %arg1: i32, %arg2: memref<16x32xbf16, #tpu.memory_space<vmem>>, %arg3: memref<13x32xbf16, #tpu.memory_space<vmem>>, %arg4: memref<16x1xi32, #tpu.memory_space<vmem>>, %arg5: memref<16x1xf32, #tpu.memory_space<vmem>>, %arg6: memref<2x32xf32, #tpu.memory_space<vmem>>, %arg7: memref<2x32xf32, #tpu.memory_space<vmem>>, %arg8: memref<1x128xf32, #tpu.memory_space<vmem>>, %arg9: memref<16x1xf32, #tpu.memory_space<vmem>>, %arg10: memref<16x1xf32, #tpu.memory_space<vmem>>, %arg11: memref<16x1xf32, #tpu.memory_space<vmem>>, %arg12: memref<16x1xf32, #tpu.memory_space<vmem>>, %arg13: memref<16x1xi32, #tpu.memory_space<vmem>>, %arg14: memref<1x1xf32, #tpu.memory_space<vmem>>, %arg15: memref<1x1xf32, #tpu.memory_space<vmem>>, %arg16: memref<1x1xf32, #tpu.memory_space<vmem>>) attributes {dimension_semantics = [#tpu.dimension_semantics<arbitrary>, #tpu.dimension_semantics<arbitrary>], iteration_bounds = array<i64: 2, 1>, scalar_prefetch = 0 : i64, scratch_operands = 8 : i64, tpu.core_type = #tpu.core_type<tc>, window_params = [{transform_indices = @transform_0, window_bounds = array<i64: 16, 32>}, {transform_indices = @transform_1, window_bounds = array<i64: 13, 32>}, {transform_indices = @transform_2, window_bounds = array<i64: 16, 1>}, {transform_indices = @transform_3, window_bounds = array<i64: 16, 1>}, {pipeline_mode = #tpu.pipeline_mode<synchronous>, transform_indices = @transform_4, window_bounds = array<i64: 2, 32>}, {pipeline_mode = #tpu.pipeline_mode<synchronous>, transform_indices = @transform_5, window_bounds = array<i64: 2, 32>}, {pipeline_mode = #tpu.pipeline_mode<synchronous>, transform_indices = @transform_6, window_bounds = array<i64: 1, 128>}]} {
    %c0_i32 = arith.constant 0 : i32
    %0 = arith.cmpi eq, %arg0, %c0_i32 : i32
    %c0_i32_0 = arith.constant 0 : i32
    %1 = arith.cmpi eq, %arg1, %c0_i32_0 : i32
    %2 = arith.andi %0, %1 : i1
    %3 = arith.extui %2 : i1 to i32
    %c0_i32_1 = arith.constant 0 : i32
    %4 = arith.cmpi ne, %3, %c0_i32_1 : i32
    scf.if %4 {
      %cst_43 = arith.constant 0.000000e+00 : f32
      %64 = vector.broadcast %cst_43 : f32 to vector<1x1xf32>
      %c0_44 = arith.constant 0 : index
      %c0_45 = arith.constant 0 : index
      %65 = vector.load %arg14[%c0_44, %c0_45] : memref<1x1xf32, #tpu.memory_space<vmem>>, vector<1x1xf32>
      tpu.vector_store %arg14[%c0_44, %c0_45], %64 {strides = array<i32>} : memref<1x1xf32, #tpu.memory_space<vmem>>, vector<1x1xf32>,
      %cst_46 = arith.constant 0.000000e+00 : f32
      %66 = vector.broadcast %cst_46 : f32 to vector<1x1xf32>
      %c0_47 = arith.constant 0 : index
      %c0_48 = arith.constant 0 : index
      %67 = vector.load %arg15[%c0_47, %c0_48] : memref<1x1xf32, #tpu.memory_space<vmem>>, vector<1x1xf32>
      tpu.vector_store %arg15[%c0_47, %c0_48], %66 {strides = array<i32>} : memref<1x1xf32, #tpu.memory_space<vmem>>, vector<1x1xf32>,
      %cst_49 = arith.constant 0.000000e+00 : f32
      %68 = vector.broadcast %cst_49 : f32 to vector<1x1xf32>
      %c0_50 = arith.constant 0 : index
      %c0_51 = arith.constant 0 : index
      %69 = vector.load %arg16[%c0_50, %c0_51] : memref<1x1xf32, #tpu.memory_space<vmem>>, vector<1x1xf32>
      tpu.vector_store %arg16[%c0_50, %c0_51], %68 {strides = array<i32>} : memref<1x1xf32, #tpu.memory_space<vmem>>, vector<1x1xf32>,
    } else {
    }
    %c0_i32_2 = arith.constant 0 : i32
    %5 = arith.cmpi eq, %arg1, %c0_i32_2 : i32
    %6 = arith.extui %5 : i1 to i32
    %c0_i32_3 = arith.constant 0 : i32
    %7 = arith.cmpi ne, %6, %c0_i32_3 : i32
    scf.if %7 {
      %cst_43 = arith.constant 0xFF800000 : f32
      %64 = vector.broadcast %cst_43 : f32 to vector<16x1xf32>
      %c0_44 = arith.constant 0 : index
      %c0_45 = arith.constant 0 : index
      %65 = vector.load %arg9[%c0_44, %c0_45] : memref<16x1xf32, #tpu.memory_space<vmem>>, vector<16x1xf32>
      tpu.vector_store %arg9[%c0_44, %c0_45], %64 {strides = array<i32>} : memref<16x1xf32, #tpu.memory_space<vmem>>, vector<16x1xf32>,
      %cst_46 = arith.constant 0.000000e+00 : f32
      %66 = vector.broadcast %cst_46 : f32 to vector<16x1xf32>
      %c0_47 = arith.constant 0 : index
      %c0_48 = arith.constant 0 : index
      %67 = vector.load %arg10[%c0_47, %c0_48] : memref<16x1xf32, #tpu.memory_space<vmem>>, vector<16x1xf32>
      tpu.vector_store %arg10[%c0_47, %c0_48], %66 {strides = array<i32>} : memref<16x1xf32, #tpu.memory_space<vmem>>, vector<16x1xf32>,
      %cst_49 = arith.constant 0.000000e+00 : f32
      %68 = vector.broadcast %cst_49 : f32 to vector<16x1xf32>
      %c0_50 = arith.constant 0 : index
      %c0_51 = arith.constant 0 : index
      %69 = vector.load %arg11[%c0_50, %c0_51] : memref<16x1xf32, #tpu.memory_space<vmem>>, vector<16x1xf32>
      tpu.vector_store %arg11[%c0_50, %c0_51], %68 {strides = array<i32>} : memref<16x1xf32, #tpu.memory_space<vmem>>, vector<16x1xf32>,
      %cst_52 = arith.constant 0xFF800000 : f32
      %70 = vector.broadcast %cst_52 : f32 to vector<16x1xf32>
      %c0_53 = arith.constant 0 : index
      %c0_54 = arith.constant 0 : index
      %71 = vector.load %arg12[%c0_53, %c0_54] : memref<16x1xf32, #tpu.memory_space<vmem>>, vector<16x1xf32>
      tpu.vector_store %arg12[%c0_53, %c0_54], %70 {strides = array<i32>} : memref<16x1xf32, #tpu.memory_space<vmem>>, vector<16x1xf32>,
      %c13_i32_55 = arith.constant 13 : i32
      %72 = vector.broadcast %c13_i32_55 : i32 to vector<16x1xi32>
      %c0_56 = arith.constant 0 : index
      %c0_57 = arith.constant 0 : index
      %73 = vector.load %arg13[%c0_56, %c0_57] : memref<16x1xi32, #tpu.memory_space<vmem>>, vector<16x1xi32>
      tpu.vector_store %arg13[%c0_56, %c0_57], %72 {strides = array<i32>} : memref<16x1xi32, #tpu.memory_space<vmem>>, vector<16x1xi32>,
    } else {
    }
    %c0 = arith.constant 0 : index
    %c0_4 = arith.constant 0 : index
    %8 = vector.load %arg2[%c0, %c0_4] : memref<16x32xbf16, #tpu.memory_space<vmem>>, vector<16x32xbf16>
    %c0_5 = arith.constant 0 : index
    %c0_6 = arith.constant 0 : index
    %9 = vector.load %arg3[%c0_5, %c0_6] : memref<13x32xbf16, #tpu.memory_space<vmem>>, vector<13x32xbf16>
    %cst = arith.constant dense<0.000000e+00> : vector<16x13xf32>
    %10 = tpu.matmul %8, %9, %cst {dimension_numbers = #tpu.dot_dimension_numbers<[1], [1], [0], [0], [0, 0, 1, 0], [], []>} : vector<16x32xbf16>, vector<13x32xbf16>, vector<16x13xf32> -> vector<16x13xf32>
    %c13_i32 = arith.constant 13 : i32
    %11 = arith.muli %arg1, %c13_i32 : i32
    %12 = tpu.iota {dimensions = array<i32: 1>} : vector<16x13xi32>
    %13 = vector.broadcast %11 : i32 to vector<16x13xi32>
    %14 = arith.addi %13, %12 : vector<16x13xi32>
    %c0_7 = arith.constant 0 : index
    %c0_8 = arith.constant 0 : index
    %15 = vector.load %arg4[%c0_7, %c0_8] : memref<16x1xi32, #tpu.memory_space<vmem>>, vector<16x1xi32>
    %c0_9 = arith.constant 0 : index
    %c0_10 = arith.constant 0 : index
    %16 = vector.load %arg11[%c0_9, %c0_10] : memref<16x1xf32, #tpu.memory_space<vmem>>, vector<16x1xf32>
    %17 = vector.broadcast %15 : vector<16x1xi32> to vector<16x13xi32>
    %18 = arith.cmpi eq, %14, %17 : vector<16x13xi32>
    %cst_11 = arith.constant 0.000000e+00 : f32
    %19 = vector.broadcast %cst_11 : f32 to vector<16x13xf32>
    %20 = arith.select %18, %10, %19 : vector<16x13xi1>, vector<16x13xf32>
    %cst_12 = arith.constant dense<0.000000e+00> : vector<16xf32>
    %21 = vector.multi_reduction <add>, %20, %cst_12 [1] : vector<16x13xf32> to vector<16xf32>
    %22 = vector.shape_cast %21 : vector<16xf32> to vector<16x1xf32>
    %23 = arith.addf %16, %22 : vector<16x1xf32>
    %c0_13 = arith.constant 0 : index
    %c0_14 = arith.constant 0 : index
    %24 = vector.load %arg11[%c0_13, %c0_14] : memref<16x1xf32, #tpu.memory_space<vmem>>, vector<16x1xf32>
    tpu.vector_store %arg11[%c0_13, %c0_14], %23 {strides = array<i32>} : memref<16x1xf32, #tpu.memory_space<vmem>>, vector<16x1xf32>,
    %cst_15 = arith.constant dense<0xFF800000> : vector<16xf32>
    %25 = vector.multi_reduction <maximumf>, %10, %cst_15 [1] : vector<16x13xf32> to vector<16xf32>
    %26 = vector.shape_cast %25 : vector<16xf32> to vector<16x1xf32>
    %c0_16 = arith.constant 0 : index
    %c0_17 = arith.constant 0 : index
    %27 = vector.load %arg9[%c0_16, %c0_17] : memref<16x1xf32, #tpu.memory_space<vmem>>, vector<16x1xf32>
    %28 = arith.maximumf %27, %26 : vector<16x1xf32>
    %c0_18 = arith.constant 0 : index
    %c0_19 = arith.constant 0 : index
    %29 = vector.load %arg10[%c0_18, %c0_19] : memref<16x1xf32, #tpu.memory_space<vmem>>, vector<16x1xf32>
    %c0_20 = arith.constant 0 : index
    %c0_21 = arith.constant 0 : index
    %30 = vector.load %arg9[%c0_20, %c0_21] : memref<16x1xf32, #tpu.memory_space<vmem>>, vector<16x1xf32>
    %31 = arith.subf %30, %28 : vector<16x1xf32>
    %32 = math.exp %31 : vector<16x1xf32>
    %33 = arith.mulf %29, %32 : vector<16x1xf32>
    %34 = vector.broadcast %28 : vector<16x1xf32> to vector<16x13xf32>
    %35 = arith.subf %10, %34 : vector<16x13xf32>
    %36 = math.exp %35 : vector<16x13xf32>
    %cst_22 = arith.constant dense<0.000000e+00> : vector<16xf32>
    %37 = vector.multi_reduction <add>, %36, %cst_22 [1] : vector<16x13xf32> to vector<16xf32>
    %38 = vector.shape_cast %37 : vector<16xf32> to vector<16x1xf32>
    %39 = arith.addf %33, %38 : vector<16x1xf32>
    %c0_23 = arith.constant 0 : index
    %c0_24 = arith.constant 0 : index
    %40 = vector.load %arg10[%c0_23, %c0_24] : memref<16x1xf32, #tpu.memory_space<vmem>>, vector<16x1xf32>
    tpu.vector_store %arg10[%c0_23, %c0_24], %39 {strides = array<i32>} : memref<16x1xf32, #tpu.memory_space<vmem>>, vector<16x1xf32>,
    %c0_25 = arith.constant 0 : index
    %c0_26 = arith.constant 0 : index
    %41 = vector.load %arg9[%c0_25, %c0_26] : memref<16x1xf32, #tpu.memory_space<vmem>>, vector<16x1xf32>
    tpu.vector_store %arg9[%c0_25, %c0_26], %28 {strides = array<i32>} : memref<16x1xf32, #tpu.memory_space<vmem>>, vector<16x1xf32>,
    %42 = vector.broadcast %26 : vector<16x1xf32> to vector<16x13xf32>
    %43 = arith.cmpf oge, %10, %42 : vector<16x13xf32>
    %c13_i32_27 = arith.constant 13 : i32
    %44 = vector.broadcast %c13_i32_27 : i32 to vector<16x13xi32>
    %45 = arith.select %43, %14, %44 : vector<16x13xi1>, vector<16x13xi32>
    %cst_28 = arith.constant dense<2147483647> : vector<16xi32>
    %46 = vector.multi_reduction <minsi>, %45, %cst_28 [1] : vector<16x13xi32> to vector<16xi32>
    %47 = vector.shape_cast %46 : vector<16xi32> to vector<16x1xi32>
    %c0_29 = arith.constant 0 : index
    %c0_30 = arith.constant 0 : index
    %48 = vector.load %arg12[%c0_29, %c0_30] : memref<16x1xf32, #tpu.memory_space<vmem>>, vector<16x1xf32>
    %49 = arith.cmpf ogt, %26, %48 : vector<16x1xf32>
    %c0_31 = arith.constant 0 : index
    %c0_32 = arith.constant 0 : index
    %50 = vector.load %arg12[%c0_31, %c0_32] : memref<16x1xf32, #tpu.memory_space<vmem>>, vector<16x1xf32>
    %51 = arith.select %49, %26, %50 : vector<16x1xi1>, vector<16x1xf32>
    %c0_33 = arith.constant 0 : index
    %c0_34 = arith.constant 0 : index
    %52 = vector.load %arg12[%c0_33, %c0_34] : memref<16x1xf32, #tpu.memory_space<vmem>>, vector<16x1xf32>
    tpu.vector_store %arg12[%c0_33, %c0_34], %51 {strides = array<i32>} : memref<16x1xf32, #tpu.memory_space<vmem>>, vector<16x1xf32>,
    %c0_35 = arith.constant 0 : index
    %c0_36 = arith.constant 0 : index
    %53 = vector.load %arg13[%c0_35, %c0_36] : memref<16x1xi32, #tpu.memory_space<vmem>>, vector<16x1xi32>
    %54 = arith.select %49, %47, %53 : vector<16x1xi1>, vector<16x1xi32>
    %c0_37 = arith.constant 0 : index
    %c0_38 = arith.constant 0 : index
    %55 = vector.load %arg13[%c0_37, %c0_38] : memref<16x1xi32, #tpu.memory_space<vmem>>, vector<16x1xi32>
    tpu.vector_store %arg13[%c0_37, %c0_38], %54 {strides = array<i32>} : memref<16x1xi32, #tpu.memory_space<vmem>>, vector<16x1xi32>,
    %c0_i32_39 = arith.constant 0 : i32
    %56 = arith.cmpi eq, %arg1, %c0_i32_39 : i32
    %57 = arith.extui %56 : i1 to i32
    %c0_i32_40 = arith.constant 0 : i32
    %58 = arith.cmpi ne, %57, %c0_i32_40 : i32
    scf.if %58 {
      %c0_43 = arith.constant 0 : index
      %c0_44 = arith.constant 0 : index
      %64 = vector.load %arg5[%c0_43, %c0_44] : memref<16x1xf32, #tpu.memory_space<vmem>>, vector<16x1xf32>
      %c0_45 = arith.constant 0 : index
      %c0_46 = arith.constant 0 : index
      %65 = vector.load %arg10[%c0_45, %c0_46] : memref<16x1xf32, #tpu.memory_space<vmem>>, vector<16x1xf32>
      %66 = math.log %65 : vector<16x1xf32>
      %c0_47 = arith.constant 0 : index
      %c0_48 = arith.constant 0 : index
      %67 = vector.load %arg9[%c0_47, %c0_48] : memref<16x1xf32, #tpu.memory_space<vmem>>, vector<16x1xf32>
      %68 = arith.addf %66, %67 : vector<16x1xf32>
      %c0_49 = arith.constant 0 : index
      %c0_50 = arith.constant 0 : index
      %69 = vector.load %arg11[%c0_49, %c0_50] : memref<16x1xf32, #tpu.memory_space<vmem>>, vector<16x1xf32>
      %70 = arith.subf %68, %69 : vector<16x1xf32>
      %c0_51 = arith.constant 0 : index
      %c0_52 = arith.constant 0 : index
      %71 = vector.load %arg14[%c0_51, %c0_52] : memref<1x1xf32, #tpu.memory_space<vmem>>, vector<1x1xf32>
      %72 = arith.mulf %70, %64 : vector<16x1xf32>
      %cst_53 = arith.constant dense<0.000000e+00> : vector<1xf32>
      %73 = vector.multi_reduction <add>, %72, %cst_53 [0] : vector<16x1xf32> to vector<1xf32>
      %74 = vector.shape_cast %73 : vector<1xf32> to vector<1x1xf32>
      %75 = arith.addf %71, %74 : vector<1x1xf32>
      %c0_54 = arith.constant 0 : index
      %c0_55 = arith.constant 0 : index
      %76 = vector.load %arg14[%c0_54, %c0_55] : memref<1x1xf32, #tpu.memory_space<vmem>>, vector<1x1xf32>
      tpu.vector_store %arg14[%c0_54, %c0_55], %75 {strides = array<i32>} : memref<1x1xf32, #tpu.memory_space<vmem>>, vector<1x1xf32>,
      %c0_56 = arith.constant 0 : index
      %c0_57 = arith.constant 0 : index
      %77 = vector.load %arg13[%c0_56, %c0_57] : memref<16x1xi32, #tpu.memory_space<vmem>>, vector<16x1xi32>
      %78 = arith.cmpi eq, %77, %15 : vector<16x1xi32>
      %79 = arith.extui %78 : vector<16x1xi1> to vector<16x1xi32>
      %80 = arith.sitofp %79 : vector<16x1xi32> to vector<16x1xf32>
      %81 = arith.mulf %80, %64 : vector<16x1xf32>
      %c0_58 = arith.constant 0 : index
      %c0_59 = arith.constant 0 : index
      %82 = vector.load %arg15[%c0_58, %c0_59] : memref<1x1xf32, #tpu.memory_space<vmem>>, vector<1x1xf32>
      %cst_60 = arith.constant dense<0.000000e+00> : vector<1xf32>
      %83 = vector.multi_reduction <add>, %81, %cst_60 [0] : vector<16x1xf32> to vector<1xf32>
      %84 = vector.shape_cast %83 : vector<1xf32> to vector<1x1xf32>
      %85 = arith.addf %82, %84 : vector<1x1xf32>
      %c0_61 = arith.constant 0 : index
      %c0_62 = arith.constant 0 : index
      %86 = vector.load %arg15[%c0_61, %c0_62] : memref<1x1xf32, #tpu.memory_space<vmem>>, vector<1x1xf32>
      tpu.vector_store %arg15[%c0_61, %c0_62], %85 {strides = array<i32>} : memref<1x1xf32, #tpu.memory_space<vmem>>, vector<1x1xf32>,
      %c0_63 = arith.constant 0 : index
      %c0_64 = arith.constant 0 : index
      %87 = vector.load %arg16[%c0_63, %c0_64] : memref<1x1xf32, #tpu.memory_space<vmem>>, vector<1x1xf32>
      %cst_65 = arith.constant dense<0.000000e+00> : vector<1xf32>
      %88 = vector.multi_reduction <add>, %64, %cst_65 [0] : vector<16x1xf32> to vector<1xf32>
      %89 = vector.shape_cast %88 : vector<1xf32> to vector<1x1xf32>
      %90 = arith.addf %87, %89 : vector<1x1xf32>
      %c0_66 = arith.constant 0 : index
      %c0_67 = arith.constant 0 : index
      %91 = vector.load %arg16[%c0_66, %c0_67] : memref<1x1xf32, #tpu.memory_space<vmem>>, vector<1x1xf32>
      tpu.vector_store %arg16[%c0_66, %c0_67], %90 {strides = array<i32>} : memref<1x1xf32, #tpu.memory_space<vmem>>, vector<1x1xf32>,
    } else {
    }
    %c1_i32 = arith.constant 1 : i32
    %59 = arith.cmpi eq, %arg0, %c1_i32 : i32
    %c0_i32_41 = arith.constant 0 : i32
    %60 = arith.cmpi eq, %arg1, %c0_i32_41 : i32
    %61 = arith.andi %59, %60 : i1
    %62 = arith.extui %61 : i1 to i32
    %c0_i32_42 = arith.constant 0 : i32
    %63 = arith.cmpi ne, %62, %c0_i32_42 : i32
    scf.if %63 {
      %c0_43 = arith.constant 0 : index
      %c0_44 = arith.constant 0 : index
      %64 = vector.load %arg16[%c0_43, %c0_44] : memref<1x1xf32, #tpu.memory_space<vmem>>, vector<1x1xf32>
      %cst_45 = arith.constant 1.000000e+00 : f32
      %65 = vector.broadcast %cst_45 : f32 to vector<1x1xf32>
      %66 = arith.maximumf %64, %65 : vector<1x1xf32>
      %67 = tpu.reciprocal %66 {approx = true} : vector<1x1xf32> -> vector<1x1xf32>
      %c0_46 = arith.constant 0 : index
      %c0_47 = arith.constant 0 : index
      %68 = vector.load %arg14[%c0_46, %c0_47] : memref<1x1xf32, #tpu.memory_space<vmem>>, vector<1x1xf32>
      %69 = arith.mulf %68, %67 : vector<1x1xf32>
      %c0_48 = arith.constant 0 : index
      %c0_49 = arith.constant 0 : index
      %70 = vector.load %arg15[%c0_48, %c0_49] : memref<1x1xf32, #tpu.memory_space<vmem>>, vector<1x1xf32>
      %71 = arith.mulf %70, %67 : vector<1x1xf32>
      %c0_50 = arith.constant 0 : index
      %c0_51 = arith.constant 0 : index
      %72 = vector.load %arg6[%c0_50, %c0_51] : memref<2x32xf32, #tpu.memory_space<vmem>>, vector<2x32xf32>
      %c0_52 = arith.constant 0 : index
      %c0_53 = arith.constant 0 : index
      %73 = vector.load %arg7[%c0_52, %c0_53] : memref<2x32xf32, #tpu.memory_space<vmem>>, vector<2x32xf32>
      %cst_54 = arith.constant 1.000000e+00 : f32
      %74 = vector.broadcast %cst_54 : f32 to vector<2x32xf32>
      %75 = arith.addf %74, %73 : vector<2x32xf32>
      %76 = arith.mulf %72, %72 : vector<2x32xf32>
      %77 = arith.subf %75, %76 : vector<2x32xf32>
      %78 = math.exp %73 : vector<2x32xf32>
      %79 = arith.subf %77, %78 : vector<2x32xf32>
      %cst_55 = arith.constant dense<0.000000e+00> : vector<2xf32>
      %80 = vector.multi_reduction <add>, %79, %cst_55 [1] : vector<2x32xf32> to vector<2xf32>
      %81 = vector.shape_cast %80 : vector<2xf32> to vector<2x1xf32>
      %cst_56 = arith.constant -5.000000e-01 : f32
      %82 = vector.broadcast %cst_56 : f32 to vector<2x1xf32>
      %83 = arith.mulf %82, %81 : vector<2x1xf32>
      %cst_57 = arith.constant dense<0.000000e+00> : vector<1xf32>
      %84 = vector.multi_reduction <add>, %83, %cst_57 [0] : vector<2x1xf32> to vector<1xf32>
      %85 = vector.shape_cast %84 : vector<1xf32> to vector<1x1xf32>
      %cst_58 = arith.constant 5.000000e-01 : f32
      %86 = vector.broadcast %cst_58 : f32 to vector<1x1xf32>
      %87 = arith.mulf %85, %86 : vector<1x1xf32>
      %cst_59 = arith.constant 1.000000e-03 : f32
      %88 = vector.broadcast %cst_59 : f32 to vector<1x1xf32>
      %89 = arith.mulf %87, %88 : vector<1x1xf32>
      %90 = arith.addf %69, %89 : vector<1x1xf32>
      %91 = tpu.iota {dimensions = array<i32: 1>} : vector<1x128xi32>
      %c0_i32_60 = arith.constant 0 : i32
      %92 = vector.broadcast %c0_i32_60 : i32 to vector<1x128xi32>
      %93 = arith.cmpi eq, %91, %92 : vector<1x128xi32>
      %c1_i32_61 = arith.constant 1 : i32
      %94 = vector.broadcast %c1_i32_61 : i32 to vector<1x128xi32>
      %95 = arith.cmpi eq, %91, %94 : vector<1x128xi32>
      %c2_i32 = arith.constant 2 : i32
      %96 = vector.broadcast %c2_i32 : i32 to vector<1x128xi32>
      %97 = arith.cmpi eq, %91, %96 : vector<1x128xi32>
      %98 = vector.shape_cast %87 : vector<1x1xf32> to vector<1x1xf32>
      %99 = vector.broadcast %98 : vector<1x1xf32> to vector<1x128xf32>
      %100 = vector.shape_cast %71 : vector<1x1xf32> to vector<1x1xf32>
      %101 = vector.broadcast %100 : vector<1x1xf32> to vector<1x128xf32>
      %102 = arith.select %97, %99, %101 : vector<1x128xi1>, vector<1x128xf32>
      %103 = vector.shape_cast %69 : vector<1x1xf32> to vector<1x1xf32>
      %104 = vector.broadcast %103 : vector<1x1xf32> to vector<1x128xf32>
      %105 = arith.select %95, %104, %102 : vector<1x128xi1>, vector<1x128xf32>
      %106 = vector.shape_cast %90 : vector<1x1xf32> to vector<1x1xf32>
      %107 = vector.broadcast %106 : vector<1x1xf32> to vector<1x128xf32>
      %108 = arith.select %93, %107, %105 : vector<1x128xi1>, vector<1x128xf32>
      %c0_62 = arith.constant 0 : index
      %c0_63 = arith.constant 0 : index
      %109 = vector.load %arg8[%c0_62, %c0_63] : memref<1x128xf32, #tpu.memory_space<vmem>>, vector<1x128xf32>
      tpu.vector_store %arg8[%c0_62, %c0_63], %108 {strides = array<i32>} : memref<1x128xf32, #tpu.memory_space<vmem>>, vector<1x128xf32>,
    } else {
    }
    return
  }
  func.func @transform_0(%arg0: i32, %arg1: i32) -> (i32, i32) {
    %c0_i32 = arith.constant 0 : i32
    %c0_i32_0 = arith.constant 0 : i32
    return %arg0, %c0_i32 : i32, i32
  }
  func.func @transform_1(%arg0: i32, %arg1: i32) -> (i32, i32) {
    %c0_i32 = arith.constant 0 : i32
    %c0_i32_0 = arith.constant 0 : i32
    return %arg1, %c0_i32 : i32, i32
  }
  func.func @transform_2(%arg0: i32, %arg1: i32) -> (i32, i32) {
    %c0_i32 = arith.constant 0 : i32
    %c0_i32_0 = arith.constant 0 : i32
    return %arg0, %c0_i32 : i32, i32
  }
  func.func @transform_3(%arg0: i32, %arg1: i32) -> (i32, i32) {
    %c0_i32 = arith.constant 0 : i32
    %c0_i32_0 = arith.constant 0 : i32
    return %arg0, %c0_i32 : i32, i32
  }
  func.func @transform_4(%arg0: i32, %arg1: i32) -> (i32, i32) {
    %c0_i32 = arith.constant 0 : i32
    %c0_i32_0 = arith.constant 0 : i32
    %c0_i32_1 = arith.constant 0 : i32
    return %c0_i32, %c0_i32_0 : i32, i32
  }
  func.func @transform_5(%arg0: i32, %arg1: i32) -> (i32, i32) {
    %c0_i32 = arith.constant 0 : i32
    %c0_i32_0 = arith.constant 0 : i32
    %c0_i32_1 = arith.constant 0 : i32
    return %c0_i32, %c0_i32_0 : i32, i32
  }
  func.func @transform_6(%arg0: i32, %arg1: i32) -> (i32, i32) {
    %c0_i32 = arith.constant 0 : i32
    %c0_i32_0 = arith.constant 0 : i32
    %c0_i32_1 = arith.constant 0 : i32
    return %c0_i32, %c0_i32_0 : i32, i32
  }
}

</mosaic_0001>

<llo_original>
// kernel: seqvae_loss_forward.5
$region0: #{seqvae_loss_forward.5}
  #allocation0 [shape = 'u32[]', space=smem, size = 0x4, offset = 0x4, fixed_abs, tag = 'smem constant byte address 0x4 - core index']
  #allocation1 [shape = 'u32[144,128]{1,0:T(1,128)}', space=vmem, size = 0x12000, scoped, tag = 'internal scratch']
  %s0 = inlined_call_operand.vmem [shape: bf16[2,16,32], index: 0, kind: input, shape index: {}]
  %s1 = inlined_call_operand.vmem [shape: f32[2,1,16], index: 1, kind: input, shape index: {}]
  %s2 = inlined_call_operand.vmem [shape: f32[1,32], index: 2, kind: input, shape index: {}]
  %s3 = inlined_call_operand.vmem [shape: f32[1,32], index: 3, kind: input, shape index: {}]
  %s4 = inlined_call_operand.vmem [shape: bf16[32,96], index: 4, kind: input, shape index: {}]
  %s5 = inlined_call_operand.vmem [shape: bf16[32,32], index: 5, kind: input, shape index: {}]
  %s6 = inlined_call_operand.vmem [shape: f32[1,32], index: 6, kind: input, shape index: {}]
  %s7 = inlined_call_operand.vmem [shape: f32[1,32], index: 7, kind: input, shape index: {}]
  %s8 = inlined_call_operand.vmem [shape: bf16[32,64], index: 8, kind: input, shape index: {}]
  %s9 = inlined_call_operand.vmem [shape: f32[1,64], index: 9, kind: input, shape index: {}]
  %s10 = inlined_call_operand.vmem [shape: bf16[64,32], index: 10, kind: input, shape index: {}]
  %s11 = inlined_call_operand.vmem [shape: f32[1,32], index: 11, kind: input, shape index: {}]
  %s12 = inlined_call_operand.vmem [shape: f32[1,32], index: 12, kind: input, shape index: {}]
  %s13 = inlined_call_operand.vmem [shape: f32[1,32], index: 13, kind: input, shape index: {}]
  %s14 = inlined_call_operand.vmem [shape: bf16[2,16,32], index: 14, kind: output, shape index: {}]
  %s15 = sld [smem:[#allocation0]]
  $region89: #{seqvae_loss_forward.5} parent=0
    _
  %s17 = ssub.s32 1, %s15
  %s18 = scalar_select 0, %s17, %s15
  loop: start=0, step=1, limit=4
  $region2: #{seqvae_loss_forward.5} parent=0 // loop_pre_header
    _
  $region3: #{seqvae_loss_forward.5} parent=0 // loop_header
    %s20 = sphi 0, %s24
    %p21 = scmp.ge.s32.totalorder %s20, 4
    %s30 = sphi 0, %s32
    %s33 = sphi 0, %s30
    %s34 = sphi 0, %s33
    %s50 = sphi 0, %s34
    %s56 = sphi 0, %s58
    %s59 = sphi 0, %s56
    %s60 = sphi 0, %s59
    %s76 = sphi 0, %s60
    %s80 = sphi 0, %s80
    %s82 = sphi 0, %s80
    %s83 = sphi 0, %s82
    %s97 = sphi 0, %s83
    %s101 = sphi 0, %s101
    %s103 = sphi 0, %s101
    %s104 = sphi 0, %s103
    %s118 = sphi 0, %s104
    %s122 = sphi 0, %s122
    %s124 = sphi 0, %s122
    %s125 = sphi 0, %s124
    %s139 = sphi 0, %s125
    %s143 = sphi 0, %s143
    %s145 = sphi 0, %s143
    %s146 = sphi 0, %s145
    %s160 = sphi 0, %s146
    %s164 = sphi 0, %s164
    %s166 = sphi 0, %s164
    %s167 = sphi 0, %s166
    %s181 = sphi 0, %s167
    %s185 = sphi 0, %s185
    %s187 = sphi 0, %s185
    %s188 = sphi 0, %s187
    %s202 = sphi 0, %s188
    %s206 = sphi 0, %s206
    %s208 = sphi 0, %s206
    %s209 = sphi 0, %s208
    %s223 = sphi 0, %s209
    %s227 = sphi 0, %s227
    %s229 = sphi 0, %s227
    %s230 = sphi 0, %s229
    %s244 = sphi 0, %s230
    %s248 = sphi 0, %s248
    %s250 = sphi 0, %s248
    %s251 = sphi 0, %s250
    %s265 = sphi 0, %s251
    %s269 = sphi 0, %s269
    %s271 = sphi 0, %s269
    %s272 = sphi 0, %s271
    %s286 = sphi 0, %s272
    %s290 = sphi 0, %s290
    %s292 = sphi 0, %s290
    %s293 = sphi 0, %s292
    %s307 = sphi 0, %s293
    %s311 = sphi 0, %s311
    %s313 = sphi 0, %s311
    %s314 = sphi 0, %s313
    %s328 = sphi 0, %s314
    %s334 = sphi 0, %s336
    %s337 = sphi 0, %s334
    %s338 = sphi 0, %s337
    %s354 = sphi 0, %s338
  $region4: #{seqvae_loss_forward.5} parent=0 // loop_header_branch
    %23 = sbr.rel (%p21) target = $region8
  $region5: #{seqvae_loss_forward.5} parent=0 // loop_body
    %s25 = ssub.s32 %s20, 1
    %s26 = ssub.s32 %s20, 2
    %s27 = sadd.s32 %s20, 1
    %s28 = ssub.s32 %s20, %s27
    %p29 = scmp.eq.s32.totalorder %s28, 0
    %s31 = sadd.s32 %s30, 1
    %s32 = scalar_select %p29, %s30, %s31
    %p35 = pneg %p29
    %p36 = scmp.eq.s32.totalorder %s20, 1
    %p37 = por %p35, %p36
    %p38 = scmp.ne.s32.totalorder %s30, %s33
    %p39 = scmp.eq.s32.totalorder %s20, 0
    %p40 = por %p38, %p39
    %p41 = scmp.ne.s32.totalorder %s30, %s33
    %p42 = scmp.eq.s32.totalorder %s25, 1
    %p43 = por %p41, %p42
    %p44 = scmp.ne.s32.totalorder %s33, %s34
    %p45 = scmp.eq.s32.totalorder %s25, 0
    %p46 = por %p44, %p45
    %p47 = scmp.ne.s32.totalorder %s33, %s34
    %p48 = scmp.eq.s32.totalorder %s26, 1
    %p49 = por %p47, %p48
    %p51 = scmp.ne.s32.totalorder %s34, %s50
    %p52 = scmp.eq.s32.totalorder %s26, 0
    %p53 = por %p51, %p52
    %s54 = ssub.s32 %s20, %s27
    %p55 = scmp.eq.s32.totalorder %s54, 0
    %s57 = sadd.s32 %s56, 1
    %s58 = scalar_select %p55, %s56, %s57
    %p61 = pneg %p55
    %p62 = scmp.eq.s32.totalorder %s20, 1
    %p63 = por %p61, %p62
    %p64 = scmp.ne.s32.totalorder %s56, %s59
    %p65 = scmp.eq.s32.totalorder %s20, 0
    %p66 = por %p64, %p65
    %p67 = scmp.ne.s32.totalorder %s56, %s59
    %p68 = scmp.eq.s32.totalorder %s25, 1
    %p69 = por %p67, %p68
    %p70 = scmp.ne.s32.totalorder %s59, %s60
    %p71 = scmp.eq.s32.totalorder %s25, 0
    %p72 = por %p70, %p71
    %p73 = scmp.ne.s32.totalorder %s59, %s60
    %p74 = scmp.eq.s32.totalorder %s26, 1
    %p75 = por %p73, %p74
    %p77 = scmp.ne.s32.totalorder %s60, %s76
    %p78 = scmp.eq.s32.totalorder %s26, 0
    %p79 = por %p77, %p78
    %s81 = sadd.s32 %s80, 1
    %p84 = scmp.eq.s32.totalorder %s20, 1
    %p85 = scmp.ne.s32.totalorder %s80, %s82
    %p86 = scmp.eq.s32.totalorder %s20, 0
    %p87 = por %p85, %p86
    %p88 = scmp.ne.s32.totalorder %s80, %s82
    %p89 = scmp.eq.s32.totalorder %s25, 1
    %p90 = por %p88, %p89
    %p91 = scmp.ne.s32.totalorder %s82, %s83
    %p92 = scmp.eq.s32.totalorder %s25, 0
    %p93 = por %p91, %p92
    %p94 = scmp.ne.s32.totalorder %s82, %s83
    %p95 = scmp.eq.s32.totalorder %s26, 1
    %p96 = por %p94, %p95
    %p98 = scmp.ne.s32.totalorder %s83, %s97
    %p99 = scmp.eq.s32.totalorder %s26, 0
    %p100 = por %p98, %p99
    %s102 = sadd.s32 %s101, 1
    %p105 = scmp.eq.s32.totalorder %s20, 1
    %p106 = scmp.ne.s32.totalorder %s101, %s103
    %p107 = scmp.eq.s32.totalorder %s20, 0
    %p108 = por %p106, %p107
    %p109 = scmp.ne.s32.totalorder %s101, %s103
    %p110 = scmp.eq.s32.totalorder %s25, 1
    %p111 = por %p109, %p110
    %p112 = scmp.ne.s32.totalorder %s103, %s104
    %p113 = scmp.eq.s32.totalorder %s25, 0
    %p114 = por %p112, %p113
    %p115 = scmp.ne.s32.totalorder %s103, %s104
    %p116 = scmp.eq.s32.totalorder %s26, 1
    %p117 = por %p115, %p116
    %p119 = scmp.ne.s32.totalorder %s104, %s118
    %p120 = scmp.eq.s32.totalorder %s26, 0
    %p121 = por %p119, %p120
    %s123 = sadd.s32 %s122, 1
    %p126 = scmp.eq.s32.totalorder %s20, 1
    %p127 = scmp.ne.s32.totalorder %s122, %s124
    %p128 = scmp.eq.s32.totalorder %s20, 0
    %p129 = por %p127, %p128
    %p130 = scmp.ne.s32.totalorder %s122, %s124
    %p131 = scmp.eq.s32.totalorder %s25, 1
    %p132 = por %p130, %p131
    %p133 = scmp.ne.s32.totalorder %s124, %s125
    %p134 = scmp.eq.s32.totalorder %s25, 0
    %p135 = por %p133, %p134
    %p136 = scmp.ne.s32.totalorder %s124, %s125
    %p137 = scmp.eq.s32.totalorder %s26, 1
    %p138 = por %p136, %p137
    %p140 = scmp.ne.s32.totalorder %s125, %s139
    %p141 = scmp.eq.s32.totalorder %s26, 0
    %p142 = por %p140, %p141
    %s144 = sadd.s32 %s143, 1
    %p147 = scmp.eq.s32.totalorder %s20, 1
    %p148 = scmp.ne.s32.totalorder %s143, %s145
    %p149 = scmp.eq.s32.totalorder %s20, 0
    %p150 = por %p148, %p149
    %p151 = scmp.ne.s32.totalorder %s143, %s145
    %p152 = scmp.eq.s32.totalorder %s25, 1
    %p153 = por %p151, %p152
    %p154 = scmp.ne.s32.totalorder %s145, %s146
    %p155 = scmp.eq.s32.totalorder %s25, 0
    %p156 = por %p154, %p155
    %p157 = scmp.ne.s32.totalorder %s145, %s146
    %p158 = scmp.eq.s32.totalorder %s26, 1
    %p159 = por %p157, %p158
    %p161 = scmp.ne.s32.totalorder %s146, %s160
    %p162 = scmp.eq.s32.totalorder %s26, 0
    %p163 = por %p161, %p162
    %s165 = sadd.s32 %s164, 1
    %p168 = scmp.eq.s32.totalorder %s20, 1
    %p169 = scmp.ne.s32.totalorder %s164, %s166
    %p170 = scmp.eq.s32.totalorder %s20, 0
    %p171 = por %p169, %p170
    %p172 = scmp.ne.s32.totalorder %s164, %s166
    %p173 = scmp.eq.s32.totalorder %s25, 1
    %p174 = por %p172, %p173
    %p175 = scmp.ne.s32.totalorder %s166, %s167
    %p176 = scmp.eq.s32.totalorder %s25, 0
    %p177 = por %p175, %p176
    %p178 = scmp.ne.s32.totalorder %s166, %s167
    %p179 = scmp.eq.s32.totalorder %s26, 1
    %p180 = por %p178, %p179
    %p182 = scmp.ne.s32.totalorder %s167, %s181
    %p183 = scmp.eq.s32.totalorder %s26, 0
    %p184 = por %p182, %p183
    %s186 = sadd.s32 %s185, 1
    %p189 = scmp.eq.s32.totalorder %s20, 1
    %p190 = scmp.ne.s32.totalorder %s185, %s187
    %p191 = scmp.eq.s32.totalorder %s20, 0
    %p192 = por %p190, %p191
    %p193 = scmp.ne.s32.totalorder %s185, %s187
    %p194 = scmp.eq.s32.totalorder %s25, 1
    %p195 = por %p193, %p194
    %p196 = scmp.ne.s32.totalorder %s187, %s188
    %p197 = scmp.eq.s32.totalorder %s25, 0
    %p198 = por %p196, %p197
    %p199 = scmp.ne.s32.totalorder %s187, %s188
    %p200 = scmp.eq.s32.totalorder %s26, 1
    %p201 = por %p199, %p200
    %p203 = scmp.ne.s32.totalorder %s188, %s202
    %p204 = scmp.eq.s32.totalorder %s26, 0
    %p205 = por %p203, %p204
    %s207 = sadd.s32 %s206, 1
    %p210 = scmp.eq.s32.totalorder %s20, 1
    %p211 = scmp.ne.s32.totalorder %s206, %s208
    %p212 = scmp.eq.s32.totalorder %s20, 0
    %p213 = por %p211, %p212
    %p214 = scmp.ne.s32.totalorder %s206, %s208
    %p215 = scmp.eq.s32.totalorder %s25, 1
    %p216 = por %p214, %p215
    %p217 = scmp.ne.s32.totalorder %s208, %s209
    %p218 = scmp.eq.s32.totalorder %s25, 0
    %p219 = por %p217, %p218
    %p220 = scmp.ne.s32.totalorder %s208, %s209
    %p221 = scmp.eq.s32.totalorder %s26, 1
    %p222 = por %p220, %p221
    %p224 = scmp.ne.s32.totalorder %s209, %s223
    %p225 = scmp.eq.s32.totalorder %s26, 0
    %p226 = por %p224, %p225
    %s228 = sadd.s32 %s227, 1
    %p231 = scmp.eq.s32.totalorder %s20, 1
    %p232 = scmp.ne.s32.totalorder %s227, %s229
    %p233 = scmp.eq.s32.totalorder %s20, 0
    %p234 = por %p232, %p233
    %p235 = scmp.ne.s32.totalorder %s227, %s229
    %p236 = scmp.eq.s32.totalorder %s25, 1
    %p237 = por %p235, %p236
    %p238 = scmp.ne.s32.totalorder %s229, %s230
    %p239 = scmp.eq.s32.totalorder %s25, 0
    %p240 = por %p238, %p239
    %p241 = scmp.ne.s32.totalorder %s229, %s230
    %p242 = scmp.eq.s32.totalorder %s26, 1
    %p243 = por %p241, %p242
    %p245 = scmp.ne.s32.totalorder %s230, %s244
    %p246 = scmp.eq.s32.totalorder %s26, 0
    %p247 = por %p245, %p246
    %s249 = sadd.s32 %s248, 1
    %p252 = scmp.eq.s32.totalorder %s20, 1
    %p253 = scmp.ne.s32.totalorder %s248, %s250
    %p254 = scmp.eq.s32.totalorder %s20, 0
    %p255 = por %p253, %p254
    %p256 = scmp.ne.s32.totalorder %s248, %s250
    %p257 = scmp.eq.s32.totalorder %s25, 1
    %p258 = por %p256, %p257
    %p259 = scmp.ne.s32.totalorder %s250, %s251
    %p260 = scmp.eq.s32.totalorder %s25, 0
    %p261 = por %p259, %p260
    %p262 = scmp.ne.s32.totalorder %s250, %s251
    %p263 = scmp.eq.s32.totalorder %s26, 1
    %p264 = por %p262, %p263
    %p266 = scmp.ne.s32.totalorder %s251, %s265
    %p267 = scmp.eq.s32.totalorder %s26, 0
    %p268 = por %p266, %p267
    %s270 = sadd.s32 %s269, 1
    %p273 = scmp.eq.s32.totalorder %s20, 1
    %p274 = scmp.ne.s32.totalorder %s269, %s271
    %p275 = scmp.eq.s32.totalorder %s20, 0
    %p276 = por %p274, %p275
    %p277 = scmp.ne.s32.totalorder %s269, %s271
    %p278 = scmp.eq.s32.totalorder %s25, 1
    %p279 = por %p277, %p278
    %p280 = scmp.ne.s32.totalorder %s271, %s272
    %p281 = scmp.eq.s32.totalorder %s25, 0
    %p282 = por %p280, %p281
    %p283 = scmp.ne.s32.totalorder %s271, %s272
    %p284 = scmp.eq.s32.totalorder %s26, 1
    %p285 = por %p283, %p284
    %p287 = scmp.ne.s32.totalorder %s272, %s286
    %p288 = scmp.eq.s32.totalorder %s26, 0
    %p289 = por %p287, %p288
    %s291 = sadd.s32 %s290, 1
    %p294 = scmp.eq.s32.totalorder %s20, 1
    %p295 = scmp.ne.s32.totalorder %s290, %s292
    %p296 = scmp.eq.s32.totalorder %s20, 0
    %p297 = por %p295, %p296
    %p298 = scmp.ne.s32.totalorder %s290, %s292
    %p299 = scmp.eq.s32.totalorder %s25, 1
    %p300 = por %p298, %p299
    %p301 = scmp.ne.s32.totalorder %s292, %s293
    %p302 = scmp.eq.s32.totalorder %s25, 0
    %p303 = por %p301, %p302
    %p304 = scmp.ne.s32.totalorder %s292, %s293
    %p305 = scmp.eq.s32.totalorder %s26, 1
    %p306 = por %p304, %p305
    %p308 = scmp.ne.s32.totalorder %s293, %s307
    %p309 = scmp.eq.s32.totalorder %s26, 0
    %p310 = por %p308, %p309
    %s312 = sadd.s32 %s311, 1
    %p315 = scmp.eq.s32.totalorder %s20, 1
    %p316 = scmp.ne.s32.totalorder %s311, %s313
    %p317 = scmp.eq.s32.totalorder %s20, 0
    %p318 = por %p316, %p317
    %p319 = scmp.ne.s32.totalorder %s311, %s313
    %p320 = scmp.eq.s32.totalorder %s25, 1
    %p321 = por %p319, %p320
    %p322 = scmp.ne.s32.totalorder %s313, %s314
    %p323 = scmp.eq.s32.totalorder %s25, 0
    %p324 = por %p322, %p323
    %p325 = scmp.ne.s32.totalorder %s313, %s314
    %p326 = scmp.eq.s32.totalorder %s26, 1
    %p327 = por %p325, %p326
    %p329 = scmp.ne.s32.totalorder %s314, %s328
    %p330 = scmp.eq.s32.totalorder %s26, 0
    %p331 = por %p329, %p330
    %s332 = ssub.s32 %s20, %s27
    %p333 = scmp.eq.s32.totalorder %s332, 0
    %s335 = sadd.s32 %s334, 1
    %s336 = scalar_select %p333, %s334, %s335
    %p339 = pneg %p333
    %p340 = scmp.eq.s32.totalorder %s20, 1
    %p341 = por %p339, %p340
    %p342 = scmp.ne.s32.totalorder %s334, %s337
    %p343 = scmp.eq.s32.totalorder %s20, 0
    %p344 = por %p342, %p343
    %p345 = scmp.ne.s32.totalorder %s334, %s337
    %p346 = scmp.eq.s32.totalorder %s25, 1
    %p347 = por %p345, %p346
    %p348 = scmp.ne.s32.totalorder %s337, %s338
    %p349 = scmp.eq.s32.totalorder %s25, 0
    %p350 = por %p348, %p349
    %p351 = scmp.ne.s32.totalorder %s337, %s338
    %p352 = scmp.eq.s32.totalorder %s26, 1
    %p353 = por %p351, %p352
    %p355 = scmp.ne.s32.totalorder %s338, %s354
    %p356 = scmp.eq.s32.totalorder %s26, 0
    %p357 = por %p355, %p356
    %p358 = scmp.le.s32.totalorder 1, %s20
    %p359 = scmp.lt.s32.totalorder %s20, 3
    %p360 = pnand %p358, %p359
    %p361 = pneg %p360
    // Predicated region
    $region9: #{seqvae_loss_forward.5} parent=5 // pred_check
      _
    $region10: #{seqvae_loss_forward.5} parent=5 // pred_check_branch
      %363 = sbr.rel (%p360) target = $region12
    $region11: #{seqvae_loss_forward.5} parent=5 // pred_region
      %s364 = ssub.s32 %s20, 1
      // Predicated region
      $region13: #{seqvae_loss_forward.5} parent=11 // pred_check
        %p365 = pneg %p93
      $region14: #{seqvae_loss_forward.5} parent=11 // pred_check_branch
        %367 = sbr.rel (%p365) target = $region16
      $region15: #{seqvae_loss_forward.5} parent=11 // pred_region
        _
      $region16: #{seqvae_loss_forward.5} parent=11 // pred_fallthru
        _
      // Predicated region
      $region17: #{seqvae_loss_forward.5} parent=11 // pred_check
        %p368 = pneg %p114
      $region18: #{seqvae_loss_forward.5} parent=11 // pred_check_branch
        %370 = sbr.rel (%p368) target = $region20
      $region19: #{seqvae_loss_forward.5} parent=11 // pred_region
        _
      $region20: #{seqvae_loss_forward.5} parent=11 // pred_fallthru
        _
      // Predicated region
      $region21: #{seqvae_loss_forward.5} parent=11 // pred_check
        %p371 = pneg %p135
      $region22: #{seqvae_loss_forward.5} parent=11 // pred_check_branch
        %373 = sbr.rel (%p371) target = $region24
      $region23: #{seqvae_loss_forward.5} parent=11 // pred_region
        _
      $region24: #{seqvae_loss_forward.5} parent=11 // pred_fallthru
        _
      // Predicated region
      $region25: #{seqvae_loss_forward.5} parent=11 // pred_check
        %p374 = pneg %p156
      $region26: #{seqvae_loss_forward.5} parent=11 // pred_check_branch
        %376 = sbr.rel (%p374) target = $region28
      $region27: #{seqvae_loss_forward.5} parent=11 // pred_region
        _
      $region28: #{seqvae_loss_forward.5} parent=11 // pred_fallthru
        _
      // Predicated region
      $region29: #{seqvae_loss_forward.5} parent=11 // pred_check
        %p377 = pneg %p177
      $region30: #{seqvae_loss_forward.5} parent=11 // pred_check_branch
        %379 = sbr.rel (%p377) target = $region32
      $region31: #{seqvae_loss_forward.5} parent=11 // pred_region
        _
      $region32: #{seqvae_loss_forward.5} parent=11 // pred_fallthru
        _
      // Predicated region
      $region33: #{seqvae_loss_forward.5} parent=11 // pred_check
        %p380 = pneg %p198
      $region34: #{seqvae_loss_forward.5} parent=11 // pred_check_branch
        %382 = sbr.rel (%p380) target = $region36
      $region35: #{seqvae_loss_forward.5} parent=11 // pred_region
        _
      $region36: #{seqvae_loss_forward.5} parent=11 // pred_fallthru
        _
      // Predicated region
      $region37: #{seqvae_loss_forward.5} parent=11 // pred_check
        %p383 = pneg %p219
      $region38: #{seqvae_loss_forward.5} parent=11 // pred_check_branch
        %385 = sbr.rel (%p383) target = $region40
      $region39: #{seqvae_loss_forward.5} parent=11 // pred_region
        _
      $region40: #{seqvae_loss_forward.5} parent=11 // pred_fallthru
        _
      // Predicated region
      $region41: #{seqvae_loss_forward.5} parent=11 // pred_check
        %p386 = pneg %p240
      $region42: #{seqvae_loss_forward.5} parent=11 // pred_check_branch
        %388 = sbr.rel (%p386) target = $region44
      $region43: #{seqvae_loss_forward.5} parent=11 // pred_region
        _
      $region44: #{seqvae_loss_forward.5} parent=11 // pred_fallthru
        _
      // Predicated region
      $region45: #{seqvae_loss_forward.5} parent=11 // pred_check
        %p389 = pneg %p261
      $region46: #{seqvae_loss_forward.5} parent=11 // pred_check_branch
        %391 = sbr.rel (%p389) target = $region48
      $region47: #{seqvae_loss_forward.5} parent=11 // pred_region
        _
      $region48: #{seqvae_loss_forward.5} parent=11 // pred_fallthru
        _
      // Predicated region
      $region49: #{seqvae_loss_forward.5} parent=11 // pred_check
        %p392 = pneg %p282
      $region50: #{seqvae_loss_forward.5} parent=11 // pred_check_branch
        %394 = sbr.rel (%p392) target = $region52
      $region51: #{seqvae_loss_forward.5} parent=11 // pred_region
        _
      $region52: #{seqvae_loss_forward.5} parent=11 // pred_fallthru
        _
      // Predicated region
      $region53: #{seqvae_loss_forward.5} parent=11 // pred_check
        %p395 = pneg %p303
      $region54: #{seqvae_loss_forward.5} parent=11 // pred_check_branch
        %397 = sbr.rel (%p395) target = $region56
      $region55: #{seqvae_loss_forward.5} parent=11 // pred_region
        _
      $region56: #{seqvae_loss_forward.5} parent=11 // pred_fallthru
        _
      // Predicated region
      $region57: #{seqvae_loss_forward.5} parent=11 // pred_check
        %p398 = pneg %p324
      $region58: #{seqvae_loss_forward.5} parent=11 // pred_check_branch
        %400 = sbr.rel (%p398) target = $region60
      $region59: #{seqvae_loss_forward.5} parent=11 // pred_region
        _
      $region60: #{seqvae_loss_forward.5} parent=11 // pred_fallthru
        _
    $region12: #{seqvae_loss_forward.5} parent=5 // pred_fallthru
      _
    %p401 = scmp.lt.s32.totalorder %s20, 2
    // Predicated region
    $region61: #{seqvae_loss_forward.5} parent=5 // pred_check
      %p402 = pneg %p401
    $region62: #{seqvae_loss_forward.5} parent=5 // pred_check_branch
      %404 = sbr.rel (%p402) target = $region64
    $region63: #{seqvae_loss_forward.5} parent=5 // pred_region
      // Predicated region
      $region65: #{seqvae_loss_forward.5} parent=63 // pred_check
        %p405 = pneg %p40
      $region66: #{seqvae_loss_forward.5} parent=63 // pred_check_branch
        %407 = sbr.rel (%p405) target = $region68
      $region67: #{seqvae_loss_forward.5} parent=63 // pred_region
        %p408 = scmp.lt.s32.totalorder %s20, 1
        %s409 = scalar_select %p408, %s20, 1
        %s410 = smul.addr %s409, 2
        %s411 = smul.addr %s410, 4
        %s412 = scalar_lea.vmem %s0, %s411
      $region68: #{seqvae_loss_forward.5} parent=63 // pred_fallthru
        _
      // Predicated region
      $region69: #{seqvae_loss_forward.5} parent=63 // pred_check
        %p413 = pneg %p66
      $region70: #{seqvae_loss_forward.5} parent=63 // pred_check_branch
        %415 = sbr.rel (%p413) target = $region72
      $region71: #{seqvae_loss_forward.5} parent=63 // pred_region
        %p416 = scmp.lt.s32.totalorder %s20, 1
        %s417 = scalar_select %p416, %s20, 1
        %s418 = scalar_lea.vmem %s1, %s417
      $region72: #{seqvae_loss_forward.5} parent=63 // pred_fallthru
        _
    $region64: #{seqvae_loss_forward.5} parent=5 // pred_fallthru
      _
    %p419 = scmp.le.s32.totalorder 1, %s20
    %p420 = scmp.lt.s32.totalorder %s20, 3
    %p421 = pnand %p419, %p420
    %p422 = pneg %p421
    // Predicated region
    $region73: #{seqvae_loss_forward.5} parent=5 // pred_check
      _
    $region74: #{seqvae_loss_forward.5} parent=5 // pred_check_branch
      %424 = sbr.rel (%p421) target = $region76
    $region75: #{seqvae_loss_forward.5} parent=5 // pred_region
      %s425 = ssub.s32 %s20, 1
      %p426 = scmp.lt.s32.totalorder %s25, 1
      %s427 = scalar_select %p426, %s25, 1
      %s428 = smul.addr %s427, 2
      %s429 = smul.addr %s428, 4
      %s430 = scalar_lea.vmem %s0, %s429
      %p431 = pneg %p46
      %p432 = pneg %p43
      %p433 = scmp.lt.s32.totalorder %s25, 1
      %s434 = scalar_select %p433, %s25, 1
      %s435 = scalar_lea.vmem %s1, %s434
      %p436 = pneg %p72
      %p437 = pneg %p69
      %p438 = pneg %p93
      %p439 = pneg %p90
      %p440 = pneg %p114
      %p441 = pneg %p111
      %p442 = pneg %p135
      %p443 = pneg %p132
      %p444 = pneg %p156
      %p445 = pneg %p153
      %p446 = pneg %p177
      %p447 = pneg %p174
      %p448 = pneg %p198
      %p449 = pneg %p195
      %p450 = pneg %p219
      %p451 = pneg %p216
      %p452 = pneg %p240
      %p453 = pneg %p237
      %p454 = pneg %p261
      %p455 = pneg %p258
      %p456 = pneg %p282
      %p457 = pneg %p279
      %p458 = pneg %p303
      %p459 = pneg %p300
      %p460 = pneg %p324
      %p461 = pneg %p321
      %p462 = pneg %p350
      %p463 = pneg %p347
      %p464 = scmp.lt.s32.totalorder %s25, 1
      %s465 = scalar_select %p464, %s25, 1
      %s466 = smul.addr %s465, 2
      %s467 = smul.addr %s466, 4
      %s468 = scalar_lea.vmem %s14, %s467
      %p469 = scmp.lt.s32.totalorder %s25, 1
      %s470 = scalar_select %p469, %s25, 1
      %s471 = smul.addr %s470, 2
      %s472 = smul.addr %s471, 4
      %s473 = scalar_lea.vmem %s0, %s472
      %p474 = scmp.lt.s32.totalorder %s25, 1
      %s475 = scalar_select %p474, %s25, 1
      %s476 = scalar_lea.vmem %s1, %s475
      %p477 = scmp.lt.s32.totalorder %s25, 1
      %s478 = scalar_select %p477, %s25, 1
      %s479 = smul.addr %s478, 2
      %s480 = smul.addr %s479, 4
      %s481 = scalar_lea.vmem %s14, %s480
      %v483 = vld [vmem:[%s4] sm:$0xf]
      %v484 = vld [vmem:[%s4 + $0x4] sm:$0xf]
      %v485 = vld [vmem:[%s4 + $0x8] sm:$0xf]
      %v486 = vld [vmem:[%s4 + $0xc] sm:$0xf]
      %v487 = vld [vmem:[%s5] sm:$0xf]
      %v488 = vld [vmem:[%s5 + $0x4] sm:$0xf]
      %v489 = vld [vmem:[%s5 + $0x8] sm:$0xf]
      %v490 = vld [vmem:[%s5 + $0xc] sm:$0xf]
      %v491 = vld [vmem:[%s6] sm:$0x1]
      %v492 = vld [vmem:[%s7] sm:$0x1]
      %v493 = vld [vmem:[%s8] sm:$0xf]
      %v494 = vld [vmem:[%s8 + $0x4] sm:$0xf]
      %v495 = vld [vmem:[%s8 + $0x8] sm:$0xf]
      %v496 = vld [vmem:[%s8 + $0xc] sm:$0xf]
      %v497 = vld [vmem:[%s9] sm:$0x1]
      %v498 = vld [vmem:[%s10] sm:$0xf]
      %v499 = vld [vmem:[%s10 + $0x4] sm:$0xf]
      %v500 = vld [vmem:[%s10 + $0x8] sm:$0xf]
      %v501 = vld [vmem:[%s10 + $0xc] sm:$0xf]
      %v502 = vld [vmem:[%s10 + $0x10] sm:$0xf]
      %v503 = vld [vmem:[%s10 + $0x14] sm:$0xf]
      %v504 = vld [vmem:[%s10 + $0x18] sm:$0xf]
      %v505 = vld [vmem:[%s10 + $0x1c] sm:$0xf]
      %v506 = vld [vmem:[%s11] sm:$0x1]
      %v507 = vld [vmem:[%s12] sm:$0x1]
      %v508 = vld [vmem:[%s13] sm:$0x1]
      %v509 = vld [vmem:[%s473] sm:$0xf]
      %v510 = vld [vmem:[%s473 + $0x4] sm:$0xf]
      %v511 = vunpack.c.l.bf16 %v509
      %v512 = vunpack.c.l.bf16 %v510
      %v513 = vld [vmem:[%s2] sm:$0x1]
      %v514 = vld [vmem:[%s3] sm:$0x1]
      %vm515 = vcmask 261120
      %v516 = vsel %vm515, %v511, 0.0
      %517 = vadd.xlane.f32.xlu0 %v516
      %v518 = vpop.xlane.xlu0 %517
      %v519 = vsel %vm515, %v512, 0.0
      %520 = vadd.xlane.f32.xlu0 %v519
      %v521 = vpop.xlane.xlu0 %520
      %v522 = vrcp.pop 32.0
      %v523 = vmul.f32 %v518, %v522
      %v524 = vmul.f32 %v521, %v522
      %v525 = vsub.f32 %v511, %v523
      %v526 = vsub.f32 %v512, %v524
      %v527 = vmul.f32 %v525, %v525
      %v528 = vmul.f32 %v526, %v526
      %v529 = vsel %vm515, %v527, 0.0
      %530 = vadd.xlane.f32.xlu0 %v529
      %v531 = vpop.xlane.xlu0 %530
      %v532 = vsel %vm515, %v528, 0.0
      %533 = vadd.xlane.f32.xlu0 %v532
      %v534 = vpop.xlane.xlu0 %533
      %v535 = vmul.f32 %v531, %v522
      %v536 = vmul.f32 %v534, %v522
      %v537 = vadd.f32 %v535, 1e-06
      %v538 = vadd.f32 %v536, 1e-06
      %v539 = vrsqrt.pop %v537
      %v540 = vrsqrt.pop %v538
      %v541 = vmul.f32 %v525, %v539
      %v542 = vmul.f32 %v526, %v540
      %v544 = vlaneseq
      %v545 = vshrl.u32 %v544, 7
      %v546 = vsub.s32 0, %v545
      %v547 = vrot.slane %v513, %v546
      %v549 = vmul.f32 %v541, %v547
      %v550 = vmul.f32 %v542, %v547
      %v552 = vlaneseq
      %v553 = vshrl.u32 %v552, 7
      %v554 = vsub.s32 0, %v553
      %v555 = vrot.slane %v514, %v554
      %v557 = vadd.f32 %v549, %v555
      %v558 = vadd.f32 %v550, %v555
      %v559 = vld [vmem:[%s476] sm:$0x1]
      %vm560 = vcmp.eq.f32.partialorder %v559, 0.0
      %v561 = vpack.c.bf16 %v558, %v557
      %v566 = vunpack.c.l.b16 %v483
      %v567 = vunpack.c.l.b16 %v484
      %v568 = vunpack.c.l.b16 %v485
      %v569 = vunpack.c.l.b16 %v486
      %v570 = vpack.c.b16 %v567, %v566
      %v571 = vpack.c.b16 %v569, %v568
      %v575 = vsel %vm515, %v561, 0
      %577 = vmatprep.subr.bf16.mxu0 0
      %578 = vmatpush1.bf16.msra.mxu0 0
      %579 = vmatprep.subr.bf16.mxu0 0
      %580 = vmatpush1.bf16.msra.mxu0 0
      %581 = vmatprep.subr.bf16.mxu0 0
      %582 = vmatpush1.bf16.msra.mxu0 0
      %583 = vmatprep.subr.bf16.mxu0 0
      %584 = vmatpush1.bf16.msra.mxu0 0
      %585 = vmatprep.subr.bf16.mxu0 0
      %586 = vmatpush1.bf16.msra.mxu0 0
      %587 = vmatprep.subr.bf16.mxu0 0
      %588 = vmatpush1.bf16.msra.mxu0 0
      %589 = vmatprep.subr.bf16.mxu0 0
      %590 = vmatpush1.bf16.msra.mxu0 %v571
      %591 = vmatprep.subr.bf16.mxu0 0
      %592 = vmatpush1.bf16.msra.mxu0 %v570
      %593 = vmatprep.subr.bf16.mxu0 0
      %594 = vmatpush2.bf16.msra.mxu0 0
      %595 = vmatprep.subr.bf16.mxu0 0
      %596 = vmatpush2.bf16.msra.mxu0 0
      %597 = vmatprep.subr.bf16.mxu0 0
      %598 = vmatpush2.bf16.msra.mxu0 0
      %599 = vmatprep.subr.bf16.mxu0 0
      %600 = vmatpush2.bf16.msra.mxu0 0
      %601 = vmatprep.subr.bf16.mxu0 0
      %602 = vmatpush2.bf16.msra.mxu0 0
      %603 = vmatprep.subr.bf16.mxu0 0
      %604 = vmatpush2.bf16.msra.mxu0 0
      %605 = vmatprep.subr.bf16.mxu0 0
      %606 = vmatpush2.bf16.msra.mxu0 0
      %607 = vmatprep.subr.bf16.mxu0 0
      %608 = vmatpush2.bf16.msra.mxu0 0
      %609 = vmatprep.mubr.bf16.mxu0 0
      %610 = vmatmul.mubr.bf16.gmra.mxu0 %v575
      %v611 = vpop.f32.mrf.mxu0
      %v612 = vadd.f32 0.0, %v611
      %v613 = vpop.f32.mrf.mxu0
      %v614 = vpop.f32.mrf.mxu0
      %v615 = vadd.f32 0.0, %v614
      %v616 = vpop.f32.mrf.mxu0
      %617 = vdwg.mxu0
      %v618 = vpack.c.bf16 %v615, %v612
      %620 = vrot.lane.b32.xlu0 %v618, 96
      %v621 = vpop.permute.xlu0 %620
      %vm622 = vcmask 130048
      %v624 = vsel %vm622, %v618, 0
      %v627 = vsel %vm622, %v621, 0
      %629 = vmatprep.subr.bf16.mxu0 0
      %630 = vmatpush1.bf16.xpose.msra.mxu0 0
      %631 = vmatprep.subr.bf16.mxu0 0
      %632 = vmatpush1.bf16.xpose.msra.mxu0 0
      %633 = vmatprep.subr.bf16.mxu0 0
      %634 = vmatpush1.bf16.xpose.msra.mxu0 0
      %635 = vmatprep.subr.bf16.mxu0 0
      %636 = vmatpush1.bf16.xpose.msra.mxu0 0
      %637 = vmatprep.subr.bf16.mxu0 0
      %638 = vmatpush1.bf16.xpose.msra.mxu0 0
      %639 = vmatprep.subr.bf16.mxu0 0
      %640 = vmatpush1.bf16.xpose.msra.mxu0 0
      %641 = vmatprep.subr.bf16.mxu0 0
      %642 = vmatpush1.bf16.xpose.msra.mxu0 0
      %643 = vmatprep.subr.bf16.mxu0 0
      %644 = vmatpush1.bf16.xpose.msra.mxu0 %v627
      %645 = vmatprep.subr.bf16.mxu0 0
      %646 = vmatpush2.bf16.xpose.msra.mxu0 0
      %647 = vmatprep.subr.bf16.mxu0 0
      %648 = vmatpush2.bf16.xpose.msra.mxu0 0
      %649 = vmatprep.subr.bf16.mxu0 0
      %650 = vmatpush2.bf16.xpose.msra.mxu0 0
      %651 = vmatprep.subr.bf16.mxu0 0
      %652 = vmatpush2.bf16.xpose.msra.mxu0 0
      %653 = vmatprep.subr.bf16.mxu0 0
      %654 = vmatpush2.bf16.xpose.msra.mxu0 0
      %655 = vmatprep.subr.bf16.mxu0 0
      %656 = vmatpush2.bf16.xpose.msra.mxu0 0
      %657 = vmatprep.subr.bf16.mxu0 0
      %658 = vmatpush2.bf16.xpose.msra.mxu0 0
      %659 = vmatprep.subr.bf16.mxu0 0
      %660 = vmatpush2.bf16.xpose.msra.mxu0 0
      %661 = vmatprep.mubr.bf16.mxu0 0
      %662 = vmatmul.mubr.bf16.gmra.mxu0 %v624
      %v663 = vpop.f32.mrf.mxu0
      %v664 = vadd.f32 0.0, %v663
      %v665 = vpop.f32.mrf.mxu0
      %v666 = vpop.f32.mrf.mxu0
      %v667 = vadd.f32 0.0, %v666
      %v668 = vpop.f32.mrf.mxu0
      %669 = vdwg.mxu0
      %v670 = vsel %vm560, 1, 0
      %v671 = vlaneseq
      %v672 = vshrl.u32 %v671, 7
      %v673 = vsub.s32 0, %v672
      %v674 = vrot.slane %v670, %v673
      %vm675 = vcmp.eq.s32.totalorder %v674, 1
      %v676 = vsel %vm675, -1e+09, %v664
      %v677 = vsel %vm675, -1e+09, %v667
      %v678 = vsel %vm622, %v676, -inf
      %679 = vmax.xlane.f32.xlu0 %v678
      %v680 = vpop.xlane.xlu0 %679
      %v681 = vsel %vm622, %v677, -inf
      %682 = vmax.xlane.f32.xlu0 %v681
      %v683 = vpop.xlane.xlu0 %682
      %v684 = vsub.f32 %v676, %v680
      %v685 = vsub.f32 %v677, %v683
      %v686 = vmul.f32 %v684, 1.442695
      %v687 = vpow.pop %v686
      %v688 = vmul.f32 %v685, 1.442695
      %v689 = vpow.pop %v688
      %v690 = vsel %vm622, %v687, 0.0
      %691 = vadd.xlane.f32.xlu0 %v690
      %v692 = vpop.xlane.xlu0 %691
      %v693 = vsel %vm622, %v689, 0.0
      %694 = vadd.xlane.f32.xlu0 %v693
      %v695 = vpop.xlane.xlu0 %694
      %v696 = vrcp.pop %v692
      %v697 = vrcp.pop %v695
      %v698 = vmul.f32 %v687, %v696
      %v699 = vmul.f32 %v689, %v697
      %v700 = vpack.c.bf16 %v699, %v698
      %701 = vrot.lane.b32.xlu0 %v618, 64
      %v702 = vpop.permute.xlu0 %701
      %v705 = vsel %vm622, %v700, 0
      %707 = vmatprep.subr.bf16.mxu0 0
      %708 = vmatpush1.bf16.msra.mxu0 0
      %709 = vmatprep.subr.bf16.mxu0 0
      %710 = vmatpush1.bf16.msra.mxu0 0
      %711 = vmatprep.subr.bf16.mxu0 0
      %712 = vmatpush1.bf16.msra.mxu0 0
      %713 = vmatprep.subr.bf16.mxu0 0
      %714 = vmatpush1.bf16.msra.mxu0 0
      %715 = vmatprep.subr.bf16.mxu0 0
      %716 = vmatpush1.bf16.msra.mxu0 0
      %717 = vmatprep.subr.bf16.mxu0 0
      %718 = vmatpush1.bf16.msra.mxu0 0
      %719 = vmatprep.subr.bf16.mxu0 0
      %720 = vmatpush1.bf16.msra.mxu0 0
      %721 = vmatprep.subr.bf16.mxu0 0
      %722 = vmatpush1.bf16.msra.mxu0 %v702
      %723 = vmatprep.subr.bf16.mxu0 0
      %724 = vmatpush2.bf16.msra.mxu0 0
      %725 = vmatprep.subr.bf16.mxu0 0
      %726 = vmatpush2.bf16.msra.mxu0 0
      %727 = vmatprep.subr.bf16.mxu0 0
      %728 = vmatpush2.bf16.msra.mxu0 0
      %729 = vmatprep.subr.bf16.mxu0 0
      %730 = vmatpush2.bf16.msra.mxu0 0
      %731 = vmatprep.subr.bf16.mxu0 0
      %732 = vmatpush2.bf16.msra.mxu0 0
      %733 = vmatprep.subr.bf16.mxu0 0
      %734 = vmatpush2.bf16.msra.mxu0 0
      %735 = vmatprep.subr.bf16.mxu0 0
      %736 = vmatpush2.bf16.msra.mxu0 0
      %737 = vmatprep.subr.bf16.mxu0 0
      %738 = vmatpush2.bf16.msra.mxu0 0
      %739 = vmatprep.mubr.bf16.mxu0 0
      %740 = vmatmul.mubr.bf16.gmra.mxu0 %v705
      %v741 = vpop.f32.mrf.mxu0
      %v742 = vadd.f32 0.0, %v741
      %v743 = vpop.f32.mrf.mxu0
      %v744 = vpop.f32.mrf.mxu0
      %v745 = vadd.f32 0.0, %v744
      %v746 = vpop.f32.mrf.mxu0
      %747 = vdwg.mxu0
      %748 = vrot.lane.b32.xlu0 %v618, 112
      %v749 = vpop.permute.xlu0 %748
      %750 = vrot.lane.b32.xlu0 %v618, 80
      %v751 = vpop.permute.xlu0 %750
      %v753 = vsel %vm622, %v749, 0
      %v756 = vsel %vm622, %v751, 0
      %758 = vmatprep.subr.bf16.mxu0 0
      %759 = vmatpush1.bf16.xpose.msra.mxu0 0
      %760 = vmatprep.subr.bf16.mxu0 0
      %761 = vmatpush1.bf16.xpose.msra.mxu0 0
      %762 = vmatprep.subr.bf16.mxu0 0
      %763 = vmatpush1.bf16.xpose.msra.mxu0 0
      %764 = vmatprep.subr.bf16.mxu0 0
      %765 = vmatpush1.bf16.xpose.msra.mxu0 0
      %766 = vmatprep.subr.bf16.mxu0 0
      %767 = vmatpush1.bf16.xpose.msra.mxu0 0
      %768 = vmatprep.subr.bf16.mxu0 0
      %769 = vmatpush1.bf16.xpose.msra.mxu0 0
      %770 = vmatprep.subr.bf16.mxu0 0
      %771 = vmatpush1.bf16.xpose.msra.mxu0 0
      %772 = vmatprep.subr.bf16.mxu0 0
      %773 = vmatpush1.bf16.xpose.msra.mxu0 %v756
      %774 = vmatprep.subr.bf16.mxu0 0
      %775 = vmatpush2.bf16.xpose.msra.mxu0 0
      %776 = vmatprep.subr.bf16.mxu0 0
      %777 = vmatpush2.bf16.xpose.msra.mxu0 0
      %778 = vmatprep.subr.bf16.mxu0 0
      %779 = vmatpush2.bf16.xpose.msra.mxu0 0
      %780 = vmatprep.subr.bf16.mxu0 0
      %781 = vmatpush2.bf16.xpose.msra.mxu0 0
      %782 = vmatprep.subr.bf16.mxu0 0
      %783 = vmatpush2.bf16.xpose.msra.mxu0 0
      %784 = vmatprep.subr.bf16.mxu0 0
      %785 = vmatpush2.bf16.xpose.msra.mxu0 0
      %786 = vmatprep.subr.bf16.mxu0 0
      %787 = vmatpush2.bf16.xpose.msra.mxu0 0
      %788 = vmatprep.subr.bf16.mxu0 0
      %789 = vmatpush2.bf16.xpose.msra.mxu0 0
      %790 = vmatprep.mubr.bf16.mxu0 0
      %791 = vmatmul.mubr.bf16.gmra.mxu0 %v753
      %v792 = vpop.f32.mrf.mxu0
      %v793 = vadd.f32 0.0, %v792
      %v794 = vpop.f32.mrf.mxu0
      %v795 = vpop.f32.mrf.mxu0
      %v796 = vadd.f32 0.0, %v795
      %v797 = vpop.f32.mrf.mxu0
      %798 = vdwg.mxu0
      %v799 = vsel %vm675, -1e+09, %v793
      %v800 = vsel %vm675, -1e+09, %v796
      %v801 = vsel %vm622, %v799, -inf
      %802 = vmax.xlane.f32.xlu0 %v801
      %v803 = vpop.xlane.xlu0 %802
      %v804 = vsel %vm622, %v800, -inf
      %805 = vmax.xlane.f32.xlu0 %v804
      %v806 = vpop.xlane.xlu0 %805
      %v807 = vsub.f32 %v799, %v803
      %v808 = vsub.f32 %v800, %v806
      %v809 = vmul.f32 %v807, 1.442695
      %v810 = vpow.pop %v809
      %v811 = vmul.f32 %v808, 1.442695
      %v812 = vpow.pop %v811
      %v813 = vsel %vm622, %v810, 0.0
      %814 = vadd.xlane.f32.xlu0 %v813
      %v815 = vpop.xlane.xlu0 %814
      %v816 = vsel %vm622, %v812, 0.0
      %817 = vadd.xlane.f32.xlu0 %v816
      %v818 = vpop.xlane.xlu0 %817
      %v819 = vrcp.pop %v815
      %v820 = vrcp.pop %v818
      %v821 = vmul.f32 %v810, %v819
      %v822 = vmul.f32 %v812, %v820
      %v823 = vpack.c.bf16 %v822, %v821
      %824 = vrot.lane.b32.xlu0 %v618, 48
      %v825 = vpop.permute.xlu0 %824
      %v828 = vsel %vm622, %v823, 0
      %830 = vmatprep.subr.bf16.mxu0 0
      %831 = vmatpush1.bf16.msra.mxu0 0
      %832 = vmatprep.subr.bf16.mxu0 0
      %833 = vmatpush1.bf16.msra.mxu0 0
      %834 = vmatprep.subr.bf16.mxu0 0
      %835 = vmatpush1.bf16.msra.mxu0 0
      %836 = vmatprep.subr.bf16.mxu0 0
      %837 = vmatpush1.bf16.msra.mxu0 0
      %838 = vmatprep.subr.bf16.mxu0 0
      %839 = vmatpush1.bf16.msra.mxu0 0
      %840 = vmatprep.subr.bf16.mxu0 0
      %841 = vmatpush1.bf16.msra.mxu0 0
      %842 = vmatprep.subr.bf16.mxu0 0
      %843 = vmatpush1.bf16.msra.mxu0 0
      %844 = vmatprep.subr.bf16.mxu0 0
      %845 = vmatpush1.bf16.msra.mxu0 %v825
      %846 = vmatprep.subr.bf16.mxu0 0
      %847 = vmatpush2.bf16.msra.mxu0 0
      %848 = vmatprep.subr.bf16.mxu0 0
      %849 = vmatpush2.bf16.msra.mxu0 0
      %850 = vmatprep.subr.bf16.mxu0 0
      %851 = vmatpush2.bf16.msra.mxu0 0
      %852 = vmatprep.subr.bf16.mxu0 0
      %853 = vmatpush2.bf16.msra.mxu0 0
      %854 = vmatprep.subr.bf16.mxu0 0
      %855 = vmatpush2.bf16.msra.mxu0 0
      %856 = vmatprep.subr.bf16.mxu0 0
      %857 = vmatpush2.bf16.msra.mxu0 0
      %858 = vmatprep.subr.bf16.mxu0 0
      %859 = vmatpush2.bf16.msra.mxu0 0
      %860 = vmatprep.subr.bf16.mxu0 0
      %861 = vmatpush2.bf16.msra.mxu0 0
      %862 = vmatprep.mubr.bf16.mxu0 0
      %863 = vmatmul.mubr.bf16.gmra.mxu0 %v828
      %v864 = vpop.f32.mrf.mxu0
      %v865 = vadd.f32 0.0, %v864
      %v866 = vpop.f32.mrf.mxu0
      %v867 = vpop.f32.mrf.mxu0
      %v868 = vadd.f32 0.0, %v867
      %v869 = vpop.f32.mrf.mxu0
      %870 = vdwg.mxu0
      %873 = vrot.lane.b32.xlu0 %v865, 16
      %v874 = vpop.permute.xlu0 %873
      %875 = vrot.lane.b32.xlu0 %v868, 16
      %v876 = vpop.permute.xlu0 %875
      %v879 = vsel %vm622, %v742, %v874
      %v880 = vsel %vm622, %v745, %v876
      %v881 = vpack.c.bf16 %v880, %v879
      %v886 = vunpack.c.l.b16 %v487
      %v887 = vunpack.c.l.b16 %v488
      %v888 = vunpack.c.l.b16 %v489
      %v889 = vunpack.c.l.b16 %v490
      %v890 = vpack.c.b16 %v887, %v886
      %v891 = vpack.c.b16 %v889, %v888
      %v895 = vsel %vm515, %v881, 0
      %897 = vmatprep.subr.bf16.mxu0 0
      %898 = vmatpush1.bf16.msra.mxu0 0
      %899 = vmatprep.subr.bf16.mxu0 0
      %900 = vmatpush1.bf16.msra.mxu0 0
      %901 = vmatprep.subr.bf16.mxu0 0
      %902 = vmatpush1.bf16.msra.mxu0 0
      %903 = vmatprep.subr.bf16.mxu0 0
      %904 = vmatpush1.bf16.msra.mxu0 0
      %905 = vmatprep.subr.bf16.mxu0 0
      %906 = vmatpush1.bf16.msra.mxu0 0
      %907 = vmatprep.subr.bf16.mxu0 0
      %908 = vmatpush1.bf16.msra.mxu0 0
      %909 = vmatprep.subr.bf16.mxu0 0
      %910 = vmatpush1.bf16.msra.mxu0 %v891
      %911 = vmatprep.subr.bf16.mxu0 0
      %912 = vmatpush1.bf16.msra.mxu0 %v890
      %913 = vmatprep.subr.bf16.mxu0 0
      %914 = vmatpush2.bf16.msra.mxu0 0
      %915 = vmatprep.subr.bf16.mxu0 0
      %916 = vmatpush2.bf16.msra.mxu0 0
      %917 = vmatprep.subr.bf16.mxu0 0
      %918 = vmatpush2.bf16.msra.mxu0 0
      %919 = vmatprep.subr.bf16.mxu0 0
      %920 = vmatpush2.bf16.msra.mxu0 0
      %921 = vmatprep.subr.bf16.mxu0 0
      %922 = vmatpush2.bf16.msra.mxu0 0
      %923 = vmatprep.subr.bf16.mxu0 0
      %924 = vmatpush2.bf16.msra.mxu0 0
      %925 = vmatprep.subr.bf16.mxu0 0
      %926 = vmatpush2.bf16.msra.mxu0 0
      %927 = vmatprep.subr.bf16.mxu0 0
      %928 = vmatpush2.bf16.msra.mxu0 0
      %929 = vmatprep.mubr.bf16.mxu0 0
      %930 = vmatmul.mubr.bf16.gmra.mxu0 %v895
      %v931 = vpop.f32.mrf.mxu0
      %v932 = vadd.f32 0.0, %v931
      %v933 = vpop.f32.mrf.mxu0
      %v934 = vpop.f32.mrf.mxu0
      %v935 = vadd.f32 0.0, %v934
      %v936 = vpop.f32.mrf.mxu0
      %937 = vdwg.mxu0
      %v938 = vadd.f32 %v557, %v932
      %v939 = vadd.f32 %v558, %v935
      %v940 = vsel %vm515, %v938, 0.0
      %941 = vadd.xlane.f32.xlu0 %v940
      %v942 = vpop.xlane.xlu0 %941
      %v943 = vsel %vm515, %v939, 0.0
      %944 = vadd.xlane.f32.xlu0 %v943
      %v945 = vpop.xlane.xlu0 %944
      %v946 = vmul.f32 %v942, %v522
      %v947 = vmul.f32 %v945, %v522
      %v948 = vsub.f32 %v938, %v946
      %v949 = vsub.f32 %v939, %v947
      %v950 = vmul.f32 %v948, %v948
      %v951 = vmul.f32 %v949, %v949
      %v952 = vsel %vm515, %v950, 0.0
      %953 = vadd.xlane.f32.xlu0 %v952
      %v954 = vpop.xlane.xlu0 %953
      %v955 = vsel %vm515, %v951, 0.0
      %956 = vadd.xlane.f32.xlu0 %v955
      %v957 = vpop.xlane.xlu0 %956
      %v958 = vmul.f32 %v954, %v522
      %v959 = vmul.f32 %v957, %v522
      %v960 = vadd.f32 %v958, 1e-06
      %v961 = vadd.f32 %v959, 1e-06
      %v962 = vrsqrt.pop %v960
      %v963 = vrsqrt.pop %v961
      %v964 = vmul.f32 %v948, %v962
      %v965 = vmul.f32 %v949, %v963
      %v967 = vlaneseq
      %v968 = vshrl.u32 %v967, 7
      %v969 = vsub.s32 0, %v968
      %v970 = vrot.slane %v491, %v969
      %v972 = vmul.f32 %v964, %v970
      %v973 = vmul.f32 %v965, %v970
      %v975 = vlaneseq
      %v976 = vshrl.u32 %v975, 7
      %v977 = vsub.s32 0, %v976
      %v978 = vrot.slane %v492, %v977
      %v980 = vadd.f32 %v972, %v978
      %v981 = vadd.f32 %v973, %v978
      %v982 = vpack.c.bf16 %v981, %v980
      %v984 = vlaneseq
      %v985 = vshrl.u32 %v984, 7
      %v986 = vsub.s32 0, %v985
      %v987 = vrot.slane %v497, %v986
      %v993 = vunpack.c.l.b16 %v493
      %v994 = vunpack.c.l.b16 %v494
      %v995 = vunpack.c.l.b16 %v495
      %v996 = vunpack.c.l.b16 %v496
      %v997 = vpack.c.b16 %v994, %v993
      %v998 = vpack.c.b16 %v996, %v995
      %v1002 = vsel %vm515, %v982, 0
      %1004 = vmatprep.subr.bf16.mxu0 0
      %1005 = vmatpush1.bf16.msra.mxu0 0
      %1006 = vmatprep.subr.bf16.mxu0 0
      %1007 = vmatpush1.bf16.msra.mxu0 0
      %1008 = vmatprep.subr.bf16.mxu0 0
      %1009 = vmatpush1.bf16.msra.mxu0 0
      %1010 = vmatprep.subr.bf16.mxu0 0
      %1011 = vmatpush1.bf16.msra.mxu0 0
      %1012 = vmatprep.subr.bf16.mxu0 0
      %1013 = vmatpush1.bf16.msra.mxu0 0
      %1014 = vmatprep.subr.bf16.mxu0 0
      %1015 = vmatpush1.bf16.msra.mxu0 0
      %1016 = vmatprep.subr.bf16.mxu0 0
      %1017 = vmatpush1.bf16.msra.mxu0 %v998
      %1018 = vmatprep.subr.bf16.mxu0 0
      %1019 = vmatpush1.bf16.msra.mxu0 %v997
      %1020 = vmatprep.subr.bf16.mxu0 0
      %1021 = vmatpush2.bf16.msra.mxu0 0
      %1022 = vmatprep.subr.bf16.mxu0 0
      %1023 = vmatpush2.bf16.msra.mxu0 0
      %1024 = vmatprep.subr.bf16.mxu0 0
      %1025 = vmatpush2.bf16.msra.mxu0 0
      %1026 = vmatprep.subr.bf16.mxu0 0
      %1027 = vmatpush2.bf16.msra.mxu0 0
      %1028 = vmatprep.subr.bf16.mxu0 0
      %1029 = vmatpush2.bf16.msra.mxu0 0
      %1030 = vmatprep.subr.bf16.mxu0 0
      %1031 = vmatpush2.bf16.msra.mxu0 0
      %1032 = vmatprep.subr.bf16.mxu0 0
      %1033 = vmatpush2.bf16.msra.mxu0 0
      %1034 = vmatprep.subr.bf16.mxu0 0
      %1035 = vmatpush2.bf16.msra.mxu0 0
      %1036 = vmatprep.mubr.bf16.mxu0 0
      %1037 = vmatmul.mubr.bf16.gmra.mxu0 %v1002
      %v1038 = vpop.f32.mrf.mxu0
      %v1039 = vadd.f32 %v987, %v1038
      %v1040 = vpop.f32.mrf.mxu0
      %v1041 = vpop.f32.mrf.mxu0
      %v1042 = vadd.f32 %v987, %v1041
      %v1043 = vpop.f32.mrf.mxu0
      %1044 = vdwg.mxu0
      %v1045 = vmax.f32 %v1039, 0.0
      %v1046 = vmax.f32 %v1042, 0.0
      %v1047 = vpack.c.bf16 %v1046, %v1045
      %v1049 = vlaneseq
      %v1050 = vshrl.u32 %v1049, 7
      %v1051 = vsub.s32 0, %v1050
      %v1052 = vrot.slane %v506, %v1051
      %v1062 = vunpack.c.l.b16 %v498
      %v1063 = vunpack.c.l.b16 %v499
      %v1064 = vunpack.c.l.b16 %v500
      %v1065 = vunpack.c.l.b16 %v501
      %v1066 = vunpack.c.l.b16 %v502
      %v1067 = vunpack.c.l.b16 %v503
      %v1068 = vunpack.c.l.b16 %v504
      %v1069 = vunpack.c.l.b16 %v505
      %v1070 = vpack.c.b16 %v1063, %v1062
      %v1071 = vpack.c.b16 %v1065, %v1064
      %v1072 = vpack.c.b16 %v1067, %v1066
      %v1073 = vpack.c.b16 %v1069, %v1068
      %vm1078 = vcmask 523264
      %v1080 = vsel %vm1078, %v1047, 0
      %1082 = vmatprep.subr.bf16.mxu0 0
      %1083 = vmatpush1.bf16.msra.mxu0 0
      %1084 = vmatprep.subr.bf16.mxu0 0
      %1085 = vmatpush1.bf16.msra.mxu0 0
      %1086 = vmatprep.subr.bf16.mxu0 0
      %1087 = vmatpush1.bf16.msra.mxu0 0
      %1088 = vmatprep.subr.bf16.mxu0 0
      %1089 = vmatpush1.bf16.msra.mxu0 0
      %1090 = vmatprep.subr.bf16.mxu0 0
      %1091 = vmatpush1.bf16.msra.mxu0 %v1073
      %1092 = vmatprep.subr.bf16.mxu0 0
      %1093 = vmatpush1.bf16.msra.mxu0 %v1072
      %1094 = vmatprep.subr.bf16.mxu0 0
      %1095 = vmatpush1.bf16.msra.mxu0 %v1071
      %1096 = vmatprep.subr.bf16.mxu0 0
      %1097 = vmatpush1.bf16.msra.mxu0 %v1070
      %1098 = vmatprep.subr.bf16.mxu0 0
      %1099 = vmatpush2.bf16.msra.mxu0 0
      %1100 = vmatprep.subr.bf16.mxu0 0
      %1101 = vmatpush2.bf16.msra.mxu0 0
      %1102 = vmatprep.subr.bf16.mxu0 0
      %1103 = vmatpush2.bf16.msra.mxu0 0
      %1104 = vmatprep.subr.bf16.mxu0 0
      %1105 = vmatpush2.bf16.msra.mxu0 0
      %1106 = vmatprep.subr.bf16.mxu0 0
      %1107 = vmatpush2.bf16.msra.mxu0 0
      %1108 = vmatprep.subr.bf16.mxu0 0
      %1109 = vmatpush2.bf16.msra.mxu0 0
      %1110 = vmatprep.subr.bf16.mxu0 0
      %1111 = vmatpush2.bf16.msra.mxu0 0
      %1112 = vmatprep.subr.bf16.mxu0 0
      %1113 = vmatpush2.bf16.msra.mxu0 0
      %1114 = vmatprep.mubr.bf16.mxu0 0
      %1115 = vmatmul.mubr.bf16.gmra.mxu0 %v1080
      %v1116 = vpop.f32.mrf.mxu0
      %v1117 = vadd.f32 %v1052, %v1116
      %v1118 = vpop.f32.mrf.mxu0
      %v1119 = vpop.f32.mrf.mxu0
      %v1120 = vadd.f32 %v1052, %v1119
      %v1121 = vpop.f32.mrf.mxu0
      %1122 = vdwg.mxu0
      %v1123 = vadd.f32 %v980, %v1117
      %v1124 = vadd.f32 %v981, %v1120
      %v1125 = vsel %vm515, %v1123, 0.0
      %1126 = vadd.xlane.f32.xlu0 %v1125
      %v1127 = vpop.xlane.xlu0 %1126
      %v1128 = vsel %vm515, %v1124, 0.0
      %1129 = vadd.xlane.f32.xlu0 %v1128
      %v1130 = vpop.xlane.xlu0 %1129
      %v1131 = vmul.f32 %v1127, %v522
      %v1132 = vmul.f32 %v1130, %v522
      %v1133 = vsub.f32 %v1123, %v1131
      %v1134 = vsub.f32 %v1124, %v1132
      %v1135 = vmul.f32 %v1133, %v1133
      %v1136 = vmul.f32 %v1134, %v1134
      %v1137 = vsel %vm515, %v1135, 0.0
      %1138 = vadd.xlane.f32.xlu0 %v1137
      %v1139 = vpop.xlane.xlu0 %1138
      %v1140 = vsel %vm515, %v1136, 0.0
      %1141 = vadd.xlane.f32.xlu0 %v1140
      %v1142 = vpop.xlane.xlu0 %1141
      %v1143 = vmul.f32 %v1139, %v522
      %v1144 = vmul.f32 %v1142, %v522
      %v1145 = vadd.f32 %v1143, 1e-06
      %v1146 = vadd.f32 %v1144, 1e-06
      %v1147 = vrsqrt.pop %v1145
      %v1148 = vrsqrt.pop %v1146
      %v1149 = vmul.f32 %v1133, %v1147
      %v1150 = vmul.f32 %v1134, %v1148
      %v1152 = vlaneseq
      %v1153 = vshrl.u32 %v1152, 7
      %v1154 = vsub.s32 0, %v1153
      %v1155 = vrot.slane %v507, %v1154
      %v1157 = vmul.f32 %v1149, %v1155
      %v1158 = vmul.f32 %v1150, %v1155
      %v1160 = vlaneseq
      %v1161 = vshrl.u32 %v1160, 7
      %v1162 = vsub.s32 0, %v1161
      %v1163 = vrot.slane %v508, %v1162
      %v1165 = vadd.f32 %v1157, %v1163
      %v1166 = vadd.f32 %v1158, %v1163
      %v1167 = vpack.c.bf16 %v1166, %v1165
      %v1169 = vunpack.c.l.b16 %v1167
      %v1170 = vunpack.c.h.b16 %v1167
      %v1171 = vpack.c.b16 %v1169, %v1169
      %v1172 = vpack.c.b16 %v1170, %v1170
      %vm1175 = vcmask 257024
      %1176 = vst.msk [vmem:[%s481] sm:$0xf] %vm1175, %v1171
      %1177 = vst.msk [vmem:[%s481 + $0x4] sm:$0xf] %vm1175, %v1172
      %p1178 = scmp.lt.s32.totalorder %s25, 1
      %s1179 = scalar_select %p1178, %s25, 1
      %s1180 = smul.addr %s1179, 2
      %s1181 = smul.addr %s1180, 4
      %s1182 = scalar_lea.vmem %s14, %s1181
      // Predicated region
      $region77: #{seqvae_loss_forward.5} parent=75 // pred_check
        %p1183 = pneg %p347
      $region78: #{seqvae_loss_forward.5} parent=75 // pred_check_branch
        %1185 = sbr.rel (%p1183) target = $region80
      $region79: #{seqvae_loss_forward.5} parent=75 // pred_region
        _
      $region80: #{seqvae_loss_forward.5} parent=75 // pred_fallthru
        _
    $region76: #{seqvae_loss_forward.5} parent=5 // pred_fallthru
      _
    %p1186 = scmp.le.s32.totalorder 2, %s20
    // Predicated region
    $region81: #{seqvae_loss_forward.5} parent=5 // pred_check
      %p1187 = pneg %p1186
    $region82: #{seqvae_loss_forward.5} parent=5 // pred_check_branch
      %1189 = sbr.rel (%p1187) target = $region84
    $region83: #{seqvae_loss_forward.5} parent=5 // pred_region
      %s1190 = ssub.s32 %s20, 2
      // Predicated region
      $region85: #{seqvae_loss_forward.5} parent=83 // pred_check
        %p1191 = pneg %p353
      $region86: #{seqvae_loss_forward.5} parent=83 // pred_check_branch
        %1193 = sbr.rel (%p1191) target = $region88
      $region87: #{seqvae_loss_forward.5} parent=83 // pred_region
        %p1194 = scmp.lt.s32.totalorder %s26, 1
        %s1195 = scalar_select %p1194, %s26, 1
        %s1196 = smul.addr %s1195, 2
        %s1197 = smul.addr %s1196, 4
        %s1198 = scalar_lea.vmem %s14, %s1197
      $region88: #{seqvae_loss_forward.5} parent=83 // pred_fallthru
        _
    $region84: #{seqvae_loss_forward.5} parent=5 // pred_fallthru
      _
  $region6: #{seqvae_loss_forward.5} parent=0 // loop_footer
    %s24 = sadd.s32 1, %s20
  $region7: #{seqvae_loss_forward.5} parent=0 // loop_footer_branch
    %19 = sbr.rel target = $region3
  $region8: #{seqvae_loss_forward.5} parent=0 // loop_exit
    _

// kernel: seqvae_loss_forward.7
$region0: #{seqvae_loss_forward.7}
  #allocation0 [shape = 'u32[]', space=smem, size = 0x4, offset = 0x4, fixed_abs, tag = 'smem constant byte address 0x4 - core index']
  #allocation1 [shape = 'u32[144,128]{1,0:T(1,128)}', space=vmem, size = 0x12000, scoped, tag = 'internal scratch']
  %s0 = inlined_call_operand.vmem [shape: bf16[2,17,32], index: 0, kind: input, shape index: {}]
  %s1 = inlined_call_operand.vmem [shape: f32[2,1,17], index: 1, kind: input, shape index: {}]
  %s2 = inlined_call_operand.vmem [shape: f32[1,32], index: 2, kind: input, shape index: {}]
  %s3 = inlined_call_operand.vmem [shape: f32[1,32], index: 3, kind: input, shape index: {}]
  %s4 = inlined_call_operand.vmem [shape: bf16[32,96], index: 4, kind: input, shape index: {}]
  %s5 = inlined_call_operand.vmem [shape: bf16[32,32], index: 5, kind: input, shape index: {}]
  %s6 = inlined_call_operand.vmem [shape: f32[1,32], index: 6, kind: input, shape index: {}]
  %s7 = inlined_call_operand.vmem [shape: f32[1,32], index: 7, kind: input, shape index: {}]
  %s8 = inlined_call_operand.vmem [shape: bf16[32,64], index: 8, kind: input, shape index: {}]
  %s9 = inlined_call_operand.vmem [shape: f32[1,64], index: 9, kind: input, shape index: {}]
  %s10 = inlined_call_operand.vmem [shape: bf16[64,32], index: 10, kind: input, shape index: {}]
  %s11 = inlined_call_operand.vmem [shape: f32[1,32], index: 11, kind: input, shape index: {}]
  %s12 = inlined_call_operand.vmem [shape: f32[1,32], index: 12, kind: input, shape index: {}]
  %s13 = inlined_call_operand.vmem [shape: f32[1,32], index: 13, kind: input, shape index: {}]
  %s14 = inlined_call_operand.vmem [shape: bf16[2,17,32], index: 14, kind: output, shape index: {}]
  %s15 = sld [smem:[#allocation0]]
  $region89: #{seqvae_loss_forward.7} parent=0
    _
  %s17 = ssub.s32 1, %s15
  %s18 = scalar_select 0, %s17, %s15
  loop: start=0, step=1, limit=4
  $region2: #{seqvae_loss_forward.7} parent=0 // loop_pre_header
    _
  $region3: #{seqvae_loss_forward.7} parent=0 // loop_header
    %s20 = sphi 0, %s24
    %p21 = scmp.ge.s32.totalorder %s20, 4
    %s30 = sphi 0, %s32
    %s33 = sphi 0, %s30
    %s34 = sphi 0, %s33
    %s50 = sphi 0, %s34
    %s56 = sphi 0, %s58
    %s59 = sphi 0, %s56
    %s60 = sphi 0, %s59
    %s76 = sphi 0, %s60
    %s80 = sphi 0, %s80
    %s82 = sphi 0, %s80
    %s83 = sphi 0, %s82
    %s97 = sphi 0, %s83
    %s101 = sphi 0, %s101
    %s103 = sphi 0, %s101
    %s104 = sphi 0, %s103
    %s118 = sphi 0, %s104
    %s122 = sphi 0, %s122
    %s124 = sphi 0, %s122
    %s125 = sphi 0, %s124
    %s139 = sphi 0, %s125
    %s143 = sphi 0, %s143
    %s145 = sphi 0, %s143
    %s146 = sphi 0, %s145
    %s160 = sphi 0, %s146
    %s164 = sphi 0, %s164
    %s166 = sphi 0, %s164
    %s167 = sphi 0, %s166
    %s181 = sphi 0, %s167
    %s185 = sphi 0, %s185
    %s187 = sphi 0, %s185
    %s188 = sphi 0, %s187
    %s202 = sphi 0, %s188
    %s206 = sphi 0, %s206
    %s208 = sphi 0, %s206
    %s209 = sphi 0, %s208
    %s223 = sphi 0, %s209
    %s227 = sphi 0, %s227
    %s229 = sphi 0, %s227
    %s230 = sphi 0, %s229
    %s244 = sphi 0, %s230
    %s248 = sphi 0, %s248
    %s250 = sphi 0, %s248
    %s251 = sphi 0, %s250
    %s265 = sphi 0, %s251
    %s269 = sphi 0, %s269
    %s271 = sphi 0, %s269
    %s272 = sphi 0, %s271
    %s286 = sphi 0, %s272
    %s290 = sphi 0, %s290
    %s292 = sphi 0, %s290
    %s293 = sphi 0, %s292
    %s307 = sphi 0, %s293
    %s311 = sphi 0, %s311
    %s313 = sphi 0, %s311
    %s314 = sphi 0, %s313
    %s328 = sphi 0, %s314
    %s334 = sphi 0, %s336
    %s337 = sphi 0, %s334
    %s338 = sphi 0, %s337
    %s354 = sphi 0, %s338
  $region4: #{seqvae_loss_forward.7} parent=0 // loop_header_branch
    %23 = sbr.rel (%p21) target = $region8
  $region5: #{seqvae_loss_forward.7} parent=0 // loop_body
    %s25 = ssub.s32 %s20, 1
    %s26 = ssub.s32 %s20, 2
    %s27 = sadd.s32 %s20, 1
    %s28 = ssub.s32 %s20, %s27
    %p29 = scmp.eq.s32.totalorder %s28, 0
    %s31 = sadd.s32 %s30, 1
    %s32 = scalar_select %p29, %s30, %s31
    %p35 = pneg %p29
    %p36 = scmp.eq.s32.totalorder %s20, 1
    %p37 = por %p35, %p36
    %p38 = scmp.ne.s32.totalorder %s30, %s33
    %p39 = scmp.eq.s32.totalorder %s20, 0
    %p40 = por %p38, %p39
    %p41 = scmp.ne.s32.totalorder %s30, %s33
    %p42 = scmp.eq.s32.totalorder %s25, 1
    %p43 = por %p41, %p42
    %p44 = scmp.ne.s32.totalorder %s33, %s34
    %p45 = scmp.eq.s32.totalorder %s25, 0
    %p46 = por %p44, %p45
    %p47 = scmp.ne.s32.totalorder %s33, %s34
    %p48 = scmp.eq.s32.totalorder %s26, 1
    %p49 = por %p47, %p48
    %p51 = scmp.ne.s32.totalorder %s34, %s50
    %p52 = scmp.eq.s32.totalorder %s26, 0
    %p53 = por %p51, %p52
    %s54 = ssub.s32 %s20, %s27
    %p55 = scmp.eq.s32.totalorder %s54, 0
    %s57 = sadd.s32 %s56, 1
    %s58 = scalar_select %p55, %s56, %s57
    %p61 = pneg %p55
    %p62 = scmp.eq.s32.totalorder %s20, 1
    %p63 = por %p61, %p62
    %p64 = scmp.ne.s32.totalorder %s56, %s59
    %p65 = scmp.eq.s32.totalorder %s20, 0
    %p66 = por %p64, %p65
    %p67 = scmp.ne.s32.totalorder %s56, %s59
    %p68 = scmp.eq.s32.totalorder %s25, 1
    %p69 = por %p67, %p68
    %p70 = scmp.ne.s32.totalorder %s59, %s60
    %p71 = scmp.eq.s32.totalorder %s25, 0
    %p72 = por %p70, %p71
    %p73 = scmp.ne.s32.totalorder %s59, %s60
    %p74 = scmp.eq.s32.totalorder %s26, 1
    %p75 = por %p73, %p74
    %p77 = scmp.ne.s32.totalorder %s60, %s76
    %p78 = scmp.eq.s32.totalorder %s26, 0
    %p79 = por %p77, %p78
    %s81 = sadd.s32 %s80, 1
    %p84 = scmp.eq.s32.totalorder %s20, 1
    %p85 = scmp.ne.s32.totalorder %s80, %s82
    %p86 = scmp.eq.s32.totalorder %s20, 0
    %p87 = por %p85, %p86
    %p88 = scmp.ne.s32.totalorder %s80, %s82
    %p89 = scmp.eq.s32.totalorder %s25, 1
    %p90 = por %p88, %p89
    %p91 = scmp.ne.s32.totalorder %s82, %s83
    %p92 = scmp.eq.s32.totalorder %s25, 0
    %p93 = por %p91, %p92
    %p94 = scmp.ne.s32.totalorder %s82, %s83
    %p95 = scmp.eq.s32.totalorder %s26, 1
    %p96 = por %p94, %p95
    %p98 = scmp.ne.s32.totalorder %s83, %s97
    %p99 = scmp.eq.s32.totalorder %s26, 0
    %p100 = por %p98, %p99
    %s102 = sadd.s32 %s101, 1
    %p105 = scmp.eq.s32.totalorder %s20, 1
    %p106 = scmp.ne.s32.totalorder %s101, %s103
    %p107 = scmp.eq.s32.totalorder %s20, 0
    %p108 = por %p106, %p107
    %p109 = scmp.ne.s32.totalorder %s101, %s103
    %p110 = scmp.eq.s32.totalorder %s25, 1
    %p111 = por %p109, %p110
    %p112 = scmp.ne.s32.totalorder %s103, %s104
    %p113 = scmp.eq.s32.totalorder %s25, 0
    %p114 = por %p112, %p113
    %p115 = scmp.ne.s32.totalorder %s103, %s104
    %p116 = scmp.eq.s32.totalorder %s26, 1
    %p117 = por %p115, %p116
    %p119 = scmp.ne.s32.totalorder %s104, %s118
    %p120 = scmp.eq.s32.totalorder %s26, 0
    %p121 = por %p119, %p120
    %s123 = sadd.s32 %s122, 1
    %p126 = scmp.eq.s32.totalorder %s20, 1
    %p127 = scmp.ne.s32.totalorder %s122, %s124
    %p128 = scmp.eq.s32.totalorder %s20, 0
    %p129 = por %p127, %p128
    %p130 = scmp.ne.s32.totalorder %s122, %s124
    %p131 = scmp.eq.s32.totalorder %s25, 1
    %p132 = por %p130, %p131
    %p133 = scmp.ne.s32.totalorder %s124, %s125
    %p134 = scmp.eq.s32.totalorder %s25, 0
    %p135 = por %p133, %p134
    %p136 = scmp.ne.s32.totalorder %s124, %s125
    %p137 = scmp.eq.s32.totalorder %s26, 1
    %p138 = por %p136, %p137
    %p140 = scmp.ne.s32.totalorder %s125, %s139
    %p141 = scmp.eq.s32.totalorder %s26, 0
    %p142 = por %p140, %p141
    %s144 = sadd.s32 %s143, 1
    %p147 = scmp.eq.s32.totalorder %s20, 1
    %p148 = scmp.ne.s32.totalorder %s143, %s145
    %p149 = scmp.eq.s32.totalorder %s20, 0
    %p150 = por %p148, %p149
    %p151 = scmp.ne.s32.totalorder %s143, %s145
    %p152 = scmp.eq.s32.totalorder %s25, 1
    %p153 = por %p151, %p152
    %p154 = scmp.ne.s32.totalorder %s145, %s146
    %p155 = scmp.eq.s32.totalorder %s25, 0
    %p156 = por %p154, %p155
    %p157 = scmp.ne.s32.totalorder %s145, %s146
    %p158 = scmp.eq.s32.totalorder %s26, 1
    %p159 = por %p157, %p158
    %p161 = scmp.ne.s32.totalorder %s146, %s160
    %p162 = scmp.eq.s32.totalorder %s26, 0
    %p163 = por %p161, %p162
    %s165 = sadd.s32 %s164, 1
    %p168 = scmp.eq.s32.totalorder %s20, 1
    %p169 = scmp.ne.s32.totalorder %s164, %s166
    %p170 = scmp.eq.s32.totalorder %s20, 0
    %p171 = por %p169, %p170
    %p172 = scmp.ne.s32.totalorder %s164, %s166
    %p173 = scmp.eq.s32.totalorder %s25, 1
    %p174 = por %p172, %p173
    %p175 = scmp.ne.s32.totalorder %s166, %s167
    %p176 = scmp.eq.s32.totalorder %s25, 0
    %p177 = por %p175, %p176
    %p178 = scmp.ne.s32.totalorder %s166, %s167
    %p179 = scmp.eq.s32.totalorder %s26, 1
    %p180 = por %p178, %p179
    %p182 = scmp.ne.s32.totalorder %s167, %s181
    %p183 = scmp.eq.s32.totalorder %s26, 0
    %p184 = por %p182, %p183
    %s186 = sadd.s32 %s185, 1
    %p189 = scmp.eq.s32.totalorder %s20, 1
    %p190 = scmp.ne.s32.totalorder %s185, %s187
    %p191 = scmp.eq.s32.totalorder %s20, 0
    %p192 = por %p190, %p191
    %p193 = scmp.ne.s32.totalorder %s185, %s187
    %p194 = scmp.eq.s32.totalorder %s25, 1
    %p195 = por %p193, %p194
    %p196 = scmp.ne.s32.totalorder %s187, %s188
    %p197 = scmp.eq.s32.totalorder %s25, 0
    %p198 = por %p196, %p197
    %p199 = scmp.ne.s32.totalorder %s187, %s188
    %p200 = scmp.eq.s32.totalorder %s26, 1
    %p201 = por %p199, %p200
    %p203 = scmp.ne.s32.totalorder %s188, %s202
    %p204 = scmp.eq.s32.totalorder %s26, 0
    %p205 = por %p203, %p204
    %s207 = sadd.s32 %s206, 1
    %p210 = scmp.eq.s32.totalorder %s20, 1
    %p211 = scmp.ne.s32.totalorder %s206, %s208
    %p212 = scmp.eq.s32.totalorder %s20, 0
    %p213 = por %p211, %p212
    %p214 = scmp.ne.s32.totalorder %s206, %s208
    %p215 = scmp.eq.s32.totalorder %s25, 1
    %p216 = por %p214, %p215
    %p217 = scmp.ne.s32.totalorder %s208, %s209
    %p218 = scmp.eq.s32.totalorder %s25, 0
    %p219 = por %p217, %p218
    %p220 = scmp.ne.s32.totalorder %s208, %s209
    %p221 = scmp.eq.s32.totalorder %s26, 1
    %p222 = por %p220, %p221
    %p224 = scmp.ne.s32.totalorder %s209, %s223
    %p225 = scmp.eq.s32.totalorder %s26, 0
    %p226 = por %p224, %p225
    %s228 = sadd.s32 %s227, 1
    %p231 = scmp.eq.s32.totalorder %s20, 1
    %p232 = scmp.ne.s32.totalorder %s227, %s229
    %p233 = scmp.eq.s32.totalorder %s20, 0
    %p234 = por %p232, %p233
    %p235 = scmp.ne.s32.totalorder %s227, %s229
    %p236 = scmp.eq.s32.totalorder %s25, 1
    %p237 = por %p235, %p236
    %p238 = scmp.ne.s32.totalorder %s229, %s230
    %p239 = scmp.eq.s32.totalorder %s25, 0
    %p240 = por %p238, %p239
    %p241 = scmp.ne.s32.totalorder %s229, %s230
    %p242 = scmp.eq.s32.totalorder %s26, 1
    %p243 = por %p241, %p242
    %p245 = scmp.ne.s32.totalorder %s230, %s244
    %p246 = scmp.eq.s32.totalorder %s26, 0
    %p247 = por %p245, %p246
    %s249 = sadd.s32 %s248, 1
    %p252 = scmp.eq.s32.totalorder %s20, 1
    %p253 = scmp.ne.s32.totalorder %s248, %s250
    %p254 = scmp.eq.s32.totalorder %s20, 0
    %p255 = por %p253, %p254
    %p256 = scmp.ne.s32.totalorder %s248, %s250
    %p257 = scmp.eq.s32.totalorder %s25, 1
    %p258 = por %p256, %p257
    %p259 = scmp.ne.s32.totalorder %s250, %s251
    %p260 = scmp.eq.s32.totalorder %s25, 0
    %p261 = por %p259, %p260
    %p262 = scmp.ne.s32.totalorder %s250, %s251
    %p263 = scmp.eq.s32.totalorder %s26, 1
    %p264 = por %p262, %p263
    %p266 = scmp.ne.s32.totalorder %s251, %s265
    %p267 = scmp.eq.s32.totalorder %s26, 0
    %p268 = por %p266, %p267
    %s270 = sadd.s32 %s269, 1
    %p273 = scmp.eq.s32.totalorder %s20, 1
    %p274 = scmp.ne.s32.totalorder %s269, %s271
    %p275 = scmp.eq.s32.totalorder %s20, 0
    %p276 = por %p274, %p275
    %p277 = scmp.ne.s32.totalorder %s269, %s271
    %p278 = scmp.eq.s32.totalorder %s25, 1
    %p279 = por %p277, %p278
    %p280 = scmp.ne.s32.totalorder %s271, %s272
    %p281 = scmp.eq.s32.totalorder %s25, 0
    %p282 = por %p280, %p281
    %p283 = scmp.ne.s32.totalorder %s271, %s272
    %p284 = scmp.eq.s32.totalorder %s26, 1
    %p285 = por %p283, %p284
    %p287 = scmp.ne.s32.totalorder %s272, %s286
    %p288 = scmp.eq.s32.totalorder %s26, 0
    %p289 = por %p287, %p288
    %s291 = sadd.s32 %s290, 1
    %p294 = scmp.eq.s32.totalorder %s20, 1
    %p295 = scmp.ne.s32.totalorder %s290, %s292
    %p296 = scmp.eq.s32.totalorder %s20, 0
    %p297 = por %p295, %p296
    %p298 = scmp.ne.s32.totalorder %s290, %s292
    %p299 = scmp.eq.s32.totalorder %s25, 1
    %p300 = por %p298, %p299
    %p301 = scmp.ne.s32.totalorder %s292, %s293
    %p302 = scmp.eq.s32.totalorder %s25, 0
    %p303 = por %p301, %p302
    %p304 = scmp.ne.s32.totalorder %s292, %s293
    %p305 = scmp.eq.s32.totalorder %s26, 1
    %p306 = por %p304, %p305
    %p308 = scmp.ne.s32.totalorder %s293, %s307
    %p309 = scmp.eq.s32.totalorder %s26, 0
    %p310 = por %p308, %p309
    %s312 = sadd.s32 %s311, 1
    %p315 = scmp.eq.s32.totalorder %s20, 1
    %p316 = scmp.ne.s32.totalorder %s311, %s313
    %p317 = scmp.eq.s32.totalorder %s20, 0
    %p318 = por %p316, %p317
    %p319 = scmp.ne.s32.totalorder %s311, %s313
    %p320 = scmp.eq.s32.totalorder %s25, 1
    %p321 = por %p319, %p320
    %p322 = scmp.ne.s32.totalorder %s313, %s314
    %p323 = scmp.eq.s32.totalorder %s25, 0
    %p324 = por %p322, %p323
    %p325 = scmp.ne.s32.totalorder %s313, %s314
    %p326 = scmp.eq.s32.totalorder %s26, 1
    %p327 = por %p325, %p326
    %p329 = scmp.ne.s32.totalorder %s314, %s328
    %p330 = scmp.eq.s32.totalorder %s26, 0
    %p331 = por %p329, %p330
    %s332 = ssub.s32 %s20, %s27
    %p333 = scmp.eq.s32.totalorder %s332, 0
    %s335 = sadd.s32 %s334, 1
    %s336 = scalar_select %p333, %s334, %s335
    %p339 = pneg %p333
    %p340 = scmp.eq.s32.totalorder %s20, 1
    %p341 = por %p339, %p340
    %p342 = scmp.ne.s32.totalorder %s334, %s337
    %p343 = scmp.eq.s32.totalorder %s20, 0
    %p344 = por %p342, %p343
    %p345 = scmp.ne.s32.totalorder %s334, %s337
    %p346 = scmp.eq.s32.totalorder %s25, 1
    %p347 = por %p345, %p346
    %p348 = scmp.ne.s32.totalorder %s337, %s338
    %p349 = scmp.eq.s32.totalorder %s25, 0
    %p350 = por %p348, %p349
    %p351 = scmp.ne.s32.totalorder %s337, %s338
    %p352 = scmp.eq.s32.totalorder %s26, 1
    %p353 = por %p351, %p352
    %p355 = scmp.ne.s32.totalorder %s338, %s354
    %p356 = scmp.eq.s32.totalorder %s26, 0
    %p357 = por %p355, %p356
    %p358 = scmp.le.s32.totalorder 1, %s20
    %p359 = scmp.lt.s32.totalorder %s20, 3
    %p360 = pnand %p358, %p359
    %p361 = pneg %p360
    // Predicated region
    $region9: #{seqvae_loss_forward.7} parent=5 // pred_check
      _
    $region10: #{seqvae_loss_forward.7} parent=5 // pred_check_branch
      %363 = sbr.rel (%p360) target = $region12
    $region11: #{seqvae_loss_forward.7} parent=5 // pred_region
      %s364 = ssub.s32 %s20, 1
      // Predicated region
      $region13: #{seqvae_loss_forward.7} parent=11 // pred_check
        %p365 = pneg %p93
      $region14: #{seqvae_loss_forward.7} parent=11 // pred_check_branch
        %367 = sbr.rel (%p365) target = $region16
      $region15: #{seqvae_loss_forward.7} parent=11 // pred_region
        _
      $region16: #{seqvae_loss_forward.7} parent=11 // pred_fallthru
        _
      // Predicated region
      $region17: #{seqvae_loss_forward.7} parent=11 // pred_check
        %p368 = pneg %p114
      $region18: #{seqvae_loss_forward.7} parent=11 // pred_check_branch
        %370 = sbr.rel (%p368) target = $region20
      $region19: #{seqvae_loss_forward.7} parent=11 // pred_region
        _
      $region20: #{seqvae_loss_forward.7} parent=11 // pred_fallthru
        _
      // Predicated region
      $region21: #{seqvae_loss_forward.7} parent=11 // pred_check
        %p371 = pneg %p135
      $region22: #{seqvae_loss_forward.7} parent=11 // pred_check_branch
        %373 = sbr.rel (%p371) target = $region24
      $region23: #{seqvae_loss_forward.7} parent=11 // pred_region
        _
      $region24: #{seqvae_loss_forward.7} parent=11 // pred_fallthru
        _
      // Predicated region
      $region25: #{seqvae_loss_forward.7} parent=11 // pred_check
        %p374 = pneg %p156
      $region26: #{seqvae_loss_forward.7} parent=11 // pred_check_branch
        %376 = sbr.rel (%p374) target = $region28
      $region27: #{seqvae_loss_forward.7} parent=11 // pred_region
        _
      $region28: #{seqvae_loss_forward.7} parent=11 // pred_fallthru
        _
      // Predicated region
      $region29: #{seqvae_loss_forward.7} parent=11 // pred_check
        %p377 = pneg %p177
      $region30: #{seqvae_loss_forward.7} parent=11 // pred_check_branch
        %379 = sbr.rel (%p377) target = $region32
      $region31: #{seqvae_loss_forward.7} parent=11 // pred_region
        _
      $region32: #{seqvae_loss_forward.7} parent=11 // pred_fallthru
        _
      // Predicated region
      $region33: #{seqvae_loss_forward.7} parent=11 // pred_check
        %p380 = pneg %p198
      $region34: #{seqvae_loss_forward.7} parent=11 // pred_check_branch
        %382 = sbr.rel (%p380) target = $region36
      $region35: #{seqvae_loss_forward.7} parent=11 // pred_region
        _
      $region36: #{seqvae_loss_forward.7} parent=11 // pred_fallthru
        _
      // Predicated region
      $region37: #{seqvae_loss_forward.7} parent=11 // pred_check
        %p383 = pneg %p219
      $region38: #{seqvae_loss_forward.7} parent=11 // pred_check_branch
        %385 = sbr.rel (%p383) target = $region40
      $region39: #{seqvae_loss_forward.7} parent=11 // pred_region
        _
      $region40: #{seqvae_loss_forward.7} parent=11 // pred_fallthru
        _
      // Predicated region
      $region41: #{seqvae_loss_forward.7} parent=11 // pred_check
        %p386 = pneg %p240
      $region42: #{seqvae_loss_forward.7} parent=11 // pred_check_branch
        %388 = sbr.rel (%p386) target = $region44
      $region43: #{seqvae_loss_forward.7} parent=11 // pred_region
        _
      $region44: #{seqvae_loss_forward.7} parent=11 // pred_fallthru
        _
      // Predicated region
      $region45: #{seqvae_loss_forward.7} parent=11 // pred_check
        %p389 = pneg %p261
      $region46: #{seqvae_loss_forward.7} parent=11 // pred_check_branch
        %391 = sbr.rel (%p389) target = $region48
      $region47: #{seqvae_loss_forward.7} parent=11 // pred_region
        _
      $region48: #{seqvae_loss_forward.7} parent=11 // pred_fallthru
        _
      // Predicated region
      $region49: #{seqvae_loss_forward.7} parent=11 // pred_check
        %p392 = pneg %p282
      $region50: #{seqvae_loss_forward.7} parent=11 // pred_check_branch
        %394 = sbr.rel (%p392) target = $region52
      $region51: #{seqvae_loss_forward.7} parent=11 // pred_region
        _
      $region52: #{seqvae_loss_forward.7} parent=11 // pred_fallthru
        _
      // Predicated region
      $region53: #{seqvae_loss_forward.7} parent=11 // pred_check
        %p395 = pneg %p303
      $region54: #{seqvae_loss_forward.7} parent=11 // pred_check_branch
        %397 = sbr.rel (%p395) target = $region56
      $region55: #{seqvae_loss_forward.7} parent=11 // pred_region
        _
      $region56: #{seqvae_loss_forward.7} parent=11 // pred_fallthru
        _
      // Predicated region
      $region57: #{seqvae_loss_forward.7} parent=11 // pred_check
        %p398 = pneg %p324
      $region58: #{seqvae_loss_forward.7} parent=11 // pred_check_branch
        %400 = sbr.rel (%p398) target = $region60
      $region59: #{seqvae_loss_forward.7} parent=11 // pred_region
        _
      $region60: #{seqvae_loss_forward.7} parent=11 // pred_fallthru
        _
    $region12: #{seqvae_loss_forward.7} parent=5 // pred_fallthru
      _
    %p401 = scmp.lt.s32.totalorder %s20, 2
    // Predicated region
    $region61: #{seqvae_loss_forward.7} parent=5 // pred_check
      %p402 = pneg %p401
    $region62: #{seqvae_loss_forward.7} parent=5 // pred_check_branch
      %404 = sbr.rel (%p402) target = $region64
    $region63: #{seqvae_loss_forward.7} parent=5 // pred_region
      // Predicated region
      $region65: #{seqvae_loss_forward.7} parent=63 // pred_check
        %p405 = pneg %p40
      $region66: #{seqvae_loss_forward.7} parent=63 // pred_check_branch
        %407 = sbr.rel (%p405) target = $region68
      $region67: #{seqvae_loss_forward.7} parent=63 // pred_region
        %p408 = scmp.lt.s32.totalorder %s20, 1
        %s409 = scalar_select %p408, %s20, 1
        %s410 = smul.addr %s409, 3
        %s411 = smul.addr %s410, 4
        %s412 = scalar_lea.vmem %s0, %s411
      $region68: #{seqvae_loss_forward.7} parent=63 // pred_fallthru
        _
      // Predicated region
      $region69: #{seqvae_loss_forward.7} parent=63 // pred_check
        %p413 = pneg %p66
      $region70: #{seqvae_loss_forward.7} parent=63 // pred_check_branch
        %415 = sbr.rel (%p413) target = $region72
      $region71: #{seqvae_loss_forward.7} parent=63 // pred_region
        %p416 = scmp.lt.s32.totalorder %s20, 1
        %s417 = scalar_select %p416, %s20, 1
        %s418 = scalar_lea.vmem %s1, %s417
      $region72: #{seqvae_loss_forward.7} parent=63 // pred_fallthru
        _
    $region64: #{seqvae_loss_forward.7} parent=5 // pred_fallthru
      _
    %p419 = scmp.le.s32.totalorder 1, %s20
    %p420 = scmp.lt.s32.totalorder %s20, 3
    %p421 = pnand %p419, %p420
    %p422 = pneg %p421
    // Predicated region
    $region73: #{seqvae_loss_forward.7} parent=5 // pred_check
      _
    $region74: #{seqvae_loss_forward.7} parent=5 // pred_check_branch
      %424 = sbr.rel (%p421) target = $region76
    $region75: #{seqvae_loss_forward.7} parent=5 // pred_region
      %s425 = ssub.s32 %s20, 1
      %p426 = scmp.lt.s32.totalorder %s25, 1
      %s427 = scalar_select %p426, %s25, 1
      %s428 = smul.addr %s427, 3
      %s429 = smul.addr %s428, 4
      %s430 = scalar_lea.vmem %s0, %s429
      %p431 = pneg %p46
      %p432 = pneg %p43
      %p433 = scmp.lt.s32.totalorder %s25, 1
      %s434 = scalar_select %p433, %s25, 1
      %s435 = scalar_lea.vmem %s1, %s434
      %p436 = pneg %p72
      %p437 = pneg %p69
      %p438 = pneg %p93
      %p439 = pneg %p90
      %p440 = pneg %p114
      %p441 = pneg %p111
      %p442 = pneg %p135
      %p443 = pneg %p132
      %p444 = pneg %p156
      %p445 = pneg %p153
      %p446 = pneg %p177
      %p447 = pneg %p174
      %p448 = pneg %p198
      %p449 = pneg %p195
      %p450 = pneg %p219
      %p451 = pneg %p216
      %p452 = pneg %p240
      %p453 = pneg %p237
      %p454 = pneg %p261
      %p455 = pneg %p258
      %p456 = pneg %p282
      %p457 = pneg %p279
      %p458 = pneg %p303
      %p459 = pneg %p300
      %p460 = pneg %p324
      %p461 = pneg %p321
      %p462 = pneg %p350
      %p463 = pneg %p347
      %p464 = scmp.lt.s32.totalorder %s25, 1
      %s465 = scalar_select %p464, %s25, 1
      %s466 = smul.addr %s465, 3
      %s467 = smul.addr %s466, 4
      %s468 = scalar_lea.vmem %s14, %s467
      %p469 = scmp.lt.s32.totalorder %s25, 1
      %s470 = scalar_select %p469, %s25, 1
      %s471 = smul.addr %s470, 3
      %s472 = smul.addr %s471, 4
      %s473 = scalar_lea.vmem %s0, %s472
      %p474 = scmp.lt.s32.totalorder %s25, 1
      %s475 = scalar_select %p474, %s25, 1
      %s476 = scalar_lea.vmem %s1, %s475
      %p477 = scmp.lt.s32.totalorder %s25, 1
      %s478 = scalar_select %p477, %s25, 1
      %s479 = smul.addr %s478, 3
      %s480 = smul.addr %s479, 4
      %s481 = scalar_lea.vmem %s14, %s480
      %v483 = vld [vmem:[%s4] sm:$0xf]
      %v484 = vld [vmem:[%s4 + $0x4] sm:$0xf]
      %v485 = vld [vmem:[%s4 + $0x8] sm:$0xf]
      %v486 = vld [vmem:[%s4 + $0xc] sm:$0xf]
      %v487 = vld [vmem:[%s5] sm:$0xf]
      %v488 = vld [vmem:[%s5 + $0x4] sm:$0xf]
      %v489 = vld [vmem:[%s5 + $0x8] sm:$0xf]
      %v490 = vld [vmem:[%s5 + $0xc] sm:$0xf]
      %v491 = vld [vmem:[%s6] sm:$0x1]
      %v492 = vld [vmem:[%s7] sm:$0x1]
      %v493 = vld [vmem:[%s8] sm:$0xf]
      %v494 = vld [vmem:[%s8 + $0x4] sm:$0xf]
      %v495 = vld [vmem:[%s8 + $0x8] sm:$0xf]
      %v496 = vld [vmem:[%s8 + $0xc] sm:$0xf]
      %v497 = vld [vmem:[%s9] sm:$0x1]
      %v498 = vld [vmem:[%s10] sm:$0xf]
      %v499 = vld [vmem:[%s10 + $0x4] sm:$0xf]
      %v500 = vld [vmem:[%s10 + $0x8] sm:$0xf]
      %v501 = vld [vmem:[%s10 + $0xc] sm:$0xf]
      %v502 = vld [vmem:[%s10 + $0x10] sm:$0xf]
      %v503 = vld [vmem:[%s10 + $0x14] sm:$0xf]
      %v504 = vld [vmem:[%s10 + $0x18] sm:$0xf]
      %v505 = vld [vmem:[%s10 + $0x1c] sm:$0xf]
      %v506 = vld [vmem:[%s11] sm:$0x1]
      %v507 = vld [vmem:[%s12] sm:$0x1]
      %v508 = vld [vmem:[%s13] sm:$0x1]
      %v509 = vld [vmem:[%s473] sm:$0xf]
      %v510 = vld [vmem:[%s473 + $0x4] sm:$0xf]
      %v511 = vld [vmem:[%s473 + $0x8] sm:$0x1]
      %v512 = vunpack.c.l.bf16 %v509
      %v513 = vunpack.c.l.bf16 %v510
      %v514 = vunpack.c.l.bf16 %v511
      %v515 = vld [vmem:[%s2] sm:$0x1]
      %v516 = vld [vmem:[%s3] sm:$0x1]
      %vm517 = vcmask 261120
      %v518 = vsel %vm517, %v512, 0.0
      %519 = vadd.xlane.f32.xlu0 %v518
      %v520 = vpop.xlane.xlu0 %519
      %v521 = vsel %vm517, %v513, 0.0
      %522 = vadd.xlane.f32.xlu0 %v521
      %v523 = vpop.xlane.xlu0 %522
      %vm524 = vcmask 253952
      %v525 = vsel %vm524, %v514, 0.0
      %526 = vadd.xlane.f32.xlu0 %v525
      %v527 = vpop.xlane.xlu0 %526
      %v528 = vrcp.pop 32.0
      %v529 = vmul.f32 %v520, %v528
      %v530 = vmul.f32 %v523, %v528
      %v531 = vmul.f32 %v527, %v528
      %v532 = vsub.f32 %v512, %v529
      %v533 = vsub.f32 %v513, %v530
      %v534 = vsub.f32 %v514, %v531
      %v535 = vmul.f32 %v532, %v532
      %v536 = vmul.f32 %v533, %v533
      %v537 = vmul.f32 %v534, %v534
      %v538 = vsel %vm517, %v535, 0.0
      %539 = vadd.xlane.f32.xlu0 %v538
      %v540 = vpop.xlane.xlu0 %539
      %v541 = vsel %vm517, %v536, 0.0
      %542 = vadd.xlane.f32.xlu0 %v541
      %v543 = vpop.xlane.xlu0 %542
      %v544 = vsel %vm524, %v537, 0.0
      %545 = vadd.xlane.f32.xlu0 %v544
      %v546 = vpop.xlane.xlu0 %545
      %v547 = vmul.f32 %v540, %v528
      %v548 = vmul.f32 %v543, %v528
      %v549 = vmul.f32 %v546, %v528
      %v550 = vadd.f32 %v547, 1e-06
      %v551 = vadd.f32 %v548, 1e-06
      %v552 = vadd.f32 %v549, 1e-06
      %v553 = vrsqrt.pop %v550
      %v554 = vrsqrt.pop %v551
      %v555 = vrsqrt.pop %v552
      %v556 = vmul.f32 %v532, %v553
      %v557 = vmul.f32 %v533, %v554
      %v558 = vmul.f32 %v534, %v555
      %v560 = vlaneseq
      %v561 = vshrl.u32 %v560, 7
      %v562 = vsub.s32 0, %v561
      %v563 = vrot.slane %v515, %v562
      %v565 = vmul.f32 %v556, %v563
      %v566 = vmul.f32 %v557, %v563
      %v567 = vmul.f32 %v558, %v563
      %v569 = vlaneseq
      %v570 = vshrl.u32 %v569, 7
      %v571 = vsub.s32 0, %v570
      %v572 = vrot.slane %v516, %v571
      %v574 = vadd.f32 %v565, %v572
      %v575 = vadd.f32 %v566, %v572
      %v576 = vadd.f32 %v567, %v572
      %v577 = vld [vmem:[%s476] sm:$0x1]
      %vm578 = vcmp.eq.f32.partialorder %v577, 0.0
      %v579 = vlaneseq
      %v580 = vshrl.u32 %v579, 7
      %v581 = vadd.s32 %v580, 8
      %v582 = vadd.s32 %v580, 16
      %v583 = vlaneseq
      %v584 = vand.u32 %v583, 127
      %vm585 = vcmp.lt.s32.totalorder %v580, %v584
      %vm586 = vcmp.lt.s32.totalorder %v581, %v584
      %vm587 = vcmp.lt.s32.totalorder %v582, %v584
      %v588 = vsel %vm578, 1, 0
      %v589 = vlaneseq
      %v590 = vshrl.u32 %v589, 7
      %v591 = vsub.s32 0, %v590
      %v592 = vrot.slane %v588, %v591
      %vm593 = vcmp.eq.s32.totalorder %v592, 1
      %vm594 = vmor %vm593, %vm585
      %vm595 = vmor %vm593, %vm586
      %vm596 = vmor %vm593, %vm587
      %v597 = vpack.c.bf16 %v575, %v574
      %v598 = vpack.c.bf16 %v576, %v576
      %v603 = vunpack.c.l.b16 %v483
      %v604 = vunpack.c.l.b16 %v484
      %v605 = vunpack.c.l.b16 %v485
      %v606 = vunpack.c.l.b16 %v486
      %v607 = vpack.c.b16 %v604, %v603
      %v608 = vpack.c.b16 %v606, %v605
      %v612 = vsel %vm517, %v597, 0
      %v615 = vsel %vm517, %v598, 0
      %617 = vmatprep.subr.bf16.mxu0 0
      %618 = vmatpush1.bf16.msra.mxu0 0
      %619 = vmatprep.subr.bf16.mxu0 0
      %620 = vmatpush1.bf16.msra.mxu0 0
      %621 = vmatprep.subr.bf16.mxu0 0
      %622 = vmatpush1.bf16.msra.mxu0 0
      %623 = vmatprep.subr.bf16.mxu0 0
      %624 = vmatpush1.bf16.msra.mxu0 0
      %625 = vmatprep.subr.bf16.mxu0 0
      %626 = vmatpush1.bf16.msra.mxu0 0
      %627 = vmatprep.subr.bf16.mxu0 0
      %628 = vmatpush1.bf16.msra.mxu0 0
      %629 = vmatprep.subr.bf16.mxu0 0
      %630 = vmatpush1.bf16.msra.mxu0 %v608
      %631 = vmatprep.subr.bf16.mxu0 0
      %632 = vmatpush1.bf16.msra.mxu0 %v607
      %633 = vmatprep.subr.bf16.mxu0 0
      %634 = vmatpush2.bf16.msra.mxu0 0
      %635 = vmatprep.subr.bf16.mxu0 0
      %636 = vmatpush2.bf16.msra.mxu0 0
      %637 = vmatprep.subr.bf16.mxu0 0
      %638 = vmatpush2.bf16.msra.mxu0 0
      %639 = vmatprep.subr.bf16.mxu0 0
      %640 = vmatpush2.bf16.msra.mxu0 0
      %641 = vmatprep.subr.bf16.mxu0 0
      %642 = vmatpush2.bf16.msra.mxu0 0
      %643 = vmatprep.subr.bf16.mxu0 0
      %644 = vmatpush2.bf16.msra.mxu0 0
      %645 = vmatprep.subr.bf16.mxu0 0
      %646 = vmatpush2.bf16.msra.mxu0 0
      %647 = vmatprep.subr.bf16.mxu0 0
      %648 = vmatpush2.bf16.msra.mxu0 0
      %649 = vmatprep.mubr.bf16.mxu0 0
      %650 = vmatmul.mubr.bf16.gmra.mxu0 %v612
      %v651 = vpop.f32.mrf.mxu0
      %v652 = vadd.f32 0.0, %v651
      %v653 = vpop.f32.mrf.mxu0
      %v654 = vpop.f32.mrf.mxu0
      %v655 = vadd.f32 0.0, %v654
      %v656 = vpop.f32.mrf.mxu0
      %657 = vmatprep.mubr.bf16.mxu0 0
      %658 = vmatmul.mubr.bf16.gmra.mxu0 %v615
      %v659 = vpop.f32.mrf.mxu0
      %v660 = vadd.f32 0.0, %v659
      %v661 = vpop.f32.mrf.mxu0
      %v662 = vpop.f32.mrf.mxu0
      %v663 = vpop.f32.mrf.mxu0
      %664 = vdwg.mxu0
      %v665 = vpack.c.bf16 %v655, %v652
      %v666 = vpack.c.bf16 %v660, %v660
      %669 = vrot.lane.b32.xlu0 %v665, 96
      %v670 = vpop.permute.xlu0 %669
      %671 = vrot.lane.b32.xlu0 %v666, 96
      %v672 = vpop.permute.xlu0 %671
      %vm673 = vcmask 130048
      %v675 = vsel %vm673, %v665, 0
      %v678 = vsel %vm673, %v666, 0
      %v681 = vsel %vm673, %v670, 0
      %v684 = vsel %vm673, %v672, 0
      %686 = vmatprep.subr.bf16.mxu0 0
      %687 = vmatpush1.bf16.xpose.msra.mxu0 0
      %688 = vmatprep.subr.bf16.mxu0 0
      %689 = vmatpush1.bf16.xpose.msra.mxu0 0
      %690 = vmatprep.subr.bf16.mxu0 0
      %691 = vmatpush1.bf16.xpose.msra.mxu0 0
      %692 = vmatprep.subr.bf16.mxu0 0
      %693 = vmatpush1.bf16.xpose.msra.mxu0 0
      %694 = vmatprep.subr.bf16.mxu0 0
      %695 = vmatpush1.bf16.xpose.msra.mxu0 0
      %696 = vmatprep.subr.bf16.mxu0 0
      %697 = vmatpush1.bf16.xpose.msra.mxu0 0
      %698 = vmatprep.subr.bf16.mxu0 0
      %699 = vmatpush1.bf16.xpose.msra.mxu0 %v684
      %700 = vmatprep.subr.bf16.mxu0 0
      %701 = vmatpush1.bf16.xpose.msra.mxu0 %v681
      %702 = vmatprep.subr.bf16.mxu0 0
      %703 = vmatpush2.bf16.xpose.msra.mxu0 0
      %704 = vmatprep.subr.bf16.mxu0 0
      %705 = vmatpush2.bf16.xpose.msra.mxu0 0
      %706 = vmatprep.subr.bf16.mxu0 0
      %707 = vmatpush2.bf16.xpose.msra.mxu0 0
      %708 = vmatprep.subr.bf16.mxu0 0
      %709 = vmatpush2.bf16.xpose.msra.mxu0 0
      %710 = vmatprep.subr.bf16.mxu0 0
      %711 = vmatpush2.bf16.xpose.msra.mxu0 0
      %712 = vmatprep.subr.bf16.mxu0 0
      %713 = vmatpush2.bf16.xpose.msra.mxu0 0
      %714 = vmatprep.subr.bf16.mxu0 0
      %715 = vmatpush2.bf16.xpose.msra.mxu0 0
      %716 = vmatprep.subr.bf16.mxu0 0
      %717 = vmatpush2.bf16.xpose.msra.mxu0 0
      %718 = vmatprep.mubr.bf16.mxu0 0
      %719 = vmatmul.mubr.bf16.gmra.mxu0 %v675
      %v720 = vpop.f32.mrf.mxu0
      %v721 = vadd.f32 0.0, %v720
      %v722 = vpop.f32.mrf.mxu0
      %v723 = vpop.f32.mrf.mxu0
      %v724 = vadd.f32 0.0, %v723
      %v725 = vpop.f32.mrf.mxu0
      %726 = vmatprep.mubr.bf16.mxu0 0
      %727 = vmatmul.mubr.bf16.gmra.mxu0 %v678
      %v728 = vpop.f32.mrf.mxu0
      %v729 = vadd.f32 0.0, %v728
      %v730 = vpop.f32.mrf.mxu0
      %v731 = vpop.f32.mrf.mxu0
      %v732 = vpop.f32.mrf.mxu0
      %733 = vdwg.mxu0
      %v734 = vsel %vm594, -1e+09, %v721
      %v735 = vsel %vm595, -1e+09, %v724
      %v736 = vsel %vm596, -1e+09, %v729
      %vm737 = vcmask 138240
      %v738 = vsel %vm737, %v734, -inf
      %739 = vmax.xlane.f32.xlu0 %v738
      %v740 = vpop.xlane.xlu0 %739
      %v741 = vsel %vm737, %v735, -inf
      %742 = vmax.xlane.f32.xlu0 %v741
      %v743 = vpop.xlane.xlu0 %742
      %vm744 = vcmask 131072
      %v745 = vsel %vm744, %v736, -inf
      %746 = vmax.xlane.f32.xlu0 %v745
      %v747 = vpop.xlane.xlu0 %746
      %v748 = vsub.f32 %v734, %v740
      %v749 = vsub.f32 %v735, %v743
      %v750 = vsub.f32 %v736, %v747
      %v751 = vmul.f32 %v748, 1.442695
      %v752 = vpow.pop %v751
      %v753 = vmul.f32 %v749, 1.442695
      %v754 = vpow.pop %v753
      %v755 = vmul.f32 %v750, 1.442695
      %v756 = vpow.pop %v755
      %v757 = vsel %vm737, %v752, 0.0
      %758 = vadd.xlane.f32.xlu0 %v757
      %v759 = vpop.xlane.xlu0 %758
      %v760 = vsel %vm737, %v754, 0.0
      %761 = vadd.xlane.f32.xlu0 %v760
      %v762 = vpop.xlane.xlu0 %761
      %v763 = vsel %vm744, %v756, 0.0
      %764 = vadd.xlane.f32.xlu0 %v763
      %v765 = vpop.xlane.xlu0 %764
      %v766 = vrcp.pop %v759
      %v767 = vrcp.pop %v762
      %v768 = vrcp.pop %v765
      %v769 = vmul.f32 %v752, %v766
      %v770 = vmul.f32 %v754, %v767
      %v771 = vmul.f32 %v756, %v768
      %v772 = vpack.c.bf16 %v770, %v769
      %v773 = vpack.c.bf16 %v771, %v771
      %774 = vrot.lane.b32.xlu0 %v665, 64
      %v775 = vpop.permute.xlu0 %774
      %776 = vrot.lane.b32.xlu0 %v666, 64
      %v777 = vpop.permute.xlu0 %776
      %v780 = vsel %vm737, %v772, 0
      %v783 = vsel %vm737, %v773, 0
      %vm785 = vcmask 1040384
      %v786 = vsel 0, 4294967295, 65535
      %v787 = vsel %vm785, %v786, 0
      %v789 = vand.u32 %v777, %v787
      %791 = vmatprep.subr.bf16.mxu0 0
      %792 = vmatpush1.bf16.msra.mxu0 0
      %793 = vmatprep.subr.bf16.mxu0 0
      %794 = vmatpush1.bf16.msra.mxu0 0
      %795 = vmatprep.subr.bf16.mxu0 0
      %796 = vmatpush1.bf16.msra.mxu0 0
      %797 = vmatprep.subr.bf16.mxu0 0
      %798 = vmatpush1.bf16.msra.mxu0 0
      %799 = vmatprep.subr.bf16.mxu0 0
      %800 = vmatpush1.bf16.msra.mxu0 0
      %801 = vmatprep.subr.bf16.mxu0 0
      %802 = vmatpush1.bf16.msra.mxu0 0
      %803 = vmatprep.subr.bf16.mxu0 0
      %804 = vmatpush1.bf16.msra.mxu0 %v789
      %805 = vmatprep.subr.bf16.mxu0 0
      %806 = vmatpush1.bf16.msra.mxu0 %v775
      %807 = vmatprep.subr.bf16.mxu0 0
      %808 = vmatpush2.bf16.msra.mxu0 0
      %809 = vmatprep.subr.bf16.mxu0 0
      %810 = vmatpush2.bf16.msra.mxu0 0
      %811 = vmatprep.subr.bf16.mxu0 0
      %812 = vmatpush2.bf16.msra.mxu0 0
      %813 = vmatprep.subr.bf16.mxu0 0
      %814 = vmatpush2.bf16.msra.mxu0 0
      %815 = vmatprep.subr.bf16.mxu0 0
      %816 = vmatpush2.bf16.msra.mxu0 0
      %817 = vmatprep.subr.bf16.mxu0 0
      %818 = vmatpush2.bf16.msra.mxu0 0
      %819 = vmatprep.subr.bf16.mxu0 0
      %820 = vmatpush2.bf16.msra.mxu0 0
      %821 = vmatprep.subr.bf16.mxu0 0
      %822 = vmatpush2.bf16.msra.mxu0 0
      %823 = vmatprep.mubr.bf16.mxu0 0
      %824 = vmatmul.mubr.bf16.gmra.mxu0 %v780
      %v825 = vpop.f32.mrf.mxu0
      %v826 = vadd.f32 0.0, %v825
      %v827 = vpop.f32.mrf.mxu0
      %v828 = vpop.f32.mrf.mxu0
      %v829 = vadd.f32 0.0, %v828
      %v830 = vpop.f32.mrf.mxu0
      %831 = vmatprep.mubr.bf16.mxu0 0
      %832 = vmatmul.mubr.bf16.gmra.mxu0 %v783
      %v833 = vpop.f32.mrf.mxu0
      %v834 = vadd.f32 0.0, %v833
      %v835 = vpop.f32.mrf.mxu0
      %v836 = vpop.f32.mrf.mxu0
      %v837 = vpop.f32.mrf.mxu0
      %838 = vdwg.mxu0
      %839 = vrot.lane.b32.xlu0 %v665, 112
      %v840 = vpop.permute.xlu0 %839
      %841 = vrot.lane.b32.xlu0 %v666, 112
      %v842 = vpop.permute.xlu0 %841
      %843 = vrot.lane.b32.xlu0 %v665, 80
      %v844 = vpop.permute.xlu0 %843
      %845 = vrot.lane.b32.xlu0 %v666, 80
      %v846 = vpop.permute.xlu0 %845
      %v848 = vsel %vm673, %v840, 0
      %v851 = vsel %vm673, %v842, 0
      %v854 = vsel %vm673, %v844, 0
      %v857 = vsel %vm673, %v846, 0
      %859 = vmatprep.subr.bf16.mxu0 0
      %860 = vmatpush1.bf16.xpose.msra.mxu0 0
      %861 = vmatprep.subr.bf16.mxu0 0
      %862 = vmatpush1.bf16.xpose.msra.mxu0 0
      %863 = vmatprep.subr.bf16.mxu0 0
      %864 = vmatpush1.bf16.xpose.msra.mxu0 0
      %865 = vmatprep.subr.bf16.mxu0 0
      %866 = vmatpush1.bf16.xpose.msra.mxu0 0
      %867 = vmatprep.subr.bf16.mxu0 0
      %868 = vmatpush1.bf16.xpose.msra.mxu0 0
      %869 = vmatprep.subr.bf16.mxu0 0
      %870 = vmatpush1.bf16.xpose.msra.mxu0 0
      %871 = vmatprep.subr.bf16.mxu0 0
      %872 = vmatpush1.bf16.xpose.msra.mxu0 %v857
      %873 = vmatprep.subr.bf16.mxu0 0
      %874 = vmatpush1.bf16.xpose.msra.mxu0 %v854
      %875 = vmatprep.subr.bf16.mxu0 0
      %876 = vmatpush2.bf16.xpose.msra.mxu0 0
      %877 = vmatprep.subr.bf16.mxu0 0
      %878 = vmatpush2.bf16.xpose.msra.mxu0 0
      %879 = vmatprep.subr.bf16.mxu0 0
      %880 = vmatpush2.bf16.xpose.msra.mxu0 0
      %881 = vmatprep.subr.bf16.mxu0 0
      %882 = vmatpush2.bf16.xpose.msra.mxu0 0
      %883 = vmatprep.subr.bf16.mxu0 0
      %884 = vmatpush2.bf16.xpose.msra.mxu0 0
      %885 = vmatprep.subr.bf16.mxu0 0
      %886 = vmatpush2.bf16.xpose.msra.mxu0 0
      %887 = vmatprep.subr.bf16.mxu0 0
      %888 = vmatpush2.bf16.xpose.msra.mxu0 0
      %889 = vmatprep.subr.bf16.mxu0 0
      %890 = vmatpush2.bf16.xpose.msra.mxu0 0
      %891 = vmatprep.mubr.bf16.mxu0 0
      %892 = vmatmul.mubr.bf16.gmra.mxu0 %v848
      %v893 = vpop.f32.mrf.mxu0
      %v894 = vadd.f32 0.0, %v893
      %v895 = vpop.f32.mrf.mxu0
      %v896 = vpop.f32.mrf.mxu0
      %v897 = vadd.f32 0.0, %v896
      %v898 = vpop.f32.mrf.mxu0
      %899 = vmatprep.mubr.bf16.mxu0 0
      %900 = vmatmul.mubr.bf16.gmra.mxu0 %v851
      %v901 = vpop.f32.mrf.mxu0
      %v902 = vadd.f32 0.0, %v901
      %v903 = vpop.f32.mrf.mxu0
      %v904 = vpop.f32.mrf.mxu0
      %v905 = vpop.f32.mrf.mxu0
      %906 = vdwg.mxu0
      %v907 = vsel %vm594, -1e+09, %v894
      %v908 = vsel %vm595, -1e+09, %v897
      %v909 = vsel %vm596, -1e+09, %v902
      %v910 = vsel %vm737, %v907, -inf
      %911 = vmax.xlane.f32.xlu0 %v910
      %v912 = vpop.xlane.xlu0 %911
      %v913 = vsel %vm737, %v908, -inf
      %914 = vmax.xlane.f32.xlu0 %v913
      %v915 = vpop.xlane.xlu0 %914
      %v916 = vsel %vm744, %v909, -inf
      %917 = vmax.xlane.f32.xlu0 %v916
      %v918 = vpop.xlane.xlu0 %917
      %v919 = vsub.f32 %v907, %v912
      %v920 = vsub.f32 %v908, %v915
      %v921 = vsub.f32 %v909, %v918
      %v922 = vmul.f32 %v919, 1.442695
      %v923 = vpow.pop %v922
      %v924 = vmul.f32 %v920, 1.442695
      %v925 = vpow.pop %v924
      %v926 = vmul.f32 %v921, 1.442695
      %v927 = vpow.pop %v926
      %v928 = vsel %vm737, %v923, 0.0
      %929 = vadd.xlane.f32.xlu0 %v928
      %v930 = vpop.xlane.xlu0 %929
      %v931 = vsel %vm737, %v925, 0.0
      %932 = vadd.xlane.f32.xlu0 %v931
      %v933 = vpop.xlane.xlu0 %932
      %v934 = vsel %vm744, %v927, 0.0
      %935 = vadd.xlane.f32.xlu0 %v934
      %v936 = vpop.xlane.xlu0 %935
      %v937 = vrcp.pop %v930
      %v938 = vrcp.pop %v933
      %v939 = vrcp.pop %v936
      %v940 = vmul.f32 %v923, %v937
      %v941 = vmul.f32 %v925, %v938
      %v942 = vmul.f32 %v927, %v939
      %v943 = vpack.c.bf16 %v941, %v940
      %v944 = vpack.c.bf16 %v942, %v942
      %945 = vrot.lane.b32.xlu0 %v665, 48
      %v946 = vpop.permute.xlu0 %945
      %947 = vrot.lane.b32.xlu0 %v666, 48
      %v948 = vpop.permute.xlu0 %947
      %v951 = vsel %vm737, %v943, 0
      %v954 = vsel %vm737, %v944, 0
      %v957 = vand.u32 %v948, %v787
      %959 = vmatprep.subr.bf16.mxu0 0
      %960 = vmatpush1.bf16.msra.mxu0 0
      %961 = vmatprep.subr.bf16.mxu0 0
      %962 = vmatpush1.bf16.msra.mxu0 0
      %963 = vmatprep.subr.bf16.mxu0 0
      %964 = vmatpush1.bf16.msra.mxu0 0
      %965 = vmatprep.subr.bf16.mxu0 0
      %966 = vmatpush1.bf16.msra.mxu0 0
      %967 = vmatprep.subr.bf16.mxu0 0
      %968 = vmatpush1.bf16.msra.mxu0 0
      %969 = vmatprep.subr.bf16.mxu0 0
      %970 = vmatpush1.bf16.msra.mxu0 0
      %971 = vmatprep.subr.bf16.mxu0 0
      %972 = vmatpush1.bf16.msra.mxu0 %v957
      %973 = vmatprep.subr.bf16.mxu0 0
      %974 = vmatpush1.bf16.msra.mxu0 %v946
      %975 = vmatprep.subr.bf16.mxu0 0
      %976 = vmatpush2.bf16.msra.mxu0 0
      %977 = vmatprep.subr.bf16.mxu0 0
      %978 = vmatpush2.bf16.msra.mxu0 0
      %979 = vmatprep.subr.bf16.mxu0 0
      %980 = vmatpush2.bf16.msra.mxu0 0
      %981 = vmatprep.subr.bf16.mxu0 0
      %982 = vmatpush2.bf16.msra.mxu0 0
      %983 = vmatprep.subr.bf16.mxu0 0
      %984 = vmatpush2.bf16.msra.mxu0 0
      %985 = vmatprep.subr.bf16.mxu0 0
      %986 = vmatpush2.bf16.msra.mxu0 0
      %987 = vmatprep.subr.bf16.mxu0 0
      %988 = vmatpush2.bf16.msra.mxu0 0
      %989 = vmatprep.subr.bf16.mxu0 0
      %990 = vmatpush2.bf16.msra.mxu0 0
      %991 = vmatprep.mubr.bf16.mxu0 0
      %992 = vmatmul.mubr.bf16.gmra.mxu0 %v951
      %v993 = vpop.f32.mrf.mxu0
      %v994 = vadd.f32 0.0, %v993
      %v995 = vpop.f32.mrf.mxu0
      %v996 = vpop.f32.mrf.mxu0
      %v997 = vadd.f32 0.0, %v996
      %v998 = vpop.f32.mrf.mxu0
      %999 = vmatprep.mubr.bf16.mxu0 0
      %1000 = vmatmul.mubr.bf16.gmra.mxu0 %v954
      %v1001 = vpop.f32.mrf.mxu0
      %v1002 = vadd.f32 0.0, %v1001
      %v1003 = vpop.f32.mrf.mxu0
      %v1004 = vpop.f32.mrf.mxu0
      %v1005 = vpop.f32.mrf.mxu0
      %1006 = vdwg.mxu0
      %1010 = vrot.lane.b32.xlu0 %v994, 16
      %v1011 = vpop.permute.xlu0 %1010
      %1012 = vrot.lane.b32.xlu0 %v997, 16
      %v1013 = vpop.permute.xlu0 %1012
      %1014 = vrot.lane.b32.xlu0 %v1002, 16
      %v1015 = vpop.permute.xlu0 %1014
      %v1019 = vsel %vm673, %v826, %v1011
      %v1020 = vsel %vm673, %v829, %v1013
      %v1021 = vsel %vm673, %v834, %v1015
      %v1022 = vpack.c.bf16 %v1020, %v1019
      %v1023 = vpack.c.bf16 %v1021, %v1021
      %v1028 = vunpack.c.l.b16 %v487
      %v1029 = vunpack.c.l.b16 %v488
      %v1030 = vunpack.c.l.b16 %v489
      %v1031 = vunpack.c.l.b16 %v490
      %v1032 = vpack.c.b16 %v1029, %v1028
      %v1033 = vpack.c.b16 %v1031, %v1030
      %v1037 = vsel %vm517, %v1022, 0
      %v1040 = vsel %vm517, %v1023, 0
      %1042 = vmatprep.subr.bf16.mxu0 0
      %1043 = vmatpush1.bf16.msra.mxu0 0
      %1044 = vmatprep.subr.bf16.mxu0 0
      %1045 = vmatpush1.bf16.msra.mxu0 0
      %1046 = vmatprep.subr.bf16.mxu0 0
      %1047 = vmatpush1.bf16.msra.mxu0 0
      %1048 = vmatprep.subr.bf16.mxu0 0
      %1049 = vmatpush1.bf16.msra.mxu0 0
      %1050 = vmatprep.subr.bf16.mxu0 0
      %1051 = vmatpush1.bf16.msra.mxu0 0
      %1052 = vmatprep.subr.bf16.mxu0 0
      %1053 = vmatpush1.bf16.msra.mxu0 0
      %1054 = vmatprep.subr.bf16.mxu0 0
      %1055 = vmatpush1.bf16.msra.mxu0 %v1033
      %1056 = vmatprep.subr.bf16.mxu0 0
      %1057 = vmatpush1.bf16.msra.mxu0 %v1032
      %1058 = vmatprep.subr.bf16.mxu0 0
      %1059 = vmatpush2.bf16.msra.mxu0 0
      %1060 = vmatprep.subr.bf16.mxu0 0
      %1061 = vmatpush2.bf16.msra.mxu0 0
      %1062 = vmatprep.subr.bf16.mxu0 0
      %1063 = vmatpush2.bf16.msra.mxu0 0
      %1064 = vmatprep.subr.bf16.mxu0 0
      %1065 = vmatpush2.bf16.msra.mxu0 0
      %1066 = vmatprep.subr.bf16.mxu0 0
      %1067 = vmatpush2.bf16.msra.mxu0 0
      %1068 = vmatprep.subr.bf16.mxu0 0
      %1069 = vmatpush2.bf16.msra.mxu0 0
      %1070 = vmatprep.subr.bf16.mxu0 0
      %1071 = vmatpush2.bf16.msra.mxu0 0
      %1072 = vmatprep.subr.bf16.mxu0 0
      %1073 = vmatpush2.bf16.msra.mxu0 0
      %1074 = vmatprep.mubr.bf16.mxu0 0
      %1075 = vmatmul.mubr.bf16.gmra.mxu0 %v1037
      %v1076 = vpop.f32.mrf.mxu0
      %v1077 = vadd.f32 0.0, %v1076
      %v1078 = vpop.f32.mrf.mxu0
      %v1079 = vpop.f32.mrf.mxu0
      %v1080 = vadd.f32 0.0, %v1079
      %v1081 = vpop.f32.mrf.mxu0
      %1082 = vmatprep.mubr.bf16.mxu0 0
      %1083 = vmatmul.mubr.bf16.gmra.mxu0 %v1040
      %v1084 = vpop.f32.mrf.mxu0
      %v1085 = vadd.f32 0.0, %v1084
      %v1086 = vpop.f32.mrf.mxu0
      %v1087 = vpop.f32.mrf.mxu0
      %v1088 = vpop.f32.mrf.mxu0
      %1089 = vdwg.mxu0
      %v1090 = vadd.f32 %v574, %v1077
      %v1091 = vadd.f32 %v575, %v1080
      %v1092 = vadd.f32 %v576, %v1085
      %v1093 = vsel %vm517, %v1090, 0.0
      %1094 = vadd.xlane.f32.xlu0 %v1093
      %v1095 = vpop.xlane.xlu0 %1094
      %v1096 = vsel %vm517, %v1091, 0.0
      %1097 = vadd.xlane.f32.xlu0 %v1096
      %v1098 = vpop.xlane.xlu0 %1097
      %v1099 = vsel %vm524, %v1092, 0.0
      %1100 = vadd.xlane.f32.xlu0 %v1099
      %v1101 = vpop.xlane.xlu0 %1100
      %v1102 = vmul.f32 %v1095, %v528
      %v1103 = vmul.f32 %v1098, %v528
      %v1104 = vmul.f32 %v1101, %v528
      %v1105 = vsub.f32 %v1090, %v1102
      %v1106 = vsub.f32 %v1091, %v1103
      %v1107 = vsub.f32 %v1092, %v1104
      %v1108 = vmul.f32 %v1105, %v1105
      %v1109 = vmul.f32 %v1106, %v1106
      %v1110 = vmul.f32 %v1107, %v1107
      %v1111 = vsel %vm517, %v1108, 0.0
      %1112 = vadd.xlane.f32.xlu0 %v1111
      %v1113 = vpop.xlane.xlu0 %1112
      %v1114 = vsel %vm517, %v1109, 0.0
      %1115 = vadd.xlane.f32.xlu0 %v1114
      %v1116 = vpop.xlane.xlu0 %1115
      %v1117 = vsel %vm524, %v1110, 0.0
      %1118 = vadd.xlane.f32.xlu0 %v1117
      %v1119 = vpop.xlane.xlu0 %1118
      %v1120 = vmul.f32 %v1113, %v528
      %v1121 = vmul.f32 %v1116, %v528
      %v1122 = vmul.f32 %v1119, %v528
      %v1123 = vadd.f32 %v1120, 1e-06
      %v1124 = vadd.f32 %v1121, 1e-06
      %v1125 = vadd.f32 %v1122, 1e-06
      %v1126 = vrsqrt.pop %v1123
      %v1127 = vrsqrt.pop %v1124
      %v1128 = vrsqrt.pop %v1125
      %v1129 = vmul.f32 %v1105, %v1126
      %v1130 = vmul.f32 %v1106, %v1127
      %v1131 = vmul.f32 %v1107, %v1128
      %v1133 = vlaneseq
      %v1134 = vshrl.u32 %v1133, 7
      %v1135 = vsub.s32 0, %v1134
      %v1136 = vrot.slane %v491, %v1135
      %v1138 = vmul.f32 %v1129, %v1136
      %v1139 = vmul.f32 %v1130, %v1136
      %v1140 = vmul.f32 %v1131, %v1136
      %v1142 = vlaneseq
      %v1143 = vshrl.u32 %v1142, 7
      %v1144 = vsub.s32 0, %v1143
      %v1145 = vrot.slane %v492, %v1144
      %v1147 = vadd.f32 %v1138, %v1145
      %v1148 = vadd.f32 %v1139, %v1145
      %v1149 = vadd.f32 %v1140, %v1145
      %v1150 = vpack.c.bf16 %v1148, %v1147
      %v1151 = vpack.c.bf16 %v1149, %v1149
      %v1153 = vlaneseq
      %v1154 = vshrl.u32 %v1153, 7
      %v1155 = vsub.s32 0, %v1154
      %v1156 = vrot.slane %v497, %v1155
      %v1162 = vunpack.c.l.b16 %v493
      %v1163 = vunpack.c.l.b16 %v494
      %v1164 = vunpack.c.l.b16 %v495
      %v1165 = vunpack.c.l.b16 %v496
      %v1166 = vpack.c.b16 %v1163, %v1162
      %v1167 = vpack.c.b16 %v1165, %v1164
      %v1171 = vsel %vm517, %v1150, 0
      %v1174 = vsel %vm517, %v1151, 0
      %1176 = vmatprep.subr.bf16.mxu0 0
      %1177 = vmatpush1.bf16.msra.mxu0 0
      %1178 = vmatprep.subr.bf16.mxu0 0
      %1179 = vmatpush1.bf16.msra.mxu0 0
      %1180 = vmatprep.subr.bf16.mxu0 0
      %1181 = vmatpush1.bf16.msra.mxu0 0
      %1182 = vmatprep.subr.bf16.mxu0 0
      %1183 = vmatpush1.bf16.msra.mxu0 0
      %1184 = vmatprep.subr.bf16.mxu0 0
      %1185 = vmatpush1.bf16.msra.mxu0 0
      %1186 = vmatprep.subr.bf16.mxu0 0
      %1187 = vmatpush1.bf16.msra.mxu0 0
      %1188 = vmatprep.subr.bf16.mxu0 0
      %1189 = vmatpush1.bf16.msra.mxu0 %v1167
      %1190 = vmatprep.subr.bf16.mxu0 0
      %1191 = vmatpush1.bf16.msra.mxu0 %v1166
      %1192 = vmatprep.subr.bf16.mxu0 0
      %1193 = vmatpush2.bf16.msra.mxu0 0
      %1194 = vmatprep.subr.bf16.mxu0 0
      %1195 = vmatpush2.bf16.msra.mxu0 0
      %1196 = vmatprep.subr.bf16.mxu0 0
      %1197 = vmatpush2.bf16.msra.mxu0 0
      %1198 = vmatprep.subr.bf16.mxu0 0
      %1199 = vmatpush2.bf16.msra.mxu0 0
      %1200 = vmatprep.subr.bf16.mxu0 0
      %1201 = vmatpush2.bf16.msra.mxu0 0
      %1202 = vmatprep.subr.bf16.mxu0 0
      %1203 = vmatpush2.bf16.msra.mxu0 0
      %1204 = vmatprep.subr.bf16.mxu0 0
      %1205 = vmatpush2.bf16.msra.mxu0 0
      %1206 = vmatprep.subr.bf16.mxu0 0
      %1207 = vmatpush2.bf16.msra.mxu0 0
      %1208 = vmatprep.mubr.bf16.mxu0 0
      %1209 = vmatmul.mubr.bf16.gmra.mxu0 %v1171
      %v1210 = vpop.f32.mrf.mxu0
      %v1211 = vadd.f32 %v1156, %v1210
      %v1212 = vpop.f32.mrf.mxu0
      %v1213 = vpop.f32.mrf.mxu0
      %v1214 = vadd.f32 %v1156, %v1213
      %v1215 = vpop.f32.mrf.mxu0
      %1216 = vmatprep.mubr.bf16.mxu0 0
      %1217 = vmatmul.mubr.bf16.gmra.mxu0 %v1174
      %v1218 = vpop.f32.mrf.mxu0
      %v1219 = vadd.f32 %v1156, %v1218
      %v1220 = vpop.f32.mrf.mxu0
      %v1221 = vpop.f32.mrf.mxu0
      %v1222 = vpop.f32.mrf.mxu0
      %1223 = vdwg.mxu0
      %v1224 = vmax.f32 %v1211, 0.0
      %v1225 = vmax.f32 %v1214, 0.0
      %v1226 = vmax.f32 %v1219, 0.0
      %v1227 = vpack.c.bf16 %v1225, %v1224
      %v1228 = vpack.c.bf16 %v1226, %v1226
      %v1230 = vlaneseq
      %v1231 = vshrl.u32 %v1230, 7
      %v1232 = vsub.s32 0, %v1231
      %v1233 = vrot.slane %v506, %v1232
      %v1243 = vunpack.c.l.b16 %v498
      %v1244 = vunpack.c.l.b16 %v499
      %v1245 = vunpack.c.l.b16 %v500
      %v1246 = vunpack.c.l.b16 %v501
      %v1247 = vunpack.c.l.b16 %v502
      %v1248 = vunpack.c.l.b16 %v503
      %v1249 = vunpack.c.l.b16 %v504
      %v1250 = vunpack.c.l.b16 %v505
      %v1251 = vpack.c.b16 %v1244, %v1243
      %v1252 = vpack.c.b16 %v1246, %v1245
      %v1253 = vpack.c.b16 %v1248, %v1247
      %v1254 = vpack.c.b16 %v1250, %v1249
      %vm1259 = vcmask 523264
      %v1261 = vsel %vm1259, %v1227, 0
      %v1264 = vsel %vm1259, %v1228, 0
      %1266 = vmatprep.subr.bf16.mxu0 0
      %1267 = vmatpush1.bf16.msra.mxu0 0
      %1268 = vmatprep.subr.bf16.mxu0 0
      %1269 = vmatpush1.bf16.msra.mxu0 0
      %1270 = vmatprep.subr.bf16.mxu0 0
      %1271 = vmatpush1.bf16.msra.mxu0 0
      %1272 = vmatprep.subr.bf16.mxu0 0
      %1273 = vmatpush1.bf16.msra.mxu0 0
      %1274 = vmatprep.subr.bf16.mxu0 0
      %1275 = vmatpush1.bf16.msra.mxu0 %v1254
      %1276 = vmatprep.subr.bf16.mxu0 0
      %1277 = vmatpush1.bf16.msra.mxu0 %v1253
      %1278 = vmatprep.subr.bf16.mxu0 0
      %1279 = vmatpush1.bf16.msra.mxu0 %v1252
      %1280 = vmatprep.subr.bf16.mxu0 0
      %1281 = vmatpush1.bf16.msra.mxu0 %v1251
      %1282 = vmatprep.subr.bf16.mxu0 0
      %1283 = vmatpush2.bf16.msra.mxu0 0
      %1284 = vmatprep.subr.bf16.mxu0 0
      %1285 = vmatpush2.bf16.msra.mxu0 0
      %1286 = vmatprep.subr.bf16.mxu0 0
      %1287 = vmatpush2.bf16.msra.mxu0 0
      %1288 = vmatprep.subr.bf16.mxu0 0
      %1289 = vmatpush2.bf16.msra.mxu0 0
      %1290 = vmatprep.subr.bf16.mxu0 0
      %1291 = vmatpush2.bf16.msra.mxu0 0
      %1292 = vmatprep.subr.bf16.mxu0 0
      %1293 = vmatpush2.bf16.msra.mxu0 0
      %1294 = vmatprep.subr.bf16.mxu0 0
      %1295 = vmatpush2.bf16.msra.mxu0 0
      %1296 = vmatprep.subr.bf16.mxu0 0
      %1297 = vmatpush2.bf16.msra.mxu0 0
      %1298 = vmatprep.mubr.bf16.mxu0 0
      %1299 = vmatmul.mubr.bf16.gmra.mxu0 %v1261
      %v1300 = vpop.f32.mrf.mxu0
      %v1301 = vadd.f32 %v1233, %v1300
      %v1302 = vpop.f32.mrf.mxu0
      %v1303 = vpop.f32.mrf.mxu0
      %v1304 = vadd.f32 %v1233, %v1303
      %v1305 = vpop.f32.mrf.mxu0
      %1306 = vmatprep.mubr.bf16.mxu0 0
      %1307 = vmatmul.mubr.bf16.gmra.mxu0 %v1264
      %v1308 = vpop.f32.mrf.mxu0
      %v1309 = vadd.f32 %v1233, %v1308
      %v1310 = vpop.f32.mrf.mxu0
      %v1311 = vpop.f32.mrf.mxu0
      %v1312 = vpop.f32.mrf.mxu0
      %1313 = vdwg.mxu0
      %v1314 = vadd.f32 %v1147, %v1301
      %v1315 = vadd.f32 %v1148, %v1304
      %v1316 = vadd.f32 %v1149, %v1309
      %v1317 = vsel %vm517, %v1314, 0.0
      %1318 = vadd.xlane.f32.xlu0 %v1317
      %v1319 = vpop.xlane.xlu0 %1318
      %v1320 = vsel %vm517, %v1315, 0.0
      %1321 = vadd.xlane.f32.xlu0 %v1320
      %v1322 = vpop.xlane.xlu0 %1321
      %v1323 = vsel %vm524, %v1316, 0.0
      %1324 = vadd.xlane.f32.xlu0 %v1323
      %v1325 = vpop.xlane.xlu0 %1324
      %v1326 = vmul.f32 %v1319, %v528
      %v1327 = vmul.f32 %v1322, %v528
      %v1328 = vmul.f32 %v1325, %v528
      %v1329 = vsub.f32 %v1314, %v1326
      %v1330 = vsub.f32 %v1315, %v1327
      %v1331 = vsub.f32 %v1316, %v1328
      %v1332 = vmul.f32 %v1329, %v1329
      %v1333 = vmul.f32 %v1330, %v1330
      %v1334 = vmul.f32 %v1331, %v1331
      %v1335 = vsel %vm517, %v1332, 0.0
      %1336 = vadd.xlane.f32.xlu0 %v1335
      %v1337 = vpop.xlane.xlu0 %1336
      %v1338 = vsel %vm517, %v1333, 0.0
      %1339 = vadd.xlane.f32.xlu0 %v1338
      %v1340 = vpop.xlane.xlu0 %1339
      %v1341 = vsel %vm524, %v1334, 0.0
      %1342 = vadd.xlane.f32.xlu0 %v1341
      %v1343 = vpop.xlane.xlu0 %1342
      %v1344 = vmul.f32 %v1337, %v528
      %v1345 = vmul.f32 %v1340, %v528
      %v1346 = vmul.f32 %v1343, %v528
      %v1347 = vadd.f32 %v1344, 1e-06
      %v1348 = vadd.f32 %v1345, 1e-06
      %v1349 = vadd.f32 %v1346, 1e-06
      %v1350 = vrsqrt.pop %v1347
      %v1351 = vrsqrt.pop %v1348
      %v1352 = vrsqrt.pop %v1349
      %v1353 = vmul.f32 %v1329, %v1350
      %v1354 = vmul.f32 %v1330, %v1351
      %v1355 = vmul.f32 %v1331, %v1352
      %v1357 = vlaneseq
      %v1358 = vshrl.u32 %v1357, 7
      %v1359 = vsub.s32 0, %v1358
      %v1360 = vrot.slane %v507, %v1359
      %v1362 = vmul.f32 %v1353, %v1360
      %v1363 = vmul.f32 %v1354, %v1360
      %v1364 = vmul.f32 %v1355, %v1360
      %v1366 = vlaneseq
      %v1367 = vshrl.u32 %v1366, 7
      %v1368 = vsub.s32 0, %v1367
      %v1369 = vrot.slane %v508, %v1368
      %v1371 = vadd.f32 %v1362, %v1369
      %v1372 = vadd.f32 %v1363, %v1369
      %v1373 = vadd.f32 %v1364, %v1369
      %v1374 = vpack.c.bf16 %v1372, %v1371
      %v1375 = vpack.c.bf16 %v1373, %v1373
      %v1378 = vunpack.c.l.b16 %v1374
      %v1379 = vunpack.c.h.b16 %v1374
      %v1380 = vunpack.c.l.b16 %v1375
      %v1381 = vpack.c.b16 %v1378, %v1378
      %v1382 = vpack.c.b16 %v1379, %v1379
      %v1383 = vpack.c.b16 %v1380, %v1380
      %vm1387 = vcmask 257024
      %1388 = vst.msk [vmem:[%s481] sm:$0xf] %vm1387, %v1381
      %1389 = vst.msk [vmem:[%s481 + $0x4] sm:$0xf] %vm1387, %v1382
      %vm1390 = vcmask 253952
      %vm1391 = vsmask.f32 256
      %vm1392 = vmand %vm1390, %vm1391
      %v1393 = vld [vmem:[%s481 + $0x8] sm:$0x1]
      %v1394 = vsel %vm1392, %v1383, %v1393
      %1395 = vst [vmem:[%s481 + $0x8] sm:$0x1] %v1394
      %p1396 = scmp.lt.s32.totalorder %s25, 1
      %s1397 = scalar_select %p1396, %s25, 1
      %s1398 = smul.addr %s1397, 3
      %s1399 = smul.addr %s1398, 4
      %s1400 = scalar_lea.vmem %s14, %s1399
      // Predicated region
      $region77: #{seqvae_loss_forward.7} parent=75 // pred_check
        %p1401 = pneg %p347
      $region78: #{seqvae_loss_forward.7} parent=75 // pred_check_branch
        %1403 = sbr.rel (%p1401) target = $region80
      $region79: #{seqvae_loss_forward.7} parent=75 // pred_region
        _
      $region80: #{seqvae_loss_forward.7} parent=75 // pred_fallthru
        _
    $region76: #{seqvae_loss_forward.7} parent=5 // pred_fallthru
      _
    %p1404 = scmp.le.s32.totalorder 2, %s20
    // Predicated region
    $region81: #{seqvae_loss_forward.7} parent=5 // pred_check
      %p1405 = pneg %p1404
    $region82: #{seqvae_loss_forward.7} parent=5 // pred_check_branch
      %1407 = sbr.rel (%p1405) target = $region84
    $region83: #{seqvae_loss_forward.7} parent=5 // pred_region
      %s1408 = ssub.s32 %s20, 2
      // Predicated region
      $region85: #{seqvae_loss_forward.7} parent=83 // pred_check
        %p1409 = pneg %p353
      $region86: #{seqvae_loss_forward.7} parent=83 // pred_check_branch
        %1411 = sbr.rel (%p1409) target = $region88
      $region87: #{seqvae_loss_forward.7} parent=83 // pred_region
        %p1412 = scmp.lt.s32.totalorder %s26, 1
        %s1413 = scalar_select %p1412, %s26, 1
        %s1414 = smul.addr %s1413, 3
        %s1415 = smul.addr %s1414, 4
        %s1416 = scalar_lea.vmem %s14, %s1415
      $region88: #{seqvae_loss_forward.7} parent=83 // pred_fallthru
        _
    $region84: #{seqvae_loss_forward.7} parent=5 // pred_fallthru
      _
  $region6: #{seqvae_loss_forward.7} parent=0 // loop_footer
    %s24 = sadd.s32 1, %s20
  $region7: #{seqvae_loss_forward.7} parent=0 // loop_footer_branch
    %19 = sbr.rel target = $region3
  $region8: #{seqvae_loss_forward.7} parent=0 // loop_exit
    _

// kernel: seqvae_loss_forward.6
$region0: #{seqvae_loss_forward.6}
  #allocation0 [shape = 'u32[]', space=smem, size = 0x4, offset = 0x4, fixed_abs, tag = 'smem constant byte address 0x4 - core index']
  #allocation1 [shape = 'u32[144,128]{1,0:T(1,128)}', space=vmem, size = 0x12000, scoped, tag = 'internal scratch']
  %s0 = inlined_call_operand.vmem [shape: bf16[2,16,32], index: 0, kind: input, shape index: {}]
  %s1 = inlined_call_operand.vmem [shape: f32[2,16,1], index: 1, kind: input, shape index: {}]
  %s2 = inlined_call_operand.vmem [shape: bf16[32,96], index: 2, kind: input, shape index: {}]
  %s3 = inlined_call_operand.vmem [shape: bf16[32,32], index: 3, kind: input, shape index: {}]
  %s4 = inlined_call_operand.vmem [shape: f32[1,32], index: 4, kind: input, shape index: {}]
  %s5 = inlined_call_operand.vmem [shape: f32[1,32], index: 5, kind: input, shape index: {}]
  %s6 = inlined_call_operand.vmem [shape: bf16[32,64], index: 6, kind: input, shape index: {}]
  %s7 = inlined_call_operand.vmem [shape: f32[1,64], index: 7, kind: input, shape index: {}]
  %s8 = inlined_call_operand.vmem [shape: bf16[64,32], index: 8, kind: input, shape index: {}]
  %s9 = inlined_call_operand.vmem [shape: f32[1,32], index: 9, kind: input, shape index: {}]
  %s10 = inlined_call_operand.vmem [shape: f32[1,32], index: 10, kind: input, shape index: {}]
  %s11 = inlined_call_operand.vmem [shape: f32[1,32], index: 11, kind: input, shape index: {}]
  %s12 = inlined_call_operand.vmem [shape: bf16[32,96], index: 12, kind: input, shape index: {}]
  %s13 = inlined_call_operand.vmem [shape: bf16[32,32], index: 13, kind: input, shape index: {}]
  %s14 = inlined_call_operand.vmem [shape: f32[1,32], index: 14, kind: input, shape index: {}]
  %s15 = inlined_call_operand.vmem [shape: f32[1,32], index: 15, kind: input, shape index: {}]
  %s16 = inlined_call_operand.vmem [shape: bf16[32,64], index: 16, kind: input, shape index: {}]
  %s17 = inlined_call_operand.vmem [shape: f32[1,64], index: 17, kind: input, shape index: {}]
  %s18 = inlined_call_operand.vmem [shape: bf16[64,32], index: 18, kind: input, shape index: {}]
  %s19 = inlined_call_operand.vmem [shape: f32[1,32], index: 19, kind: input, shape index: {}]
  %s20 = inlined_call_operand.vmem [shape: f32[1,32], index: 20, kind: input, shape index: {}]
  %s21 = inlined_call_operand.vmem [shape: f32[1,32], index: 21, kind: input, shape index: {}]
  %s22 = inlined_call_operand.vmem [shape: f32[2,1,32], index: 22, kind: output, shape index: {0}]
  %s23 = inlined_call_operand.vmem [shape: f32[2,1,32], index: 23, kind: output, shape index: {1}]
  %24 = xla_tuple %s22, %s23
  %s25 = sld [smem:[#allocation0]]
  $region129: #{seqvae_loss_forward.6} parent=0
    _
  %s27 = ssub.s32 1, %s25
  %s28 = scalar_select 0, %s27, %s25
  loop: start=0, step=1, limit=4
  $region2: #{seqvae_loss_forward.6} parent=0 // loop_pre_header
    _
  $region3: #{seqvae_loss_forward.6} parent=0 // loop_header
    %s30 = sphi 0, %s34
    %p31 = scmp.ge.s32.totalorder %s30, 4
    %s40 = sphi 0, %s42
    %s43 = sphi 0, %s40
    %s44 = sphi 0, %s43
    %s60 = sphi 0, %s44
    %s66 = sphi 0, %s68
    %s69 = sphi 0, %s66
    %s70 = sphi 0, %s69
    %s86 = sphi 0, %s70
    %s90 = sphi 0, %s90
    %s92 = sphi 0, %s90
    %s93 = sphi 0, %s92
    %s107 = sphi 0, %s93
    %s111 = sphi 0, %s111
    %s113 = sphi 0, %s111
    %s114 = sphi 0, %s113
    %s128 = sphi 0, %s114
    %s132 = sphi 0, %s132
    %s134 = sphi 0, %s132
    %s135 = sphi 0, %s134
    %s149 = sphi 0, %s135
    %s153 = sphi 0, %s153
    %s155 = sphi 0, %s153
    %s156 = sphi 0, %s155
    %s170 = sphi 0, %s156
    %s174 = sphi 0, %s174
    %s176 = sphi 0, %s174
    %s177 = sphi 0, %s176
    %s191 = sphi 0, %s177
    %s195 = sphi 0, %s195
    %s197 = sphi 0, %s195
    %s198 = sphi 0, %s197
    %s212 = sphi 0, %s198
    %s216 = sphi 0, %s216
    %s218 = sphi 0, %s216
    %s219 = sphi 0, %s218
    %s233 = sphi 0, %s219
    %s237 = sphi 0, %s237
    %s239 = sphi 0, %s237
    %s240 = sphi 0, %s239
    %s254 = sphi 0, %s240
    %s258 = sphi 0, %s258
    %s260 = sphi 0, %s258
    %s261 = sphi 0, %s260
    %s275 = sphi 0, %s261
    %s279 = sphi 0, %s279
    %s281 = sphi 0, %s279
    %s282 = sphi 0, %s281
    %s296 = sphi 0, %s282
    %s300 = sphi 0, %s300
    %s302 = sphi 0, %s300
    %s303 = sphi 0, %s302
    %s317 = sphi 0, %s303
    %s321 = sphi 0, %s321
    %s323 = sphi 0, %s321
    %s324 = sphi 0, %s323
    %s338 = sphi 0, %s324
    %s342 = sphi 0, %s342
    %s344 = sphi 0, %s342
    %s345 = sphi 0, %s344
    %s359 = sphi 0, %s345
    %s363 = sphi 0, %s363
    %s365 = sphi 0, %s363
    %s366 = sphi 0, %s365
    %s380 = sphi 0, %s366
    %s384 = sphi 0, %s384
    %s386 = sphi 0, %s384
    %s387 = sphi 0, %s386
    %s401 = sphi 0, %s387
    %s405 = sphi 0, %s405
    %s407 = sphi 0, %s405
    %s408 = sphi 0, %s407
    %s422 = sphi 0, %s408
    %s426 = sphi 0, %s426
    %s428 = sphi 0, %s426
    %s429 = sphi 0, %s428
    %s443 = sphi 0, %s429
    %s447 = sphi 0, %s447
    %s449 = sphi 0, %s447
    %s450 = sphi 0, %s449
    %s464 = sphi 0, %s450
    %s468 = sphi 0, %s468
    %s470 = sphi 0, %s468
    %s471 = sphi 0, %s470
    %s485 = sphi 0, %s471
    %s489 = sphi 0, %s489
    %s491 = sphi 0, %s489
    %s492 = sphi 0, %s491
    %s506 = sphi 0, %s492
    %s512 = sphi 0, %s514
    %s515 = sphi 0, %s512
    %s516 = sphi 0, %s515
    %s532 = sphi 0, %s516
    %s538 = sphi 0, %s540
    %s541 = sphi 0, %s538
    %s542 = sphi 0, %s541
    %s558 = sphi 0, %s542
  $region4: #{seqvae_loss_forward.6} parent=0 // loop_header_branch
    %33 = sbr.rel (%p31) target = $region8
  $region5: #{seqvae_loss_forward.6} parent=0 // loop_body
    %s35 = ssub.s32 %s30, 1
    %s36 = ssub.s32 %s30, 2
    %s37 = sadd.s32 %s30, 1
    %s38 = ssub.s32 %s30, %s37
    %p39 = scmp.eq.s32.totalorder %s38, 0
    %s41 = sadd.s32 %s40, 1
    %s42 = scalar_select %p39, %s40, %s41
    %p45 = pneg %p39
    %p46 = scmp.eq.s32.totalorder %s30, 1
    %p47 = por %p45, %p46
    %p48 = scmp.ne.s32.totalorder %s40, %s43
    %p49 = scmp.eq.s32.totalorder %s30, 0
    %p50 = por %p48, %p49
    %p51 = scmp.ne.s32.totalorder %s40, %s43
    %p52 = scmp.eq.s32.totalorder %s35, 1
    %p53 = por %p51, %p52
    %p54 = scmp.ne.s32.totalorder %s43, %s44
    %p55 = scmp.eq.s32.totalorder %s35, 0
    %p56 = por %p54, %p55
    %p57 = scmp.ne.s32.totalorder %s43, %s44
    %p58 = scmp.eq.s32.totalorder %s36, 1
    %p59 = por %p57, %p58
    %p61 = scmp.ne.s32.totalorder %s44, %s60
    %p62 = scmp.eq.s32.totalorder %s36, 0
    %p63 = por %p61, %p62
    %s64 = ssub.s32 %s30, %s37
    %p65 = scmp.eq.s32.totalorder %s64, 0
    %s67 = sadd.s32 %s66, 1
    %s68 = scalar_select %p65, %s66, %s67
    %p71 = pneg %p65
    %p72 = scmp.eq.s32.totalorder %s30, 1
    %p73 = por %p71, %p72
    %p74 = scmp.ne.s32.totalorder %s66, %s69
    %p75 = scmp.eq.s32.totalorder %s30, 0
    %p76 = por %p74, %p75
    %p77 = scmp.ne.s32.totalorder %s66, %s69
    %p78 = scmp.eq.s32.totalorder %s35, 1
    %p79 = por %p77, %p78
    %p80 = scmp.ne.s32.totalorder %s69, %s70
    %p81 = scmp.eq.s32.totalorder %s35, 0
    %p82 = por %p80, %p81
    %p83 = scmp.ne.s32.totalorder %s69, %s70
    %p84 = scmp.eq.s32.totalorder %s36, 1
    %p85 = por %p83, %p84
    %p87 = scmp.ne.s32.totalorder %s70, %s86
    %p88 = scmp.eq.s32.totalorder %s36, 0
    %p89 = por %p87, %p88
    %s91 = sadd.s32 %s90, 1
    %p94 = scmp.eq.s32.totalorder %s30, 1
    %p95 = scmp.ne.s32.totalorder %s90, %s92
    %p96 = scmp.eq.s32.totalorder %s30, 0
    %p97 = por %p95, %p96
    %p98 = scmp.ne.s32.totalorder %s90, %s92
    %p99 = scmp.eq.s32.totalorder %s35, 1
    %p100 = por %p98, %p99
    %p101 = scmp.ne.s32.totalorder %s92, %s93
    %p102 = scmp.eq.s32.totalorder %s35, 0
    %p103 = por %p101, %p102
    %p104 = scmp.ne.s32.totalorder %s92, %s93
    %p105 = scmp.eq.s32.totalorder %s36, 1
    %p106 = por %p104, %p105
    %p108 = scmp.ne.s32.totalorder %s93, %s107
    %p109 = scmp.eq.s32.totalorder %s36, 0
    %p110 = por %p108, %p109
    %s112 = sadd.s32 %s111, 1
    %p115 = scmp.eq.s32.totalorder %s30, 1
    %p116 = scmp.ne.s32.totalorder %s111, %s113
    %p117 = scmp.eq.s32.totalorder %s30, 0
    %p118 = por %p116, %p117
    %p119 = scmp.ne.s32.totalorder %s111, %s113
    %p120 = scmp.eq.s32.totalorder %s35, 1
    %p121 = por %p119, %p120
    %p122 = scmp.ne.s32.totalorder %s113, %s114
    %p123 = scmp.eq.s32.totalorder %s35, 0
    %p124 = por %p122, %p123
    %p125 = scmp.ne.s32.totalorder %s113, %s114
    %p126 = scmp.eq.s32.totalorder %s36, 1
    %p127 = por %p125, %p126
    %p129 = scmp.ne.s32.totalorder %s114, %s128
    %p130 = scmp.eq.s32.totalorder %s36, 0
    %p131 = por %p129, %p130
    %s133 = sadd.s32 %s132, 1
    %p136 = scmp.eq.s32.totalorder %s30, 1
    %p137 = scmp.ne.s32.totalorder %s132, %s134
    %p138 = scmp.eq.s32.totalorder %s30, 0
    %p139 = por %p137, %p138
    %p140 = scmp.ne.s32.totalorder %s132, %s134
    %p141 = scmp.eq.s32.totalorder %s35, 1
    %p142 = por %p140, %p141
    %p143 = scmp.ne.s32.totalorder %s134, %s135
    %p144 = scmp.eq.s32.totalorder %s35, 0
    %p145 = por %p143, %p144
    %p146 = scmp.ne.s32.totalorder %s134, %s135
    %p147 = scmp.eq.s32.totalorder %s36, 1
    %p148 = por %p146, %p147
    %p150 = scmp.ne.s32.totalorder %s135, %s149
    %p151 = scmp.eq.s32.totalorder %s36, 0
    %p152 = por %p150, %p151
    %s154 = sadd.s32 %s153, 1
    %p157 = scmp.eq.s32.totalorder %s30, 1
    %p158 = scmp.ne.s32.totalorder %s153, %s155
    %p159 = scmp.eq.s32.totalorder %s30, 0
    %p160 = por %p158, %p159
    %p161 = scmp.ne.s32.totalorder %s153, %s155
    %p162 = scmp.eq.s32.totalorder %s35, 1
    %p163 = por %p161, %p162
    %p164 = scmp.ne.s32.totalorder %s155, %s156
    %p165 = scmp.eq.s32.totalorder %s35, 0
    %p166 = por %p164, %p165
    %p167 = scmp.ne.s32.totalorder %s155, %s156
    %p168 = scmp.eq.s32.totalorder %s36, 1
    %p169 = por %p167, %p168
    %p171 = scmp.ne.s32.totalorder %s156, %s170
    %p172 = scmp.eq.s32.totalorder %s36, 0
    %p173 = por %p171, %p172
    %s175 = sadd.s32 %s174, 1
    %p178 = scmp.eq.s32.totalorder %s30, 1
    %p179 = scmp.ne.s32.totalorder %s174, %s176
    %p180 = scmp.eq.s32.totalorder %s30, 0
    %p181 = por %p179, %p180
    %p182 = scmp.ne.s32.totalorder %s174, %s176
    %p183 = scmp.eq.s32.totalorder %s35, 1
    %p184 = por %p182, %p183
    %p185 = scmp.ne.s32.totalorder %s176, %s177
    %p186 = scmp.eq.s32.totalorder %s35, 0
    %p187 = por %p185, %p186
    %p188 = scmp.ne.s32.totalorder %s176, %s177
    %p189 = scmp.eq.s32.totalorder %s36, 1
    %p190 = por %p188, %p189
    %p192 = scmp.ne.s32.totalorder %s177, %s191
    %p193 = scmp.eq.s32.totalorder %s36, 0
    %p194 = por %p192, %p193
    %s196 = sadd.s32 %s195, 1
    %p199 = scmp.eq.s32.totalorder %s30, 1
    %p200 = scmp.ne.s32.totalorder %s195, %s197
    %p201 = scmp.eq.s32.totalorder %s30, 0
    %p202 = por %p200, %p201
    %p203 = scmp.ne.s32.totalorder %s195, %s197
    %p204 = scmp.eq.s32.totalorder %s35, 1
    %p205 = por %p203, %p204
    %p206 = scmp.ne.s32.totalorder %s197, %s198
    %p207 = scmp.eq.s32.totalorder %s35, 0
    %p208 = por %p206, %p207
    %p209 = scmp.ne.s32.totalorder %s197, %s198
    %p210 = scmp.eq.s32.totalorder %s36, 1
    %p211 = por %p209, %p210
    %p213 = scmp.ne.s32.totalorder %s198, %s212
    %p214 = scmp.eq.s32.totalorder %s36, 0
    %p215 = por %p213, %p214
    %s217 = sadd.s32 %s216, 1
    %p220 = scmp.eq.s32.totalorder %s30, 1
    %p221 = scmp.ne.s32.totalorder %s216, %s218
    %p222 = scmp.eq.s32.totalorder %s30, 0
    %p223 = por %p221, %p222
    %p224 = scmp.ne.s32.totalorder %s216, %s218
    %p225 = scmp.eq.s32.totalorder %s35, 1
    %p226 = por %p224, %p225
    %p227 = scmp.ne.s32.totalorder %s218, %s219
    %p228 = scmp.eq.s32.totalorder %s35, 0
    %p229 = por %p227, %p228
    %p230 = scmp.ne.s32.totalorder %s218, %s219
    %p231 = scmp.eq.s32.totalorder %s36, 1
    %p232 = por %p230, %p231
    %p234 = scmp.ne.s32.totalorder %s219, %s233
    %p235 = scmp.eq.s32.totalorder %s36, 0
    %p236 = por %p234, %p235
    %s238 = sadd.s32 %s237, 1
    %p241 = scmp.eq.s32.totalorder %s30, 1
    %p242 = scmp.ne.s32.totalorder %s237, %s239
    %p243 = scmp.eq.s32.totalorder %s30, 0
    %p244 = por %p242, %p243
    %p245 = scmp.ne.s32.totalorder %s237, %s239
    %p246 = scmp.eq.s32.totalorder %s35, 1
    %p247 = por %p245, %p246
    %p248 = scmp.ne.s32.totalorder %s239, %s240
    %p249 = scmp.eq.s32.totalorder %s35, 0
    %p250 = por %p248, %p249
    %p251 = scmp.ne.s32.totalorder %s239, %s240
    %p252 = scmp.eq.s32.totalorder %s36, 1
    %p253 = por %p251, %p252
    %p255 = scmp.ne.s32.totalorder %s240, %s254
    %p256 = scmp.eq.s32.totalorder %s36, 0
    %p257 = por %p255, %p256
    %s259 = sadd.s32 %s258, 1
    %p262 = scmp.eq.s32.totalorder %s30, 1
    %p263 = scmp.ne.s32.totalorder %s258, %s260
    %p264 = scmp.eq.s32.totalorder %s30, 0
    %p265 = por %p263, %p264
    %p266 = scmp.ne.s32.totalorder %s258, %s260
    %p267 = scmp.eq.s32.totalorder %s35, 1
    %p268 = por %p266, %p267
    %p269 = scmp.ne.s32.totalorder %s260, %s261
    %p270 = scmp.eq.s32.totalorder %s35, 0
    %p271 = por %p269, %p270
    %p272 = scmp.ne.s32.totalorder %s260, %s261
    %p273 = scmp.eq.s32.totalorder %s36, 1
    %p274 = por %p272, %p273
    %p276 = scmp.ne.s32.totalorder %s261, %s275
    %p277 = scmp.eq.s32.totalorder %s36, 0
    %p278 = por %p276, %p277
    %s280 = sadd.s32 %s279, 1
    %p283 = scmp.eq.s32.totalorder %s30, 1
    %p284 = scmp.ne.s32.totalorder %s279, %s281
    %p285 = scmp.eq.s32.totalorder %s30, 0
    %p286 = por %p284, %p285
    %p287 = scmp.ne.s32.totalorder %s279, %s281
    %p288 = scmp.eq.s32.totalorder %s35, 1
    %p289 = por %p287, %p288
    %p290 = scmp.ne.s32.totalorder %s281, %s282
    %p291 = scmp.eq.s32.totalorder %s35, 0
    %p292 = por %p290, %p291
    %p293 = scmp.ne.s32.totalorder %s281, %s282
    %p294 = scmp.eq.s32.totalorder %s36, 1
    %p295 = por %p293, %p294
    %p297 = scmp.ne.s32.totalorder %s282, %s296
    %p298 = scmp.eq.s32.totalorder %s36, 0
    %p299 = por %p297, %p298
    %s301 = sadd.s32 %s300, 1
    %p304 = scmp.eq.s32.totalorder %s30, 1
    %p305 = scmp.ne.s32.totalorder %s300, %s302
    %p306 = scmp.eq.s32.totalorder %s30, 0
    %p307 = por %p305, %p306
    %p308 = scmp.ne.s32.totalorder %s300, %s302
    %p309 = scmp.eq.s32.totalorder %s35, 1
    %p310 = por %p308, %p309
    %p311 = scmp.ne.s32.totalorder %s302, %s303
    %p312 = scmp.eq.s32.totalorder %s35, 0
    %p313 = por %p311, %p312
    %p314 = scmp.ne.s32.totalorder %s302, %s303
    %p315 = scmp.eq.s32.totalorder %s36, 1
    %p316 = por %p314, %p315
    %p318 = scmp.ne.s32.totalorder %s303, %s317
    %p319 = scmp.eq.s32.totalorder %s36, 0
    %p320 = por %p318, %p319
    %s322 = sadd.s32 %s321, 1
    %p325 = scmp.eq.s32.totalorder %s30, 1
    %p326 = scmp.ne.s32.totalorder %s321, %s323
    %p327 = scmp.eq.s32.totalorder %s30, 0
    %p328 = por %p326, %p327
    %p329 = scmp.ne.s32.totalorder %s321, %s323
    %p330 = scmp.eq.s32.totalorder %s35, 1
    %p331 = por %p329, %p330
    %p332 = scmp.ne.s32.totalorder %s323, %s324
    %p333 = scmp.eq.s32.totalorder %s35, 0
    %p334 = por %p332, %p333
    %p335 = scmp.ne.s32.totalorder %s323, %s324
    %p336 = scmp.eq.s32.totalorder %s36, 1
    %p337 = por %p335, %p336
    %p339 = scmp.ne.s32.totalorder %s324, %s338
    %p340 = scmp.eq.s32.totalorder %s36, 0
    %p341 = por %p339, %p340
    %s343 = sadd.s32 %s342, 1
    %p346 = scmp.eq.s32.totalorder %s30, 1
    %p347 = scmp.ne.s32.totalorder %s342, %s344
    %p348 = scmp.eq.s32.totalorder %s30, 0
    %p349 = por %p347, %p348
    %p350 = scmp.ne.s32.totalorder %s342, %s344
    %p351 = scmp.eq.s32.totalorder %s35, 1
    %p352 = por %p350, %p351
    %p353 = scmp.ne.s32.totalorder %s344, %s345
    %p354 = scmp.eq.s32.totalorder %s35, 0
    %p355 = por %p353, %p354
    %p356 = scmp.ne.s32.totalorder %s344, %s345
    %p357 = scmp.eq.s32.totalorder %s36, 1
    %p358 = por %p356, %p357
    %p360 = scmp.ne.s32.totalorder %s345, %s359
    %p361 = scmp.eq.s32.totalorder %s36, 0
    %p362 = por %p360, %p361
    %s364 = sadd.s32 %s363, 1
    %p367 = scmp.eq.s32.totalorder %s30, 1
    %p368 = scmp.ne.s32.totalorder %s363, %s365
    %p369 = scmp.eq.s32.totalorder %s30, 0
    %p370 = por %p368, %p369
    %p371 = scmp.ne.s32.totalorder %s363, %s365
    %p372 = scmp.eq.s32.totalorder %s35, 1
    %p373 = por %p371, %p372
    %p374 = scmp.ne.s32.totalorder %s365, %s366
    %p375 = scmp.eq.s32.totalorder %s35, 0
    %p376 = por %p374, %p375
    %p377 = scmp.ne.s32.totalorder %s365, %s366
    %p378 = scmp.eq.s32.totalorder %s36, 1
    %p379 = por %p377, %p378
    %p381 = scmp.ne.s32.totalorder %s366, %s380
    %p382 = scmp.eq.s32.totalorder %s36, 0
    %p383 = por %p381, %p382
    %s385 = sadd.s32 %s384, 1
    %p388 = scmp.eq.s32.totalorder %s30, 1
    %p389 = scmp.ne.s32.totalorder %s384, %s386
    %p390 = scmp.eq.s32.totalorder %s30, 0
    %p391 = por %p389, %p390
    %p392 = scmp.ne.s32.totalorder %s384, %s386
    %p393 = scmp.eq.s32.totalorder %s35, 1
    %p394 = por %p392, %p393
    %p395 = scmp.ne.s32.totalorder %s386, %s387
    %p396 = scmp.eq.s32.totalorder %s35, 0
    %p397 = por %p395, %p396
    %p398 = scmp.ne.s32.totalorder %s386, %s387
    %p399 = scmp.eq.s32.totalorder %s36, 1
    %p400 = por %p398, %p399
    %p402 = scmp.ne.s32.totalorder %s387, %s401
    %p403 = scmp.eq.s32.totalorder %s36, 0
    %p404 = por %p402, %p403
    %s406 = sadd.s32 %s405, 1
    %p409 = scmp.eq.s32.totalorder %s30, 1
    %p410 = scmp.ne.s32.totalorder %s405, %s407
    %p411 = scmp.eq.s32.totalorder %s30, 0
    %p412 = por %p410, %p411
    %p413 = scmp.ne.s32.totalorder %s405, %s407
    %p414 = scmp.eq.s32.totalorder %s35, 1
    %p415 = por %p413, %p414
    %p416 = scmp.ne.s32.totalorder %s407, %s408
    %p417 = scmp.eq.s32.totalorder %s35, 0
    %p418 = por %p416, %p417
    %p419 = scmp.ne.s32.totalorder %s407, %s408
    %p420 = scmp.eq.s32.totalorder %s36, 1
    %p421 = por %p419, %p420
    %p423 = scmp.ne.s32.totalorder %s408, %s422
    %p424 = scmp.eq.s32.totalorder %s36, 0
    %p425 = por %p423, %p424
    %s427 = sadd.s32 %s426, 1
    %p430 = scmp.eq.s32.totalorder %s30, 1
    %p431 = scmp.ne.s32.totalorder %s426, %s428
    %p432 = scmp.eq.s32.totalorder %s30, 0
    %p433 = por %p431, %p432
    %p434 = scmp.ne.s32.totalorder %s426, %s428
    %p435 = scmp.eq.s32.totalorder %s35, 1
    %p436 = por %p434, %p435
    %p437 = scmp.ne.s32.totalorder %s428, %s429
    %p438 = scmp.eq.s32.totalorder %s35, 0
    %p439 = por %p437, %p438
    %p440 = scmp.ne.s32.totalorder %s428, %s429
    %p441 = scmp.eq.s32.totalorder %s36, 1
    %p442 = por %p440, %p441
    %p444 = scmp.ne.s32.totalorder %s429, %s443
    %p445 = scmp.eq.s32.totalorder %s36, 0
    %p446 = por %p444, %p445
    %s448 = sadd.s32 %s447, 1
    %p451 = scmp.eq.s32.totalorder %s30, 1
    %p452 = scmp.ne.s32.totalorder %s447, %s449
    %p453 = scmp.eq.s32.totalorder %s30, 0
    %p454 = por %p452, %p453
    %p455 = scmp.ne.s32.totalorder %s447, %s449
    %p456 = scmp.eq.s32.totalorder %s35, 1
    %p457 = por %p455, %p456
    %p458 = scmp.ne.s32.totalorder %s449, %s450
    %p459 = scmp.eq.s32.totalorder %s35, 0
    %p460 = por %p458, %p459
    %p461 = scmp.ne.s32.totalorder %s449, %s450
    %p462 = scmp.eq.s32.totalorder %s36, 1
    %p463 = por %p461, %p462
    %p465 = scmp.ne.s32.totalorder %s450, %s464
    %p466 = scmp.eq.s32.totalorder %s36, 0
    %p467 = por %p465, %p466
    %s469 = sadd.s32 %s468, 1
    %p472 = scmp.eq.s32.totalorder %s30, 1
    %p473 = scmp.ne.s32.totalorder %s468, %s470
    %p474 = scmp.eq.s32.totalorder %s30, 0
    %p475 = por %p473, %p474
    %p476 = scmp.ne.s32.totalorder %s468, %s470
    %p477 = scmp.eq.s32.totalorder %s35, 1
    %p478 = por %p476, %p477
    %p479 = scmp.ne.s32.totalorder %s470, %s471
    %p480 = scmp.eq.s32.totalorder %s35, 0
    %p481 = por %p479, %p480
    %p482 = scmp.ne.s32.totalorder %s470, %s471
    %p483 = scmp.eq.s32.totalorder %s36, 1
    %p484 = por %p482, %p483
    %p486 = scmp.ne.s32.totalorder %s471, %s485
    %p487 = scmp.eq.s32.totalorder %s36, 0
    %p488 = por %p486, %p487
    %s490 = sadd.s32 %s489, 1
    %p493 = scmp.eq.s32.totalorder %s30, 1
    %p494 = scmp.ne.s32.totalorder %s489, %s491
    %p495 = scmp.eq.s32.totalorder %s30, 0
    %p496 = por %p494, %p495
    %p497 = scmp.ne.s32.totalorder %s489, %s491
    %p498 = scmp.eq.s32.totalorder %s35, 1
    %p499 = por %p497, %p498
    %p500 = scmp.ne.s32.totalorder %s491, %s492
    %p501 = scmp.eq.s32.totalorder %s35, 0
    %p502 = por %p500, %p501
    %p503 = scmp.ne.s32.totalorder %s491, %s492
    %p504 = scmp.eq.s32.totalorder %s36, 1
    %p505 = por %p503, %p504
    %p507 = scmp.ne.s32.totalorder %s492, %s506
    %p508 = scmp.eq.s32.totalorder %s36, 0
    %p509 = por %p507, %p508
    %s510 = ssub.s32 %s30, %s37
    %p511 = scmp.eq.s32.totalorder %s510, 0
    %s513 = sadd.s32 %s512, 1
    %s514 = scalar_select %p511, %s512, %s513
    %p517 = pneg %p511
    %p518 = scmp.eq.s32.totalorder %s30, 1
    %p519 = por %p517, %p518
    %p520 = scmp.ne.s32.totalorder %s512, %s515
    %p521 = scmp.eq.s32.totalorder %s30, 0
    %p522 = por %p520, %p521
    %p523 = scmp.ne.s32.totalorder %s512, %s515
    %p524 = scmp.eq.s32.totalorder %s35, 1
    %p525 = por %p523, %p524
    %p526 = scmp.ne.s32.totalorder %s515, %s516
    %p527 = scmp.eq.s32.totalorder %s35, 0
    %p528 = por %p526, %p527
    %p529 = scmp.ne.s32.totalorder %s515, %s516
    %p530 = scmp.eq.s32.totalorder %s36, 1
    %p531 = por %p529, %p530
    %p533 = scmp.ne.s32.totalorder %s516, %s532
    %p534 = scmp.eq.s32.totalorder %s36, 0
    %p535 = por %p533, %p534
    %s536 = ssub.s32 %s30, %s37
    %p537 = scmp.eq.s32.totalorder %s536, 0
    %s539 = sadd.s32 %s538, 1
    %s540 = scalar_select %p537, %s538, %s539
    %p543 = pneg %p537
    %p544 = scmp.eq.s32.totalorder %s30, 1
    %p545 = por %p543, %p544
    %p546 = scmp.ne.s32.totalorder %s538, %s541
    %p547 = scmp.eq.s32.totalorder %s30, 0
    %p548 = por %p546, %p547
    %p549 = scmp.ne.s32.totalorder %s538, %s541
    %p550 = scmp.eq.s32.totalorder %s35, 1
    %p551 = por %p549, %p550
    %p552 = scmp.ne.s32.totalorder %s541, %s542
    %p553 = scmp.eq.s32.totalorder %s35, 0
    %p554 = por %p552, %p553
    %p555 = scmp.ne.s32.totalorder %s541, %s542
    %p556 = scmp.eq.s32.totalorder %s36, 1
    %p557 = por %p555, %p556
    %p559 = scmp.ne.s32.totalorder %s542, %s558
    %p560 = scmp.eq.s32.totalorder %s36, 0
    %p561 = por %p559, %p560
    %p562 = scmp.le.s32.totalorder 1, %s30
    %p563 = scmp.lt.s32.totalorder %s30, 3
    %p564 = pnand %p562, %p563
    %p565 = pneg %p564
    // Predicated region
    $region9: #{seqvae_loss_forward.6} parent=5 // pred_check
      _
    $region10: #{seqvae_loss_forward.6} parent=5 // pred_check_branch
      %567 = sbr.rel (%p564) target = $region12
    $region11: #{seqvae_loss_forward.6} parent=5 // pred_region
      %s568 = ssub.s32 %s30, 1
      // Predicated region
      $region13: #{seqvae_loss_forward.6} parent=11 // pred_check
        %p569 = pneg %p103
      $region14: #{seqvae_loss_forward.6} parent=11 // pred_check_branch
        %571 = sbr.rel (%p569) target = $region16
      $region15: #{seqvae_loss_forward.6} parent=11 // pred_region
        _
      $region16: #{seqvae_loss_forward.6} parent=11 // pred_fallthru
        _
      // Predicated region
      $region17: #{seqvae_loss_forward.6} parent=11 // pred_check
        %p572 = pneg %p124
      $region18: #{seqvae_loss_forward.6} parent=11 // pred_check_branch
        %574 = sbr.rel (%p572) target = $region20
      $region19: #{seqvae_loss_forward.6} parent=11 // pred_region
        _
      $region20: #{seqvae_loss_forward.6} parent=11 // pred_fallthru
        _
      // Predicated region
      $region21: #{seqvae_loss_forward.6} parent=11 // pred_check
        %p575 = pneg %p145
      $region22: #{seqvae_loss_forward.6} parent=11 // pred_check_branch
        %577 = sbr.rel (%p575) target = $region24
      $region23: #{seqvae_loss_forward.6} parent=11 // pred_region
        _
      $region24: #{seqvae_loss_forward.6} parent=11 // pred_fallthru
        _
      // Predicated region
      $region25: #{seqvae_loss_forward.6} parent=11 // pred_check
        %p578 = pneg %p166
      $region26: #{seqvae_loss_forward.6} parent=11 // pred_check_branch
        %580 = sbr.rel (%p578) target = $region28
      $region27: #{seqvae_loss_forward.6} parent=11 // pred_region
        _
      $region28: #{seqvae_loss_forward.6} parent=11 // pred_fallthru
        _
      // Predicated region
      $region29: #{seqvae_loss_forward.6} parent=11 // pred_check
        %p581 = pneg %p187
      $region30: #{seqvae_loss_forward.6} parent=11 // pred_check_branch
        %583 = sbr.rel (%p581) target = $region32
      $region31: #{seqvae_loss_forward.6} parent=11 // pred_region
        _
      $region32: #{seqvae_loss_forward.6} parent=11 // pred_fallthru
        _
      // Predicated region
      $region33: #{seqvae_loss_forward.6} parent=11 // pred_check
        %p584 = pneg %p208
      $region34: #{seqvae_loss_forward.6} parent=11 // pred_check_branch
        %586 = sbr.rel (%p584) target = $region36
      $region35: #{seqvae_loss_forward.6} parent=11 // pred_region
        _
      $region36: #{seqvae_loss_forward.6} parent=11 // pred_fallthru
        _
      // Predicated region
      $region37: #{seqvae_loss_forward.6} parent=11 // pred_check
        %p587 = pneg %p229
      $region38: #{seqvae_loss_forward.6} parent=11 // pred_check_branch
        %589 = sbr.rel (%p587) target = $region40
      $region39: #{seqvae_loss_forward.6} parent=11 // pred_region
        _
      $region40: #{seqvae_loss_forward.6} parent=11 // pred_fallthru
        _
      // Predicated region
      $region41: #{seqvae_loss_forward.6} parent=11 // pred_check
        %p590 = pneg %p250
      $region42: #{seqvae_loss_forward.6} parent=11 // pred_check_branch
        %592 = sbr.rel (%p590) target = $region44
      $region43: #{seqvae_loss_forward.6} parent=11 // pred_region
        _
      $region44: #{seqvae_loss_forward.6} parent=11 // pred_fallthru
        _
      // Predicated region
      $region45: #{seqvae_loss_forward.6} parent=11 // pred_check
        %p593 = pneg %p271
      $region46: #{seqvae_loss_forward.6} parent=11 // pred_check_branch
        %595 = sbr.rel (%p593) target = $region48
      $region47: #{seqvae_loss_forward.6} parent=11 // pred_region
        _
      $region48: #{seqvae_loss_forward.6} parent=11 // pred_fallthru
        _
      // Predicated region
      $region49: #{seqvae_loss_forward.6} parent=11 // pred_check
        %p596 = pneg %p292
      $region50: #{seqvae_loss_forward.6} parent=11 // pred_check_branch
        %598 = sbr.rel (%p596) target = $region52
      $region51: #{seqvae_loss_forward.6} parent=11 // pred_region
        _
      $region52: #{seqvae_loss_forward.6} parent=11 // pred_fallthru
        _
      // Predicated region
      $region53: #{seqvae_loss_forward.6} parent=11 // pred_check
        %p599 = pneg %p313
      $region54: #{seqvae_loss_forward.6} parent=11 // pred_check_branch
        %601 = sbr.rel (%p599) target = $region56
      $region55: #{seqvae_loss_forward.6} parent=11 // pred_region
        _
      $region56: #{seqvae_loss_forward.6} parent=11 // pred_fallthru
        _
      // Predicated region
      $region57: #{seqvae_loss_forward.6} parent=11 // pred_check
        %p602 = pneg %p334
      $region58: #{seqvae_loss_forward.6} parent=11 // pred_check_branch
        %604 = sbr.rel (%p602) target = $region60
      $region59: #{seqvae_loss_forward.6} parent=11 // pred_region
        _
      $region60: #{seqvae_loss_forward.6} parent=11 // pred_fallthru
        _
      // Predicated region
      $region61: #{seqvae_loss_forward.6} parent=11 // pred_check
        %p605 = pneg %p355
      $region62: #{seqvae_loss_forward.6} parent=11 // pred_check_branch
        %607 = sbr.rel (%p605) target = $region64
      $region63: #{seqvae_loss_forward.6} parent=11 // pred_region
        _
      $region64: #{seqvae_loss_forward.6} parent=11 // pred_fallthru
        _
      // Predicated region
      $region65: #{seqvae_loss_forward.6} parent=11 // pred_check
        %p608 = pneg %p376
      $region66: #{seqvae_loss_forward.6} parent=11 // pred_check_branch
        %610 = sbr.rel (%p608) target = $region68
      $region67: #{seqvae_loss_forward.6} parent=11 // pred_region
        _
      $region68: #{seqvae_loss_forward.6} parent=11 // pred_fallthru
        _
      // Predicated region
      $region69: #{seqvae_loss_forward.6} parent=11 // pred_check
        %p611 = pneg %p397
      $region70: #{seqvae_loss_forward.6} parent=11 // pred_check_branch
        %613 = sbr.rel (%p611) target = $region72
      $region71: #{seqvae_loss_forward.6} parent=11 // pred_region
        _
      $region72: #{seqvae_loss_forward.6} parent=11 // pred_fallthru
        _
      // Predicated region
      $region73: #{seqvae_loss_forward.6} parent=11 // pred_check
        %p614 = pneg %p418
      $region74: #{seqvae_loss_forward.6} parent=11 // pred_check_branch
        %616 = sbr.rel (%p614) target = $region76
      $region75: #{seqvae_loss_forward.6} parent=11 // pred_region
        _
      $region76: #{seqvae_loss_forward.6} parent=11 // pred_fallthru
        _
      // Predicated region
      $region77: #{seqvae_loss_forward.6} parent=11 // pred_check
        %p617 = pneg %p439
      $region78: #{seqvae_loss_forward.6} parent=11 // pred_check_branch
        %619 = sbr.rel (%p617) target = $region80
      $region79: #{seqvae_loss_forward.6} parent=11 // pred_region
        _
      $region80: #{seqvae_loss_forward.6} parent=11 // pred_fallthru
        _
      // Predicated region
      $region81: #{seqvae_loss_forward.6} parent=11 // pred_check
        %p620 = pneg %p460
      $region82: #{seqvae_loss_forward.6} parent=11 // pred_check_branch
        %622 = sbr.rel (%p620) target = $region84
      $region83: #{seqvae_loss_forward.6} parent=11 // pred_region
        _
      $region84: #{seqvae_loss_forward.6} parent=11 // pred_fallthru
        _
      // Predicated region
      $region85: #{seqvae_loss_forward.6} parent=11 // pred_check
        %p623 = pneg %p481
      $region86: #{seqvae_loss_forward.6} parent=11 // pred_check_branch
        %625 = sbr.rel (%p623) target = $region88
      $region87: #{seqvae_loss_forward.6} parent=11 // pred_region
        _
      $region88: #{seqvae_loss_forward.6} parent=11 // pred_fallthru
        _
      // Predicated region
      $region89: #{seqvae_loss_forward.6} parent=11 // pred_check
        %p626 = pneg %p502
      $region90: #{seqvae_loss_forward.6} parent=11 // pred_check_branch
        %628 = sbr.rel (%p626) target = $region92
      $region91: #{seqvae_loss_forward.6} parent=11 // pred_region
        _
      $region92: #{seqvae_loss_forward.6} parent=11 // pred_fallthru
        _
    $region12: #{seqvae_loss_forward.6} parent=5 // pred_fallthru
      _
    %p629 = scmp.lt.s32.totalorder %s30, 2
    // Predicated region
    $region93: #{seqvae_loss_forward.6} parent=5 // pred_check
      %p630 = pneg %p629
    $region94: #{seqvae_loss_forward.6} parent=5 // pred_check_branch
      %632 = sbr.rel (%p630) target = $region96
    $region95: #{seqvae_loss_forward.6} parent=5 // pred_region
      // Predicated region
      $region97: #{seqvae_loss_forward.6} parent=95 // pred_check
        %p633 = pneg %p50
      $region98: #{seqvae_loss_forward.6} parent=95 // pred_check_branch
        %635 = sbr.rel (%p633) target = $region100
      $region99: #{seqvae_loss_forward.6} parent=95 // pred_region
        %p636 = scmp.lt.s32.totalorder %s30, 1
        %s637 = scalar_select %p636, %s30, 1
        %s638 = smul.addr %s637, 2
        %s639 = smul.addr %s638, 4
        %s640 = scalar_lea.vmem %s0, %s639
      $region100: #{seqvae_loss_forward.6} parent=95 // pred_fallthru
        _
      // Predicated region
      $region101: #{seqvae_loss_forward.6} parent=95 // pred_check
        %p641 = pneg %p76
      $region102: #{seqvae_loss_forward.6} parent=95 // pred_check_branch
        %643 = sbr.rel (%p641) target = $region104
      $region103: #{seqvae_loss_forward.6} parent=95 // pred_region
        %p644 = scmp.lt.s32.totalorder %s30, 1
        %s645 = scalar_select %p644, %s30, 1
        %s646 = smul.addr %s645, 2
        %s647 = smul.addr %s646, 8
        %s648 = scalar_lea.vmem %s1, %s647
      $region104: #{seqvae_loss_forward.6} parent=95 // pred_fallthru
        _
    $region96: #{seqvae_loss_forward.6} parent=5 // pred_fallthru
      _
    %p649 = scmp.le.s32.totalorder 1, %s30
    %p650 = scmp.lt.s32.totalorder %s30, 3
    %p651 = pnand %p649, %p650
    %p652 = pneg %p651
    // Predicated region
    $region105: #{seqvae_loss_forward.6} parent=5 // pred_check
      _
    $region106: #{seqvae_loss_forward.6} parent=5 // pred_check_branch
      %654 = sbr.rel (%p651) target = $region108
    $region107: #{seqvae_loss_forward.6} parent=5 // pred_region
      %s655 = ssub.s32 %s30, 1
      %p656 = scmp.lt.s32.totalorder %s35, 1
      %s657 = scalar_select %p656, %s35, 1
      %s658 = smul.addr %s657, 2
      %s659 = smul.addr %s658, 4
      %s660 = scalar_lea.vmem %s0, %s659
      %p661 = pneg %p56
      %p662 = pneg %p53
      %p663 = scmp.lt.s32.totalorder %s35, 1
      %s664 = scalar_select %p663, %s35, 1
      %s665 = smul.addr %s664, 2
      %s666 = smul.addr %s665, 8
      %s667 = scalar_lea.vmem %s1, %s666
      %p668 = pneg %p82
      %p669 = pneg %p79
      %p670 = pneg %p103
      %p671 = pneg %p100
      %p672 = pneg %p124
      %p673 = pneg %p121
      %p674 = pneg %p145
      %p675 = pneg %p142
      %p676 = pneg %p166
      %p677 = pneg %p163
      %p678 = pneg %p187
      %p679 = pneg %p184
      %p680 = pneg %p208
      %p681 = pneg %p205
      %p682 = pneg %p229
      %p683 = pneg %p226
      %p684 = pneg %p250
      %p685 = pneg %p247
      %p686 = pneg %p271
      %p687 = pneg %p268
      %p688 = pneg %p292
      %p689 = pneg %p289
      %p690 = pneg %p313
      %p691 = pneg %p310
      %p692 = pneg %p334
      %p693 = pneg %p331
      %p694 = pneg %p355
      %p695 = pneg %p352
      %p696 = pneg %p376
      %p697 = pneg %p373
      %p698 = pneg %p397
      %p699 = pneg %p394
      %p700 = pneg %p418
      %p701 = pneg %p415
      %p702 = pneg %p439
      %p703 = pneg %p436
      %p704 = pneg %p460
      %p705 = pneg %p457
      %p706 = pneg %p481
      %p707 = pneg %p478
      %p708 = pneg %p502
      %p709 = pneg %p499
      %p710 = pneg %p528
      %p711 = pneg %p525
      %p712 = scmp.lt.s32.totalorder %s35, 1
      %s713 = scalar_select %p712, %s35, 1
      %s714 = scalar_lea.vmem %s22, %s713
      %p715 = pneg %p554
      %p716 = pneg %p551
      %p717 = scmp.lt.s32.totalorder %s35, 1
      %s718 = scalar_select %p717, %s35, 1
      %s719 = scalar_lea.vmem %s23, %s718
      %p720 = scmp.lt.s32.totalorder %s35, 1
      %s721 = scalar_select %p720, %s35, 1
      %s722 = smul.addr %s721, 2
      %s723 = smul.addr %s722, 4
      %s724 = scalar_lea.vmem %s0, %s723
      %p725 = scmp.lt.s32.totalorder %s35, 1
      %s726 = scalar_select %p725, %s35, 1
      %s727 = smul.addr %s726, 2
      %s728 = smul.addr %s727, 8
      %s729 = scalar_lea.vmem %s1, %s728
      %p730 = scmp.lt.s32.totalorder %s35, 1
      %s731 = scalar_select %p730, %s35, 1
      %s732 = scalar_lea.vmem %s22, %s731
      %p733 = scmp.lt.s32.totalorder %s35, 1
      %s734 = scalar_select %p733, %s35, 1
      %s735 = scalar_lea.vmem %s23, %s734
      %v737 = vld [vmem:[%s2] sm:$0xf]
      %v738 = vld [vmem:[%s2 + $0x4] sm:$0xf]
      %v739 = vld [vmem:[%s2 + $0x8] sm:$0xf]
      %v740 = vld [vmem:[%s2 + $0xc] sm:$0xf]
      %v741 = vld [vmem:[%s3] sm:$0xf]
      %v742 = vld [vmem:[%s3 + $0x4] sm:$0xf]
      %v743 = vld [vmem:[%s3 + $0x8] sm:$0xf]
      %v744 = vld [vmem:[%s3 + $0xc] sm:$0xf]
      %v745 = vld [vmem:[%s4] sm:$0x1]
      %v746 = vld [vmem:[%s5] sm:$0x1]
      %v747 = vld [vmem:[%s6] sm:$0xf]
      %v748 = vld [vmem:[%s6 + $0x4] sm:$0xf]
      %v749 = vld [vmem:[%s6 + $0x8] sm:$0xf]
      %v750 = vld [vmem:[%s6 + $0xc] sm:$0xf]
      %v751 = vld [vmem:[%s7] sm:$0x1]
      %v752 = vld [vmem:[%s8] sm:$0xf]
      %v753 = vld [vmem:[%s8 + $0x4] sm:$0xf]
      %v754 = vld [vmem:[%s8 + $0x8] sm:$0xf]
      %v755 = vld [vmem:[%s8 + $0xc] sm:$0xf]
      %v756 = vld [vmem:[%s8 + $0x10] sm:$0xf]
      %v757 = vld [vmem:[%s8 + $0x14] sm:$0xf]
      %v758 = vld [vmem:[%s8 + $0x18] sm:$0xf]
      %v759 = vld [vmem:[%s8 + $0x1c] sm:$0xf]
      %v760 = vld [vmem:[%s9] sm:$0x1]
      %v761 = vld [vmem:[%s10] sm:$0x1]
      %v762 = vld [vmem:[%s11] sm:$0x1]
      %v763 = vld [vmem:[%s12] sm:$0xf]
      %v764 = vld [vmem:[%s12 + $0x4] sm:$0xf]
      %v765 = vld [vmem:[%s12 + $0x8] sm:$0xf]
      %v766 = vld [vmem:[%s12 + $0xc] sm:$0xf]
      %v767 = vld [vmem:[%s13] sm:$0xf]
      %v768 = vld [vmem:[%s13 + $0x4] sm:$0xf]
      %v769 = vld [vmem:[%s13 + $0x8] sm:$0xf]
      %v770 = vld [vmem:[%s13 + $0xc] sm:$0xf]
      %v771 = vld [vmem:[%s14] sm:$0x1]
      %v772 = vld [vmem:[%s15] sm:$0x1]
      %v773 = vld [vmem:[%s16] sm:$0xf]
      %v774 = vld [vmem:[%s16 + $0x4] sm:$0xf]
      %v775 = vld [vmem:[%s16 + $0x8] sm:$0xf]
      %v776 = vld [vmem:[%s16 + $0xc] sm:$0xf]
      %v777 = vld [vmem:[%s17] sm:$0x1]
      %v778 = vld [vmem:[%s18] sm:$0xf]
      %v779 = vld [vmem:[%s18 + $0x4] sm:$0xf]
      %v780 = vld [vmem:[%s18 + $0x8] sm:$0xf]
      %v781 = vld [vmem:[%s18 + $0xc] sm:$0xf]
      %v782 = vld [vmem:[%s18 + $0x10] sm:$0xf]
      %v783 = vld [vmem:[%s18 + $0x14] sm:$0xf]
      %v784 = vld [vmem:[%s18 + $0x18] sm:$0xf]
      %v785 = vld [vmem:[%s18 + $0x1c] sm:$0xf]
      %v786 = vld [vmem:[%s19] sm:$0x1]
      %v787 = vld [vmem:[%s20] sm:$0x1]
      %v788 = vld [vmem:[%s21] sm:$0x1]
      %v789 = vld [vmem:[%s724] sm:$0xf]
      %v790 = vld [vmem:[%s724 + $0x4] sm:$0xf]
      %v791 = vunpack.c.l.bf16 %v789
      %v792 = vunpack.c.l.bf16 %v790
      %v793 = vld [vmem:[%s729] sm:$0xff]
      %v794 = vld [vmem:[%s729 + $0x8] sm:$0xff]
      %vm795 = vcmask 7168
      %v796 = vsel %vm795, %v793, 0.0
      %v797 = vsel %vm795, %v794, 0.0
      %v798 = vadd.f32 %v796, %v797
      %v799 = vrot.slane %v798, 4
      %v800 = vadd.f32 %v798, %v799
      %v801 = vrot.slane %v800, 2
      %v802 = vadd.f32 %v800, %v801
      %v803 = vrot.slane %v802, 1
      %v804 = vadd.f32 %v802, %v803
      %v805 = vmax.f32 %v804, 1.0
      %v806 = vrcp.pop %v805
      %v809 = vunpack.c.l.b16 %v789
      %v810 = vunpack.c.l.b16 %v790
      %v811 = vpack.c.b16 %v810, %v809
      %v816 = vunpack.c.l.b16 %v737
      %v817 = vunpack.c.l.b16 %v738
      %v818 = vunpack.c.l.b16 %v739
      %v819 = vunpack.c.l.b16 %v740
      %v820 = vpack.c.b16 %v817, %v816
      %v821 = vpack.c.b16 %v819, %v818
      %vm824 = vcmask 261120
      %v826 = vsel %vm824, %v811, 0
      %828 = vmatprep.subr.bf16.mxu0 0
      %829 = vmatpush1.bf16.msra.mxu0 0
      %830 = vmatprep.subr.bf16.mxu0 0
      %831 = vmatpush1.bf16.msra.mxu0 0
      %832 = vmatprep.subr.bf16.mxu0 0
      %833 = vmatpush1.bf16.msra.mxu0 0
      %834 = vmatprep.subr.bf16.mxu0 0
      %835 = vmatpush1.bf16.msra.mxu0 0
      %836 = vmatprep.subr.bf16.mxu0 0
      %837 = vmatpush1.bf16.msra.mxu0 0
      %838 = vmatprep.subr.bf16.mxu0 0
      %839 = vmatpush1.bf16.msra.mxu0 0
      %840 = vmatprep.subr.bf16.mxu0 0
      %841 = vmatpush1.bf16.msra.mxu0 %v821
      %842 = vmatprep.subr.bf16.mxu0 0
      %843 = vmatpush1.bf16.msra.mxu0 %v820
      %844 = vmatprep.subr.bf16.mxu0 0
      %845 = vmatpush2.bf16.msra.mxu0 0
      %846 = vmatprep.subr.bf16.mxu0 0
      %847 = vmatpush2.bf16.msra.mxu0 0
      %848 = vmatprep.subr.bf16.mxu0 0
      %849 = vmatpush2.bf16.msra.mxu0 0
      %850 = vmatprep.subr.bf16.mxu0 0
      %851 = vmatpush2.bf16.msra.mxu0 0
      %852 = vmatprep.subr.bf16.mxu0 0
      %853 = vmatpush2.bf16.msra.mxu0 0
      %854 = vmatprep.subr.bf16.mxu0 0
      %855 = vmatpush2.bf16.msra.mxu0 0
      %856 = vmatprep.subr.bf16.mxu0 0
      %857 = vmatpush2.bf16.msra.mxu0 0
      %858 = vmatprep.subr.bf16.mxu0 0
      %859 = vmatpush2.bf16.msra.mxu0 0
      %860 = vmatprep.mubr.bf16.mxu0 0
      %861 = vmatmul.mubr.bf16.gmra.mxu0 %v826
      %v862 = vpop.f32.mrf.mxu0
      %v863 = vadd.f32 0.0, %v862
      %v864 = vpop.f32.mrf.mxu0
      %v865 = vpop.f32.mrf.mxu0
      %v866 = vadd.f32 0.0, %v865
      %v867 = vpop.f32.mrf.mxu0
      %868 = vdwg.mxu0
      %v869 = vpack.c.bf16 %v866, %v863
      %871 = vrot.lane.b32.xlu0 %v869, 96
      %v872 = vpop.permute.xlu0 %871
      %vm873 = vcmask 130048
      %v875 = vsel %vm873, %v869, 0
      %v878 = vsel %vm873, %v872, 0
      %880 = vmatprep.subr.bf16.mxu0 0
      %881 = vmatpush1.bf16.xpose.msra.mxu0 0
      %882 = vmatprep.subr.bf16.mxu0 0
      %883 = vmatpush1.bf16.xpose.msra.mxu0 0
      %884 = vmatprep.subr.bf16.mxu0 0
      %885 = vmatpush1.bf16.xpose.msra.mxu0 0
      %886 = vmatprep.subr.bf16.mxu0 0
      %887 = vmatpush1.bf16.xpose.msra.mxu0 0
      %888 = vmatprep.subr.bf16.mxu0 0
      %889 = vmatpush1.bf16.xpose.msra.mxu0 0
      %890 = vmatprep.subr.bf16.mxu0 0
      %891 = vmatpush1.bf16.xpose.msra.mxu0 0
      %892 = vmatprep.subr.bf16.mxu0 0
      %893 = vmatpush1.bf16.xpose.msra.mxu0 0
      %894 = vmatprep.subr.bf16.mxu0 0
      %895 = vmatpush1.bf16.xpose.msra.mxu0 %v878
      %896 = vmatprep.subr.bf16.mxu0 0
      %897 = vmatpush2.bf16.xpose.msra.mxu0 0
      %898 = vmatprep.subr.bf16.mxu0 0
      %899 = vmatpush2.bf16.xpose.msra.mxu0 0
      %900 = vmatprep.subr.bf16.mxu0 0
      %901 = vmatpush2.bf16.xpose.msra.mxu0 0
      %902 = vmatprep.subr.bf16.mxu0 0
      %903 = vmatpush2.bf16.xpose.msra.mxu0 0
      %904 = vmatprep.subr.bf16.mxu0 0
      %905 = vmatpush2.bf16.xpose.msra.mxu0 0
      %906 = vmatprep.subr.bf16.mxu0 0
      %907 = vmatpush2.bf16.xpose.msra.mxu0 0
      %908 = vmatprep.subr.bf16.mxu0 0
      %909 = vmatpush2.bf16.xpose.msra.mxu0 0
      %910 = vmatprep.subr.bf16.mxu0 0
      %911 = vmatpush2.bf16.xpose.msra.mxu0 0
      %912 = vmatprep.mubr.bf16.mxu0 0
      %913 = vmatmul.mubr.bf16.gmra.mxu0 %v875
      %v914 = vpop.f32.mrf.mxu0
      %v915 = vadd.f32 0.0, %v914
      %v916 = vpop.f32.mrf.mxu0
      %v917 = vpop.f32.mrf.mxu0
      %v918 = vadd.f32 0.0, %v917
      %v919 = vpop.f32.mrf.mxu0
      %920 = vdwg.mxu0
      %v921 = vsel %vm873, %v915, -inf
      %922 = vmax.xlane.f32.xlu0 %v921
      %v923 = vpop.xlane.xlu0 %922
      %v924 = vsel %vm873, %v918, -inf
      %925 = vmax.xlane.f32.xlu0 %v924
      %v926 = vpop.xlane.xlu0 %925
      %v927 = vsub.f32 %v915, %v923
      %v928 = vsub.f32 %v918, %v926
      %v929 = vmul.f32 %v927, 1.442695
      %v930 = vpow.pop %v929
      %v931 = vmul.f32 %v928, 1.442695
      %v932 = vpow.pop %v931
      %v933 = vsel %vm873, %v930, 0.0
      %934 = vadd.xlane.f32.xlu0 %v933
      %v935 = vpop.xlane.xlu0 %934
      %v936 = vsel %vm873, %v932, 0.0
      %937 = vadd.xlane.f32.xlu0 %v936
      %v938 = vpop.xlane.xlu0 %937
      %v939 = vrcp.pop %v935
      %v940 = vrcp.pop %v938
      %v941 = vmul.f32 %v930, %v939
      %v942 = vmul.f32 %v932, %v940
      %v943 = vpack.c.bf16 %v942, %v941
      %944 = vrot.lane.b32.xlu0 %v869, 64
      %v945 = vpop.permute.xlu0 %944
      %v948 = vsel %vm873, %v943, 0
      %950 = vmatprep.subr.bf16.mxu0 0
      %951 = vmatpush1.bf16.msra.mxu0 0
      %952 = vmatprep.subr.bf16.mxu0 0
      %953 = vmatpush1.bf16.msra.mxu0 0
      %954 = vmatprep.subr.bf16.mxu0 0
      %955 = vmatpush1.bf16.msra.mxu0 0
      %956 = vmatprep.subr.bf16.mxu0 0
      %957 = vmatpush1.bf16.msra.mxu0 0
      %958 = vmatprep.subr.bf16.mxu0 0
      %959 = vmatpush1.bf16.msra.mxu0 0
      %960 = vmatprep.subr.bf16.mxu0 0
      %961 = vmatpush1.bf16.msra.mxu0 0
      %962 = vmatprep.subr.bf16.mxu0 0
      %963 = vmatpush1.bf16.msra.mxu0 0
      %964 = vmatprep.subr.bf16.mxu0 0
      %965 = vmatpush1.bf16.msra.mxu0 %v945
      %966 = vmatprep.subr.bf16.mxu0 0
      %967 = vmatpush2.bf16.msra.mxu0 0
      %968 = vmatprep.subr.bf16.mxu0 0
      %969 = vmatpush2.bf16.msra.mxu0 0
      %970 = vmatprep.subr.bf16.mxu0 0
      %971 = vmatpush2.bf16.msra.mxu0 0
      %972 = vmatprep.subr.bf16.mxu0 0
      %973 = vmatpush2.bf16.msra.mxu0 0
      %974 = vmatprep.subr.bf16.mxu0 0
      %975 = vmatpush2.bf16.msra.mxu0 0
      %976 = vmatprep.subr.bf16.mxu0 0
      %977 = vmatpush2.bf16.msra.mxu0 0
      %978 = vmatprep.subr.bf16.mxu0 0
      %979 = vmatpush2.bf16.msra.mxu0 0
      %980 = vmatprep.subr.bf16.mxu0 0
      %981 = vmatpush2.bf16.msra.mxu0 0
      %982 = vmatprep.mubr.bf16.mxu0 0
      %983 = vmatmul.mubr.bf16.gmra.mxu0 %v948
      %v984 = vpop.f32.mrf.mxu0
      %v985 = vadd.f32 0.0, %v984
      %v986 = vpop.f32.mrf.mxu0
      %v987 = vpop.f32.mrf.mxu0
      %v988 = vadd.f32 0.0, %v987
      %v989 = vpop.f32.mrf.mxu0
      %990 = vdwg.mxu0
      %991 = vrot.lane.b32.xlu0 %v869, 112
      %v992 = vpop.permute.xlu0 %991
      %993 = vrot.lane.b32.xlu0 %v869, 80
      %v994 = vpop.permute.xlu0 %993
      %v996 = vsel %vm873, %v992, 0
      %v999 = vsel %vm873, %v994, 0
      %1001 = vmatprep.subr.bf16.mxu0 0
      %1002 = vmatpush1.bf16.xpose.msra.mxu0 0
      %1003 = vmatprep.subr.bf16.mxu0 0
      %1004 = vmatpush1.bf16.xpose.msra.mxu0 0
      %1005 = vmatprep.subr.bf16.mxu0 0
      %1006 = vmatpush1.bf16.xpose.msra.mxu0 0
      %1007 = vmatprep.subr.bf16.mxu0 0
      %1008 = vmatpush1.bf16.xpose.msra.mxu0 0
      %1009 = vmatprep.subr.bf16.mxu0 0
      %1010 = vmatpush1.bf16.xpose.msra.mxu0 0
      %1011 = vmatprep.subr.bf16.mxu0 0
      %1012 = vmatpush1.bf16.xpose.msra.mxu0 0
      %1013 = vmatprep.subr.bf16.mxu0 0
      %1014 = vmatpush1.bf16.xpose.msra.mxu0 0
      %1015 = vmatprep.subr.bf16.mxu0 0
      %1016 = vmatpush1.bf16.xpose.msra.mxu0 %v999
      %1017 = vmatprep.subr.bf16.mxu0 0
      %1018 = vmatpush2.bf16.xpose.msra.mxu0 0
      %1019 = vmatprep.subr.bf16.mxu0 0
      %1020 = vmatpush2.bf16.xpose.msra.mxu0 0
      %1021 = vmatprep.subr.bf16.mxu0 0
      %1022 = vmatpush2.bf16.xpose.msra.mxu0 0
      %1023 = vmatprep.subr.bf16.mxu0 0
      %1024 = vmatpush2.bf16.xpose.msra.mxu0 0
      %1025 = vmatprep.subr.bf16.mxu0 0
      %1026 = vmatpush2.bf16.xpose.msra.mxu0 0
      %1027 = vmatprep.subr.bf16.mxu0 0
      %1028 = vmatpush2.bf16.xpose.msra.mxu0 0
      %1029 = vmatprep.subr.bf16.mxu0 0
      %1030 = vmatpush2.bf16.xpose.msra.mxu0 0
      %1031 = vmatprep.subr.bf16.mxu0 0
      %1032 = vmatpush2.bf16.xpose.msra.mxu0 0
      %1033 = vmatprep.mubr.bf16.mxu0 0
      %1034 = vmatmul.mubr.bf16.gmra.mxu0 %v996
      %v1035 = vpop.f32.mrf.mxu0
      %v1036 = vadd.f32 0.0, %v1035
      %v1037 = vpop.f32.mrf.mxu0
      %v1038 = vpop.f32.mrf.mxu0
      %v1039 = vadd.f32 0.0, %v1038
      %v1040 = vpop.f32.mrf.mxu0
      %1041 = vdwg.mxu0
      %v1042 = vsel %vm873, %v1036, -inf
      %1043 = vmax.xlane.f32.xlu0 %v1042
      %v1044 = vpop.xlane.xlu0 %1043
      %v1045 = vsel %vm873, %v1039, -inf
      %1046 = vmax.xlane.f32.xlu0 %v1045
      %v1047 = vpop.xlane.xlu0 %1046
      %v1048 = vsub.f32 %v1036, %v1044
      %v1049 = vsub.f32 %v1039, %v1047
      %v1050 = vmul.f32 %v1048, 1.442695
      %v1051 = vpow.pop %v1050
      %v1052 = vmul.f32 %v1049, 1.442695
      %v1053 = vpow.pop %v1052
      %v1054 = vsel %vm873, %v1051, 0.0
      %1055 = vadd.xlane.f32.xlu0 %v1054
      %v1056 = vpop.xlane.xlu0 %1055
      %v1057 = vsel %vm873, %v1053, 0.0
      %1058 = vadd.xlane.f32.xlu0 %v1057
      %v1059 = vpop.xlane.xlu0 %1058
      %v1060 = vrcp.pop %v1056
      %v1061 = vrcp.pop %v1059
      %v1062 = vmul.f32 %v1051, %v1060
      %v1063 = vmul.f32 %v1053, %v1061
      %v1064 = vpack.c.bf16 %v1063, %v1062
      %1065 = vrot.lane.b32.xlu0 %v869, 48
      %v1066 = vpop.permute.xlu0 %1065
      %v1069 = vsel %vm873, %v1064, 0
      %1071 = vmatprep.subr.bf16.mxu0 0
      %1072 = vmatpush1.bf16.msra.mxu0 0
      %1073 = vmatprep.subr.bf16.mxu0 0
      %1074 = vmatpush1.bf16.msra.mxu0 0
      %1075 = vmatprep.subr.bf16.mxu0 0
      %1076 = vmatpush1.bf16.msra.mxu0 0
      %1077 = vmatprep.subr.bf16.mxu0 0
      %1078 = vmatpush1.bf16.msra.mxu0 0
      %1079 = vmatprep.subr.bf16.mxu0 0
      %1080 = vmatpush1.bf16.msra.mxu0 0
      %1081 = vmatprep.subr.bf16.mxu0 0
      %1082 = vmatpush1.bf16.msra.mxu0 0
      %1083 = vmatprep.subr.bf16.mxu0 0
      %1084 = vmatpush1.bf16.msra.mxu0 0
      %1085 = vmatprep.subr.bf16.mxu0 0
      %1086 = vmatpush1.bf16.msra.mxu0 %v1066
      %1087 = vmatprep.subr.bf16.mxu0 0
      %1088 = vmatpush2.bf16.msra.mxu0 0
      %1089 = vmatprep.subr.bf16.mxu0 0
      %1090 = vmatpush2.bf16.msra.mxu0 0
      %1091 = vmatprep.subr.bf16.mxu0 0
      %1092 = vmatpush2.bf16.msra.mxu0 0
      %1093 = vmatprep.subr.bf16.mxu0 0
      %1094 = vmatpush2.bf16.msra.mxu0 0
      %1095 = vmatprep.subr.bf16.mxu0 0
      %1096 = vmatpush2.bf16.msra.mxu0 0
      %1097 = vmatprep.subr.bf16.mxu0 0
      %1098 = vmatpush2.bf16.msra.mxu0 0
      %1099 = vmatprep.subr.bf16.mxu0 0
      %1100 = vmatpush2.bf16.msra.mxu0 0
      %1101 = vmatprep.subr.bf16.mxu0 0
      %1102 = vmatpush2.bf16.msra.mxu0 0
      %1103 = vmatprep.mubr.bf16.mxu0 0
      %1104 = vmatmul.mubr.bf16.gmra.mxu0 %v1069
      %v1105 = vpop.f32.mrf.mxu0
      %v1106 = vadd.f32 0.0, %v1105
      %v1107 = vpop.f32.mrf.mxu0
      %v1108 = vpop.f32.mrf.mxu0
      %v1109 = vadd.f32 0.0, %v1108
      %v1110 = vpop.f32.mrf.mxu0
      %1111 = vdwg.mxu0
      %1114 = vrot.lane.b32.xlu0 %v1106, 16
      %v1115 = vpop.permute.xlu0 %1114
      %1116 = vrot.lane.b32.xlu0 %v1109, 16
      %v1117 = vpop.permute.xlu0 %1116
      %v1120 = vsel %vm873, %v985, %v1115
      %v1121 = vsel %vm873, %v988, %v1117
      %v1122 = vpack.c.bf16 %v1121, %v1120
      %v1127 = vunpack.c.l.b16 %v741
      %v1128 = vunpack.c.l.b16 %v742
      %v1129 = vunpack.c.l.b16 %v743
      %v1130 = vunpack.c.l.b16 %v744
      %v1131 = vpack.c.b16 %v1128, %v1127
      %v1132 = vpack.c.b16 %v1130, %v1129
      %v1136 = vsel %vm824, %v1122, 0
      %1138 = vmatprep.subr.bf16.mxu0 0
      %1139 = vmatpush1.bf16.msra.mxu0 0
      %1140 = vmatprep.subr.bf16.mxu0 0
      %1141 = vmatpush1.bf16.msra.mxu0 0
      %1142 = vmatprep.subr.bf16.mxu0 0
      %1143 = vmatpush1.bf16.msra.mxu0 0
      %1144 = vmatprep.subr.bf16.mxu0 0
      %1145 = vmatpush1.bf16.msra.mxu0 0
      %1146 = vmatprep.subr.bf16.mxu0 0
      %1147 = vmatpush1.bf16.msra.mxu0 0
      %1148 = vmatprep.subr.bf16.mxu0 0
      %1149 = vmatpush1.bf16.msra.mxu0 0
      %1150 = vmatprep.subr.bf16.mxu0 0
      %1151 = vmatpush1.bf16.msra.mxu0 %v1132
      %1152 = vmatprep.subr.bf16.mxu0 0
      %1153 = vmatpush1.bf16.msra.mxu0 %v1131
      %1154 = vmatprep.subr.bf16.mxu0 0
      %1155 = vmatpush2.bf16.msra.mxu0 0
      %1156 = vmatprep.subr.bf16.mxu0 0
      %1157 = vmatpush2.bf16.msra.mxu0 0
      %1158 = vmatprep.subr.bf16.mxu0 0
      %1159 = vmatpush2.bf16.msra.mxu0 0
      %1160 = vmatprep.subr.bf16.mxu0 0
      %1161 = vmatpush2.bf16.msra.mxu0 0
      %1162 = vmatprep.subr.bf16.mxu0 0
      %1163 = vmatpush2.bf16.msra.mxu0 0
      %1164 = vmatprep.subr.bf16.mxu0 0
      %1165 = vmatpush2.bf16.msra.mxu0 0
      %1166 = vmatprep.subr.bf16.mxu0 0
      %1167 = vmatpush2.bf16.msra.mxu0 0
      %1168 = vmatprep.subr.bf16.mxu0 0
      %1169 = vmatpush2.bf16.msra.mxu0 0
      %1170 = vmatprep.mubr.bf16.mxu0 0
      %1171 = vmatmul.mubr.bf16.gmra.mxu0 %v1136
      %v1172 = vpop.f32.mrf.mxu0
      %v1173 = vadd.f32 0.0, %v1172
      %v1174 = vpop.f32.mrf.mxu0
      %v1175 = vpop.f32.mrf.mxu0
      %v1176 = vadd.f32 0.0, %v1175
      %v1177 = vpop.f32.mrf.mxu0
      %1178 = vdwg.mxu0
      %v1179 = vadd.f32 %v791, %v1173
      %v1180 = vadd.f32 %v792, %v1176
      %v1181 = vsel %vm824, %v1179, 0.0
      %1182 = vadd.xlane.f32.xlu0 %v1181
      %v1183 = vpop.xlane.xlu0 %1182
      %v1184 = vsel %vm824, %v1180, 0.0
      %1185 = vadd.xlane.f32.xlu0 %v1184
      %v1186 = vpop.xlane.xlu0 %1185
      %v1187 = vrcp.pop 32.0
      %v1188 = vmul.f32 %v1183, %v1187
      %v1189 = vmul.f32 %v1186, %v1187
      %v1190 = vsub.f32 %v1179, %v1188
      %v1191 = vsub.f32 %v1180, %v1189
      %v1192 = vmul.f32 %v1190, %v1190
      %v1193 = vmul.f32 %v1191, %v1191
      %v1194 = vsel %vm824, %v1192, 0.0
      %1195 = vadd.xlane.f32.xlu0 %v1194
      %v1196 = vpop.xlane.xlu0 %1195
      %v1197 = vsel %vm824, %v1193, 0.0
      %1198 = vadd.xlane.f32.xlu0 %v1197
      %v1199 = vpop.xlane.xlu0 %1198
      %v1200 = vmul.f32 %v1196, %v1187
      %v1201 = vmul.f32 %v1199, %v1187
      %v1202 = vadd.f32 %v1200, 1e-06
      %v1203 = vadd.f32 %v1201, 1e-06
      %v1204 = vrsqrt.pop %v1202
      %v1205 = vrsqrt.pop %v1203
      %v1206 = vmul.f32 %v1190, %v1204
      %v1207 = vmul.f32 %v1191, %v1205
      %v1209 = vlaneseq
      %v1210 = vshrl.u32 %v1209, 7
      %v1211 = vsub.s32 0, %v1210
      %v1212 = vrot.slane %v745, %v1211
      %v1214 = vmul.f32 %v1206, %v1212
      %v1215 = vmul.f32 %v1207, %v1212
      %v1217 = vlaneseq
      %v1218 = vshrl.u32 %v1217, 7
      %v1219 = vsub.s32 0, %v1218
      %v1220 = vrot.slane %v746, %v1219
      %v1222 = vadd.f32 %v1214, %v1220
      %v1223 = vadd.f32 %v1215, %v1220
      %v1224 = vpack.c.bf16 %v1223, %v1222
      %v1226 = vlaneseq
      %v1227 = vshrl.u32 %v1226, 7
      %v1228 = vsub.s32 0, %v1227
      %v1229 = vrot.slane %v751, %v1228
      %v1235 = vunpack.c.l.b16 %v747
      %v1236 = vunpack.c.l.b16 %v748
      %v1237 = vunpack.c.l.b16 %v749
      %v1238 = vunpack.c.l.b16 %v750
      %v1239 = vpack.c.b16 %v1236, %v1235
      %v1240 = vpack.c.b16 %v1238, %v1237
      %v1244 = vsel %vm824, %v1224, 0
      %1246 = vmatprep.subr.bf16.mxu0 0
      %1247 = vmatpush1.bf16.msra.mxu0 0
      %1248 = vmatprep.subr.bf16.mxu0 0
      %1249 = vmatpush1.bf16.msra.mxu0 0
      %1250 = vmatprep.subr.bf16.mxu0 0
      %1251 = vmatpush1.bf16.msra.mxu0 0
      %1252 = vmatprep.subr.bf16.mxu0 0
      %1253 = vmatpush1.bf16.msra.mxu0 0
      %1254 = vmatprep.subr.bf16.mxu0 0
      %1255 = vmatpush1.bf16.msra.mxu0 0
      %1256 = vmatprep.subr.bf16.mxu0 0
      %1257 = vmatpush1.bf16.msra.mxu0 0
      %1258 = vmatprep.subr.bf16.mxu0 0
      %1259 = vmatpush1.bf16.msra.mxu0 %v1240
      %1260 = vmatprep.subr.bf16.mxu0 0
      %1261 = vmatpush1.bf16.msra.mxu0 %v1239
      %1262 = vmatprep.subr.bf16.mxu0 0
      %1263 = vmatpush2.bf16.msra.mxu0 0
      %1264 = vmatprep.subr.bf16.mxu0 0
      %1265 = vmatpush2.bf16.msra.mxu0 0
      %1266 = vmatprep.subr.bf16.mxu0 0
      %1267 = vmatpush2.bf16.msra.mxu0 0
      %1268 = vmatprep.subr.bf16.mxu0 0
      %1269 = vmatpush2.bf16.msra.mxu0 0
      %1270 = vmatprep.subr.bf16.mxu0 0
      %1271 = vmatpush2.bf16.msra.mxu0 0
      %1272 = vmatprep.subr.bf16.mxu0 0
      %1273 = vmatpush2.bf16.msra.mxu0 0
      %1274 = vmatprep.subr.bf16.mxu0 0
      %1275 = vmatpush2.bf16.msra.mxu0 0
      %1276 = vmatprep.subr.bf16.mxu0 0
      %1277 = vmatpush2.bf16.msra.mxu0 0
      %1278 = vmatprep.mubr.bf16.mxu0 0
      %1279 = vmatmul.mubr.bf16.gmra.mxu0 %v1244
      %v1280 = vpop.f32.mrf.mxu0
      %v1281 = vadd.f32 %v1229, %v1280
      %v1282 = vpop.f32.mrf.mxu0
      %v1283 = vpop.f32.mrf.mxu0
      %v1284 = vadd.f32 %v1229, %v1283
      %v1285 = vpop.f32.mrf.mxu0
      %1286 = vdwg.mxu0
      %v1287 = vmax.f32 %v1281, 0.0
      %v1288 = vmax.f32 %v1284, 0.0
      %v1289 = vpack.c.bf16 %v1288, %v1287
      %v1291 = vlaneseq
      %v1292 = vshrl.u32 %v1291, 7
      %v1293 = vsub.s32 0, %v1292
      %v1294 = vrot.slane %v760, %v1293
      %v1304 = vunpack.c.l.b16 %v752
      %v1305 = vunpack.c.l.b16 %v753
      %v1306 = vunpack.c.l.b16 %v754
      %v1307 = vunpack.c.l.b16 %v755
      %v1308 = vunpack.c.l.b16 %v756
      %v1309 = vunpack.c.l.b16 %v757
      %v1310 = vunpack.c.l.b16 %v758
      %v1311 = vunpack.c.l.b16 %v759
      %v1312 = vpack.c.b16 %v1305, %v1304
      %v1313 = vpack.c.b16 %v1307, %v1306
      %v1314 = vpack.c.b16 %v1309, %v1308
      %v1315 = vpack.c.b16 %v1311, %v1310
      %vm1320 = vcmask 523264
      %v1322 = vsel %vm1320, %v1289, 0
      %1324 = vmatprep.subr.bf16.mxu0 0
      %1325 = vmatpush1.bf16.msra.mxu0 0
      %1326 = vmatprep.subr.bf16.mxu0 0
      %1327 = vmatpush1.bf16.msra.mxu0 0
      %1328 = vmatprep.subr.bf16.mxu0 0
      %1329 = vmatpush1.bf16.msra.mxu0 0
      %1330 = vmatprep.subr.bf16.mxu0 0
      %1331 = vmatpush1.bf16.msra.mxu0 0
      %1332 = vmatprep.subr.bf16.mxu0 0
      %1333 = vmatpush1.bf16.msra.mxu0 %v1315
      %1334 = vmatprep.subr.bf16.mxu0 0
      %1335 = vmatpush1.bf16.msra.mxu0 %v1314
      %1336 = vmatprep.subr.bf16.mxu0 0
      %1337 = vmatpush1.bf16.msra.mxu0 %v1313
      %1338 = vmatprep.subr.bf16.mxu0 0
      %1339 = vmatpush1.bf16.msra.mxu0 %v1312
      %1340 = vmatprep.subr.bf16.mxu0 0
      %1341 = vmatpush2.bf16.msra.mxu0 0
      %1342 = vmatprep.subr.bf16.mxu0 0
      %1343 = vmatpush2.bf16.msra.mxu0 0
      %1344 = vmatprep.subr.bf16.mxu0 0
      %1345 = vmatpush2.bf16.msra.mxu0 0
      %1346 = vmatprep.subr.bf16.mxu0 0
      %1347 = vmatpush2.bf16.msra.mxu0 0
      %1348 = vmatprep.subr.bf16.mxu0 0
      %1349 = vmatpush2.bf16.msra.mxu0 0
      %1350 = vmatprep.subr.bf16.mxu0 0
      %1351 = vmatpush2.bf16.msra.mxu0 0
      %1352 = vmatprep.subr.bf16.mxu0 0
      %1353 = vmatpush2.bf16.msra.mxu0 0
      %1354 = vmatprep.subr.bf16.mxu0 0
      %1355 = vmatpush2.bf16.msra.mxu0 0
      %1356 = vmatprep.mubr.bf16.mxu0 0
      %1357 = vmatmul.mubr.bf16.gmra.mxu0 %v1322
      %v1358 = vpop.f32.mrf.mxu0
      %v1359 = vadd.f32 %v1294, %v1358
      %v1360 = vpop.f32.mrf.mxu0
      %v1361 = vpop.f32.mrf.mxu0
      %v1362 = vadd.f32 %v1294, %v1361
      %v1363 = vpop.f32.mrf.mxu0
      %1364 = vdwg.mxu0
      %v1365 = vadd.f32 %v1222, %v1359
      %v1366 = vadd.f32 %v1223, %v1362
      %v1367 = vsel %vm824, %v1365, 0.0
      %1368 = vadd.xlane.f32.xlu0 %v1367
      %v1369 = vpop.xlane.xlu0 %1368
      %v1370 = vsel %vm824, %v1366, 0.0
      %1371 = vadd.xlane.f32.xlu0 %v1370
      %v1372 = vpop.xlane.xlu0 %1371
      %v1373 = vmul.f32 %v1369, %v1187
      %v1374 = vmul.f32 %v1372, %v1187
      %v1375 = vsub.f32 %v1365, %v1373
      %v1376 = vsub.f32 %v1366, %v1374
      %v1377 = vmul.f32 %v1375, %v1375
      %v1378 = vmul.f32 %v1376, %v1376
      %v1379 = vsel %vm824, %v1377, 0.0
      %1380 = vadd.xlane.f32.xlu0 %v1379
      %v1381 = vpop.xlane.xlu0 %1380
      %v1382 = vsel %vm824, %v1378, 0.0
      %1383 = vadd.xlane.f32.xlu0 %v1382
      %v1384 = vpop.xlane.xlu0 %1383
      %v1385 = vmul.f32 %v1381, %v1187
      %v1386 = vmul.f32 %v1384, %v1187
      %v1387 = vadd.f32 %v1385, 1e-06
      %v1388 = vadd.f32 %v1386, 1e-06
      %v1389 = vrsqrt.pop %v1387
      %v1390 = vrsqrt.pop %v1388
      %v1391 = vmul.f32 %v1375, %v1389
      %v1392 = vmul.f32 %v1376, %v1390
      %v1394 = vlaneseq
      %v1395 = vshrl.u32 %v1394, 7
      %v1396 = vsub.s32 0, %v1395
      %v1397 = vrot.slane %v761, %v1396
      %v1399 = vmul.f32 %v1391, %v1397
      %v1400 = vmul.f32 %v1392, %v1397
      %v1402 = vlaneseq
      %v1403 = vshrl.u32 %v1402, 7
      %v1404 = vsub.s32 0, %v1403
      %v1405 = vrot.slane %v762, %v1404
      %v1407 = vadd.f32 %v1399, %v1405
      %v1408 = vadd.f32 %v1400, %v1405
      %1410 = vset.pattern.permute.xlu0 0
      %1411 = vperm.xlu0 %1410, %v793
      %v1412 = vpop.permute.xlu0 %1411
      %1415 = vset.pattern.permute.xlu0 0
      %1416 = vperm.xlu0 %1415, %v794
      %v1417 = vpop.permute.xlu0 %1416
      %v1419 = vmul.f32 %v1407, %v1412
      %v1420 = vmul.f32 %v1408, %v1417
      %v1421 = vsel %vm824, %v1419, 0.0
      %v1422 = vsel %vm824, %v1420, 0.0
      %v1423 = vadd.f32 %v1421, %v1422
      %v1424 = vrot.slane %v1423, 4
      %v1425 = vadd.f32 %v1423, %v1424
      %v1426 = vrot.slane %v1425, 2
      %v1427 = vadd.f32 %v1425, %v1426
      %v1428 = vrot.slane %v1427, 1
      %v1429 = vadd.f32 %v1427, %v1428
      %1431 = vset.pattern.permute.xlu0 0
      %1432 = vperm.xlu0 %1431, %v806
      %v1433 = vpop.permute.xlu0 %1432
      %v1435 = vmul.f32 %v1429, %v1433
      %vm1436 = vcmask 253952
      %1437 = vst.msk [vmem:[%s732] sm:$0x1] %vm1436, %v1435
      %v1442 = vunpack.c.l.b16 %v763
      %v1443 = vunpack.c.l.b16 %v764
      %v1444 = vunpack.c.l.b16 %v765
      %v1445 = vunpack.c.l.b16 %v766
      %v1446 = vpack.c.b16 %v1443, %v1442
      %v1447 = vpack.c.b16 %v1445, %v1444
      %1450 = vmatprep.subr.bf16.mxu0 0
      %1451 = vmatpush1.bf16.msra.mxu0 0
      %1452 = vmatprep.subr.bf16.mxu0 0
      %1453 = vmatpush1.bf16.msra.mxu0 0
      %1454 = vmatprep.subr.bf16.mxu0 0
      %1455 = vmatpush1.bf16.msra.mxu0 0
      %1456 = vmatprep.subr.bf16.mxu0 0
      %1457 = vmatpush1.bf16.msra.mxu0 0
      %1458 = vmatprep.subr.bf16.mxu0 0
      %1459 = vmatpush1.bf16.msra.mxu0 0
      %1460 = vmatprep.subr.bf16.mxu0 0
      %1461 = vmatpush1.bf16.msra.mxu0 0
      %1462 = vmatprep.subr.bf16.mxu0 0
      %1463 = vmatpush1.bf16.msra.mxu0 %v1447
      %1464 = vmatprep.subr.bf16.mxu0 0
      %1465 = vmatpush1.bf16.msra.mxu0 %v1446
      %1466 = vmatprep.subr.bf16.mxu0 0
      %1467 = vmatpush2.bf16.msra.mxu0 0
      %1468 = vmatprep.subr.bf16.mxu0 0
      %1469 = vmatpush2.bf16.msra.mxu0 0
      %1470 = vmatprep.subr.bf16.mxu0 0
      %1471 = vmatpush2.bf16.msra.mxu0 0
      %1472 = vmatprep.subr.bf16.mxu0 0
      %1473 = vmatpush2.bf16.msra.mxu0 0
      %1474 = vmatprep.subr.bf16.mxu0 0
      %1475 = vmatpush2.bf16.msra.mxu0 0
      %1476 = vmatprep.subr.bf16.mxu0 0
      %1477 = vmatpush2.bf16.msra.mxu0 0
      %1478 = vmatprep.subr.bf16.mxu0 0
      %1479 = vmatpush2.bf16.msra.mxu0 0
      %1480 = vmatprep.subr.bf16.mxu0 0
      %1481 = vmatpush2.bf16.msra.mxu0 0
      %1482 = vmatprep.mubr.bf16.mxu0 0
      %1483 = vmatmul.mubr.bf16.gmra.mxu0 %v826
      %v1484 = vpop.f32.mrf.mxu0
      %v1485 = vadd.f32 0.0, %v1484
      %v1486 = vpop.f32.mrf.mxu0
      %v1487 = vpop.f32.mrf.mxu0
      %v1488 = vadd.f32 0.0, %v1487
      %v1489 = vpop.f32.mrf.mxu0
      %1490 = vdwg.mxu0
      %v1491 = vpack.c.bf16 %v1488, %v1485
      %1493 = vrot.lane.b32.xlu0 %v1491, 96
      %v1494 = vpop.permute.xlu0 %1493
      %v1496 = vsel %vm873, %v1491, 0
      %v1499 = vsel %vm873, %v1494, 0
      %1501 = vmatprep.subr.bf16.mxu0 0
      %1502 = vmatpush1.bf16.xpose.msra.mxu0 0
      %1503 = vmatprep.subr.bf16.mxu0 0
      %1504 = vmatpush1.bf16.xpose.msra.mxu0 0
      %1505 = vmatprep.subr.bf16.mxu0 0
      %1506 = vmatpush1.bf16.xpose.msra.mxu0 0
      %1507 = vmatprep.subr.bf16.mxu0 0
      %1508 = vmatpush1.bf16.xpose.msra.mxu0 0
      %1509 = vmatprep.subr.bf16.mxu0 0
      %1510 = vmatpush1.bf16.xpose.msra.mxu0 0
      %1511 = vmatprep.subr.bf16.mxu0 0
      %1512 = vmatpush1.bf16.xpose.msra.mxu0 0
      %1513 = vmatprep.subr.bf16.mxu0 0
      %1514 = vmatpush1.bf16.xpose.msra.mxu0 0
      %1515 = vmatprep.subr.bf16.mxu0 0
      %1516 = vmatpush1.bf16.xpose.msra.mxu0 %v1499
      %1517 = vmatprep.subr.bf16.mxu0 0
      %1518 = vmatpush2.bf16.xpose.msra.mxu0 0
      %1519 = vmatprep.subr.bf16.mxu0 0
      %1520 = vmatpush2.bf16.xpose.msra.mxu0 0
      %1521 = vmatprep.subr.bf16.mxu0 0
      %1522 = vmatpush2.bf16.xpose.msra.mxu0 0
      %1523 = vmatprep.subr.bf16.mxu0 0
      %1524 = vmatpush2.bf16.xpose.msra.mxu0 0
      %1525 = vmatprep.subr.bf16.mxu0 0
      %1526 = vmatpush2.bf16.xpose.msra.mxu0 0
      %1527 = vmatprep.subr.bf16.mxu0 0
      %1528 = vmatpush2.bf16.xpose.msra.mxu0 0
      %1529 = vmatprep.subr.bf16.mxu0 0
      %1530 = vmatpush2.bf16.xpose.msra.mxu0 0
      %1531 = vmatprep.subr.bf16.mxu0 0
      %1532 = vmatpush2.bf16.xpose.msra.mxu0 0
      %1533 = vmatprep.mubr.bf16.mxu0 0
      %1534 = vmatmul.mubr.bf16.gmra.mxu0 %v1496
      %v1535 = vpop.f32.mrf.mxu0
      %v1536 = vadd.f32 0.0, %v1535
      %v1537 = vpop.f32.mrf.mxu0
      %v1538 = vpop.f32.mrf.mxu0
      %v1539 = vadd.f32 0.0, %v1538
      %v1540 = vpop.f32.mrf.mxu0
      %1541 = vdwg.mxu0
      %v1542 = vsel %vm873, %v1536, -inf
      %1543 = vmax.xlane.f32.xlu0 %v1542
      %v1544 = vpop.xlane.xlu0 %1543
      %v1545 = vsel %vm873, %v1539, -inf
      %1546 = vmax.xlane.f32.xlu0 %v1545
      %v1547 = vpop.xlane.xlu0 %1546
      %v1548 = vsub.f32 %v1536, %v1544
      %v1549 = vsub.f32 %v1539, %v1547
      %v1550 = vmul.f32 %v1548, 1.442695
      %v1551 = vpow.pop %v1550
      %v1552 = vmul.f32 %v1549, 1.442695
      %v1553 = vpow.pop %v1552
      %v1554 = vsel %vm873, %v1551, 0.0
      %1555 = vadd.xlane.f32.xlu0 %v1554
      %v1556 = vpop.xlane.xlu0 %1555
      %v1557 = vsel %vm873, %v1553, 0.0
      %1558 = vadd.xlane.f32.xlu0 %v1557
      %v1559 = vpop.xlane.xlu0 %1558
      %v1560 = vrcp.pop %v1556
      %v1561 = vrcp.pop %v1559
      %v1562 = vmul.f32 %v1551, %v1560
      %v1563 = vmul.f32 %v1553, %v1561
      %v1564 = vpack.c.bf16 %v1563, %v1562
      %1565 = vrot.lane.b32.xlu0 %v1491, 64
      %v1566 = vpop.permute.xlu0 %1565
      %v1569 = vsel %vm873, %v1564, 0
      %1571 = vmatprep.subr.bf16.mxu0 0
      %1572 = vmatpush1.bf16.msra.mxu0 0
      %1573 = vmatprep.subr.bf16.mxu0 0
      %1574 = vmatpush1.bf16.msra.mxu0 0
      %1575 = vmatprep.subr.bf16.mxu0 0
      %1576 = vmatpush1.bf16.msra.mxu0 0
      %1577 = vmatprep.subr.bf16.mxu0 0
      %1578 = vmatpush1.bf16.msra.mxu0 0
      %1579 = vmatprep.subr.bf16.mxu0 0
      %1580 = vmatpush1.bf16.msra.mxu0 0
      %1581 = vmatprep.subr.bf16.mxu0 0
      %1582 = vmatpush1.bf16.msra.mxu0 0
      %1583 = vmatprep.subr.bf16.mxu0 0
      %1584 = vmatpush1.bf16.msra.mxu0 0
      %1585 = vmatprep.subr.bf16.mxu0 0
      %1586 = vmatpush1.bf16.msra.mxu0 %v1566
      %1587 = vmatprep.subr.bf16.mxu0 0
      %1588 = vmatpush2.bf16.msra.mxu0 0
      %1589 = vmatprep.subr.bf16.mxu0 0
      %1590 = vmatpush2.bf16.msra.mxu0 0
      %1591 = vmatprep.subr.bf16.mxu0 0
      %1592 = vmatpush2.bf16.msra.mxu0 0
      %1593 = vmatprep.subr.bf16.mxu0 0
      %1594 = vmatpush2.bf16.msra.mxu0 0
      %1595 = vmatprep.subr.bf16.mxu0 0
      %1596 = vmatpush2.bf16.msra.mxu0 0
      %1597 = vmatprep.subr.bf16.mxu0 0
      %1598 = vmatpush2.bf16.msra.mxu0 0
      %1599 = vmatprep.subr.bf16.mxu0 0
      %1600 = vmatpush2.bf16.msra.mxu0 0
      %1601 = vmatprep.subr.bf16.mxu0 0
      %1602 = vmatpush2.bf16.msra.mxu0 0
      %1603 = vmatprep.mubr.bf16.mxu0 0
      %1604 = vmatmul.mubr.bf16.gmra.mxu0 %v1569
      %v1605 = vpop.f32.mrf.mxu0
      %v1606 = vadd.f32 0.0, %v1605
      %v1607 = vpop.f32.mrf.mxu0
      %v1608 = vpop.f32.mrf.mxu0
      %v1609 = vadd.f32 0.0, %v1608
      %v1610 = vpop.f32.mrf.mxu0
      %1611 = vdwg.mxu0
      %1612 = vrot.lane.b32.xlu0 %v1491, 112
      %v1613 = vpop.permute.xlu0 %1612
      %1614 = vrot.lane.b32.xlu0 %v1491, 80
      %v1615 = vpop.permute.xlu0 %1614
      %v1617 = vsel %vm873, %v1613, 0
      %v1620 = vsel %vm873, %v1615, 0
      %1622 = vmatprep.subr.bf16.mxu0 0
      %1623 = vmatpush1.bf16.xpose.msra.mxu0 0
      %1624 = vmatprep.subr.bf16.mxu0 0
      %1625 = vmatpush1.bf16.xpose.msra.mxu0 0
      %1626 = vmatprep.subr.bf16.mxu0 0
      %1627 = vmatpush1.bf16.xpose.msra.mxu0 0
      %1628 = vmatprep.subr.bf16.mxu0 0
      %1629 = vmatpush1.bf16.xpose.msra.mxu0 0
      %1630 = vmatprep.subr.bf16.mxu0 0
      %1631 = vmatpush1.bf16.xpose.msra.mxu0 0
      %1632 = vmatprep.subr.bf16.mxu0 0
      %1633 = vmatpush1.bf16.xpose.msra.mxu0 0
      %1634 = vmatprep.subr.bf16.mxu0 0
      %1635 = vmatpush1.bf16.xpose.msra.mxu0 0
      %1636 = vmatprep.subr.bf16.mxu0 0
      %1637 = vmatpush1.bf16.xpose.msra.mxu0 %v1620
      %1638 = vmatprep.subr.bf16.mxu0 0
      %1639 = vmatpush2.bf16.xpose.msra.mxu0 0
      %1640 = vmatprep.subr.bf16.mxu0 0
      %1641 = vmatpush2.bf16.xpose.msra.mxu0 0
      %1642 = vmatprep.subr.bf16.mxu0 0
      %1643 = vmatpush2.bf16.xpose.msra.mxu0 0
      %1644 = vmatprep.subr.bf16.mxu0 0
      %1645 = vmatpush2.bf16.xpose.msra.mxu0 0
      %1646 = vmatprep.subr.bf16.mxu0 0
      %1647 = vmatpush2.bf16.xpose.msra.mxu0 0
      %1648 = vmatprep.subr.bf16.mxu0 0
      %1649 = vmatpush2.bf16.xpose.msra.mxu0 0
      %1650 = vmatprep.subr.bf16.mxu0 0
      %1651 = vmatpush2.bf16.xpose.msra.mxu0 0
      %1652 = vmatprep.subr.bf16.mxu0 0
      %1653 = vmatpush2.bf16.xpose.msra.mxu0 0
      %1654 = vmatprep.mubr.bf16.mxu0 0
      %1655 = vmatmul.mubr.bf16.gmra.mxu0 %v1617
      %v1656 = vpop.f32.mrf.mxu0
      %v1657 = vadd.f32 0.0, %v1656
      %v1658 = vpop.f32.mrf.mxu0
      %v1659 = vpop.f32.mrf.mxu0
      %v1660 = vadd.f32 0.0, %v1659
      %v1661 = vpop.f32.mrf.mxu0
      %1662 = vdwg.mxu0
      %v1663 = vsel %vm873, %v1657, -inf
      %1664 = vmax.xlane.f32.xlu0 %v1663
      %v1665 = vpop.xlane.xlu0 %1664
      %v1666 = vsel %vm873, %v1660, -inf
      %1667 = vmax.xlane.f32.xlu0 %v1666
      %v1668 = vpop.xlane.xlu0 %1667
      %v1669 = vsub.f32 %v1657, %v1665
      %v1670 = vsub.f32 %v1660, %v1668
      %v1671 = vmul.f32 %v1669, 1.442695
      %v1672 = vpow.pop %v1671
      %v1673 = vmul.f32 %v1670, 1.442695
      %v1674 = vpow.pop %v1673
      %v1675 = vsel %vm873, %v1672, 0.0
      %1676 = vadd.xlane.f32.xlu0 %v1675
      %v1677 = vpop.xlane.xlu0 %1676
      %v1678 = vsel %vm873, %v1674, 0.0
      %1679 = vadd.xlane.f32.xlu0 %v1678
      %v1680 = vpop.xlane.xlu0 %1679
      %v1681 = vrcp.pop %v1677
      %v1682 = vrcp.pop %v1680
      %v1683 = vmul.f32 %v1672, %v1681
      %v1684 = vmul.f32 %v1674, %v1682
      %v1685 = vpack.c.bf16 %v1684, %v1683
      %1686 = vrot.lane.b32.xlu0 %v1491, 48
      %v1687 = vpop.permute.xlu0 %1686
      %v1690 = vsel %vm873, %v1685, 0
      %1692 = vmatprep.subr.bf16.mxu0 0
      %1693 = vmatpush1.bf16.msra.mxu0 0
      %1694 = vmatprep.subr.bf16.mxu0 0
      %1695 = vmatpush1.bf16.msra.mxu0 0
      %1696 = vmatprep.subr.bf16.mxu0 0
      %1697 = vmatpush1.bf16.msra.mxu0 0
      %1698 = vmatprep.subr.bf16.mxu0 0
      %1699 = vmatpush1.bf16.msra.mxu0 0
      %1700 = vmatprep.subr.bf16.mxu0 0
      %1701 = vmatpush1.bf16.msra.mxu0 0
      %1702 = vmatprep.subr.bf16.mxu0 0
      %1703 = vmatpush1.bf16.msra.mxu0 0
      %1704 = vmatprep.subr.bf16.mxu0 0
      %1705 = vmatpush1.bf16.msra.mxu0 0
      %1706 = vmatprep.subr.bf16.mxu0 0
      %1707 = vmatpush1.bf16.msra.mxu0 %v1687
      %1708 = vmatprep.subr.bf16.mxu0 0
      %1709 = vmatpush2.bf16.msra.mxu0 0
      %1710 = vmatprep.subr.bf16.mxu0 0
      %1711 = vmatpush2.bf16.msra.mxu0 0
      %1712 = vmatprep.subr.bf16.mxu0 0
      %1713 = vmatpush2.bf16.msra.mxu0 0
      %1714 = vmatprep.subr.bf16.mxu0 0
      %1715 = vmatpush2.bf16.msra.mxu0 0
      %1716 = vmatprep.subr.bf16.mxu0 0
      %1717 = vmatpush2.bf16.msra.mxu0 0
      %1718 = vmatprep.subr.bf16.mxu0 0
      %1719 = vmatpush2.bf16.msra.mxu0 0
      %1720 = vmatprep.subr.bf16.mxu0 0
      %1721 = vmatpush2.bf16.msra.mxu0 0
      %1722 = vmatprep.subr.bf16.mxu0 0
      %1723 = vmatpush2.bf16.msra.mxu0 0
      %1724 = vmatprep.mubr.bf16.mxu0 0
      %1725 = vmatmul.mubr.bf16.gmra.mxu0 %v1690
      %v1726 = vpop.f32.mrf.mxu0
      %v1727 = vadd.f32 0.0, %v1726
      %v1728 = vpop.f32.mrf.mxu0
      %v1729 = vpop.f32.mrf.mxu0
      %v1730 = vadd.f32 0.0, %v1729
      %v1731 = vpop.f32.mrf.mxu0
      %1732 = vdwg.mxu0
      %1735 = vrot.lane.b32.xlu0 %v1727, 16
      %v1736 = vpop.permute.xlu0 %1735
      %1737 = vrot.lane.b32.xlu0 %v1730, 16
      %v1738 = vpop.permute.xlu0 %1737
      %v1741 = vsel %vm873, %v1606, %v1736
      %v1742 = vsel %vm873, %v1609, %v1738
      %v1743 = vpack.c.bf16 %v1742, %v1741
      %v1748 = vunpack.c.l.b16 %v767
      %v1749 = vunpack.c.l.b16 %v768
      %v1750 = vunpack.c.l.b16 %v769
      %v1751 = vunpack.c.l.b16 %v770
      %v1752 = vpack.c.b16 %v1749, %v1748
      %v1753 = vpack.c.b16 %v1751, %v1750
      %v1757 = vsel %vm824, %v1743, 0
      %1759 = vmatprep.subr.bf16.mxu0 0
      %1760 = vmatpush1.bf16.msra.mxu0 0
      %1761 = vmatprep.subr.bf16.mxu0 0
      %1762 = vmatpush1.bf16.msra.mxu0 0
      %1763 = vmatprep.subr.bf16.mxu0 0
      %1764 = vmatpush1.bf16.msra.mxu0 0
      %1765 = vmatprep.subr.bf16.mxu0 0
      %1766 = vmatpush1.bf16.msra.mxu0 0
      %1767 = vmatprep.subr.bf16.mxu0 0
      %1768 = vmatpush1.bf16.msra.mxu0 0
      %1769 = vmatprep.subr.bf16.mxu0 0
      %1770 = vmatpush1.bf16.msra.mxu0 0
      %1771 = vmatprep.subr.bf16.mxu0 0
      %1772 = vmatpush1.bf16.msra.mxu0 %v1753
      %1773 = vmatprep.subr.bf16.mxu0 0
      %1774 = vmatpush1.bf16.msra.mxu0 %v1752
      %1775 = vmatprep.subr.bf16.mxu0 0
      %1776 = vmatpush2.bf16.msra.mxu0 0
      %1777 = vmatprep.subr.bf16.mxu0 0
      %1778 = vmatpush2.bf16.msra.mxu0 0
      %1779 = vmatprep.subr.bf16.mxu0 0
      %1780 = vmatpush2.bf16.msra.mxu0 0
      %1781 = vmatprep.subr.bf16.mxu0 0
      %1782 = vmatpush2.bf16.msra.mxu0 0
      %1783 = vmatprep.subr.bf16.mxu0 0
      %1784 = vmatpush2.bf16.msra.mxu0 0
      %1785 = vmatprep.subr.bf16.mxu0 0
      %1786 = vmatpush2.bf16.msra.mxu0 0
      %1787 = vmatprep.subr.bf16.mxu0 0
      %1788 = vmatpush2.bf16.msra.mxu0 0
      %1789 = vmatprep.subr.bf16.mxu0 0
      %1790 = vmatpush2.bf16.msra.mxu0 0
      %1791 = vmatprep.mubr.bf16.mxu0 0
      %1792 = vmatmul.mubr.bf16.gmra.mxu0 %v1757
      %v1793 = vpop.f32.mrf.mxu0
      %v1794 = vadd.f32 0.0, %v1793
      %v1795 = vpop.f32.mrf.mxu0
      %v1796 = vpop.f32.mrf.mxu0
      %v1797 = vadd.f32 0.0, %v1796
      %v1798 = vpop.f32.mrf.mxu0
      %1799 = vdwg.mxu0
      %v1800 = vadd.f32 %v791, %v1794
      %v1801 = vadd.f32 %v792, %v1797
      %v1802 = vsel %vm824, %v1800, 0.0
      %1803 = vadd.xlane.f32.xlu0 %v1802
      %v1804 = vpop.xlane.xlu0 %1803
      %v1805 = vsel %vm824, %v1801, 0.0
      %1806 = vadd.xlane.f32.xlu0 %v1805
      %v1807 = vpop.xlane.xlu0 %1806
      %v1808 = vmul.f32 %v1804, %v1187
      %v1809 = vmul.f32 %v1807, %v1187
      %v1810 = vsub.f32 %v1800, %v1808
      %v1811 = vsub.f32 %v1801, %v1809
      %v1812 = vmul.f32 %v1810, %v1810
      %v1813 = vmul.f32 %v1811, %v1811
      %v1814 = vsel %vm824, %v1812, 0.0
      %1815 = vadd.xlane.f32.xlu0 %v1814
      %v1816 = vpop.xlane.xlu0 %1815
      %v1817 = vsel %vm824, %v1813, 0.0
      %1818 = vadd.xlane.f32.xlu0 %v1817
      %v1819 = vpop.xlane.xlu0 %1818
      %v1820 = vmul.f32 %v1816, %v1187
      %v1821 = vmul.f32 %v1819, %v1187
      %v1822 = vadd.f32 %v1820, 1e-06
      %v1823 = vadd.f32 %v1821, 1e-06
      %v1824 = vrsqrt.pop %v1822
      %v1825 = vrsqrt.pop %v1823
      %v1826 = vmul.f32 %v1810, %v1824
      %v1827 = vmul.f32 %v1811, %v1825
      %v1829 = vlaneseq
      %v1830 = vshrl.u32 %v1829, 7
      %v1831 = vsub.s32 0, %v1830
      %v1832 = vrot.slane %v771, %v1831
      %v1834 = vmul.f32 %v1826, %v1832
      %v1835 = vmul.f32 %v1827, %v1832
      %v1837 = vlaneseq
      %v1838 = vshrl.u32 %v1837, 7
      %v1839 = vsub.s32 0, %v1838
      %v1840 = vrot.slane %v772, %v1839
      %v1842 = vadd.f32 %v1834, %v1840
      %v1843 = vadd.f32 %v1835, %v1840
      %v1844 = vpack.c.bf16 %v1843, %v1842
      %v1846 = vlaneseq
      %v1847 = vshrl.u32 %v1846, 7
      %v1848 = vsub.s32 0, %v1847
      %v1849 = vrot.slane %v777, %v1848
      %v1855 = vunpack.c.l.b16 %v773
      %v1856 = vunpack.c.l.b16 %v774
      %v1857 = vunpack.c.l.b16 %v775
      %v1858 = vunpack.c.l.b16 %v776
      %v1859 = vpack.c.b16 %v1856, %v1855
      %v1860 = vpack.c.b16 %v1858, %v1857
      %v1864 = vsel %vm824, %v1844, 0
      %1866 = vmatprep.subr.bf16.mxu0 0
      %1867 = vmatpush1.bf16.msra.mxu0 0
      %1868 = vmatprep.subr.bf16.mxu0 0
      %1869 = vmatpush1.bf16.msra.mxu0 0
      %1870 = vmatprep.subr.bf16.mxu0 0
      %1871 = vmatpush1.bf16.msra.mxu0 0
      %1872 = vmatprep.subr.bf16.mxu0 0
      %1873 = vmatpush1.bf16.msra.mxu0 0
      %1874 = vmatprep.subr.bf16.mxu0 0
      %1875 = vmatpush1.bf16.msra.mxu0 0
      %1876 = vmatprep.subr.bf16.mxu0 0
      %1877 = vmatpush1.bf16.msra.mxu0 0
      %1878 = vmatprep.subr.bf16.mxu0 0
      %1879 = vmatpush1.bf16.msra.mxu0 %v1860
      %1880 = vmatprep.subr.bf16.mxu0 0
      %1881 = vmatpush1.bf16.msra.mxu0 %v1859
      %1882 = vmatprep.subr.bf16.mxu0 0
      %1883 = vmatpush2.bf16.msra.mxu0 0
      %1884 = vmatprep.subr.bf16.mxu0 0
      %1885 = vmatpush2.bf16.msra.mxu0 0
      %1886 = vmatprep.subr.bf16.mxu0 0
      %1887 = vmatpush2.bf16.msra.mxu0 0
      %1888 = vmatprep.subr.bf16.mxu0 0
      %1889 = vmatpush2.bf16.msra.mxu0 0
      %1890 = vmatprep.subr.bf16.mxu0 0
      %1891 = vmatpush2.bf16.msra.mxu0 0
      %1892 = vmatprep.subr.bf16.mxu0 0
      %1893 = vmatpush2.bf16.msra.mxu0 0
      %1894 = vmatprep.subr.bf16.mxu0 0
      %1895 = vmatpush2.bf16.msra.mxu0 0
      %1896 = vmatprep.subr.bf16.mxu0 0
      %1897 = vmatpush2.bf16.msra.mxu0 0
      %1898 = vmatprep.mubr.bf16.mxu0 0
      %1899 = vmatmul.mubr.bf16.gmra.mxu0 %v1864
      %v1900 = vpop.f32.mrf.mxu0
      %v1901 = vadd.f32 %v1849, %v1900
      %v1902 = vpop.f32.mrf.mxu0
      %v1903 = vpop.f32.mrf.mxu0
      %v1904 = vadd.f32 %v1849, %v1903
      %v1905 = vpop.f32.mrf.mxu0
      %1906 = vdwg.mxu0
      %v1907 = vmax.f32 %v1901, 0.0
      %v1908 = vmax.f32 %v1904, 0.0
      %v1909 = vpack.c.bf16 %v1908, %v1907
      %v1911 = vlaneseq
      %v1912 = vshrl.u32 %v1911, 7
      %v1913 = vsub.s32 0, %v1912
      %v1914 = vrot.slane %v786, %v1913
      %v1924 = vunpack.c.l.b16 %v778
      %v1925 = vunpack.c.l.b16 %v779
      %v1926 = vunpack.c.l.b16 %v780
      %v1927 = vunpack.c.l.b16 %v781
      %v1928 = vunpack.c.l.b16 %v782
      %v1929 = vunpack.c.l.b16 %v783
      %v1930 = vunpack.c.l.b16 %v784
      %v1931 = vunpack.c.l.b16 %v785
      %v1932 = vpack.c.b16 %v1925, %v1924
      %v1933 = vpack.c.b16 %v1927, %v1926
      %v1934 = vpack.c.b16 %v1929, %v1928
      %v1935 = vpack.c.b16 %v1931, %v1930
      %v1941 = vsel %vm1320, %v1909, 0
      %1943 = vmatprep.subr.bf16.mxu0 0
      %1944 = vmatpush1.bf16.msra.mxu0 0
      %1945 = vmatprep.subr.bf16.mxu0 0
      %1946 = vmatpush1.bf16.msra.mxu0 0
      %1947 = vmatprep.subr.bf16.mxu0 0
      %1948 = vmatpush1.bf16.msra.mxu0 0
      %1949 = vmatprep.subr.bf16.mxu0 0
      %1950 = vmatpush1.bf16.msra.mxu0 0
      %1951 = vmatprep.subr.bf16.mxu0 0
      %1952 = vmatpush1.bf16.msra.mxu0 %v1935
      %1953 = vmatprep.subr.bf16.mxu0 0
      %1954 = vmatpush1.bf16.msra.mxu0 %v1934
      %1955 = vmatprep.subr.bf16.mxu0 0
      %1956 = vmatpush1.bf16.msra.mxu0 %v1933
      %1957 = vmatprep.subr.bf16.mxu0 0
      %1958 = vmatpush1.bf16.msra.mxu0 %v1932
      %1959 = vmatprep.subr.bf16.mxu0 0
      %1960 = vmatpush2.bf16.msra.mxu0 0
      %1961 = vmatprep.subr.bf16.mxu0 0
      %1962 = vmatpush2.bf16.msra.mxu0 0
      %1963 = vmatprep.subr.bf16.mxu0 0
      %1964 = vmatpush2.bf16.msra.mxu0 0
      %1965 = vmatprep.subr.bf16.mxu0 0
      %1966 = vmatpush2.bf16.msra.mxu0 0
      %1967 = vmatprep.subr.bf16.mxu0 0
      %1968 = vmatpush2.bf16.msra.mxu0 0
      %1969 = vmatprep.subr.bf16.mxu0 0
      %1970 = vmatpush2.bf16.msra.mxu0 0
      %1971 = vmatprep.subr.bf16.mxu0 0
      %1972 = vmatpush2.bf16.msra.mxu0 0
      %1973 = vmatprep.subr.bf16.mxu0 0
      %1974 = vmatpush2.bf16.msra.mxu0 0
      %1975 = vmatprep.mubr.bf16.mxu0 0
      %1976 = vmatmul.mubr.bf16.gmra.mxu0 %v1941
      %v1977 = vpop.f32.mrf.mxu0
      %v1978 = vadd.f32 %v1914, %v1977
      %v1979 = vpop.f32.mrf.mxu0
      %v1980 = vpop.f32.mrf.mxu0
      %v1981 = vadd.f32 %v1914, %v1980
      %v1982 = vpop.f32.mrf.mxu0
      %1983 = vdwg.mxu0
      %v1984 = vadd.f32 %v1842, %v1978
      %v1985 = vadd.f32 %v1843, %v1981
      %v1986 = vsel %vm824, %v1984, 0.0
      %1987 = vadd.xlane.f32.xlu0 %v1986
      %v1988 = vpop.xlane.xlu0 %1987
      %v1989 = vsel %vm824, %v1985, 0.0
      %1990 = vadd.xlane.f32.xlu0 %v1989
      %v1991 = vpop.xlane.xlu0 %1990
      %v1992 = vmul.f32 %v1988, %v1187
      %v1993 = vmul.f32 %v1991, %v1187
      %v1994 = vsub.f32 %v1984, %v1992
      %v1995 = vsub.f32 %v1985, %v1993
      %v1996 = vmul.f32 %v1994, %v1994
      %v1997 = vmul.f32 %v1995, %v1995
      %v1998 = vsel %vm824, %v1996, 0.0
      %1999 = vadd.xlane.f32.xlu0 %v1998
      %v2000 = vpop.xlane.xlu0 %1999
      %v2001 = vsel %vm824, %v1997, 0.0
      %2002 = vadd.xlane.f32.xlu0 %v2001
      %v2003 = vpop.xlane.xlu0 %2002
      %v2004 = vmul.f32 %v2000, %v1187
      %v2005 = vmul.f32 %v2003, %v1187
      %v2006 = vadd.f32 %v2004, 1e-06
      %v2007 = vadd.f32 %v2005, 1e-06
      %v2008 = vrsqrt.pop %v2006
      %v2009 = vrsqrt.pop %v2007
      %v2010 = vmul.f32 %v1994, %v2008
      %v2011 = vmul.f32 %v1995, %v2009
      %v2013 = vlaneseq
      %v2014 = vshrl.u32 %v2013, 7
      %v2015 = vsub.s32 0, %v2014
      %v2016 = vrot.slane %v787, %v2015
      %v2018 = vmul.f32 %v2010, %v2016
      %v2019 = vmul.f32 %v2011, %v2016
      %v2021 = vlaneseq
      %v2022 = vshrl.u32 %v2021, 7
      %v2023 = vsub.s32 0, %v2022
      %v2024 = vrot.slane %v788, %v2023
      %v2026 = vadd.f32 %v2018, %v2024
      %v2027 = vadd.f32 %v2019, %v2024
      %v2028 = vmul.f32 %v2026, %v1412
      %v2029 = vmul.f32 %v2027, %v1417
      %v2030 = vsel %vm824, %v2028, 0.0
      %v2031 = vsel %vm824, %v2029, 0.0
      %v2032 = vadd.f32 %v2030, %v2031
      %v2033 = vrot.slane %v2032, 4
      %v2034 = vadd.f32 %v2032, %v2033
      %v2035 = vrot.slane %v2034, 2
      %v2036 = vadd.f32 %v2034, %v2035
      %v2037 = vrot.slane %v2036, 1
      %v2038 = vadd.f32 %v2036, %v2037
      %v2039 = vmul.f32 %v2038, %v1433
      %v2040 = vmin.f32 %v2039, 80.0
      %2041 = vst.msk [vmem:[%s735] sm:$0x1] %vm1436, %v2040
      %p2042 = scmp.lt.s32.totalorder %s35, 1
      %s2043 = scalar_select %p2042, %s35, 1
      %s2044 = scalar_lea.vmem %s22, %s2043
      %p2045 = scmp.lt.s32.totalorder %s35, 1
      %s2046 = scalar_select %p2045, %s35, 1
      %s2047 = scalar_lea.vmem %s23, %s2046
      // Predicated region
      $region109: #{seqvae_loss_forward.6} parent=107 // pred_check
        %p2048 = pneg %p525
      $region110: #{seqvae_loss_forward.6} parent=107 // pred_check_branch
        %2050 = sbr.rel (%p2048) target = $region112
      $region111: #{seqvae_loss_forward.6} parent=107 // pred_region
        _
      $region112: #{seqvae_loss_forward.6} parent=107 // pred_fallthru
        _
      // Predicated region
      $region113: #{seqvae_loss_forward.6} parent=107 // pred_check
        %p2051 = pneg %p551
      $region114: #{seqvae_loss_forward.6} parent=107 // pred_check_branch
        %2053 = sbr.rel (%p2051) target = $region116
      $region115: #{seqvae_loss_forward.6} parent=107 // pred_region
        _
      $region116: #{seqvae_loss_forward.6} parent=107 // pred_fallthru
        _
    $region108: #{seqvae_loss_forward.6} parent=5 // pred_fallthru
      _
    %p2054 = scmp.le.s32.totalorder 2, %s30
    // Predicated region
    $region117: #{seqvae_loss_forward.6} parent=5 // pred_check
      %p2055 = pneg %p2054
    $region118: #{seqvae_loss_forward.6} parent=5 // pred_check_branch
      %2057 = sbr.rel (%p2055) target = $region120
    $region119: #{seqvae_loss_forward.6} parent=5 // pred_region
      %s2058 = ssub.s32 %s30, 2
      // Predicated region
      $region121: #{seqvae_loss_forward.6} parent=119 // pred_check
        %p2059 = pneg %p531
      $region122: #{seqvae_loss_forward.6} parent=119 // pred_check_branch
        %2061 = sbr.rel (%p2059) target = $region124
      $region123: #{seqvae_loss_forward.6} parent=119 // pred_region
        %p2062 = scmp.lt.s32.totalorder %s36, 1
        %s2063 = scalar_select %p2062, %s36, 1
        %s2064 = scalar_lea.vmem %s22, %s2063
      $region124: #{seqvae_loss_forward.6} parent=119 // pred_fallthru
        _
      // Predicated region
      $region125: #{seqvae_loss_forward.6} parent=119 // pred_check
        %p2065 = pneg %p557
      $region126: #{seqvae_loss_forward.6} parent=119 // pred_check_branch
        %2067 = sbr.rel (%p2065) target = $region128
      $region127: #{seqvae_loss_forward.6} parent=119 // pred_region
        %p2068 = scmp.lt.s32.totalorder %s36, 1
        %s2069 = scalar_select %p2068, %s36, 1
        %s2070 = scalar_lea.vmem %s23, %s2069
      $region128: #{seqvae_loss_forward.6} parent=119 // pred_fallthru
        _
    $region120: #{seqvae_loss_forward.6} parent=5 // pred_fallthru
      _
  $region6: #{seqvae_loss_forward.6} parent=0 // loop_footer
    %s34 = sadd.s32 1, %s30
  $region7: #{seqvae_loss_forward.6} parent=0 // loop_footer_branch
    %29 = sbr.rel target = $region3
  $region8: #{seqvae_loss_forward.6} parent=0 // loop_exit
    _

// kernel: seqvae_loss_forward.8
$region0: #{seqvae_loss_forward.8}
  #allocation0 [shape = 'u32[]', space=smem, size = 0x4, offset = 0x4, fixed_abs, tag = 'smem constant byte address 0x4 - core index']
  #allocation1 [shape = 'u32[144,128]{1,0:T(1,128)}', space=vmem, size = 0x12000, scoped, tag = 'internal scratch']
  %s0 = inlined_call_operand.vmem [shape: bf16[2,17,32], index: 0, kind: input, shape index: {}]
  %s1 = inlined_call_operand.vmem [shape: f32[2,1,17], index: 1, kind: input, shape index: {}]
  %s2 = inlined_call_operand.vmem [shape: bf16[32,96], index: 2, kind: input, shape index: {}]
  %s3 = inlined_call_operand.vmem [shape: bf16[32,32], index: 3, kind: input, shape index: {}]
  %s4 = inlined_call_operand.vmem [shape: f32[1,32], index: 4, kind: input, shape index: {}]
  %s5 = inlined_call_operand.vmem [shape: f32[1,32], index: 5, kind: input, shape index: {}]
  %s6 = inlined_call_operand.vmem [shape: bf16[32,64], index: 6, kind: input, shape index: {}]
  %s7 = inlined_call_operand.vmem [shape: f32[1,64], index: 7, kind: input, shape index: {}]
  %s8 = inlined_call_operand.vmem [shape: bf16[64,32], index: 8, kind: input, shape index: {}]
  %s9 = inlined_call_operand.vmem [shape: f32[1,32], index: 9, kind: input, shape index: {}]
  %s10 = inlined_call_operand.vmem [shape: f32[1,32], index: 10, kind: input, shape index: {}]
  %s11 = inlined_call_operand.vmem [shape: f32[1,32], index: 11, kind: input, shape index: {}]
  %s12 = inlined_call_operand.vmem [shape: bf16[2,17,32], index: 12, kind: output, shape index: {}]
  %s13 = sld [smem:[#allocation0]]
  $region81: #{seqvae_loss_forward.8} parent=0
    _
  %s15 = ssub.s32 1, %s13
  %s16 = scalar_select 0, %s15, %s13
  loop: start=0, step=1, limit=4
  $region2: #{seqvae_loss_forward.8} parent=0 // loop_pre_header
    _
  $region3: #{seqvae_loss_forward.8} parent=0 // loop_header
    %s18 = sphi 0, %s22
    %p19 = scmp.ge.s32.totalorder %s18, 4
    %s28 = sphi 0, %s30
    %s31 = sphi 0, %s28
    %s32 = sphi 0, %s31
    %s48 = sphi 0, %s32
    %s54 = sphi 0, %s56
    %s57 = sphi 0, %s54
    %s58 = sphi 0, %s57
    %s74 = sphi 0, %s58
    %s78 = sphi 0, %s78
    %s80 = sphi 0, %s78
    %s81 = sphi 0, %s80
    %s95 = sphi 0, %s81
    %s99 = sphi 0, %s99
    %s101 = sphi 0, %s99
    %s102 = sphi 0, %s101
    %s116 = sphi 0, %s102
    %s120 = sphi 0, %s120
    %s122 = sphi 0, %s120
    %s123 = sphi 0, %s122
    %s137 = sphi 0, %s123
    %s141 = sphi 0, %s141
    %s143 = sphi 0, %s141
    %s144 = sphi 0, %s143
    %s158 = sphi 0, %s144
    %s162 = sphi 0, %s162
    %s164 = sphi 0, %s162
    %s165 = sphi 0, %s164
    %s179 = sphi 0, %s165
    %s183 = sphi 0, %s183
    %s185 = sphi 0, %s183
    %s186 = sphi 0, %s185
    %s200 = sphi 0, %s186
    %s204 = sphi 0, %s204
    %s206 = sphi 0, %s204
    %s207 = sphi 0, %s206
    %s221 = sphi 0, %s207
    %s225 = sphi 0, %s225
    %s227 = sphi 0, %s225
    %s228 = sphi 0, %s227
    %s242 = sphi 0, %s228
    %s246 = sphi 0, %s246
    %s248 = sphi 0, %s246
    %s249 = sphi 0, %s248
    %s263 = sphi 0, %s249
    %s267 = sphi 0, %s267
    %s269 = sphi 0, %s267
    %s270 = sphi 0, %s269
    %s284 = sphi 0, %s270
    %s290 = sphi 0, %s292
    %s293 = sphi 0, %s290
    %s294 = sphi 0, %s293
    %s310 = sphi 0, %s294
  $region4: #{seqvae_loss_forward.8} parent=0 // loop_header_branch
    %21 = sbr.rel (%p19) target = $region8
  $region5: #{seqvae_loss_forward.8} parent=0 // loop_body
    %s23 = ssub.s32 %s18, 1
    %s24 = ssub.s32 %s18, 2
    %s25 = sadd.s32 %s18, 1
    %s26 = ssub.s32 %s18, %s25
    %p27 = scmp.eq.s32.totalorder %s26, 0
    %s29 = sadd.s32 %s28, 1
    %s30 = scalar_select %p27, %s28, %s29
    %p33 = pneg %p27
    %p34 = scmp.eq.s32.totalorder %s18, 1
    %p35 = por %p33, %p34
    %p36 = scmp.ne.s32.totalorder %s28, %s31
    %p37 = scmp.eq.s32.totalorder %s18, 0
    %p38 = por %p36, %p37
    %p39 = scmp.ne.s32.totalorder %s28, %s31
    %p40 = scmp.eq.s32.totalorder %s23, 1
    %p41 = por %p39, %p40
    %p42 = scmp.ne.s32.totalorder %s31, %s32
    %p43 = scmp.eq.s32.totalorder %s23, 0
    %p44 = por %p42, %p43
    %p45 = scmp.ne.s32.totalorder %s31, %s32
    %p46 = scmp.eq.s32.totalorder %s24, 1
    %p47 = por %p45, %p46
    %p49 = scmp.ne.s32.totalorder %s32, %s48
    %p50 = scmp.eq.s32.totalorder %s24, 0
    %p51 = por %p49, %p50
    %s52 = ssub.s32 %s18, %s25
    %p53 = scmp.eq.s32.totalorder %s52, 0
    %s55 = sadd.s32 %s54, 1
    %s56 = scalar_select %p53, %s54, %s55
    %p59 = pneg %p53
    %p60 = scmp.eq.s32.totalorder %s18, 1
    %p61 = por %p59, %p60
    %p62 = scmp.ne.s32.totalorder %s54, %s57
    %p63 = scmp.eq.s32.totalorder %s18, 0
    %p64 = por %p62, %p63
    %p65 = scmp.ne.s32.totalorder %s54, %s57
    %p66 = scmp.eq.s32.totalorder %s23, 1
    %p67 = por %p65, %p66
    %p68 = scmp.ne.s32.totalorder %s57, %s58
    %p69 = scmp.eq.s32.totalorder %s23, 0
    %p70 = por %p68, %p69
    %p71 = scmp.ne.s32.totalorder %s57, %s58
    %p72 = scmp.eq.s32.totalorder %s24, 1
    %p73 = por %p71, %p72
    %p75 = scmp.ne.s32.totalorder %s58, %s74
    %p76 = scmp.eq.s32.totalorder %s24, 0
    %p77 = por %p75, %p76
    %s79 = sadd.s32 %s78, 1
    %p82 = scmp.eq.s32.totalorder %s18, 1
    %p83 = scmp.ne.s32.totalorder %s78, %s80
    %p84 = scmp.eq.s32.totalorder %s18, 0
    %p85 = por %p83, %p84
    %p86 = scmp.ne.s32.totalorder %s78, %s80
    %p87 = scmp.eq.s32.totalorder %s23, 1
    %p88 = por %p86, %p87
    %p89 = scmp.ne.s32.totalorder %s80, %s81
    %p90 = scmp.eq.s32.totalorder %s23, 0
    %p91 = por %p89, %p90
    %p92 = scmp.ne.s32.totalorder %s80, %s81
    %p93 = scmp.eq.s32.totalorder %s24, 1
    %p94 = por %p92, %p93
    %p96 = scmp.ne.s32.totalorder %s81, %s95
    %p97 = scmp.eq.s32.totalorder %s24, 0
    %p98 = por %p96, %p97
    %s100 = sadd.s32 %s99, 1
    %p103 = scmp.eq.s32.totalorder %s18, 1
    %p104 = scmp.ne.s32.totalorder %s99, %s101
    %p105 = scmp.eq.s32.totalorder %s18, 0
    %p106 = por %p104, %p105
    %p107 = scmp.ne.s32.totalorder %s99, %s101
    %p108 = scmp.eq.s32.totalorder %s23, 1
    %p109 = por %p107, %p108
    %p110 = scmp.ne.s32.totalorder %s101, %s102
    %p111 = scmp.eq.s32.totalorder %s23, 0
    %p112 = por %p110, %p111
    %p113 = scmp.ne.s32.totalorder %s101, %s102
    %p114 = scmp.eq.s32.totalorder %s24, 1
    %p115 = por %p113, %p114
    %p117 = scmp.ne.s32.totalorder %s102, %s116
    %p118 = scmp.eq.s32.totalorder %s24, 0
    %p119 = por %p117, %p118
    %s121 = sadd.s32 %s120, 1
    %p124 = scmp.eq.s32.totalorder %s18, 1
    %p125 = scmp.ne.s32.totalorder %s120, %s122
    %p126 = scmp.eq.s32.totalorder %s18, 0
    %p127 = por %p125, %p126
    %p128 = scmp.ne.s32.totalorder %s120, %s122
    %p129 = scmp.eq.s32.totalorder %s23, 1
    %p130 = por %p128, %p129
    %p131 = scmp.ne.s32.totalorder %s122, %s123
    %p132 = scmp.eq.s32.totalorder %s23, 0
    %p133 = por %p131, %p132
    %p134 = scmp.ne.s32.totalorder %s122, %s123
    %p135 = scmp.eq.s32.totalorder %s24, 1
    %p136 = por %p134, %p135
    %p138 = scmp.ne.s32.totalorder %s123, %s137
    %p139 = scmp.eq.s32.totalorder %s24, 0
    %p140 = por %p138, %p139
    %s142 = sadd.s32 %s141, 1
    %p145 = scmp.eq.s32.totalorder %s18, 1
    %p146 = scmp.ne.s32.totalorder %s141, %s143
    %p147 = scmp.eq.s32.totalorder %s18, 0
    %p148 = por %p146, %p147
    %p149 = scmp.ne.s32.totalorder %s141, %s143
    %p150 = scmp.eq.s32.totalorder %s23, 1
    %p151 = por %p149, %p150
    %p152 = scmp.ne.s32.totalorder %s143, %s144
    %p153 = scmp.eq.s32.totalorder %s23, 0
    %p154 = por %p152, %p153
    %p155 = scmp.ne.s32.totalorder %s143, %s144
    %p156 = scmp.eq.s32.totalorder %s24, 1
    %p157 = por %p155, %p156
    %p159 = scmp.ne.s32.totalorder %s144, %s158
    %p160 = scmp.eq.s32.totalorder %s24, 0
    %p161 = por %p159, %p160
    %s163 = sadd.s32 %s162, 1
    %p166 = scmp.eq.s32.totalorder %s18, 1
    %p167 = scmp.ne.s32.totalorder %s162, %s164
    %p168 = scmp.eq.s32.totalorder %s18, 0
    %p169 = por %p167, %p168
    %p170 = scmp.ne.s32.totalorder %s162, %s164
    %p171 = scmp.eq.s32.totalorder %s23, 1
    %p172 = por %p170, %p171
    %p173 = scmp.ne.s32.totalorder %s164, %s165
    %p174 = scmp.eq.s32.totalorder %s23, 0
    %p175 = por %p173, %p174
    %p176 = scmp.ne.s32.totalorder %s164, %s165
    %p177 = scmp.eq.s32.totalorder %s24, 1
    %p178 = por %p176, %p177
    %p180 = scmp.ne.s32.totalorder %s165, %s179
    %p181 = scmp.eq.s32.totalorder %s24, 0
    %p182 = por %p180, %p181
    %s184 = sadd.s32 %s183, 1
    %p187 = scmp.eq.s32.totalorder %s18, 1
    %p188 = scmp.ne.s32.totalorder %s183, %s185
    %p189 = scmp.eq.s32.totalorder %s18, 0
    %p190 = por %p188, %p189
    %p191 = scmp.ne.s32.totalorder %s183, %s185
    %p192 = scmp.eq.s32.totalorder %s23, 1
    %p193 = por %p191, %p192
    %p194 = scmp.ne.s32.totalorder %s185, %s186
    %p195 = scmp.eq.s32.totalorder %s23, 0
    %p196 = por %p194, %p195
    %p197 = scmp.ne.s32.totalorder %s185, %s186
    %p198 = scmp.eq.s32.totalorder %s24, 1
    %p199 = por %p197, %p198
    %p201 = scmp.ne.s32.totalorder %s186, %s200
    %p202 = scmp.eq.s32.totalorder %s24, 0
    %p203 = por %p201, %p202
    %s205 = sadd.s32 %s204, 1
    %p208 = scmp.eq.s32.totalorder %s18, 1
    %p209 = scmp.ne.s32.totalorder %s204, %s206
    %p210 = scmp.eq.s32.totalorder %s18, 0
    %p211 = por %p209, %p210
    %p212 = scmp.ne.s32.totalorder %s204, %s206
    %p213 = scmp.eq.s32.totalorder %s23, 1
    %p214 = por %p212, %p213
    %p215 = scmp.ne.s32.totalorder %s206, %s207
    %p216 = scmp.eq.s32.totalorder %s23, 0
    %p217 = por %p215, %p216
    %p218 = scmp.ne.s32.totalorder %s206, %s207
    %p219 = scmp.eq.s32.totalorder %s24, 1
    %p220 = por %p218, %p219
    %p222 = scmp.ne.s32.totalorder %s207, %s221
    %p223 = scmp.eq.s32.totalorder %s24, 0
    %p224 = por %p222, %p223
    %s226 = sadd.s32 %s225, 1
    %p229 = scmp.eq.s32.totalorder %s18, 1
    %p230 = scmp.ne.s32.totalorder %s225, %s227
    %p231 = scmp.eq.s32.totalorder %s18, 0
    %p232 = por %p230, %p231
    %p233 = scmp.ne.s32.totalorder %s225, %s227
    %p234 = scmp.eq.s32.totalorder %s23, 1
    %p235 = por %p233, %p234
    %p236 = scmp.ne.s32.totalorder %s227, %s228
    %p237 = scmp.eq.s32.totalorder %s23, 0
    %p238 = por %p236, %p237
    %p239 = scmp.ne.s32.totalorder %s227, %s228
    %p240 = scmp.eq.s32.totalorder %s24, 1
    %p241 = por %p239, %p240
    %p243 = scmp.ne.s32.totalorder %s228, %s242
    %p244 = scmp.eq.s32.totalorder %s24, 0
    %p245 = por %p243, %p244
    %s247 = sadd.s32 %s246, 1
    %p250 = scmp.eq.s32.totalorder %s18, 1
    %p251 = scmp.ne.s32.totalorder %s246, %s248
    %p252 = scmp.eq.s32.totalorder %s18, 0
    %p253 = por %p251, %p252
    %p254 = scmp.ne.s32.totalorder %s246, %s248
    %p255 = scmp.eq.s32.totalorder %s23, 1
    %p256 = por %p254, %p255
    %p257 = scmp.ne.s32.totalorder %s248, %s249
    %p258 = scmp.eq.s32.totalorder %s23, 0
    %p259 = por %p257, %p258
    %p260 = scmp.ne.s32.totalorder %s248, %s249
    %p261 = scmp.eq.s32.totalorder %s24, 1
    %p262 = por %p260, %p261
    %p264 = scmp.ne.s32.totalorder %s249, %s263
    %p265 = scmp.eq.s32.totalorder %s24, 0
    %p266 = por %p264, %p265
    %s268 = sadd.s32 %s267, 1
    %p271 = scmp.eq.s32.totalorder %s18, 1
    %p272 = scmp.ne.s32.totalorder %s267, %s269
    %p273 = scmp.eq.s32.totalorder %s18, 0
    %p274 = por %p272, %p273
    %p275 = scmp.ne.s32.totalorder %s267, %s269
    %p276 = scmp.eq.s32.totalorder %s23, 1
    %p277 = por %p275, %p276
    %p278 = scmp.ne.s32.totalorder %s269, %s270
    %p279 = scmp.eq.s32.totalorder %s23, 0
    %p280 = por %p278, %p279
    %p281 = scmp.ne.s32.totalorder %s269, %s270
    %p282 = scmp.eq.s32.totalorder %s24, 1
    %p283 = por %p281, %p282
    %p285 = scmp.ne.s32.totalorder %s270, %s284
    %p286 = scmp.eq.s32.totalorder %s24, 0
    %p287 = por %p285, %p286
    %s288 = ssub.s32 %s18, %s25
    %p289 = scmp.eq.s32.totalorder %s288, 0
    %s291 = sadd.s32 %s290, 1
    %s292 = scalar_select %p289, %s290, %s291
    %p295 = pneg %p289
    %p296 = scmp.eq.s32.totalorder %s18, 1
    %p297 = por %p295, %p296
    %p298 = scmp.ne.s32.totalorder %s290, %s293
    %p299 = scmp.eq.s32.totalorder %s18, 0
    %p300 = por %p298, %p299
    %p301 = scmp.ne.s32.totalorder %s290, %s293
    %p302 = scmp.eq.s32.totalorder %s23, 1
    %p303 = por %p301, %p302
    %p304 = scmp.ne.s32.totalorder %s293, %s294
    %p305 = scmp.eq.s32.totalorder %s23, 0
    %p306 = por %p304, %p305
    %p307 = scmp.ne.s32.totalorder %s293, %s294
    %p308 = scmp.eq.s32.totalorder %s24, 1
    %p309 = por %p307, %p308
    %p311 = scmp.ne.s32.totalorder %s294, %s310
    %p312 = scmp.eq.s32.totalorder %s24, 0
    %p313 = por %p311, %p312
    %p314 = scmp.le.s32.totalorder 1, %s18
    %p315 = scmp.lt.s32.totalorder %s18, 3
    %p316 = pnand %p314, %p315
    %p317 = pneg %p316
    // Predicated region
    $region9: #{seqvae_loss_forward.8} parent=5 // pred_check
      _
    $region10: #{seqvae_loss_forward.8} parent=5 // pred_check_branch
      %319 = sbr.rel (%p316) target = $region12
    $region11: #{seqvae_loss_forward.8} parent=5 // pred_region
      %s320 = ssub.s32 %s18, 1
      // Predicated region
      $region13: #{seqvae_loss_forward.8} parent=11 // pred_check
        %p321 = pneg %p91
      $region14: #{seqvae_loss_forward.8} parent=11 // pred_check_branch
        %323 = sbr.rel (%p321) target = $region16
      $region15: #{seqvae_loss_forward.8} parent=11 // pred_region
        _
      $region16: #{seqvae_loss_forward.8} parent=11 // pred_fallthru
        _
      // Predicated region
      $region17: #{seqvae_loss_forward.8} parent=11 // pred_check
        %p324 = pneg %p112
      $region18: #{seqvae_loss_forward.8} parent=11 // pred_check_branch
        %326 = sbr.rel (%p324) target = $region20
      $region19: #{seqvae_loss_forward.8} parent=11 // pred_region
        _
      $region20: #{seqvae_loss_forward.8} parent=11 // pred_fallthru
        _
      // Predicated region
      $region21: #{seqvae_loss_forward.8} parent=11 // pred_check
        %p327 = pneg %p133
      $region22: #{seqvae_loss_forward.8} parent=11 // pred_check_branch
        %329 = sbr.rel (%p327) target = $region24
      $region23: #{seqvae_loss_forward.8} parent=11 // pred_region
        _
      $region24: #{seqvae_loss_forward.8} parent=11 // pred_fallthru
        _
      // Predicated region
      $region25: #{seqvae_loss_forward.8} parent=11 // pred_check
        %p330 = pneg %p154
      $region26: #{seqvae_loss_forward.8} parent=11 // pred_check_branch
        %332 = sbr.rel (%p330) target = $region28
      $region27: #{seqvae_loss_forward.8} parent=11 // pred_region
        _
      $region28: #{seqvae_loss_forward.8} parent=11 // pred_fallthru
        _
      // Predicated region
      $region29: #{seqvae_loss_forward.8} parent=11 // pred_check
        %p333 = pneg %p175
      $region30: #{seqvae_loss_forward.8} parent=11 // pred_check_branch
        %335 = sbr.rel (%p333) target = $region32
      $region31: #{seqvae_loss_forward.8} parent=11 // pred_region
        _
      $region32: #{seqvae_loss_forward.8} parent=11 // pred_fallthru
        _
      // Predicated region
      $region33: #{seqvae_loss_forward.8} parent=11 // pred_check
        %p336 = pneg %p196
      $region34: #{seqvae_loss_forward.8} parent=11 // pred_check_branch
        %338 = sbr.rel (%p336) target = $region36
      $region35: #{seqvae_loss_forward.8} parent=11 // pred_region
        _
      $region36: #{seqvae_loss_forward.8} parent=11 // pred_fallthru
        _
      // Predicated region
      $region37: #{seqvae_loss_forward.8} parent=11 // pred_check
        %p339 = pneg %p217
      $region38: #{seqvae_loss_forward.8} parent=11 // pred_check_branch
        %341 = sbr.rel (%p339) target = $region40
      $region39: #{seqvae_loss_forward.8} parent=11 // pred_region
        _
      $region40: #{seqvae_loss_forward.8} parent=11 // pred_fallthru
        _
      // Predicated region
      $region41: #{seqvae_loss_forward.8} parent=11 // pred_check
        %p342 = pneg %p238
      $region42: #{seqvae_loss_forward.8} parent=11 // pred_check_branch
        %344 = sbr.rel (%p342) target = $region44
      $region43: #{seqvae_loss_forward.8} parent=11 // pred_region
        _
      $region44: #{seqvae_loss_forward.8} parent=11 // pred_fallthru
        _
      // Predicated region
      $region45: #{seqvae_loss_forward.8} parent=11 // pred_check
        %p345 = pneg %p259
      $region46: #{seqvae_loss_forward.8} parent=11 // pred_check_branch
        %347 = sbr.rel (%p345) target = $region48
      $region47: #{seqvae_loss_forward.8} parent=11 // pred_region
        _
      $region48: #{seqvae_loss_forward.8} parent=11 // pred_fallthru
        _
      // Predicated region
      $region49: #{seqvae_loss_forward.8} parent=11 // pred_check
        %p348 = pneg %p280
      $region50: #{seqvae_loss_forward.8} parent=11 // pred_check_branch
        %350 = sbr.rel (%p348) target = $region52
      $region51: #{seqvae_loss_forward.8} parent=11 // pred_region
        _
      $region52: #{seqvae_loss_forward.8} parent=11 // pred_fallthru
        _
    $region12: #{seqvae_loss_forward.8} parent=5 // pred_fallthru
      _
    %p351 = scmp.lt.s32.totalorder %s18, 2
    // Predicated region
    $region53: #{seqvae_loss_forward.8} parent=5 // pred_check
      %p352 = pneg %p351
    $region54: #{seqvae_loss_forward.8} parent=5 // pred_check_branch
      %354 = sbr.rel (%p352) target = $region56
    $region55: #{seqvae_loss_forward.8} parent=5 // pred_region
      // Predicated region
      $region57: #{seqvae_loss_forward.8} parent=55 // pred_check
        %p355 = pneg %p38
      $region58: #{seqvae_loss_forward.8} parent=55 // pred_check_branch
        %357 = sbr.rel (%p355) target = $region60
      $region59: #{seqvae_loss_forward.8} parent=55 // pred_region
        %p358 = scmp.lt.s32.totalorder %s18, 1
        %s359 = scalar_select %p358, %s18, 1
        %s360 = smul.addr %s359, 3
        %s361 = smul.addr %s360, 4
        %s362 = scalar_lea.vmem %s0, %s361
      $region60: #{seqvae_loss_forward.8} parent=55 // pred_fallthru
        _
      // Predicated region
      $region61: #{seqvae_loss_forward.8} parent=55 // pred_check
        %p363 = pneg %p64
      $region62: #{seqvae_loss_forward.8} parent=55 // pred_check_branch
        %365 = sbr.rel (%p363) target = $region64
      $region63: #{seqvae_loss_forward.8} parent=55 // pred_region
        %p366 = scmp.lt.s32.totalorder %s18, 1
        %s367 = scalar_select %p366, %s18, 1
        %s368 = scalar_lea.vmem %s1, %s367
      $region64: #{seqvae_loss_forward.8} parent=55 // pred_fallthru
        _
    $region56: #{seqvae_loss_forward.8} parent=5 // pred_fallthru
      _
    %p369 = scmp.le.s32.totalorder 1, %s18
    %p370 = scmp.lt.s32.totalorder %s18, 3
    %p371 = pnand %p369, %p370
    %p372 = pneg %p371
    // Predicated region
    $region65: #{seqvae_loss_forward.8} parent=5 // pred_check
      _
    $region66: #{seqvae_loss_forward.8} parent=5 // pred_check_branch
      %374 = sbr.rel (%p371) target = $region68
    $region67: #{seqvae_loss_forward.8} parent=5 // pred_region
      %s375 = ssub.s32 %s18, 1
      %p376 = scmp.lt.s32.totalorder %s23, 1
      %s377 = scalar_select %p376, %s23, 1
      %s378 = smul.addr %s377, 3
      %s379 = smul.addr %s378, 4
      %s380 = scalar_lea.vmem %s0, %s379
      %p381 = pneg %p44
      %p382 = pneg %p41
      %p383 = scmp.lt.s32.totalorder %s23, 1
      %s384 = scalar_select %p383, %s23, 1
      %s385 = scalar_lea.vmem %s1, %s384
      %p386 = pneg %p70
      %p387 = pneg %p67
      %p388 = pneg %p91
      %p389 = pneg %p88
      %p390 = pneg %p112
      %p391 = pneg %p109
      %p392 = pneg %p133
      %p393 = pneg %p130
      %p394 = pneg %p154
      %p395 = pneg %p151
      %p396 = pneg %p175
      %p397 = pneg %p172
      %p398 = pneg %p196
      %p399 = pneg %p193
      %p400 = pneg %p217
      %p401 = pneg %p214
      %p402 = pneg %p238
      %p403 = pneg %p235
      %p404 = pneg %p259
      %p405 = pneg %p256
      %p406 = pneg %p280
      %p407 = pneg %p277
      %p408 = pneg %p306
      %p409 = pneg %p303
      %p410 = scmp.lt.s32.totalorder %s23, 1
      %s411 = scalar_select %p410, %s23, 1
      %s412 = smul.addr %s411, 3
      %s413 = smul.addr %s412, 4
      %s414 = scalar_lea.vmem %s12, %s413
      %p415 = scmp.lt.s32.totalorder %s23, 1
      %s416 = scalar_select %p415, %s23, 1
      %s417 = smul.addr %s416, 3
      %s418 = smul.addr %s417, 4
      %s419 = scalar_lea.vmem %s0, %s418
      %p420 = scmp.lt.s32.totalorder %s23, 1
      %s421 = scalar_select %p420, %s23, 1
      %s422 = scalar_lea.vmem %s1, %s421
      %p423 = scmp.lt.s32.totalorder %s23, 1
      %s424 = scalar_select %p423, %s23, 1
      %s425 = smul.addr %s424, 3
      %s426 = smul.addr %s425, 4
      %s427 = scalar_lea.vmem %s12, %s426
      %v429 = vld [vmem:[%s2] sm:$0xf]
      %v430 = vld [vmem:[%s2 + $0x4] sm:$0xf]
      %v431 = vld [vmem:[%s2 + $0x8] sm:$0xf]
      %v432 = vld [vmem:[%s2 + $0xc] sm:$0xf]
      %v433 = vld [vmem:[%s3] sm:$0xf]
      %v434 = vld [vmem:[%s3 + $0x4] sm:$0xf]
      %v435 = vld [vmem:[%s3 + $0x8] sm:$0xf]
      %v436 = vld [vmem:[%s3 + $0xc] sm:$0xf]
      %v437 = vld [vmem:[%s4] sm:$0x1]
      %v438 = vld [vmem:[%s5] sm:$0x1]
      %v439 = vld [vmem:[%s6] sm:$0xf]
      %v440 = vld [vmem:[%s6 + $0x4] sm:$0xf]
      %v441 = vld [vmem:[%s6 + $0x8] sm:$0xf]
      %v442 = vld [vmem:[%s6 + $0xc] sm:$0xf]
      %v443 = vld [vmem:[%s7] sm:$0x1]
      %v444 = vld [vmem:[%s8] sm:$0xf]
      %v445 = vld [vmem:[%s8 + $0x4] sm:$0xf]
      %v446 = vld [vmem:[%s8 + $0x8] sm:$0xf]
      %v447 = vld [vmem:[%s8 + $0xc] sm:$0xf]
      %v448 = vld [vmem:[%s8 + $0x10] sm:$0xf]
      %v449 = vld [vmem:[%s8 + $0x14] sm:$0xf]
      %v450 = vld [vmem:[%s8 + $0x18] sm:$0xf]
      %v451 = vld [vmem:[%s8 + $0x1c] sm:$0xf]
      %v452 = vld [vmem:[%s9] sm:$0x1]
      %v453 = vld [vmem:[%s10] sm:$0x1]
      %v454 = vld [vmem:[%s11] sm:$0x1]
      %v455 = vld [vmem:[%s419] sm:$0xf]
      %v456 = vld [vmem:[%s419 + $0x4] sm:$0xf]
      %v457 = vld [vmem:[%s419 + $0x8] sm:$0x1]
      %v458 = vunpack.c.l.bf16 %v455
      %v459 = vunpack.c.l.bf16 %v456
      %v460 = vunpack.c.l.bf16 %v457
      %v461 = vld [vmem:[%s422] sm:$0x1]
      %vm462 = vcmp.eq.f32.partialorder %v461, 0.0
      %v463 = vlaneseq
      %v464 = vshrl.u32 %v463, 7
      %v465 = vadd.s32 %v464, 8
      %v466 = vadd.s32 %v464, 16
      %v467 = vlaneseq
      %v468 = vand.u32 %v467, 127
      %vm469 = vcmp.lt.s32.totalorder %v464, %v468
      %vm470 = vcmp.lt.s32.totalorder %v465, %v468
      %vm471 = vcmp.lt.s32.totalorder %v466, %v468
      %v472 = vsel %vm462, 1, 0
      %v473 = vlaneseq
      %v474 = vshrl.u32 %v473, 7
      %v475 = vsub.s32 0, %v474
      %v476 = vrot.slane %v472, %v475
      %vm477 = vcmp.eq.s32.totalorder %v476, 1
      %vm478 = vmor %vm477, %vm469
      %vm479 = vmor %vm477, %vm470
      %vm480 = vmor %vm477, %vm471
      %v484 = vunpack.c.l.b16 %v455
      %v485 = vunpack.c.l.b16 %v456
      %v486 = vunpack.c.l.b16 %v457
      %v487 = vpack.c.b16 %v485, %v484
      %v488 = vpack.c.b16 %v486, %v486
      %v493 = vunpack.c.l.b16 %v429
      %v494 = vunpack.c.l.b16 %v430
      %v495 = vunpack.c.l.b16 %v431
      %v496 = vunpack.c.l.b16 %v432
      %v497 = vpack.c.b16 %v494, %v493
      %v498 = vpack.c.b16 %v496, %v495
      %vm501 = vcmask 261120
      %v503 = vsel %vm501, %v487, 0
      %v506 = vsel %vm501, %v488, 0
      %508 = vmatprep.subr.bf16.mxu0 0
      %509 = vmatpush1.bf16.msra.mxu0 0
      %510 = vmatprep.subr.bf16.mxu0 0
      %511 = vmatpush1.bf16.msra.mxu0 0
      %512 = vmatprep.subr.bf16.mxu0 0
      %513 = vmatpush1.bf16.msra.mxu0 0
      %514 = vmatprep.subr.bf16.mxu0 0
      %515 = vmatpush1.bf16.msra.mxu0 0
      %516 = vmatprep.subr.bf16.mxu0 0
      %517 = vmatpush1.bf16.msra.mxu0 0
      %518 = vmatprep.subr.bf16.mxu0 0
      %519 = vmatpush1.bf16.msra.mxu0 0
      %520 = vmatprep.subr.bf16.mxu0 0
      %521 = vmatpush1.bf16.msra.mxu0 %v498
      %522 = vmatprep.subr.bf16.mxu0 0
      %523 = vmatpush1.bf16.msra.mxu0 %v497
      %524 = vmatprep.subr.bf16.mxu0 0
      %525 = vmatpush2.bf16.msra.mxu0 0
      %526 = vmatprep.subr.bf16.mxu0 0
      %527 = vmatpush2.bf16.msra.mxu0 0
      %528 = vmatprep.subr.bf16.mxu0 0
      %529 = vmatpush2.bf16.msra.mxu0 0
      %530 = vmatprep.subr.bf16.mxu0 0
      %531 = vmatpush2.bf16.msra.mxu0 0
      %532 = vmatprep.subr.bf16.mxu0 0
      %533 = vmatpush2.bf16.msra.mxu0 0
      %534 = vmatprep.subr.bf16.mxu0 0
      %535 = vmatpush2.bf16.msra.mxu0 0
      %536 = vmatprep.subr.bf16.mxu0 0
      %537 = vmatpush2.bf16.msra.mxu0 0
      %538 = vmatprep.subr.bf16.mxu0 0
      %539 = vmatpush2.bf16.msra.mxu0 0
      %540 = vmatprep.mubr.bf16.mxu0 0
      %541 = vmatmul.mubr.bf16.gmra.mxu0 %v503
      %v542 = vpop.f32.mrf.mxu0
      %v543 = vadd.f32 0.0, %v542
      %v544 = vpop.f32.mrf.mxu0
      %v545 = vpop.f32.mrf.mxu0
      %v546 = vadd.f32 0.0, %v545
      %v547 = vpop.f32.mrf.mxu0
      %548 = vmatprep.mubr.bf16.mxu0 0
      %549 = vmatmul.mubr.bf16.gmra.mxu0 %v506
      %v550 = vpop.f32.mrf.mxu0
      %v551 = vadd.f32 0.0, %v550
      %v552 = vpop.f32.mrf.mxu0
      %v553 = vpop.f32.mrf.mxu0
      %v554 = vpop.f32.mrf.mxu0
      %555 = vdwg.mxu0
      %v556 = vpack.c.bf16 %v546, %v543
      %v557 = vpack.c.bf16 %v551, %v551
      %560 = vrot.lane.b32.xlu0 %v556, 96
      %v561 = vpop.permute.xlu0 %560
      %562 = vrot.lane.b32.xlu0 %v557, 96
      %v563 = vpop.permute.xlu0 %562
      %vm564 = vcmask 130048
      %v566 = vsel %vm564, %v556, 0
      %v569 = vsel %vm564, %v557, 0
      %v572 = vsel %vm564, %v561, 0
      %v575 = vsel %vm564, %v563, 0
      %577 = vmatprep.subr.bf16.mxu0 0
      %578 = vmatpush1.bf16.xpose.msra.mxu0 0
      %579 = vmatprep.subr.bf16.mxu0 0
      %580 = vmatpush1.bf16.xpose.msra.mxu0 0
      %581 = vmatprep.subr.bf16.mxu0 0
      %582 = vmatpush1.bf16.xpose.msra.mxu0 0
      %583 = vmatprep.subr.bf16.mxu0 0
      %584 = vmatpush1.bf16.xpose.msra.mxu0 0
      %585 = vmatprep.subr.bf16.mxu0 0
      %586 = vmatpush1.bf16.xpose.msra.mxu0 0
      %587 = vmatprep.subr.bf16.mxu0 0
      %588 = vmatpush1.bf16.xpose.msra.mxu0 0
      %589 = vmatprep.subr.bf16.mxu0 0
      %590 = vmatpush1.bf16.xpose.msra.mxu0 %v575
      %591 = vmatprep.subr.bf16.mxu0 0
      %592 = vmatpush1.bf16.xpose.msra.mxu0 %v572
      %593 = vmatprep.subr.bf16.mxu0 0
      %594 = vmatpush2.bf16.xpose.msra.mxu0 0
      %595 = vmatprep.subr.bf16.mxu0 0
      %596 = vmatpush2.bf16.xpose.msra.mxu0 0
      %597 = vmatprep.subr.bf16.mxu0 0
      %598 = vmatpush2.bf16.xpose.msra.mxu0 0
      %599 = vmatprep.subr.bf16.mxu0 0
      %600 = vmatpush2.bf16.xpose.msra.mxu0 0
      %601 = vmatprep.subr.bf16.mxu0 0
      %602 = vmatpush2.bf16.xpose.msra.mxu0 0
      %603 = vmatprep.subr.bf16.mxu0 0
      %604 = vmatpush2.bf16.xpose.msra.mxu0 0
      %605 = vmatprep.subr.bf16.mxu0 0
      %606 = vmatpush2.bf16.xpose.msra.mxu0 0
      %607 = vmatprep.subr.bf16.mxu0 0
      %608 = vmatpush2.bf16.xpose.msra.mxu0 0
      %609 = vmatprep.mubr.bf16.mxu0 0
      %610 = vmatmul.mubr.bf16.gmra.mxu0 %v566
      %v611 = vpop.f32.mrf.mxu0
      %v612 = vadd.f32 0.0, %v611
      %v613 = vpop.f32.mrf.mxu0
      %v614 = vpop.f32.mrf.mxu0
      %v615 = vadd.f32 0.0, %v614
      %v616 = vpop.f32.mrf.mxu0
      %617 = vmatprep.mubr.bf16.mxu0 0
      %618 = vmatmul.mubr.bf16.gmra.mxu0 %v569
      %v619 = vpop.f32.mrf.mxu0
      %v620 = vadd.f32 0.0, %v619
      %v621 = vpop.f32.mrf.mxu0
      %v622 = vpop.f32.mrf.mxu0
      %v623 = vpop.f32.mrf.mxu0
      %624 = vdwg.mxu0
      %v625 = vsel %vm478, -1e+09, %v612
      %v626 = vsel %vm479, -1e+09, %v615
      %v627 = vsel %vm480, -1e+09, %v620
      %vm628 = vcmask 138240
      %v629 = vsel %vm628, %v625, -inf
      %630 = vmax.xlane.f32.xlu0 %v629
      %v631 = vpop.xlane.xlu0 %630
      %v632 = vsel %vm628, %v626, -inf
      %633 = vmax.xlane.f32.xlu0 %v632
      %v634 = vpop.xlane.xlu0 %633
      %vm635 = vcmask 131072
      %v636 = vsel %vm635, %v627, -inf
      %637 = vmax.xlane.f32.xlu0 %v636
      %v638 = vpop.xlane.xlu0 %637
      %v639 = vsub.f32 %v625, %v631
      %v640 = vsub.f32 %v626, %v634
      %v641 = vsub.f32 %v627, %v638
      %v642 = vmul.f32 %v639, 1.442695
      %v643 = vpow.pop %v642
      %v644 = vmul.f32 %v640, 1.442695
      %v645 = vpow.pop %v644
      %v646 = vmul.f32 %v641, 1.442695
      %v647 = vpow.pop %v646
      %v648 = vsel %vm628, %v643, 0.0
      %649 = vadd.xlane.f32.xlu0 %v648
      %v650 = vpop.xlane.xlu0 %649
      %v651 = vsel %vm628, %v645, 0.0
      %652 = vadd.xlane.f32.xlu0 %v651
      %v653 = vpop.xlane.xlu0 %652
      %v654 = vsel %vm635, %v647, 0.0
      %655 = vadd.xlane.f32.xlu0 %v654
      %v656 = vpop.xlane.xlu0 %655
      %v657 = vrcp.pop %v650
      %v658 = vrcp.pop %v653
      %v659 = vrcp.pop %v656
      %v660 = vmul.f32 %v643, %v657
      %v661 = vmul.f32 %v645, %v658
      %v662 = vmul.f32 %v647, %v659
      %v663 = vpack.c.bf16 %v661, %v660
      %v664 = vpack.c.bf16 %v662, %v662
      %665 = vrot.lane.b32.xlu0 %v556, 64
      %v666 = vpop.permute.xlu0 %665
      %667 = vrot.lane.b32.xlu0 %v557, 64
      %v668 = vpop.permute.xlu0 %667
      %v671 = vsel %vm628, %v663, 0
      %v674 = vsel %vm628, %v664, 0
      %vm676 = vcmask 1040384
      %v677 = vsel 0, 4294967295, 65535
      %v678 = vsel %vm676, %v677, 0
      %v680 = vand.u32 %v668, %v678
      %682 = vmatprep.subr.bf16.mxu0 0
      %683 = vmatpush1.bf16.msra.mxu0 0
      %684 = vmatprep.subr.bf16.mxu0 0
      %685 = vmatpush1.bf16.msra.mxu0 0
      %686 = vmatprep.subr.bf16.mxu0 0
      %687 = vmatpush1.bf16.msra.mxu0 0
      %688 = vmatprep.subr.bf16.mxu0 0
      %689 = vmatpush1.bf16.msra.mxu0 0
      %690 = vmatprep.subr.bf16.mxu0 0
      %691 = vmatpush1.bf16.msra.mxu0 0
      %692 = vmatprep.subr.bf16.mxu0 0
      %693 = vmatpush1.bf16.msra.mxu0 0
      %694 = vmatprep.subr.bf16.mxu0 0
      %695 = vmatpush1.bf16.msra.mxu0 %v680
      %696 = vmatprep.subr.bf16.mxu0 0
      %697 = vmatpush1.bf16.msra.mxu0 %v666
      %698 = vmatprep.subr.bf16.mxu0 0
      %699 = vmatpush2.bf16.msra.mxu0 0
      %700 = vmatprep.subr.bf16.mxu0 0
      %701 = vmatpush2.bf16.msra.mxu0 0
      %702 = vmatprep.subr.bf16.mxu0 0
      %703 = vmatpush2.bf16.msra.mxu0 0
      %704 = vmatprep.subr.bf16.mxu0 0
      %705 = vmatpush2.bf16.msra.mxu0 0
      %706 = vmatprep.subr.bf16.mxu0 0
      %707 = vmatpush2.bf16.msra.mxu0 0
      %708 = vmatprep.subr.bf16.mxu0 0
      %709 = vmatpush2.bf16.msra.mxu0 0
      %710 = vmatprep.subr.bf16.mxu0 0
      %711 = vmatpush2.bf16.msra.mxu0 0
      %712 = vmatprep.subr.bf16.mxu0 0
      %713 = vmatpush2.bf16.msra.mxu0 0
      %714 = vmatprep.mubr.bf16.mxu0 0
      %715 = vmatmul.mubr.bf16.gmra.mxu0 %v671
      %v716 = vpop.f32.mrf.mxu0
      %v717 = vadd.f32 0.0, %v716
      %v718 = vpop.f32.mrf.mxu0
      %v719 = vpop.f32.mrf.mxu0
      %v720 = vadd.f32 0.0, %v719
      %v721 = vpop.f32.mrf.mxu0
      %722 = vmatprep.mubr.bf16.mxu0 0
      %723 = vmatmul.mubr.bf16.gmra.mxu0 %v674
      %v724 = vpop.f32.mrf.mxu0
      %v725 = vadd.f32 0.0, %v724
      %v726 = vpop.f32.mrf.mxu0
      %v727 = vpop.f32.mrf.mxu0
      %v728 = vpop.f32.mrf.mxu0
      %729 = vdwg.mxu0
      %730 = vrot.lane.b32.xlu0 %v556, 112
      %v731 = vpop.permute.xlu0 %730
      %732 = vrot.lane.b32.xlu0 %v557, 112
      %v733 = vpop.permute.xlu0 %732
      %734 = vrot.lane.b32.xlu0 %v556, 80
      %v735 = vpop.permute.xlu0 %734
      %736 = vrot.lane.b32.xlu0 %v557, 80
      %v737 = vpop.permute.xlu0 %736
      %v739 = vsel %vm564, %v731, 0
      %v742 = vsel %vm564, %v733, 0
      %v745 = vsel %vm564, %v735, 0
      %v748 = vsel %vm564, %v737, 0
      %750 = vmatprep.subr.bf16.mxu0 0
      %751 = vmatpush1.bf16.xpose.msra.mxu0 0
      %752 = vmatprep.subr.bf16.mxu0 0
      %753 = vmatpush1.bf16.xpose.msra.mxu0 0
      %754 = vmatprep.subr.bf16.mxu0 0
      %755 = vmatpush1.bf16.xpose.msra.mxu0 0
      %756 = vmatprep.subr.bf16.mxu0 0
      %757 = vmatpush1.bf16.xpose.msra.mxu0 0
      %758 = vmatprep.subr.bf16.mxu0 0
      %759 = vmatpush1.bf16.xpose.msra.mxu0 0
      %760 = vmatprep.subr.bf16.mxu0 0
      %761 = vmatpush1.bf16.xpose.msra.mxu0 0
      %762 = vmatprep.subr.bf16.mxu0 0
      %763 = vmatpush1.bf16.xpose.msra.mxu0 %v748
      %764 = vmatprep.subr.bf16.mxu0 0
      %765 = vmatpush1.bf16.xpose.msra.mxu0 %v745
      %766 = vmatprep.subr.bf16.mxu0 0
      %767 = vmatpush2.bf16.xpose.msra.mxu0 0
      %768 = vmatprep.subr.bf16.mxu0 0
      %769 = vmatpush2.bf16.xpose.msra.mxu0 0
      %770 = vmatprep.subr.bf16.mxu0 0
      %771 = vmatpush2.bf16.xpose.msra.mxu0 0
      %772 = vmatprep.subr.bf16.mxu0 0
      %773 = vmatpush2.bf16.xpose.msra.mxu0 0
      %774 = vmatprep.subr.bf16.mxu0 0
      %775 = vmatpush2.bf16.xpose.msra.mxu0 0
      %776 = vmatprep.subr.bf16.mxu0 0
      %777 = vmatpush2.bf16.xpose.msra.mxu0 0
      %778 = vmatprep.subr.bf16.mxu0 0
      %779 = vmatpush2.bf16.xpose.msra.mxu0 0
      %780 = vmatprep.subr.bf16.mxu0 0
      %781 = vmatpush2.bf16.xpose.msra.mxu0 0
      %782 = vmatprep.mubr.bf16.mxu0 0
      %783 = vmatmul.mubr.bf16.gmra.mxu0 %v739
      %v784 = vpop.f32.mrf.mxu0
      %v785 = vadd.f32 0.0, %v784
      %v786 = vpop.f32.mrf.mxu0
      %v787 = vpop.f32.mrf.mxu0
      %v788 = vadd.f32 0.0, %v787
      %v789 = vpop.f32.mrf.mxu0
      %790 = vmatprep.mubr.bf16.mxu0 0
      %791 = vmatmul.mubr.bf16.gmra.mxu0 %v742
      %v792 = vpop.f32.mrf.mxu0
      %v793 = vadd.f32 0.0, %v792
      %v794 = vpop.f32.mrf.mxu0
      %v795 = vpop.f32.mrf.mxu0
      %v796 = vpop.f32.mrf.mxu0
      %797 = vdwg.mxu0
      %v798 = vsel %vm478, -1e+09, %v785
      %v799 = vsel %vm479, -1e+09, %v788
      %v800 = vsel %vm480, -1e+09, %v793
      %v801 = vsel %vm628, %v798, -inf
      %802 = vmax.xlane.f32.xlu0 %v801
      %v803 = vpop.xlane.xlu0 %802
      %v804 = vsel %vm628, %v799, -inf
      %805 = vmax.xlane.f32.xlu0 %v804
      %v806 = vpop.xlane.xlu0 %805
      %v807 = vsel %vm635, %v800, -inf
      %808 = vmax.xlane.f32.xlu0 %v807
      %v809 = vpop.xlane.xlu0 %808
      %v810 = vsub.f32 %v798, %v803
      %v811 = vsub.f32 %v799, %v806
      %v812 = vsub.f32 %v800, %v809
      %v813 = vmul.f32 %v810, 1.442695
      %v814 = vpow.pop %v813
      %v815 = vmul.f32 %v811, 1.442695
      %v816 = vpow.pop %v815
      %v817 = vmul.f32 %v812, 1.442695
      %v818 = vpow.pop %v817
      %v819 = vsel %vm628, %v814, 0.0
      %820 = vadd.xlane.f32.xlu0 %v819
      %v821 = vpop.xlane.xlu0 %820
      %v822 = vsel %vm628, %v816, 0.0
      %823 = vadd.xlane.f32.xlu0 %v822
      %v824 = vpop.xlane.xlu0 %823
      %v825 = vsel %vm635, %v818, 0.0
      %826 = vadd.xlane.f32.xlu0 %v825
      %v827 = vpop.xlane.xlu0 %826
      %v828 = vrcp.pop %v821
      %v829 = vrcp.pop %v824
      %v830 = vrcp.pop %v827
      %v831 = vmul.f32 %v814, %v828
      %v832 = vmul.f32 %v816, %v829
      %v833 = vmul.f32 %v818, %v830
      %v834 = vpack.c.bf16 %v832, %v831
      %v835 = vpack.c.bf16 %v833, %v833
      %836 = vrot.lane.b32.xlu0 %v556, 48
      %v837 = vpop.permute.xlu0 %836
      %838 = vrot.lane.b32.xlu0 %v557, 48
      %v839 = vpop.permute.xlu0 %838
      %v842 = vsel %vm628, %v834, 0
      %v845 = vsel %vm628, %v835, 0
      %v848 = vand.u32 %v839, %v678
      %850 = vmatprep.subr.bf16.mxu0 0
      %851 = vmatpush1.bf16.msra.mxu0 0
      %852 = vmatprep.subr.bf16.mxu0 0
      %853 = vmatpush1.bf16.msra.mxu0 0
      %854 = vmatprep.subr.bf16.mxu0 0
      %855 = vmatpush1.bf16.msra.mxu0 0
      %856 = vmatprep.subr.bf16.mxu0 0
      %857 = vmatpush1.bf16.msra.mxu0 0
      %858 = vmatprep.subr.bf16.mxu0 0
      %859 = vmatpush1.bf16.msra.mxu0 0
      %860 = vmatprep.subr.bf16.mxu0 0
      %861 = vmatpush1.bf16.msra.mxu0 0
      %862 = vmatprep.subr.bf16.mxu0 0
      %863 = vmatpush1.bf16.msra.mxu0 %v848
      %864 = vmatprep.subr.bf16.mxu0 0
      %865 = vmatpush1.bf16.msra.mxu0 %v837
      %866 = vmatprep.subr.bf16.mxu0 0
      %867 = vmatpush2.bf16.msra.mxu0 0
      %868 = vmatprep.subr.bf16.mxu0 0
      %869 = vmatpush2.bf16.msra.mxu0 0
      %870 = vmatprep.subr.bf16.mxu0 0
      %871 = vmatpush2.bf16.msra.mxu0 0
      %872 = vmatprep.subr.bf16.mxu0 0
      %873 = vmatpush2.bf16.msra.mxu0 0
      %874 = vmatprep.subr.bf16.mxu0 0
      %875 = vmatpush2.bf16.msra.mxu0 0
      %876 = vmatprep.subr.bf16.mxu0 0
      %877 = vmatpush2.bf16.msra.mxu0 0
      %878 = vmatprep.subr.bf16.mxu0 0
      %879 = vmatpush2.bf16.msra.mxu0 0
      %880 = vmatprep.subr.bf16.mxu0 0
      %881 = vmatpush2.bf16.msra.mxu0 0
      %882 = vmatprep.mubr.bf16.mxu0 0
      %883 = vmatmul.mubr.bf16.gmra.mxu0 %v842
      %v884 = vpop.f32.mrf.mxu0
      %v885 = vadd.f32 0.0, %v884
      %v886 = vpop.f32.mrf.mxu0
      %v887 = vpop.f32.mrf.mxu0
      %v888 = vadd.f32 0.0, %v887
      %v889 = vpop.f32.mrf.mxu0
      %890 = vmatprep.mubr.bf16.mxu0 0
      %891 = vmatmul.mubr.bf16.gmra.mxu0 %v845
      %v892 = vpop.f32.mrf.mxu0
      %v893 = vadd.f32 0.0, %v892
      %v894 = vpop.f32.mrf.mxu0
      %v895 = vpop.f32.mrf.mxu0
      %v896 = vpop.f32.mrf.mxu0
      %897 = vdwg.mxu0
      %901 = vrot.lane.b32.xlu0 %v885, 16
      %v902 = vpop.permute.xlu0 %901
      %903 = vrot.lane.b32.xlu0 %v888, 16
      %v904 = vpop.permute.xlu0 %903
      %905 = vrot.lane.b32.xlu0 %v893, 16
      %v906 = vpop.permute.xlu0 %905
      %v910 = vsel %vm564, %v717, %v902
      %v911 = vsel %vm564, %v720, %v904
      %v912 = vsel %vm564, %v725, %v906
      %v913 = vpack.c.bf16 %v911, %v910
      %v914 = vpack.c.bf16 %v912, %v912
      %v919 = vunpack.c.l.b16 %v433
      %v920 = vunpack.c.l.b16 %v434
      %v921 = vunpack.c.l.b16 %v435
      %v922 = vunpack.c.l.b16 %v436
      %v923 = vpack.c.b16 %v920, %v919
      %v924 = vpack.c.b16 %v922, %v921
      %v928 = vsel %vm501, %v913, 0
      %v931 = vsel %vm501, %v914, 0
      %933 = vmatprep.subr.bf16.mxu0 0
      %934 = vmatpush1.bf16.msra.mxu0 0
      %935 = vmatprep.subr.bf16.mxu0 0
      %936 = vmatpush1.bf16.msra.mxu0 0
      %937 = vmatprep.subr.bf16.mxu0 0
      %938 = vmatpush1.bf16.msra.mxu0 0
      %939 = vmatprep.subr.bf16.mxu0 0
      %940 = vmatpush1.bf16.msra.mxu0 0
      %941 = vmatprep.subr.bf16.mxu0 0
      %942 = vmatpush1.bf16.msra.mxu0 0
      %943 = vmatprep.subr.bf16.mxu0 0
      %944 = vmatpush1.bf16.msra.mxu0 0
      %945 = vmatprep.subr.bf16.mxu0 0
      %946 = vmatpush1.bf16.msra.mxu0 %v924
      %947 = vmatprep.subr.bf16.mxu0 0
      %948 = vmatpush1.bf16.msra.mxu0 %v923
      %949 = vmatprep.subr.bf16.mxu0 0
      %950 = vmatpush2.bf16.msra.mxu0 0
      %951 = vmatprep.subr.bf16.mxu0 0
      %952 = vmatpush2.bf16.msra.mxu0 0
      %953 = vmatprep.subr.bf16.mxu0 0
      %954 = vmatpush2.bf16.msra.mxu0 0
      %955 = vmatprep.subr.bf16.mxu0 0
      %956 = vmatpush2.bf16.msra.mxu0 0
      %957 = vmatprep.subr.bf16.mxu0 0
      %958 = vmatpush2.bf16.msra.mxu0 0
      %959 = vmatprep.subr.bf16.mxu0 0
      %960 = vmatpush2.bf16.msra.mxu0 0
      %961 = vmatprep.subr.bf16.mxu0 0
      %962 = vmatpush2.bf16.msra.mxu0 0
      %963 = vmatprep.subr.bf16.mxu0 0
      %964 = vmatpush2.bf16.msra.mxu0 0
      %965 = vmatprep.mubr.bf16.mxu0 0
      %966 = vmatmul.mubr.bf16.gmra.mxu0 %v928
      %v967 = vpop.f32.mrf.mxu0
      %v968 = vadd.f32 0.0, %v967
      %v969 = vpop.f32.mrf.mxu0
      %v970 = vpop.f32.mrf.mxu0
      %v971 = vadd.f32 0.0, %v970
      %v972 = vpop.f32.mrf.mxu0
      %973 = vmatprep.mubr.bf16.mxu0 0
      %974 = vmatmul.mubr.bf16.gmra.mxu0 %v931
      %v975 = vpop.f32.mrf.mxu0
      %v976 = vadd.f32 0.0, %v975
      %v977 = vpop.f32.mrf.mxu0
      %v978 = vpop.f32.mrf.mxu0
      %v979 = vpop.f32.mrf.mxu0
      %980 = vdwg.mxu0
      %v981 = vadd.f32 %v458, %v968
      %v982 = vadd.f32 %v459, %v971
      %v983 = vadd.f32 %v460, %v976
      %v984 = vsel %vm501, %v981, 0.0
      %985 = vadd.xlane.f32.xlu0 %v984
      %v986 = vpop.xlane.xlu0 %985
      %v987 = vsel %vm501, %v982, 0.0
      %988 = vadd.xlane.f32.xlu0 %v987
      %v989 = vpop.xlane.xlu0 %988
      %vm990 = vcmask 253952
      %v991 = vsel %vm990, %v983, 0.0
      %992 = vadd.xlane.f32.xlu0 %v991
      %v993 = vpop.xlane.xlu0 %992
      %v994 = vrcp.pop 32.0
      %v995 = vmul.f32 %v986, %v994
      %v996 = vmul.f32 %v989, %v994
      %v997 = vmul.f32 %v993, %v994
      %v998 = vsub.f32 %v981, %v995
      %v999 = vsub.f32 %v982, %v996
      %v1000 = vsub.f32 %v983, %v997
      %v1001 = vmul.f32 %v998, %v998
      %v1002 = vmul.f32 %v999, %v999
      %v1003 = vmul.f32 %v1000, %v1000
      %v1004 = vsel %vm501, %v1001, 0.0
      %1005 = vadd.xlane.f32.xlu0 %v1004
      %v1006 = vpop.xlane.xlu0 %1005
      %v1007 = vsel %vm501, %v1002, 0.0
      %1008 = vadd.xlane.f32.xlu0 %v1007
      %v1009 = vpop.xlane.xlu0 %1008
      %v1010 = vsel %vm990, %v1003, 0.0
      %1011 = vadd.xlane.f32.xlu0 %v1010
      %v1012 = vpop.xlane.xlu0 %1011
      %v1013 = vmul.f32 %v1006, %v994
      %v1014 = vmul.f32 %v1009, %v994
      %v1015 = vmul.f32 %v1012, %v994
      %v1016 = vadd.f32 %v1013, 1e-06
      %v1017 = vadd.f32 %v1014, 1e-06
      %v1018 = vadd.f32 %v1015, 1e-06
      %v1019 = vrsqrt.pop %v1016
      %v1020 = vrsqrt.pop %v1017
      %v1021 = vrsqrt.pop %v1018
      %v1022 = vmul.f32 %v998, %v1019
      %v1023 = vmul.f32 %v999, %v1020
      %v1024 = vmul.f32 %v1000, %v1021
      %v1026 = vlaneseq
      %v1027 = vshrl.u32 %v1026, 7
      %v1028 = vsub.s32 0, %v1027
      %v1029 = vrot.slane %v437, %v1028
      %v1031 = vmul.f32 %v1022, %v1029
      %v1032 = vmul.f32 %v1023, %v1029
      %v1033 = vmul.f32 %v1024, %v1029
      %v1035 = vlaneseq
      %v1036 = vshrl.u32 %v1035, 7
      %v1037 = vsub.s32 0, %v1036
      %v1038 = vrot.slane %v438, %v1037
      %v1040 = vadd.f32 %v1031, %v1038
      %v1041 = vadd.f32 %v1032, %v1038
      %v1042 = vadd.f32 %v1033, %v1038
      %v1043 = vpack.c.bf16 %v1041, %v1040
      %v1044 = vpack.c.bf16 %v1042, %v1042
      %v1046 = vlaneseq
      %v1047 = vshrl.u32 %v1046, 7
      %v1048 = vsub.s32 0, %v1047
      %v1049 = vrot.slane %v443, %v1048
      %v1055 = vunpack.c.l.b16 %v439
      %v1056 = vunpack.c.l.b16 %v440
      %v1057 = vunpack.c.l.b16 %v441
      %v1058 = vunpack.c.l.b16 %v442
      %v1059 = vpack.c.b16 %v1056, %v1055
      %v1060 = vpack.c.b16 %v1058, %v1057
      %v1064 = vsel %vm501, %v1043, 0
      %v1067 = vsel %vm501, %v1044, 0
      %1069 = vmatprep.subr.bf16.mxu0 0
      %1070 = vmatpush1.bf16.msra.mxu0 0
      %1071 = vmatprep.subr.bf16.mxu0 0
      %1072 = vmatpush1.bf16.msra.mxu0 0
      %1073 = vmatprep.subr.bf16.mxu0 0
      %1074 = vmatpush1.bf16.msra.mxu0 0
      %1075 = vmatprep.subr.bf16.mxu0 0
      %1076 = vmatpush1.bf16.msra.mxu0 0
      %1077 = vmatprep.subr.bf16.mxu0 0
      %1078 = vmatpush1.bf16.msra.mxu0 0
      %1079 = vmatprep.subr.bf16.mxu0 0
      %1080 = vmatpush1.bf16.msra.mxu0 0
      %1081 = vmatprep.subr.bf16.mxu0 0
      %1082 = vmatpush1.bf16.msra.mxu0 %v1060
      %1083 = vmatprep.subr.bf16.mxu0 0
      %1084 = vmatpush1.bf16.msra.mxu0 %v1059
      %1085 = vmatprep.subr.bf16.mxu0 0
      %1086 = vmatpush2.bf16.msra.mxu0 0
      %1087 = vmatprep.subr.bf16.mxu0 0
      %1088 = vmatpush2.bf16.msra.mxu0 0
      %1089 = vmatprep.subr.bf16.mxu0 0
      %1090 = vmatpush2.bf16.msra.mxu0 0
      %1091 = vmatprep.subr.bf16.mxu0 0
      %1092 = vmatpush2.bf16.msra.mxu0 0
      %1093 = vmatprep.subr.bf16.mxu0 0
      %1094 = vmatpush2.bf16.msra.mxu0 0
      %1095 = vmatprep.subr.bf16.mxu0 0
      %1096 = vmatpush2.bf16.msra.mxu0 0
      %1097 = vmatprep.subr.bf16.mxu0 0
      %1098 = vmatpush2.bf16.msra.mxu0 0
      %1099 = vmatprep.subr.bf16.mxu0 0
      %1100 = vmatpush2.bf16.msra.mxu0 0
      %1101 = vmatprep.mubr.bf16.mxu0 0
      %1102 = vmatmul.mubr.bf16.gmra.mxu0 %v1064
      %v1103 = vpop.f32.mrf.mxu0
      %v1104 = vadd.f32 %v1049, %v1103
      %v1105 = vpop.f32.mrf.mxu0
      %v1106 = vpop.f32.mrf.mxu0
      %v1107 = vadd.f32 %v1049, %v1106
      %v1108 = vpop.f32.mrf.mxu0
      %1109 = vmatprep.mubr.bf16.mxu0 0
      %1110 = vmatmul.mubr.bf16.gmra.mxu0 %v1067
      %v1111 = vpop.f32.mrf.mxu0
      %v1112 = vadd.f32 %v1049, %v1111
      %v1113 = vpop.f32.mrf.mxu0
      %v1114 = vpop.f32.mrf.mxu0
      %v1115 = vpop.f32.mrf.mxu0
      %1116 = vdwg.mxu0
      %v1117 = vmax.f32 %v1104, 0.0
      %v1118 = vmax.f32 %v1107, 0.0
      %v1119 = vmax.f32 %v1112, 0.0
      %v1120 = vpack.c.bf16 %v1118, %v1117
      %v1121 = vpack.c.bf16 %v1119, %v1119
      %v1123 = vlaneseq
      %v1124 = vshrl.u32 %v1123, 7
      %v1125 = vsub.s32 0, %v1124
      %v1126 = vrot.slane %v452, %v1125
      %v1136 = vunpack.c.l.b16 %v444
      %v1137 = vunpack.c.l.b16 %v445
      %v1138 = vunpack.c.l.b16 %v446
      %v1139 = vunpack.c.l.b16 %v447
      %v1140 = vunpack.c.l.b16 %v448
      %v1141 = vunpack.c.l.b16 %v449
      %v1142 = vunpack.c.l.b16 %v450
      %v1143 = vunpack.c.l.b16 %v451
      %v1144 = vpack.c.b16 %v1137, %v1136
      %v1145 = vpack.c.b16 %v1139, %v1138
      %v1146 = vpack.c.b16 %v1141, %v1140
      %v1147 = vpack.c.b16 %v1143, %v1142
      %vm1152 = vcmask 523264
      %v1154 = vsel %vm1152, %v1120, 0
      %v1157 = vsel %vm1152, %v1121, 0
      %1159 = vmatprep.subr.bf16.mxu0 0
      %1160 = vmatpush1.bf16.msra.mxu0 0
      %1161 = vmatprep.subr.bf16.mxu0 0
      %1162 = vmatpush1.bf16.msra.mxu0 0
      %1163 = vmatprep.subr.bf16.mxu0 0
      %1164 = vmatpush1.bf16.msra.mxu0 0
      %1165 = vmatprep.subr.bf16.mxu0 0
      %1166 = vmatpush1.bf16.msra.mxu0 0
      %1167 = vmatprep.subr.bf16.mxu0 0
      %1168 = vmatpush1.bf16.msra.mxu0 %v1147
      %1169 = vmatprep.subr.bf16.mxu0 0
      %1170 = vmatpush1.bf16.msra.mxu0 %v1146
      %1171 = vmatprep.subr.bf16.mxu0 0
      %1172 = vmatpush1.bf16.msra.mxu0 %v1145
      %1173 = vmatprep.subr.bf16.mxu0 0
      %1174 = vmatpush1.bf16.msra.mxu0 %v1144
      %1175 = vmatprep.subr.bf16.mxu0 0
      %1176 = vmatpush2.bf16.msra.mxu0 0
      %1177 = vmatprep.subr.bf16.mxu0 0
      %1178 = vmatpush2.bf16.msra.mxu0 0
      %1179 = vmatprep.subr.bf16.mxu0 0
      %1180 = vmatpush2.bf16.msra.mxu0 0
      %1181 = vmatprep.subr.bf16.mxu0 0
      %1182 = vmatpush2.bf16.msra.mxu0 0
      %1183 = vmatprep.subr.bf16.mxu0 0
      %1184 = vmatpush2.bf16.msra.mxu0 0
      %1185 = vmatprep.subr.bf16.mxu0 0
      %1186 = vmatpush2.bf16.msra.mxu0 0
      %1187 = vmatprep.subr.bf16.mxu0 0
      %1188 = vmatpush2.bf16.msra.mxu0 0
      %1189 = vmatprep.subr.bf16.mxu0 0
      %1190 = vmatpush2.bf16.msra.mxu0 0
      %1191 = vmatprep.mubr.bf16.mxu0 0
      %1192 = vmatmul.mubr.bf16.gmra.mxu0 %v1154
      %v1193 = vpop.f32.mrf.mxu0
      %v1194 = vadd.f32 %v1126, %v1193
      %v1195 = vpop.f32.mrf.mxu0
      %v1196 = vpop.f32.mrf.mxu0
      %v1197 = vadd.f32 %v1126, %v1196
      %v1198 = vpop.f32.mrf.mxu0
      %1199 = vmatprep.mubr.bf16.mxu0 0
      %1200 = vmatmul.mubr.bf16.gmra.mxu0 %v1157
      %v1201 = vpop.f32.mrf.mxu0
      %v1202 = vadd.f32 %v1126, %v1201
      %v1203 = vpop.f32.mrf.mxu0
      %v1204 = vpop.f32.mrf.mxu0
      %v1205 = vpop.f32.mrf.mxu0
      %1206 = vdwg.mxu0
      %v1207 = vadd.f32 %v1040, %v1194
      %v1208 = vadd.f32 %v1041, %v1197
      %v1209 = vadd.f32 %v1042, %v1202
      %v1210 = vsel %vm501, %v1207, 0.0
      %1211 = vadd.xlane.f32.xlu0 %v1210
      %v1212 = vpop.xlane.xlu0 %1211
      %v1213 = vsel %vm501, %v1208, 0.0
      %1214 = vadd.xlane.f32.xlu0 %v1213
      %v1215 = vpop.xlane.xlu0 %1214
      %v1216 = vsel %vm990, %v1209, 0.0
      %1217 = vadd.xlane.f32.xlu0 %v1216
      %v1218 = vpop.xlane.xlu0 %1217
      %v1219 = vmul.f32 %v1212, %v994
      %v1220 = vmul.f32 %v1215, %v994
      %v1221 = vmul.f32 %v1218, %v994
      %v1222 = vsub.f32 %v1207, %v1219
      %v1223 = vsub.f32 %v1208, %v1220
      %v1224 = vsub.f32 %v1209, %v1221
      %v1225 = vmul.f32 %v1222, %v1222
      %v1226 = vmul.f32 %v1223, %v1223
      %v1227 = vmul.f32 %v1224, %v1224
      %v1228 = vsel %vm501, %v1225, 0.0
      %1229 = vadd.xlane.f32.xlu0 %v1228
      %v1230 = vpop.xlane.xlu0 %1229
      %v1231 = vsel %vm501, %v1226, 0.0
      %1232 = vadd.xlane.f32.xlu0 %v1231
      %v1233 = vpop.xlane.xlu0 %1232
      %v1234 = vsel %vm990, %v1227, 0.0
      %1235 = vadd.xlane.f32.xlu0 %v1234
      %v1236 = vpop.xlane.xlu0 %1235
      %v1237 = vmul.f32 %v1230, %v994
      %v1238 = vmul.f32 %v1233, %v994
      %v1239 = vmul.f32 %v1236, %v994
      %v1240 = vadd.f32 %v1237, 1e-06
      %v1241 = vadd.f32 %v1238, 1e-06
      %v1242 = vadd.f32 %v1239, 1e-06
      %v1243 = vrsqrt.pop %v1240
      %v1244 = vrsqrt.pop %v1241
      %v1245 = vrsqrt.pop %v1242
      %v1246 = vmul.f32 %v1222, %v1243
      %v1247 = vmul.f32 %v1223, %v1244
      %v1248 = vmul.f32 %v1224, %v1245
      %v1250 = vlaneseq
      %v1251 = vshrl.u32 %v1250, 7
      %v1252 = vsub.s32 0, %v1251
      %v1253 = vrot.slane %v453, %v1252
      %v1255 = vmul.f32 %v1246, %v1253
      %v1256 = vmul.f32 %v1247, %v1253
      %v1257 = vmul.f32 %v1248, %v1253
      %v1259 = vlaneseq
      %v1260 = vshrl.u32 %v1259, 7
      %v1261 = vsub.s32 0, %v1260
      %v1262 = vrot.slane %v454, %v1261
      %v1264 = vadd.f32 %v1255, %v1262
      %v1265 = vadd.f32 %v1256, %v1262
      %v1266 = vadd.f32 %v1257, %v1262
      %v1267 = vpack.c.bf16 %v1265, %v1264
      %v1268 = vpack.c.bf16 %v1266, %v1266
      %v1271 = vunpack.c.l.b16 %v1267
      %v1272 = vunpack.c.h.b16 %v1267
      %v1273 = vunpack.c.l.b16 %v1268
      %v1274 = vpack.c.b16 %v1271, %v1271
      %v1275 = vpack.c.b16 %v1272, %v1272
      %v1276 = vpack.c.b16 %v1273, %v1273
      %vm1280 = vcmask 257024
      %1281 = vst.msk [vmem:[%s427] sm:$0xf] %vm1280, %v1274
      %1282 = vst.msk [vmem:[%s427 + $0x4] sm:$0xf] %vm1280, %v1275
      %vm1283 = vcmask 253952
      %vm1284 = vsmask.f32 256
      %vm1285 = vmand %vm1283, %vm1284
      %v1286 = vld [vmem:[%s427 + $0x8] sm:$0x1]
      %v1287 = vsel %vm1285, %v1276, %v1286
      %1288 = vst [vmem:[%s427 + $0x8] sm:$0x1] %v1287
      %p1289 = scmp.lt.s32.totalorder %s23, 1
      %s1290 = scalar_select %p1289, %s23, 1
      %s1291 = smul.addr %s1290, 3
      %s1292 = smul.addr %s1291, 4
      %s1293 = scalar_lea.vmem %s12, %s1292
      // Predicated region
      $region69: #{seqvae_loss_forward.8} parent=67 // pred_check
        %p1294 = pneg %p303
      $region70: #{seqvae_loss_forward.8} parent=67 // pred_check_branch
        %1296 = sbr.rel (%p1294) target = $region72
      $region71: #{seqvae_loss_forward.8} parent=67 // pred_region
        _
      $region72: #{seqvae_loss_forward.8} parent=67 // pred_fallthru
        _
    $region68: #{seqvae_loss_forward.8} parent=5 // pred_fallthru
      _
    %p1297 = scmp.le.s32.totalorder 2, %s18
    // Predicated region
    $region73: #{seqvae_loss_forward.8} parent=5 // pred_check
      %p1298 = pneg %p1297
    $region74: #{seqvae_loss_forward.8} parent=5 // pred_check_branch
      %1300 = sbr.rel (%p1298) target = $region76
    $region75: #{seqvae_loss_forward.8} parent=5 // pred_region
      %s1301 = ssub.s32 %s18, 2
      // Predicated region
      $region77: #{seqvae_loss_forward.8} parent=75 // pred_check
        %p1302 = pneg %p309
      $region78: #{seqvae_loss_forward.8} parent=75 // pred_check_branch
        %1304 = sbr.rel (%p1302) target = $region80
      $region79: #{seqvae_loss_forward.8} parent=75 // pred_region
        %p1305 = scmp.lt.s32.totalorder %s24, 1
        %s1306 = scalar_select %p1305, %s24, 1
        %s1307 = smul.addr %s1306, 3
        %s1308 = smul.addr %s1307, 4
        %s1309 = scalar_lea.vmem %s12, %s1308
      $region80: #{seqvae_loss_forward.8} parent=75 // pred_fallthru
        _
    $region76: #{seqvae_loss_forward.8} parent=5 // pred_fallthru
      _
  $region6: #{seqvae_loss_forward.8} parent=0 // loop_footer
    %s22 = sadd.s32 1, %s18
  $region7: #{seqvae_loss_forward.8} parent=0 // loop_footer_branch
    %17 = sbr.rel target = $region3
  $region8: #{seqvae_loss_forward.8} parent=0 // loop_exit
    _

// kernel: seqvae_loss_forward.9
$region0: #{seqvae_loss_forward.9}
  #allocation0 [shape = 'u32[]', space=smem, size = 0x4, offset = 0x4, fixed_abs, tag = 'smem constant byte address 0x4 - core index']
  #allocation1 [shape = 'u32[144,128]{1,0:T(1,128)}', space=vmem, size = 0x12000, scoped, tag = 'internal scratch']
  #allocation2 [shape = 'f32[16,1]{1,0:T(8,128)}', space=vmem, size = 0x2000, scoped, tag = 'scratch operand']
  #allocation3 [shape = 'f32[16,1]{1,0:T(8,128)}', space=vmem, size = 0x2000, scoped, tag = 'scratch operand']
  #allocation4 [shape = 'f32[16,1]{1,0:T(8,128)}', space=vmem, size = 0x2000, scoped, tag = 'scratch operand']
  #allocation5 [shape = 'f32[16,1]{1,0:T(8,128)}', space=vmem, size = 0x2000, scoped, tag = 'scratch operand']
  #allocation6 [shape = 's32[16,1]{1,0:T(8,128)}', space=vmem, size = 0x2000, scoped, tag = 'scratch operand']
  #allocation7 [shape = 'f32[1,1]{1,0:T(1,128)}', space=vmem, size = 0x200, scoped, tag = 'scratch operand']
  #allocation8 [shape = 'f32[1,1]{1,0:T(1,128)}', space=vmem, size = 0x200, scoped, tag = 'scratch operand']
  #allocation9 [shape = 'f32[1,1]{1,0:T(1,128)}', space=vmem, size = 0x200, scoped, tag = 'scratch operand']
  %s0 = inlined_call_operand.vmem [shape: bf16[32,32], index: 0, kind: input, shape index: {}]
  %s1 = inlined_call_operand.vmem [shape: bf16[13,32], index: 1, kind: input, shape index: {}]
  %s2 = inlined_call_operand.vmem [shape: s32[32,1], index: 2, kind: input, shape index: {}]
  %s3 = inlined_call_operand.vmem [shape: f32[32,1], index: 3, kind: input, shape index: {}]
  %s4 = inlined_call_operand.vmem [shape: f32[2,32], index: 4, kind: input, shape index: {}]
  %s5 = inlined_call_operand.vmem [shape: f32[2,32], index: 5, kind: input, shape index: {}]
  %s6 = inlined_call_operand.vmem [shape: f32[1,128], index: 6, kind: output, shape index: {}]
  %s7 = sld [smem:[#allocation0]]
  $region73: #{seqvae_loss_forward.9} parent=0
    _
  %s9 = ssub.s32 1, %s7
  %s10 = scalar_select 0, %s9, %s7
  loop: start=0, step=1, limit=4
  $region2: #{seqvae_loss_forward.9} parent=0 // loop_pre_header
    _
  $region3: #{seqvae_loss_forward.9} parent=0 // loop_header
    %s12 = sphi 0, %s16
    %p13 = scmp.ge.s32.totalorder %s12, 4
    %s19 = sphi 0, %s31
    %s20 = sphi 0, %s27
    %s21 = sphi 0, %s19
    %s22 = sphi 0, %s20
    %s23 = sphi 0, %s21
    %s24 = sphi 0, %s22
    %s34 = sphi 0, %s36
    %s37 = sphi 0, %s34
    %s38 = sphi 0, %s37
    %s54 = sphi 0, %s38
    %s60 = sphi 0, %s62
    %s63 = sphi 0, %s60
    %s64 = sphi 0, %s63
    %s80 = sphi 0, %s64
    %s86 = sphi 0, %s88
    %s89 = sphi 0, %s86
    %s90 = sphi 0, %s89
    %s106 = sphi 0, %s90
    %s112 = sphi 0, %s114
    %s115 = sphi 0, %s112
    %s116 = sphi 0, %s115
    %s132 = sphi 0, %s116
    %s136 = sphi 0, %s136
    %s138 = sphi 0, %s136
    %s139 = sphi 0, %s138
    %s153 = sphi 0, %s139
    %s157 = sphi 0, %s157
    %s159 = sphi 0, %s157
    %s160 = sphi 0, %s159
    %s174 = sphi 0, %s160
    %s178 = sphi 0, %s178
    %s180 = sphi 0, %s178
    %s181 = sphi 0, %s180
    %s195 = sphi 0, %s181
  $region4: #{seqvae_loss_forward.9} parent=0 // loop_header_branch
    %15 = sbr.rel (%p13) target = $region8
  $region5: #{seqvae_loss_forward.9} parent=0 // loop_body
    %s17 = ssub.s32 %s12, 1
    %s18 = ssub.s32 %s12, 2
    %s25 = sadd.s32 1, %s20
    %p26 = scmp.ge.s32.totalorder %s25, 1
    %s27 = scalar_select %p26, 0, %s25
    %s28 = sadd.s32 1, %s19
    %s29 = scalar_select %p26, %s28, %s19
    %p30 = scmp.ge.s32.totalorder %s29, 2
    %s31 = scalar_select %p30, 0, %s29
    %s32 = ssub.s32 %s19, %s31
    %p33 = scmp.eq.s32.totalorder %s32, 0
    %s35 = sadd.s32 %s34, 1
    %s36 = scalar_select %p33, %s34, %s35
    %p39 = pneg %p33
    %p40 = scmp.eq.s32.totalorder %s12, 1
    %p41 = por %p39, %p40
    %p42 = scmp.ne.s32.totalorder %s34, %s37
    %p43 = scmp.eq.s32.totalorder %s12, 0
    %p44 = por %p42, %p43
    %p45 = scmp.ne.s32.totalorder %s34, %s37
    %p46 = scmp.eq.s32.totalorder %s17, 1
    %p47 = por %p45, %p46
    %p48 = scmp.ne.s32.totalorder %s37, %s38
    %p49 = scmp.eq.s32.totalorder %s17, 0
    %p50 = por %p48, %p49
    %p51 = scmp.ne.s32.totalorder %s37, %s38
    %p52 = scmp.eq.s32.totalorder %s18, 1
    %p53 = por %p51, %p52
    %p55 = scmp.ne.s32.totalorder %s38, %s54
    %p56 = scmp.eq.s32.totalorder %s18, 0
    %p57 = por %p55, %p56
    %s58 = ssub.s32 %s20, %s27
    %p59 = scmp.eq.s32.totalorder %s58, 0
    %s61 = sadd.s32 %s60, 1
    %s62 = scalar_select %p59, %s60, %s61
    %p65 = pneg %p59
    %p66 = scmp.eq.s32.totalorder %s12, 1
    %p67 = por %p65, %p66
    %p68 = scmp.ne.s32.totalorder %s60, %s63
    %p69 = scmp.eq.s32.totalorder %s12, 0
    %p70 = por %p68, %p69
    %p71 = scmp.ne.s32.totalorder %s60, %s63
    %p72 = scmp.eq.s32.totalorder %s17, 1
    %p73 = por %p71, %p72
    %p74 = scmp.ne.s32.totalorder %s63, %s64
    %p75 = scmp.eq.s32.totalorder %s17, 0
    %p76 = por %p74, %p75
    %p77 = scmp.ne.s32.totalorder %s63, %s64
    %p78 = scmp.eq.s32.totalorder %s18, 1
    %p79 = por %p77, %p78
    %p81 = scmp.ne.s32.totalorder %s64, %s80
    %p82 = scmp.eq.s32.totalorder %s18, 0
    %p83 = por %p81, %p82
    %s84 = ssub.s32 %s19, %s31
    %p85 = scmp.eq.s32.totalorder %s84, 0
    %s87 = sadd.s32 %s86, 1
    %s88 = scalar_select %p85, %s86, %s87
    %p91 = pneg %p85
    %p92 = scmp.eq.s32.totalorder %s12, 1
    %p93 = por %p91, %p92
    %p94 = scmp.ne.s32.totalorder %s86, %s89
    %p95 = scmp.eq.s32.totalorder %s12, 0
    %p96 = por %p94, %p95
    %p97 = scmp.ne.s32.totalorder %s86, %s89
    %p98 = scmp.eq.s32.totalorder %s17, 1
    %p99 = por %p97, %p98
    %p100 = scmp.ne.s32.totalorder %s89, %s90
    %p101 = scmp.eq.s32.totalorder %s17, 0
    %p102 = por %p100, %p101
    %p103 = scmp.ne.s32.totalorder %s89, %s90
    %p104 = scmp.eq.s32.totalorder %s18, 1
    %p105 = por %p103, %p104
    %p107 = scmp.ne.s32.totalorder %s90, %s106
    %p108 = scmp.eq.s32.totalorder %s18, 0
    %p109 = por %p107, %p108
    %s110 = ssub.s32 %s19, %s31
    %p111 = scmp.eq.s32.totalorder %s110, 0
    %s113 = sadd.s32 %s112, 1
    %s114 = scalar_select %p111, %s112, %s113
    %p117 = pneg %p111
    %p118 = scmp.eq.s32.totalorder %s12, 1
    %p119 = por %p117, %p118
    %p120 = scmp.ne.s32.totalorder %s112, %s115
    %p121 = scmp.eq.s32.totalorder %s12, 0
    %p122 = por %p120, %p121
    %p123 = scmp.ne.s32.totalorder %s112, %s115
    %p124 = scmp.eq.s32.totalorder %s17, 1
    %p125 = por %p123, %p124
    %p126 = scmp.ne.s32.totalorder %s115, %s116
    %p127 = scmp.eq.s32.totalorder %s17, 0
    %p128 = por %p126, %p127
    %p129 = scmp.ne.s32.totalorder %s115, %s116
    %p130 = scmp.eq.s32.totalorder %s18, 1
    %p131 = por %p129, %p130
    %p133 = scmp.ne.s32.totalorder %s116, %s132
    %p134 = scmp.eq.s32.totalorder %s18, 0
    %p135 = por %p133, %p134
    %s137 = sadd.s32 %s136, 1
    %p140 = scmp.eq.s32.totalorder %s12, 1
    %p141 = scmp.ne.s32.totalorder %s136, %s138
    %p142 = scmp.eq.s32.totalorder %s12, 0
    %p143 = por %p141, %p142
    %p144 = scmp.ne.s32.totalorder %s136, %s138
    %p145 = scmp.eq.s32.totalorder %s17, 1
    %p146 = por %p144, %p145
    %p147 = scmp.ne.s32.totalorder %s138, %s139
    %p148 = scmp.eq.s32.totalorder %s17, 0
    %p149 = por %p147, %p148
    %p150 = scmp.ne.s32.totalorder %s138, %s139
    %p151 = scmp.eq.s32.totalorder %s18, 1
    %p152 = por %p150, %p151
    %p154 = scmp.ne.s32.totalorder %s139, %s153
    %p155 = scmp.eq.s32.totalorder %s18, 0
    %p156 = por %p154, %p155
    %s158 = sadd.s32 %s157, 1
    %p161 = scmp.eq.s32.totalorder %s12, 1
    %p162 = scmp.ne.s32.totalorder %s157, %s159
    %p163 = scmp.eq.s32.totalorder %s12, 0
    %p164 = por %p162, %p163
    %p165 = scmp.ne.s32.totalorder %s157, %s159
    %p166 = scmp.eq.s32.totalorder %s17, 1
    %p167 = por %p165, %p166
    %p168 = scmp.ne.s32.totalorder %s159, %s160
    %p169 = scmp.eq.s32.totalorder %s17, 0
    %p170 = por %p168, %p169
    %p171 = scmp.ne.s32.totalorder %s159, %s160
    %p172 = scmp.eq.s32.totalorder %s18, 1
    %p173 = por %p171, %p172
    %p175 = scmp.ne.s32.totalorder %s160, %s174
    %p176 = scmp.eq.s32.totalorder %s18, 0
    %p177 = por %p175, %p176
    %s179 = sadd.s32 %s178, 1
    %p182 = scmp.eq.s32.totalorder %s12, 1
    %p183 = scmp.ne.s32.totalorder %s178, %s180
    %p184 = scmp.eq.s32.totalorder %s12, 0
    %p185 = por %p183, %p184
    %p186 = scmp.ne.s32.totalorder %s178, %s180
    %p187 = scmp.eq.s32.totalorder %s17, 1
    %p188 = por %p186, %p187
    %p189 = scmp.ne.s32.totalorder %s180, %s181
    %p190 = scmp.eq.s32.totalorder %s17, 0
    %p191 = por %p189, %p190
    %p192 = scmp.ne.s32.totalorder %s180, %s181
    %p193 = scmp.eq.s32.totalorder %s18, 1
    %p194 = por %p192, %p193
    %p196 = scmp.ne.s32.totalorder %s181, %s195
    %p197 = scmp.eq.s32.totalorder %s18, 0
    %p198 = por %p196, %p197
    %p199 = scmp.le.s32.totalorder 1, %s12
    %p200 = scmp.lt.s32.totalorder %s12, 3
    %p201 = pnand %p199, %p200
    %p202 = pneg %p201
    // Predicated region
    $region9: #{seqvae_loss_forward.9} parent=5 // pred_check
      _
    $region10: #{seqvae_loss_forward.9} parent=5 // pred_check_branch
      %204 = sbr.rel (%p201) target = $region12
    $region11: #{seqvae_loss_forward.9} parent=5 // pred_region
      %s205 = ssub.s32 %s12, 1
      // Predicated region
      $region13: #{seqvae_loss_forward.9} parent=11 // pred_check
        %p206 = pneg %p76
      $region14: #{seqvae_loss_forward.9} parent=11 // pred_check_branch
        %208 = sbr.rel (%p206) target = $region16
      $region15: #{seqvae_loss_forward.9} parent=11 // pred_region
        %s209 = smul.u32 2, %s22
        %p210 = scmp.lt.s32.totalorder %s209, 1
        %s211 = scalar_select %p210, %s209, 1
        %s212 = smul.addr %s211, 4
        %s213 = scalar_lea.vmem %s1, %s212
        %s214 = smul.u32 2, %s22
      $region16: #{seqvae_loss_forward.9} parent=11 // pred_fallthru
        _
      // Predicated region
      $region17: #{seqvae_loss_forward.9} parent=11 // pred_check
        %p215 = pneg %p149
      $region18: #{seqvae_loss_forward.9} parent=11 // pred_check_branch
        %217 = sbr.rel (%p215) target = $region20
      $region19: #{seqvae_loss_forward.9} parent=11 // pred_region
        _
      $region20: #{seqvae_loss_forward.9} parent=11 // pred_fallthru
        _
      // Predicated region
      $region21: #{seqvae_loss_forward.9} parent=11 // pred_check
        %p218 = pneg %p170
      $region22: #{seqvae_loss_forward.9} parent=11 // pred_check_branch
        %220 = sbr.rel (%p218) target = $region24
      $region23: #{seqvae_loss_forward.9} parent=11 // pred_region
        _
      $region24: #{seqvae_loss_forward.9} parent=11 // pred_fallthru
        _
    $region12: #{seqvae_loss_forward.9} parent=5 // pred_fallthru
      _
    %p221 = scmp.lt.s32.totalorder %s12, 2
    // Predicated region
    $region25: #{seqvae_loss_forward.9} parent=5 // pred_check
      %p222 = pneg %p221
    $region26: #{seqvae_loss_forward.9} parent=5 // pred_check_branch
      %224 = sbr.rel (%p222) target = $region28
    $region27: #{seqvae_loss_forward.9} parent=5 // pred_region
      // Predicated region
      $region29: #{seqvae_loss_forward.9} parent=27 // pred_check
        %p225 = pneg %p44
      $region30: #{seqvae_loss_forward.9} parent=27 // pred_check_branch
        %227 = sbr.rel (%p225) target = $region32
      $region31: #{seqvae_loss_forward.9} parent=27 // pred_region
        %s228 = smul.u32 2, %s19
        %p229 = scmp.lt.s32.totalorder %s228, 3
        %s230 = scalar_select %p229, %s228, 3
        %s231 = smul.addr %s230, 4
        %s232 = scalar_lea.vmem %s0, %s231
        %s233 = smul.u32 2, %s19
      $region32: #{seqvae_loss_forward.9} parent=27 // pred_fallthru
        _
      // Predicated region
      $region33: #{seqvae_loss_forward.9} parent=27 // pred_check
        %p234 = pneg %p96
      $region34: #{seqvae_loss_forward.9} parent=27 // pred_check_branch
        %236 = sbr.rel (%p234) target = $region36
      $region35: #{seqvae_loss_forward.9} parent=27 // pred_region
        %s237 = smul.u32 2, %s19
        %p238 = scmp.lt.s32.totalorder %s237, 3
        %s239 = scalar_select %p238, %s237, 3
        %s240 = smul.addr %s239, 8
        %s241 = scalar_lea.vmem %s2, %s240
        %s242 = smul.u32 2, %s19
      $region36: #{seqvae_loss_forward.9} parent=27 // pred_fallthru
        _
      // Predicated region
      $region37: #{seqvae_loss_forward.9} parent=27 // pred_check
        %p243 = pneg %p122
      $region38: #{seqvae_loss_forward.9} parent=27 // pred_check_branch
        %245 = sbr.rel (%p243) target = $region40
      $region39: #{seqvae_loss_forward.9} parent=27 // pred_region
        %s246 = smul.u32 2, %s19
        %p247 = scmp.lt.s32.totalorder %s246, 3
        %s248 = scalar_select %p247, %s246, 3
        %s249 = smul.addr %s248, 8
        %s250 = scalar_lea.vmem %s3, %s249
        %s251 = smul.u32 2, %s19
      $region40: #{seqvae_loss_forward.9} parent=27 // pred_fallthru
        _
    $region28: #{seqvae_loss_forward.9} parent=5 // pred_fallthru
      _
    %p252 = scmp.le.s32.totalorder 1, %s12
    %p253 = scmp.lt.s32.totalorder %s12, 3
    %p254 = pnand %p252, %p253
    %p255 = pneg %p254
    // Predicated region
    $region41: #{seqvae_loss_forward.9} parent=5 // pred_check
      _
    $region42: #{seqvae_loss_forward.9} parent=5 // pred_check_branch
      %257 = sbr.rel (%p254) target = $region44
    $region43: #{seqvae_loss_forward.9} parent=5 // pred_region
      %s258 = ssub.s32 %s12, 1
      %s259 = smul.u32 2, %s21
      %p260 = scmp.lt.s32.totalorder %s259, 3
      %s261 = scalar_select %p260, %s259, 3
      %s262 = smul.addr %s261, 4
      %s263 = scalar_lea.vmem %s0, %s262
      %p264 = pneg %p50
      %p265 = pneg %p47
      %s266 = smul.u32 2, %s22
      %p267 = scmp.lt.s32.totalorder %s266, 1
      %s268 = scalar_select %p267, %s266, 1
      %s269 = smul.addr %s268, 4
      %s270 = scalar_lea.vmem %s1, %s269
      %p271 = pneg %p76
      %p272 = pneg %p73
      %s273 = smul.u32 2, %s21
      %p274 = scmp.lt.s32.totalorder %s273, 3
      %s275 = scalar_select %p274, %s273, 3
      %s276 = smul.addr %s275, 8
      %s277 = scalar_lea.vmem %s2, %s276
      %p278 = pneg %p102
      %p279 = pneg %p99
      %s280 = smul.u32 2, %s21
      %p281 = scmp.lt.s32.totalorder %s280, 3
      %s282 = scalar_select %p281, %s280, 3
      %s283 = smul.addr %s282, 8
      %s284 = scalar_lea.vmem %s3, %s283
      %p285 = pneg %p128
      %p286 = pneg %p125
      %p287 = pneg %p149
      %p288 = pneg %p146
      %p289 = pneg %p170
      %p290 = pneg %p167
      %p291 = pneg %p191
      %p292 = pneg %p188
      %s293 = smul.u32 2, %s21
      %p294 = scmp.lt.s32.totalorder %s293, 3
      %s295 = scalar_select %p294, %s293, 3
      %s296 = smul.addr %s295, 4
      %s297 = scalar_lea.vmem %s0, %s296
      %s298 = smul.u32 2, %s21
      %s299 = smul.u32 2, %s22
      %p300 = scmp.lt.s32.totalorder %s299, 1
      %s301 = scalar_select %p300, %s299, 1
      %s302 = smul.addr %s301, 4
      %s303 = scalar_lea.vmem %s1, %s302
      %s304 = smul.u32 2, %s22
      %s305 = smul.u32 2, %s21
      %p306 = scmp.lt.s32.totalorder %s305, 3
      %s307 = scalar_select %p306, %s305, 3
      %s308 = smul.addr %s307, 8
      %s309 = scalar_lea.vmem %s2, %s308
      %s310 = smul.u32 2, %s21
      %s311 = smul.u32 2, %s21
      %p312 = scmp.lt.s32.totalorder %s311, 3
      %s313 = scalar_select %p312, %s311, 3
      %s314 = smul.addr %s313, 8
      %s315 = scalar_lea.vmem %s3, %s314
      %s316 = smul.u32 2, %s21
      %p318 = scmp.eq.s32.totalorder %s21, 0
      %p319 = scmp.eq.s32.totalorder %s22, 0
      %p320 = pnand %p318, %p319
      %p321 = pneg %p320
      // Predicated region
      $region45: #{seqvae_loss_forward.9} parent=43 // pred_check
        _
      $region46: #{seqvae_loss_forward.9} parent=43 // pred_check_branch
        %323 = sbr.rel (%p320) target = $region48
      $region47: #{seqvae_loss_forward.9} parent=43 // pred_region
        %vm324 = vcmask 0
        %325 = vst.msk [vmem:[#allocation7] sm:$0x1] %vm324, 0.0
        %326 = vst.msk [vmem:[#allocation8] sm:$0x1] %vm324, 0.0
        %327 = vst.msk [vmem:[#allocation9] sm:$0x1] %vm324, 0.0
      $region48: #{seqvae_loss_forward.9} parent=43 // pred_fallthru
        _
      // Predicated region
      $region49: #{seqvae_loss_forward.9} parent=43 // pred_check
        %p328 = pneg %p319
      $region50: #{seqvae_loss_forward.9} parent=43 // pred_check_branch
        %330 = sbr.rel (%p328) target = $region52
      $region51: #{seqvae_loss_forward.9} parent=43 // pred_region
        %vm331 = vcmask 7168
        %332 = vst.msk [vmem:[#allocation2] sm:$0xff] %vm331, -inf
        %333 = vst.msk [vmem:[#allocation2 + $0x8] sm:$0xff] %vm331, -inf
        %334 = vst.msk [vmem:[#allocation3] sm:$0xff] %vm331, 0.0
        %335 = vst.msk [vmem:[#allocation3 + $0x8] sm:$0xff] %vm331, 0.0
        %336 = vst.msk [vmem:[#allocation4] sm:$0xff] %vm331, 0.0
        %337 = vst.msk [vmem:[#allocation4 + $0x8] sm:$0xff] %vm331, 0.0
        %338 = vst.msk [vmem:[#allocation5] sm:$0xff] %vm331, -inf
        %339 = vst.msk [vmem:[#allocation5 + $0x8] sm:$0xff] %vm331, -inf
        %340 = vst.msk [vmem:[#allocation6] sm:$0xff] %vm331, 13
        %341 = vst.msk [vmem:[#allocation6 + $0x8] sm:$0xff] %vm331, 13
      $region52: #{seqvae_loss_forward.9} parent=43 // pred_fallthru
        _
      %v342 = vld [vmem:[%s297] sm:$0xf]
      %v343 = vld [vmem:[%s297 + $0x4] sm:$0xf]
      %v344 = vld [vmem:[%s303] sm:$0xf]
      %v345 = vld [vmem:[%s303 + $0x4] sm:$0x7]
      %v348 = vunpack.c.l.b16 %v342
      %v349 = vunpack.c.l.b16 %v343
      %v350 = vpack.c.b16 %v349, %v348
      %v353 = vunpack.c.l.b16 %v344
      %v354 = vunpack.c.l.b16 %v345
      %v355 = vpack.c.b16 %v354, %v353
      %vm356 = vcmask 261120
      %v358 = vsel %vm356, %v350, 0
      %v361 = vsel %vm356, %v355, 0
      %363 = vmatprep.subr.bf16.mxu0 0
      %364 = vmatpush1.bf16.xpose.msra.mxu0 0
      %365 = vmatprep.subr.bf16.mxu0 0
      %366 = vmatpush1.bf16.xpose.msra.mxu0 0
      %367 = vmatprep.subr.bf16.mxu0 0
      %368 = vmatpush1.bf16.xpose.msra.mxu0 0
      %369 = vmatprep.subr.bf16.mxu0 0
      %370 = vmatpush1.bf16.xpose.msra.mxu0 0
      %371 = vmatprep.subr.bf16.mxu0 0
      %372 = vmatpush1.bf16.xpose.msra.mxu0 0
      %373 = vmatprep.subr.bf16.mxu0 0
      %374 = vmatpush1.bf16.xpose.msra.mxu0 0
      %375 = vmatprep.subr.bf16.mxu0 0
      %376 = vmatpush1.bf16.xpose.msra.mxu0 0
      %377 = vmatprep.subr.bf16.mxu0 0
      %378 = vmatpush1.bf16.xpose.msra.mxu0 %v361
      %379 = vmatprep.subr.bf16.mxu0 0
      %380 = vmatpush2.bf16.xpose.msra.mxu0 0
      %381 = vmatprep.subr.bf16.mxu0 0
      %382 = vmatpush2.bf16.xpose.msra.mxu0 0
      %383 = vmatprep.subr.bf16.mxu0 0
      %384 = vmatpush2.bf16.xpose.msra.mxu0 0
      %385 = vmatprep.subr.bf16.mxu0 0
      %386 = vmatpush2.bf16.xpose.msra.mxu0 0
      %387 = vmatprep.subr.bf16.mxu0 0
      %388 = vmatpush2.bf16.xpose.msra.mxu0 0
      %389 = vmatprep.subr.bf16.mxu0 0
      %390 = vmatpush2.bf16.xpose.msra.mxu0 0
      %391 = vmatprep.subr.bf16.mxu0 0
      %392 = vmatpush2.bf16.xpose.msra.mxu0 0
      %393 = vmatprep.subr.bf16.mxu0 0
      %394 = vmatpush2.bf16.xpose.msra.mxu0 0
      %395 = vmatprep.mubr.bf16.mxu0 0
      %396 = vmatmul.mubr.bf16.gmra.mxu0 %v358
      %v397 = vpop.f32.mrf.mxu0
      %v398 = vadd.f32 0.0, %v397
      %v399 = vpop.f32.mrf.mxu0
      %v400 = vpop.f32.mrf.mxu0
      %v401 = vadd.f32 0.0, %v400
      %v402 = vpop.f32.mrf.mxu0
      %403 = vdwg.mxu0
      %s404 = smul.u32 %s22, 13
      %v405 = vlaneseq
      %v406 = vand.u32 %v405, 127
      %v407 = vstv %s404
      %v408 = vadd.s32 %v407, %v406
      %v409 = vld [vmem:[%s309] sm:$0xff]
      %v410 = vld [vmem:[%s309 + $0x8] sm:$0xff]
      %v411 = vld [vmem:[#allocation4] sm:$0xff]
      %v412 = vld [vmem:[#allocation4 + $0x8] sm:$0xff]
      %413 = vset.pattern.permute.xlu0 0
      %414 = vperm.xlu0 %413, %v409
      %v415 = vpop.permute.xlu0 %414
      %416 = vset.pattern.permute.xlu0 0
      %417 = vperm.xlu0 %416, %v410
      %v418 = vpop.permute.xlu0 %417
      %vm419 = vcmp.eq.s32.totalorder %v408, %v415
      %vm420 = vcmp.eq.s32.totalorder %v408, %v418
      %v421 = vsel %vm419, %v398, 0.0
      %v422 = vsel %vm420, %v401, 0.0
      %vm423 = vcmask 105472
      %v424 = vsel %vm423, %v421, 0.0
      %425 = vadd.xlane.f32.xlu0 %v424
      %v426 = vpop.xlane.xlu0 %425
      %v427 = vsel %vm423, %v422, 0.0
      %428 = vadd.xlane.f32.xlu0 %v427
      %v429 = vpop.xlane.xlu0 %428
      %v430 = vadd.f32 %v411, %v426
      %v431 = vadd.f32 %v412, %v429
      %vm432 = vcmask 7168
      %433 = vst.msk [vmem:[#allocation4] sm:$0xff] %vm432, %v430
      %434 = vst.msk [vmem:[#allocation4 + $0x8] sm:$0xff] %vm432, %v431
      %v435 = vsel %vm423, %v398, -inf
      %436 = vmax.xlane.f32.xlu0 %v435
      %v437 = vpop.xlane.xlu0 %436
      %v438 = vsel %vm423, %v401, -inf
      %439 = vmax.xlane.f32.xlu0 %v438
      %v440 = vpop.xlane.xlu0 %439
      %v441 = vld [vmem:[#allocation2] sm:$0xff]
      %v442 = vld [vmem:[#allocation2 + $0x8] sm:$0xff]
      %v443 = vmax.f32 %v441, %v437
      %v444 = vmax.f32 %v442, %v440
      %v445 = vld [vmem:[#allocation3] sm:$0xff]
      %v446 = vld [vmem:[#allocation3 + $0x8] sm:$0xff]
      %v447 = vsub.f32 %v441, %v443
      %v448 = vsub.f32 %v442, %v444
      %v449 = vmul.f32 %v447, 1.442695
      %v450 = vpow.pop %v449
      %v451 = vmul.f32 %v448, 1.442695
      %v452 = vpow.pop %v451
      %v453 = vmul.f32 %v445, %v450
      %v454 = vmul.f32 %v446, %v452
      %456 = vset.pattern.permute.xlu0 0
      %457 = vperm.xlu0 %456, %v443
      %v458 = vpop.permute.xlu0 %457
      %461 = vset.pattern.permute.xlu0 0
      %462 = vperm.xlu0 %461, %v444
      %v463 = vpop.permute.xlu0 %462
      %v465 = vsub.f32 %v398, %v458
      %v466 = vsub.f32 %v401, %v463
      %v467 = vmul.f32 %v465, 1.442695
      %v468 = vpow.pop %v467
      %v469 = vmul.f32 %v466, 1.442695
      %v470 = vpow.pop %v469
      %v471 = vsel %vm423, %v468, 0.0
      %472 = vadd.xlane.f32.xlu0 %v471
      %v473 = vpop.xlane.xlu0 %472
      %v474 = vsel %vm423, %v470, 0.0
      %475 = vadd.xlane.f32.xlu0 %v474
      %v476 = vpop.xlane.xlu0 %475
      %v477 = vadd.f32 %v453, %v473
      %v478 = vadd.f32 %v454, %v476
      %479 = vst.msk [vmem:[#allocation3] sm:$0xff] %vm432, %v477
      %480 = vst.msk [vmem:[#allocation3 + $0x8] sm:$0xff] %vm432, %v478
      %481 = vst.msk [vmem:[#allocation2] sm:$0xff] %vm432, %v443
      %482 = vst.msk [vmem:[#allocation2 + $0x8] sm:$0xff] %vm432, %v444
      %vm483 = vcmp.ge.f32.partialorder %v398, %v437
      %vm484 = vcmp.ge.f32.partialorder %v401, %v440
      %v485 = vsel %vm483, %v408, 13
      %v486 = vsel %vm484, %v408, 13
      %v487 = vsel %vm423, %v485, 2147483647
      %v488 = vand.u32 %v487, 65535
      %v489 = vshra.s32 %v487, 16
      %v490 = vcvt.s32.f32 %v488
      %v491 = vcvt.s32.f32 %v489
      %492 = vmin.xlane.f32.xlu0 %v491
      %v493 = vpop.xlane.xlu0 %492
      %vm494 = vcmp.eq.f32.partialorder %v491, %v493
      %v495 = vsel %vm494, %v490, inf
      %496 = vmin.xlane.f32.xlu0 %v495
      %v497 = vpop.xlane.xlu0 %496
      %v498 = vcvt.f32.s32 %v497
      %v499 = vcvt.f32.s32 %v493
      %v500 = vshll.u32 %v499, 16
      %v501 = vadd.s32 %v500, %v498
      %v502 = vsel %vm423, %v486, 2147483647
      %v503 = vand.u32 %v502, 65535
      %v504 = vshra.s32 %v502, 16
      %v505 = vcvt.s32.f32 %v503
      %v506 = vcvt.s32.f32 %v504
      %507 = vmin.xlane.f32.xlu0 %v506
      %v508 = vpop.xlane.xlu0 %507
      %vm509 = vcmp.eq.f32.partialorder %v506, %v508
      %v510 = vsel %vm509, %v505, inf
      %511 = vmin.xlane.f32.xlu0 %v510
      %v512 = vpop.xlane.xlu0 %511
      %v513 = vcvt.f32.s32 %v512
      %v514 = vcvt.f32.s32 %v508
      %v515 = vshll.u32 %v514, 16
      %v516 = vadd.s32 %v515, %v513
      %v517 = vld [vmem:[#allocation5] sm:$0xff]
      %v518 = vld [vmem:[#allocation5 + $0x8] sm:$0xff]
      %vm519 = vcmp.gt.f32.partialorder %v437, %v517
      %vm520 = vcmp.gt.f32.partialorder %v440, %v518
      %v521 = vsel %vm519, %v437, %v517
      %v522 = vsel %vm520, %v440, %v518
      %523 = vst.msk [vmem:[#allocation5] sm:$0xff] %vm432, %v521
      %524 = vst.msk [vmem:[#allocation5 + $0x8] sm:$0xff] %vm432, %v522
      %v525 = vld [vmem:[#allocation6] sm:$0xff]
      %v526 = vld [vmem:[#allocation6 + $0x8] sm:$0xff]
      %v527 = vsel %vm519, %v501, %v525
      %v528 = vsel %vm520, %v516, %v526
      %529 = vst.msk [vmem:[#allocation6] sm:$0xff] %vm432, %v527
      %530 = vst.msk [vmem:[#allocation6 + $0x8] sm:$0xff] %vm432, %v528
      // Predicated region
      $region53: #{seqvae_loss_forward.9} parent=43 // pred_check
        %p531 = pneg %p319
      $region54: #{seqvae_loss_forward.9} parent=43 // pred_check_branch
        %533 = sbr.rel (%p531) target = $region56
      $region55: #{seqvae_loss_forward.9} parent=43 // pred_region
        %v534 = vld [vmem:[%s315] sm:$0xff]
        %v535 = vld [vmem:[%s315 + $0x8] sm:$0xff]
        %v536 = vld [vmem:[#allocation3] sm:$0xff]
        %v537 = vld [vmem:[#allocation3 + $0x8] sm:$0xff]
        %v538 = vlog2.pop %v536
        %v539 = vmul.f32 %v538, 0.6931472
        %v540 = vlog2.pop %v537
        %v541 = vmul.f32 %v540, 0.6931472
        %v542 = vld [vmem:[#allocation2] sm:$0xff]
        %v543 = vld [vmem:[#allocation2 + $0x8] sm:$0xff]
        %v544 = vadd.f32 %v539, %v542
        %v545 = vadd.f32 %v541, %v543
        %v546 = vld [vmem:[#allocation4] sm:$0xff]
        %v547 = vld [vmem:[#allocation4 + $0x8] sm:$0xff]
        %v548 = vsub.f32 %v544, %v546
        %v549 = vsub.f32 %v545, %v547
        %v550 = vld [vmem:[#allocation7] sm:$0x1]
        %v551 = vmul.f32 %v548, %v534
        %v552 = vmul.f32 %v549, %v535
        %v553 = vsel %vm432, %v551, 0.0
        %v554 = vsel %vm432, %v552, 0.0
        %v555 = vadd.f32 %v553, %v554
        %v556 = vrot.slane %v555, 4
        %v557 = vadd.f32 %v555, %v556
        %v558 = vrot.slane %v557, 2
        %v559 = vadd.f32 %v557, %v558
        %v560 = vrot.slane %v559, 1
        %v561 = vadd.f32 %v559, %v560
        %v562 = vadd.f32 %v550, %v561
        %vm563 = vcmask 0
        %564 = vst.msk [vmem:[#allocation7] sm:$0x1] %vm563, %v562
        %v565 = vld [vmem:[#allocation6] sm:$0xff]
        %v566 = vld [vmem:[#allocation6 + $0x8] sm:$0xff]
        %vm567 = vcmp.eq.s32.totalorder %v565, %v409
        %vm568 = vcmp.eq.s32.totalorder %v566, %v410
        %v569 = vsel %vm567, 1, 0
        %v570 = vsel %vm568, 1, 0
        %v571 = vcvt.s32.f32 %v569
        %v572 = vcvt.s32.f32 %v570
        %v573 = vmul.f32 %v571, %v534
        %v574 = vmul.f32 %v572, %v535
        %v575 = vld [vmem:[#allocation8] sm:$0x1]
        %v576 = vsel %vm432, %v573, 0.0
        %v577 = vsel %vm432, %v574, 0.0
        %v578 = vadd.f32 %v576, %v577
        %v579 = vrot.slane %v578, 4
        %v580 = vadd.f32 %v578, %v579
        %v581 = vrot.slane %v580, 2
        %v582 = vadd.f32 %v580, %v581
        %v583 = vrot.slane %v582, 1
        %v584 = vadd.f32 %v582, %v583
        %v585 = vadd.f32 %v575, %v584
        %586 = vst.msk [vmem:[#allocation8] sm:$0x1] %vm563, %v585
        %v587 = vld [vmem:[#allocation9] sm:$0x1]
        %v588 = vsel %vm432, %v534, 0.0
        %v589 = vsel %vm432, %v535, 0.0
        %v590 = vadd.f32 %v588, %v589
        %v591 = vrot.slane %v590, 4
        %v592 = vadd.f32 %v590, %v591
        %v593 = vrot.slane %v592, 2
        %v594 = vadd.f32 %v592, %v593
        %v595 = vrot.slane %v594, 1
        %v596 = vadd.f32 %v594, %v595
        %v597 = vadd.f32 %v587, %v596
        %598 = vst.msk [vmem:[#allocation9] sm:$0x1] %vm563, %v597
      $region56: #{seqvae_loss_forward.9} parent=43 // pred_fallthru
        _
      %p599 = scmp.eq.s32.totalorder %s21, 1
      %p600 = pnand %p599, %p319
      %p601 = pneg %p600
      // Predicated region
      $region57: #{seqvae_loss_forward.9} parent=43 // pred_check
        _
      $region58: #{seqvae_loss_forward.9} parent=43 // pred_check_branch
        %603 = sbr.rel (%p600) target = $region60
      $region59: #{seqvae_loss_forward.9} parent=43 // pred_region
        %v604 = vld [vmem:[#allocation9] sm:$0x1]
        %v605 = vmax.f32 %v604, 1.0
        %v606 = vrcp.pop %v605
        %v607 = vld [vmem:[#allocation7] sm:$0x1]
        %v608 = vmul.f32 %v607, %v606
        %v609 = vld [vmem:[#allocation8] sm:$0x1]
        %v610 = vmul.f32 %v609, %v606
        %v611 = vld [vmem:[%s4] sm:$0x3]
        %v612 = vld [vmem:[%s5] sm:$0x3]
        %v613 = vadd.f32 %v612, 1.0
        %v614 = vmul.f32 %v611, %v611
        %v615 = vsub.f32 %v613, %v614
        %v616 = vmul.f32 %v612, 1.442695
        %v617 = vpow.pop %v616
        %v618 = vsub.f32 %v615, %v617
        %vm619 = vcmask 254976
        %v620 = vsel %vm619, %v618, 0.0
        %621 = vadd.xlane.f32.xlu0 %v620
        %v622 = vpop.xlane.xlu0 %621
        %v623 = vmul.f32 %v622, -0.5
        %vm624 = vcmask 1041408
        %v625 = vsel %vm624, %v623, 0.0
        %v626 = vrot.slane %v625, 4
        %v627 = vadd.f32 %v625, %v626
        %v628 = vrot.slane %v627, 2
        %v629 = vadd.f32 %v627, %v628
        %v630 = vrot.slane %v629, 1
        %v631 = vadd.f32 %v629, %v630
        %v632 = vmul.f32 %v631, 0.5
        %v633 = vmul.f32 %v632, 0.001
        %v634 = vadd.f32 %v608, %v633
        %vm635 = vcmp.eq.s32.totalorder %v406, 0
        %vm636 = vcmp.eq.s32.totalorder %v406, 1
        %vm637 = vcmp.eq.s32.totalorder %v406, 2
        %639 = vset.pattern.permute.xlu0 0
        %640 = vperm.xlu0 %639, %v610
        %v641 = vpop.permute.xlu0 %640
        %v643 = vlaneseq
        %v644 = vshrl.u32 %v643, 7
        %v645 = vsub.s32 0, %v644
        %v646 = vrot.slane %v641, %v645
        %v647 = vsel %vm637, %v632, %v646
        %649 = vset.pattern.permute.xlu0 0
        %650 = vperm.xlu0 %649, %v608
        %v651 = vpop.permute.xlu0 %650
        %v653 = vlaneseq
        %v654 = vshrl.u32 %v653, 7
        %v655 = vsub.s32 0, %v654
        %v656 = vrot.slane %v651, %v655
        %v657 = vsel %vm636, %v656, %v647
        %659 = vset.pattern.permute.xlu0 0
        %660 = vperm.xlu0 %659, %v634
        %v661 = vpop.permute.xlu0 %660
        %v663 = vlaneseq
        %v664 = vshrl.u32 %v663, 7
        %v665 = vsub.s32 0, %v664
        %v666 = vrot.slane %v661, %v665
        %v667 = vsel %vm635, %v666, %v657
        %668 = vst [vmem:[%s6] sm:$0x1] %v667
      $region60: #{seqvae_loss_forward.9} parent=43 // pred_fallthru
        _
      // Predicated region
      $region61: #{seqvae_loss_forward.9} parent=43 // pred_check
        %p669 = pneg %p188
      $region62: #{seqvae_loss_forward.9} parent=43 // pred_check_branch
        %671 = sbr.rel (%p669) target = $region64
      $region63: #{seqvae_loss_forward.9} parent=43 // pred_region
        _
      $region64: #{seqvae_loss_forward.9} parent=43 // pred_fallthru
        _
      // Predicated region
      $region65: #{seqvae_loss_forward.9} parent=43 // pred_check
        %p672 = pneg %p188
      $region66: #{seqvae_loss_forward.9} parent=43 // pred_check_branch
        %674 = sbr.rel (%p672) target = $region68
      $region67: #{seqvae_loss_forward.9} parent=43 // pred_region
        _
      $region68: #{seqvae_loss_forward.9} parent=43 // pred_fallthru
        _
    $region44: #{seqvae_loss_forward.9} parent=5 // pred_fallthru
      _
    %p675 = scmp.le.s32.totalorder 2, %s12
    // Predicated region
    $region69: #{seqvae_loss_forward.9} parent=5 // pred_check
      %p676 = pneg %p675
    $region70: #{seqvae_loss_forward.9} parent=5 // pred_check_branch
      %678 = sbr.rel (%p676) target = $region72
    $region71: #{seqvae_loss_forward.9} parent=5 // pred_region
      %s679 = ssub.s32 %s12, 2
    $region72: #{seqvae_loss_forward.9} parent=5 // pred_fallthru
      _
  $region6: #{seqvae_loss_forward.9} parent=0 // loop_footer
    %s16 = sadd.s32 1, %s12
  $region7: #{seqvae_loss_forward.9} parent=0 // loop_footer_branch
    %11 = sbr.rel target = $region3
  $region8: #{seqvae_loss_forward.9} parent=0 // loop_exit
    _

</llo_original>
